<compile_context>
chip_gen: v6e
topology: v6e:2x2x1
jax: 0.10.0
libtpu: 0.0.40
codegen_flags: <defaults>
</compile_context>

<pallas_src>
import jax
import jax.numpy as jnp
import numpy as np
from jax.experimental import pallas as pl
from jax.experimental.pallas import tpu as pltpu

B = 2                 # batch
H = 5                 # num_net -> conv kernel height
KS = 1                # ks
N_IN = 2019 - KS + 1  # fc2 in_features  == 2019
N_OUT = 2019          # fc2 out_features
KPAD = 2048           # padded contraction dim (multiple of 128)
NPAD = 2048           # padded output-feature dim (multiple of TN)

_KIND = jax.devices()[0].device_kind.lower()
_IS_V7 = "v7" in _KIND
if _IS_V7:
    TN = 1024                            # 2 tiles -> one per TensorCore on v7x
    _DIM_SEM = (pltpu.CORE_PARALLEL,)    # real 2-TC sharding (plain "parallel" doesn't)
else:
    TN = 2048                            # single tile: one contiguous weight DMA, no step overhead
    _DIM_SEM = (pltpu.ARBITRARY,)
NTILES = NPAD // TN


def _network_kernel(x_ref, cw_ref, wq_ref, sc_ref, b2_ref, o_ref):
    # x_ref  : (B, H, KPAD)   f32   resident zero-padded input
    # cw_ref : (1, H, 1)      f32   conv1 weights (resident)
    # wq_ref : (1, KPAD, TN)  int8  contiguous pre-tiled slab of quantized fc2.weight^T
    # sc_ref : (NTILES, TN)   f32   per-output-column dequant scales (resident)
    # b2_ref : (NTILES, TN)   f32   fc2 bias (resident)
    # o_ref  : (B, TN)        f32   tile of logits
    j = pl.program_id(0)
    # conv2d(kernel=(5,1), stride=1, no bias) == weighted sum over the H axis (VPU filler,
    # fully hidden under the weight DMA; keep it in-kernel, not in the XLA wrapper).
    conv = jnp.sum(x_ref[...] * cw_ref[...], axis=1)                 # (B, KPAD) f32
    # Dequantize the streamed int8 tile to bf16 on the VPU (hidden under the DMA);
    # int8 values (|w_q| <= 127) are exactly representable in bf16.
    w = wq_ref[0].astype(jnp.bfloat16)                               # (KPAD, TN)
    acc = jnp.dot(conv.astype(jnp.bfloat16), w,
                  preferred_element_type=jnp.float32)                # MXU, f32 accumulate
    # Fold the per-column dequant scale into the epilogue, then add the bias row.
    o_ref[...] = acc * sc_ref[pl.ds(j, 1), :] + b2_ref[pl.ds(j, 1), :]


def prepare_params(conv_w, fc2_w, fc2_b):
    """One-time parameter preparation (quantize / pad / pre-tile). Cache the result."""
    cw = conv_w[0, 0, :, 0].reshape(1, H, 1).astype(jnp.float32)           # (1, H, 1)

    # fc2.weight^T, zero-padded to (KPAD, NPAD).
    w_t = jnp.pad(fc2_w.T.astype(jnp.float32),
                  ((0, KPAD - N_IN), (0, NPAD - N_OUT)))                   # (KPAD, NPAD)
    # Symmetric int8 quantization with per-output-column scales.
    col_amax = jnp.max(jnp.abs(w_t), axis=0)                               # (NPAD,)
    scale = jnp.maximum(col_amax, 1e-30) / 127.0
    w_q = jnp.clip(jnp.round(w_t / scale[None, :]), -127.0, 127.0).astype(jnp.int8)
    # Pre-tile so each grid step's (KPAD, TN) slab is contiguous in HBM.
    w_q = w_q.reshape(KPAD, NTILES, TN).transpose(1, 0, 2)                 # (NTILES, KPAD, TN)

    sc = scale.reshape(NTILES, TN).astype(jnp.float32)                     # (NTILES, TN)
    b2 = jnp.pad(fc2_b.astype(jnp.float32),
                 (0, NPAD - N_OUT)).reshape(NTILES, TN)                    # (NTILES, TN)
    return cw, w_q, sc, b2


@jax.jit
def network_forward(x_nchw, cw, w_q, sc, b2):
    """x_nchw: (B, 1, H, N_IN) f32; (cw, w_q, sc, b2) from prepare_params()."""
    bs = x_nchw.shape[0]
    x = x_nchw[:, 0, :, :]                                      # (B, H, N_IN), squeeze channel
    x = jnp.pad(x, ((0, 0), (0, 0), (0, KPAD - N_IN)))          # (B, H, KPAD)  (tiny, ~80 KB)

    cost = pl.CostEstimate(
        flops=2 * bs * KPAD * NPAD,
        transcendentals=0,
        bytes_accessed=NTILES * KPAD * TN            # int8 weight stream (dominant)
                       + x.size * 4 + bs * NPAD * 4,
    )

    out = pl.pallas_call(
        _network_kernel,
        out_shape=jax.ShapeDtypeStruct((bs, NPAD), jnp.float32),
        grid_spec=pltpu.PrefetchScalarGridSpec(
            num_scalar_prefetch=0,
            grid=(NTILES,),
            in_specs=[
                pl.BlockSpec((bs, H, KPAD), lambda j: (0, 0, 0)),    # resident input
                pl.BlockSpec((1, H, 1), lambda j: (0, 0, 0)),        # resident conv weights
                pl.BlockSpec((1, KPAD, TN), lambda j: (j, 0, 0)),    # contiguous int8 weight slab
                pl.BlockSpec((NTILES, TN), lambda j: (0, 0)),        # resident dequant scales
                pl.BlockSpec((NTILES, TN), lambda j: (0, 0)),        # resident bias
            ],
            out_specs=pl.BlockSpec((bs, TN), lambda j: (0, j)),
        ),
        compiler_params=pltpu.CompilerParams(
            dimension_semantics=_DIM_SEM,
            vmem_limit_bytes=32 << 20,   # ~16.3 MiB worst case (TN=2048 path) + headroom
        ),
        cost_estimate=cost,
    )(x, cw, w_q, sc, b2)
    return out[:, :N_OUT]                                        # (B, 2019)


def _reference(x_nchw, conv_w, fc2_w, fc2_b):
    cw = conv_w[0, 0, :, 0]                                      # (H,)
    conv = jnp.einsum("bhw,h->bw", x_nchw[:, 0, :, :], cw)       # (B, 2019)
    return conv @ fc2_w.T + fc2_b                                # (B, 2019)


if __name__ == "__main__":
    key = jax.random.PRNGKey(0)
    k_x, k_cw, k_w2, k_b2 = jax.random.split(key, 4)

    # deterministic synthetic parameters (shapes from Network.__init__)
    x = jax.random.normal(k_x, (B, 1, H, N_IN), dtype=jnp.float32)
    conv_w = jax.random.normal(k_cw, (1, 1, H, KS), dtype=jnp.float32) * 0.5
    fc2_w = jax.random.normal(k_w2, (N_OUT, N_IN), dtype=jnp.float32) * (1.0 / np.sqrt(N_IN))
    fc2_b = jax.random.normal(k_b2, (N_OUT,), dtype=jnp.float32) * 0.01

    cw, w_q, sc, b2 = prepare_params(conv_w, fc2_w, fc2_b)       # one-time prep, cached
    logits = jax.block_until_ready(network_forward(x, cw, w_q, sc, b2))
    assert logits.shape == (B, N_OUT), logits.shape

    # (a) Tight check vs the SAME int8-dequantized weights in f32
    #     (isolates kernel correctness; only bf16 MXU-input rounding remains).
    w_deq = (w_q.transpose(1, 0, 2).reshape(KPAD, NPAD).astype(jnp.float32)
             * sc.reshape(1, NPAD))
    conv_ref = jnp.einsum("bhw,h->bw", x[:, 0, :, :], conv_w[0, 0, :, 0])   # (B, N_IN)
    ref_q = conv_ref @ w_deq[:N_IN, :N_OUT] + fc2_b
    np.testing.assert_allclose(np.asarray(logits), np.asarray(ref_q), rtol=1e-2, atol=2e-2)

    # (b) End-to-end check vs the unquantized f32 reference
    #     (tolerance covers the int8-weight + bf16-activation error budget).
    ref = jax.block_until_ready(_reference(x, conv_w, fc2_w, fc2_b))
    np.testing.assert_allclose(np.asarray(logits), np.asarray(ref), rtol=2e-2, atol=8e-2)

    print("KERNEL_OK")
</pallas_src>

<mosaic_0001>
module attributes {stable_mosaic.version = 11 : i64} {
  func.func @_network_kernel(%arg0: i32, %arg1: memref<2x5x2048xf32, #tpu.memory_space<vmem>>, %arg2: memref<1x5x1xf32, #tpu.memory_space<vmem>>, %arg3: memref<1x2048x2048xi8, #tpu.memory_space<vmem>>, %arg4: memref<1x2048xf32, #tpu.memory_space<vmem>>, %arg5: memref<1x2048xf32, #tpu.memory_space<vmem>>, %arg6: memref<2x2048xf32, #tpu.memory_space<vmem>>) attributes {dimension_semantics = [#tpu.dimension_semantics<arbitrary>], iteration_bounds = array<i64: 1>, scalar_prefetch = 0 : i64, scratch_operands = 0 : i64, tpu.core_type = #tpu.core_type<tc>, window_params = [{pipeline_mode = #tpu.pipeline_mode<synchronous>, transform_indices = @transform_0, window_bounds = array<i64: 2, 5, 2048>}, {pipeline_mode = #tpu.pipeline_mode<synchronous>, transform_indices = @transform_1, window_bounds = array<i64: 1, 5, 1>}, {transform_indices = @transform_2, window_bounds = array<i64: 1, 2048, 2048>}, {pipeline_mode = #tpu.pipeline_mode<synchronous>, transform_indices = @transform_3, window_bounds = array<i64: 1, 2048>}, {pipeline_mode = #tpu.pipeline_mode<synchronous>, transform_indices = @transform_4, window_bounds = array<i64: 1, 2048>}, {transform_indices = @transform_5, window_bounds = array<i64: 2, 2048>}]} {
    %c0 = arith.constant 0 : index
    %c0_0 = arith.constant 0 : index
    %c0_1 = arith.constant 0 : index
    %0 = vector.load %arg1[%c0, %c0_0, %c0_1] : memref<2x5x2048xf32, #tpu.memory_space<vmem>>, vector<2x5x2048xf32>
    %c0_2 = arith.constant 0 : index
    %c0_3 = arith.constant 0 : index
    %c0_4 = arith.constant 0 : index
    %1 = vector.load %arg2[%c0_2, %c0_3, %c0_4] : memref<1x5x1xf32, #tpu.memory_space<vmem>>, vector<1x5x1xf32>
    %2 = vector.broadcast %1 : vector<1x5x1xf32> to vector<2x5x2048xf32>
    %3 = arith.mulf %0, %2 : vector<2x5x2048xf32>
    %cst = arith.constant dense<0.000000e+00> : vector<2x2048xf32>
    %4 = vector.multi_reduction <add>, %3, %cst [1] : vector<2x5x2048xf32> to vector<2x2048xf32>
    %c0_5 = arith.constant 0 : index
    %c0_6 = arith.constant 0 : index
    %c0_7 = arith.constant 0 : index
    %5 = vector.load %arg3[%c0_5, %c0_6, %c0_7] : memref<1x2048x2048xi8, #tpu.memory_space<vmem>>, vector<1x2048x2048xi8>
    %6 = vector.shape_cast %5 : vector<1x2048x2048xi8> to vector<2048x2048xi8>
    %7 = arith.sitofp %6 : vector<2048x2048xi8> to vector<2048x2048xbf16>
    %8 = arith.truncf %4 : vector<2x2048xf32> to vector<2x2048xbf16>
    %cst_8 = arith.constant dense<0.000000e+00> : vector<2x2048xf32>
    %9 = tpu.matmul %8, %7, %cst_8 {dimension_numbers = #tpu.dot_dimension_numbers<[1], [0], [0], [1], [0, 0, 1, 1], [], []>} : vector<2x2048xbf16>, vector<2048x2048xbf16>, vector<2x2048xf32> -> vector<2x2048xf32>
    %10 = arith.index_cast %arg0 : i32 to index
    %c0_9 = arith.constant 0 : index
    %11 = vector.load %arg4[%10, %c0_9] : memref<1x2048xf32, #tpu.memory_space<vmem>>, vector<1x2048xf32>
    %12 = vector.broadcast %11 : vector<1x2048xf32> to vector<2x2048xf32>
    %13 = arith.mulf %9, %12 : vector<2x2048xf32>
    %14 = arith.index_cast %arg0 : i32 to index
    %c0_10 = arith.constant 0 : index
    %15 = vector.load %arg5[%14, %c0_10] : memref<1x2048xf32, #tpu.memory_space<vmem>>, vector<1x2048xf32>
    %16 = vector.broadcast %15 : vector<1x2048xf32> to vector<2x2048xf32>
    %17 = arith.addf %13, %16 : vector<2x2048xf32>
    %c0_11 = arith.constant 0 : index
    %c0_12 = arith.constant 0 : index
    %18 = vector.load %arg6[%c0_11, %c0_12] : memref<2x2048xf32, #tpu.memory_space<vmem>>, vector<2x2048xf32>
    tpu.vector_store %arg6[%c0_11, %c0_12], %17 {strides = array<i32>} : memref<2x2048xf32, #tpu.memory_space<vmem>>, vector<2x2048xf32>,
    return
  }
  func.func @transform_0(%arg0: i32) -> (i32, i32, i32) {
    %c0_i32 = arith.constant 0 : i32
    %c0_i32_0 = arith.constant 0 : i32
    %c0_i32_1 = arith.constant 0 : i32
    %c0_i32_2 = arith.constant 0 : i32
    return %c0_i32, %c0_i32_0, %c0_i32_1 : i32, i32, i32
  }
  func.func @transform_1(%arg0: i32) -> (i32, i32, i32) {
    %c0_i32 = arith.constant 0 : i32
    %c0_i32_0 = arith.constant 0 : i32
    %c0_i32_1 = arith.constant 0 : i32
    %c0_i32_2 = arith.constant 0 : i32
    return %c0_i32, %c0_i32_0, %c0_i32_1 : i32, i32, i32
  }
  func.func @transform_2(%arg0: i32) -> (i32, i32, i32) {
    %c0_i32 = arith.constant 0 : i32
    %c0_i32_0 = arith.constant 0 : i32
    %c0_i32_1 = arith.constant 0 : i32
    return %arg0, %c0_i32, %c0_i32_0 : i32, i32, i32
  }
  func.func @transform_3(%arg0: i32) -> (i32, i32) {
    %c0_i32 = arith.constant 0 : i32
    %c0_i32_0 = arith.constant 0 : i32
    %c0_i32_1 = arith.constant 0 : i32
    return %c0_i32, %c0_i32_0 : i32, i32
  }
  func.func @transform_4(%arg0: i32) -> (i32, i32) {
    %c0_i32 = arith.constant 0 : i32
    %c0_i32_0 = arith.constant 0 : i32
    %c0_i32_1 = arith.constant 0 : i32
    return %c0_i32, %c0_i32_0 : i32, i32
  }
  func.func @transform_5(%arg0: i32) -> (i32, i32) {
    %c0_i32 = arith.constant 0 : i32
    %c0_i32_0 = arith.constant 0 : i32
    return %c0_i32, %arg0 : i32, i32
  }
}

</mosaic_0001>

<llo_original>
// kernel: network_forward.1
$region0: #{network_forward.1}
  #allocation0 [shape = 'u32[]', space=smem, size = 0x4, offset = 0x4, fixed_abs, tag = 'smem constant byte address 0x4 - core index']
  #allocation1 [shape = 'u32[144,128]{1,0:T(1,128)}', space=vmem, size = 0x12000, scoped, tag = 'internal scratch']
  %s0 = inlined_call_operand.vmem [shape: f32[2,5,2048], index: 0, kind: input, shape index: {}]
  %s1 = inlined_call_operand.vmem [shape: f32[1,5,1], index: 1, kind: input, shape index: {}]
  %s2 = inlined_call_operand.hbm [shape: s8[1,2048,2048], index: 2, kind: input, shape index: {}]
  %s3 = inlined_call_operand.hbm [shape: f32[1,2048], index: 3, kind: input, shape index: {}]
  %s4 = inlined_call_operand.hbm [shape: f32[1,2048], index: 4, kind: input, shape index: {}]
  %s5 = inlined_call_operand.hbm [shape: f32[2,2048], index: 5, kind: output, shape index: {}]
  %s6 = sld [smem:[#allocation0]]
  $region42: #{network_forward.1} parent=0
    _
  %s8 = ssub.s32 1, %s6
  %s9 = scalar_select 0, %s8, %s6
  $region1: #{network_forward.1} parent=0
    #allocation2 [shape = 'u8[4194304]{0}', space=vmem, size = 0x400000, scoped, tag = 'input window, operand 2, single buffered']
    #allocation3 [shape = 's32[1]{0}', space=sflag, size = 0x4, scoped, tag = 'scoped memory for network_forward.1']
    #allocation4 [shape = 's32[1]{0}', space=sflag, size = 0x4, scoped, tag = 'scoped memory for network_forward.1']
    #allocation5 [shape = 'u8[8192]{0}', space=vmem, size = 0x2000, scoped, tag = 'input window, operand 3, single buffered']
    #allocation6 [shape = 's32[1]{0}', space=sflag, size = 0x4, scoped, tag = 'scoped memory for network_forward.1']
    #allocation7 [shape = 'u8[8192]{0}', space=vmem, size = 0x2000, scoped, tag = 'input window, operand 4, single buffered']
    #allocation8 [shape = 'u8[16384]{0}', space=vmem, size = 0x4000, scoped, tag = 'output window, operand 0, single buffered']
    %10 = vsyncpa [#allocation3], 0
    %11 = vsyncpa [#allocation6], 0
    %12 = vsyncpa [#allocation4], 0
    // Predicated region
    $region2: #{network_forward.1} parent=1 // pred_check
      _
    $region3: #{network_forward.1} parent=1 // pred_check_branch
      %14 = sbr.rel (0) target = $region5
    $region4: #{network_forward.1} parent=1 // pred_region
      _
    $region5: #{network_forward.1} parent=1 // pred_fallthru
      _
    // Predicated region
    $region6: #{network_forward.1} parent=1 // pred_check
      _
    $region7: #{network_forward.1} parent=1 // pred_check_branch
      %16 = sbr.rel (0) target = $region9
    $region8: #{network_forward.1} parent=1 // pred_region
      _
    $region9: #{network_forward.1} parent=1 // pred_fallthru
      _
    // Predicated region
    $region10: #{network_forward.1} parent=1 // pred_check
      _
    $region11: #{network_forward.1} parent=1 // pred_check_branch
      %18 = sbr.rel (0) target = $region13
    $region12: #{network_forward.1} parent=1 // pred_region
      %s20 = ssub.s32 131072, 131072
      %21 = vsyncadd [#allocation3], %s20
      %s22 = sshll.u32 [#allocation2], 4
      %s23 = int_to_ptr.vmem [resolvable:$true] %s22
      %28 = dma.hbm_to_vmem [thread:$0]  %s2, 131072, %s23, [#allocation3], 2048, 2048, 128
    $region13: #{network_forward.1} parent=1 // pred_fallthru
      _
    // Predicated region
    $region14: #{network_forward.1} parent=1 // pred_check
      _
    $region15: #{network_forward.1} parent=1 // pred_check_branch
      %30 = sbr.rel (0) target = $region17
    $region16: #{network_forward.1} parent=1 // pred_region
      %s32 = ssub.s32 256, 256
      %33 = vsyncadd [#allocation6], %s32
      %s35 = sshll.u32 [#allocation5], 4
      %s36 = int_to_ptr.vmem [resolvable:$true] %s35
      %38 = dma.hbm_to_vmem [thread:$0]  %s3, 256, %s36, [#allocation6]
    $region17: #{network_forward.1} parent=1 // pred_fallthru
      _
    // Predicated region
    $region18: #{network_forward.1} parent=1 // pred_check
      _
    $region19: #{network_forward.1} parent=1 // pred_check_branch
      %40 = sbr.rel (0) target = $region21
    $region20: #{network_forward.1} parent=1 // pred_region
      %s42 = ssub.s32 256, 256
      %43 = vsyncadd [#allocation6], %s42
      %s45 = sshll.u32 [#allocation7], 4
      %s46 = int_to_ptr.vmem [resolvable:$true] %s45
      %48 = dma.hbm_to_vmem [thread:$0]  %s4, 256, %s46, [#allocation6]
    $region21: #{network_forward.1} parent=1 // pred_fallthru
      _
    // Predicated region
    $region22: #{network_forward.1} parent=1 // pred_check
      _
    $region23: #{network_forward.1} parent=1 // pred_check_branch
      %50 = sbr.rel (0) target = $region25
    $region24: #{network_forward.1} parent=1 // pred_region
      %51 = dma.done [#allocation3], 131072
    $region25: #{network_forward.1} parent=1 // pred_fallthru
      _
    // Predicated region
    $region26: #{network_forward.1} parent=1 // pred_check
      _
    $region27: #{network_forward.1} parent=1 // pred_check_branch
      %53 = sbr.rel (0) target = $region29
    $region28: #{network_forward.1} parent=1 // pred_region
      %54 = dma.done [#allocation6], 256
    $region29: #{network_forward.1} parent=1 // pred_fallthru
      _
    // Predicated region
    $region30: #{network_forward.1} parent=1 // pred_check
      _
    $region31: #{network_forward.1} parent=1 // pred_check_branch
      %56 = sbr.rel (0) target = $region33
    $region32: #{network_forward.1} parent=1 // pred_region
      %57 = dma.done [#allocation6], 256
    $region33: #{network_forward.1} parent=1 // pred_fallthru
      _
    %v58 = vld [vmem:[%s0] sm:$0x1f]
    %v59 = vld [vmem:[%s0 + $0x8] sm:$0x1f]
    %v60 = vld [vmem:[%s0 + $0x10] sm:$0x1f]
    %v61 = vld [vmem:[%s0 + $0x18] sm:$0x1f]
    %v62 = vld [vmem:[%s0 + $0x20] sm:$0x1f]
    %v63 = vld [vmem:[%s0 + $0x28] sm:$0x1f]
    %v64 = vld [vmem:[%s0 + $0x30] sm:$0x1f]
    %v65 = vld [vmem:[%s0 + $0x38] sm:$0x1f]
    %v66 = vld [vmem:[%s0 + $0x40] sm:$0x1f]
    %v67 = vld [vmem:[%s0 + $0x48] sm:$0x1f]
    %v68 = vld [vmem:[%s0 + $0x50] sm:$0x1f]
    %v69 = vld [vmem:[%s0 + $0x58] sm:$0x1f]
    %v70 = vld [vmem:[%s0 + $0x60] sm:$0x1f]
    %v71 = vld [vmem:[%s0 + $0x68] sm:$0x1f]
    %v72 = vld [vmem:[%s0 + $0x70] sm:$0x1f]
    %v73 = vld [vmem:[%s0 + $0x78] sm:$0x1f]
    %v74 = vld [vmem:[%s0 + $0x80] sm:$0x1f]
    %v75 = vld [vmem:[%s0 + $0x88] sm:$0x1f]
    %v76 = vld [vmem:[%s0 + $0x90] sm:$0x1f]
    %v77 = vld [vmem:[%s0 + $0x98] sm:$0x1f]
    %v78 = vld [vmem:[%s0 + $0xa0] sm:$0x1f]
    %v79 = vld [vmem:[%s0 + $0xa8] sm:$0x1f]
    %v80 = vld [vmem:[%s0 + $0xb0] sm:$0x1f]
    %v81 = vld [vmem:[%s0 + $0xb8] sm:$0x1f]
    %v82 = vld [vmem:[%s0 + $0xc0] sm:$0x1f]
    %v83 = vld [vmem:[%s0 + $0xc8] sm:$0x1f]
    %v84 = vld [vmem:[%s0 + $0xd0] sm:$0x1f]
    %v85 = vld [vmem:[%s0 + $0xd8] sm:$0x1f]
    %v86 = vld [vmem:[%s0 + $0xe0] sm:$0x1f]
    %v87 = vld [vmem:[%s0 + $0xe8] sm:$0x1f]
    %v88 = vld [vmem:[%s0 + $0xf0] sm:$0x1f]
    %v89 = vld [vmem:[%s0 + $0xf8] sm:$0x1f]
    %v90 = vld [vmem:[%s1] sm:$0x1f]
    %92 = vset.pattern.permute.xlu0 0
    %93 = vperm.xlu0 %92, %v90
    %v94 = vpop.permute.xlu0 %93
    %v96 = vmul.f32 %v58, %v94
    %v97 = vmul.f32 %v59, %v94
    %v98 = vmul.f32 %v60, %v94
    %v99 = vmul.f32 %v61, %v94
    %v100 = vmul.f32 %v62, %v94
    %v101 = vmul.f32 %v63, %v94
    %v102 = vmul.f32 %v64, %v94
    %v103 = vmul.f32 %v65, %v94
    %v104 = vmul.f32 %v66, %v94
    %v105 = vmul.f32 %v67, %v94
    %v106 = vmul.f32 %v68, %v94
    %v107 = vmul.f32 %v69, %v94
    %v108 = vmul.f32 %v70, %v94
    %v109 = vmul.f32 %v71, %v94
    %v110 = vmul.f32 %v72, %v94
    %v111 = vmul.f32 %v73, %v94
    %v112 = vmul.f32 %v74, %v94
    %v113 = vmul.f32 %v75, %v94
    %v114 = vmul.f32 %v76, %v94
    %v115 = vmul.f32 %v77, %v94
    %v116 = vmul.f32 %v78, %v94
    %v117 = vmul.f32 %v79, %v94
    %v118 = vmul.f32 %v80, %v94
    %v119 = vmul.f32 %v81, %v94
    %v120 = vmul.f32 %v82, %v94
    %v121 = vmul.f32 %v83, %v94
    %v122 = vmul.f32 %v84, %v94
    %v123 = vmul.f32 %v85, %v94
    %v124 = vmul.f32 %v86, %v94
    %v125 = vmul.f32 %v87, %v94
    %v126 = vmul.f32 %v88, %v94
    %v127 = vmul.f32 %v89, %v94
    %vm128 = vcmask 1044480
    %v129 = vsel %vm128, %v96, 0.0
    %v130 = vrot.slane %v129, 4
    %v131 = vadd.f32 %v129, %v130
    %v132 = vrot.slane %v131, 2
    %v133 = vadd.f32 %v131, %v132
    %v134 = vrot.slane %v133, 1
    %v135 = vadd.f32 %v133, %v134
    %v136 = vsel %vm128, %v97, 0.0
    %v137 = vrot.slane %v136, 4
    %v138 = vadd.f32 %v136, %v137
    %v139 = vrot.slane %v138, 2
    %v140 = vadd.f32 %v138, %v139
    %v141 = vrot.slane %v140, 1
    %v142 = vadd.f32 %v140, %v141
    %v143 = vsel %vm128, %v98, 0.0
    %v144 = vrot.slane %v143, 4
    %v145 = vadd.f32 %v143, %v144
    %v146 = vrot.slane %v145, 2
    %v147 = vadd.f32 %v145, %v146
    %v148 = vrot.slane %v147, 1
    %v149 = vadd.f32 %v147, %v148
    %v150 = vsel %vm128, %v99, 0.0
    %v151 = vrot.slane %v150, 4
    %v152 = vadd.f32 %v150, %v151
    %v153 = vrot.slane %v152, 2
    %v154 = vadd.f32 %v152, %v153
    %v155 = vrot.slane %v154, 1
    %v156 = vadd.f32 %v154, %v155
    %v157 = vsel %vm128, %v100, 0.0
    %v158 = vrot.slane %v157, 4
    %v159 = vadd.f32 %v157, %v158
    %v160 = vrot.slane %v159, 2
    %v161 = vadd.f32 %v159, %v160
    %v162 = vrot.slane %v161, 1
    %v163 = vadd.f32 %v161, %v162
    %v164 = vsel %vm128, %v101, 0.0
    %v165 = vrot.slane %v164, 4
    %v166 = vadd.f32 %v164, %v165
    %v167 = vrot.slane %v166, 2
    %v168 = vadd.f32 %v166, %v167
    %v169 = vrot.slane %v168, 1
    %v170 = vadd.f32 %v168, %v169
    %v171 = vsel %vm128, %v102, 0.0
    %v172 = vrot.slane %v171, 4
    %v173 = vadd.f32 %v171, %v172
    %v174 = vrot.slane %v173, 2
    %v175 = vadd.f32 %v173, %v174
    %v176 = vrot.slane %v175, 1
    %v177 = vadd.f32 %v175, %v176
    %v178 = vsel %vm128, %v103, 0.0
    %v179 = vrot.slane %v178, 4
    %v180 = vadd.f32 %v178, %v179
    %v181 = vrot.slane %v180, 2
    %v182 = vadd.f32 %v180, %v181
    %v183 = vrot.slane %v182, 1
    %v184 = vadd.f32 %v182, %v183
    %v185 = vsel %vm128, %v104, 0.0
    %v186 = vrot.slane %v185, 4
    %v187 = vadd.f32 %v185, %v186
    %v188 = vrot.slane %v187, 2
    %v189 = vadd.f32 %v187, %v188
    %v190 = vrot.slane %v189, 1
    %v191 = vadd.f32 %v189, %v190
    %v192 = vsel %vm128, %v105, 0.0
    %v193 = vrot.slane %v192, 4
    %v194 = vadd.f32 %v192, %v193
    %v195 = vrot.slane %v194, 2
    %v196 = vadd.f32 %v194, %v195
    %v197 = vrot.slane %v196, 1
    %v198 = vadd.f32 %v196, %v197
    %v199 = vsel %vm128, %v106, 0.0
    %v200 = vrot.slane %v199, 4
    %v201 = vadd.f32 %v199, %v200
    %v202 = vrot.slane %v201, 2
    %v203 = vadd.f32 %v201, %v202
    %v204 = vrot.slane %v203, 1
    %v205 = vadd.f32 %v203, %v204
    %v206 = vsel %vm128, %v107, 0.0
    %v207 = vrot.slane %v206, 4
    %v208 = vadd.f32 %v206, %v207
    %v209 = vrot.slane %v208, 2
    %v210 = vadd.f32 %v208, %v209
    %v211 = vrot.slane %v210, 1
    %v212 = vadd.f32 %v210, %v211
    %v213 = vsel %vm128, %v108, 0.0
    %v214 = vrot.slane %v213, 4
    %v215 = vadd.f32 %v213, %v214
    %v216 = vrot.slane %v215, 2
    %v217 = vadd.f32 %v215, %v216
    %v218 = vrot.slane %v217, 1
    %v219 = vadd.f32 %v217, %v218
    %v220 = vsel %vm128, %v109, 0.0
    %v221 = vrot.slane %v220, 4
    %v222 = vadd.f32 %v220, %v221
    %v223 = vrot.slane %v222, 2
    %v224 = vadd.f32 %v222, %v223
    %v225 = vrot.slane %v224, 1
    %v226 = vadd.f32 %v224, %v225
    %v227 = vsel %vm128, %v110, 0.0
    %v228 = vrot.slane %v227, 4
    %v229 = vadd.f32 %v227, %v228
    %v230 = vrot.slane %v229, 2
    %v231 = vadd.f32 %v229, %v230
    %v232 = vrot.slane %v231, 1
    %v233 = vadd.f32 %v231, %v232
    %v234 = vsel %vm128, %v111, 0.0
    %v235 = vrot.slane %v234, 4
    %v236 = vadd.f32 %v234, %v235
    %v237 = vrot.slane %v236, 2
    %v238 = vadd.f32 %v236, %v237
    %v239 = vrot.slane %v238, 1
    %v240 = vadd.f32 %v238, %v239
    %v241 = vsel %vm128, %v112, 0.0
    %v242 = vrot.slane %v241, 4
    %v243 = vadd.f32 %v241, %v242
    %v244 = vrot.slane %v243, 2
    %v245 = vadd.f32 %v243, %v244
    %v246 = vrot.slane %v245, 1
    %v247 = vadd.f32 %v245, %v246
    %v248 = vsel %vm128, %v113, 0.0
    %v249 = vrot.slane %v248, 4
    %v250 = vadd.f32 %v248, %v249
    %v251 = vrot.slane %v250, 2
    %v252 = vadd.f32 %v250, %v251
    %v253 = vrot.slane %v252, 1
    %v254 = vadd.f32 %v252, %v253
    %v255 = vsel %vm128, %v114, 0.0
    %v256 = vrot.slane %v255, 4
    %v257 = vadd.f32 %v255, %v256
    %v258 = vrot.slane %v257, 2
    %v259 = vadd.f32 %v257, %v258
    %v260 = vrot.slane %v259, 1
    %v261 = vadd.f32 %v259, %v260
    %v262 = vsel %vm128, %v115, 0.0
    %v263 = vrot.slane %v262, 4
    %v264 = vadd.f32 %v262, %v263
    %v265 = vrot.slane %v264, 2
    %v266 = vadd.f32 %v264, %v265
    %v267 = vrot.slane %v266, 1
    %v268 = vadd.f32 %v266, %v267
    %v269 = vsel %vm128, %v116, 0.0
    %v270 = vrot.slane %v269, 4
    %v271 = vadd.f32 %v269, %v270
    %v272 = vrot.slane %v271, 2
    %v273 = vadd.f32 %v271, %v272
    %v274 = vrot.slane %v273, 1
    %v275 = vadd.f32 %v273, %v274
    %v276 = vsel %vm128, %v117, 0.0
    %v277 = vrot.slane %v276, 4
    %v278 = vadd.f32 %v276, %v277
    %v279 = vrot.slane %v278, 2
    %v280 = vadd.f32 %v278, %v279
    %v281 = vrot.slane %v280, 1
    %v282 = vadd.f32 %v280, %v281
    %v283 = vsel %vm128, %v118, 0.0
    %v284 = vrot.slane %v283, 4
    %v285 = vadd.f32 %v283, %v284
    %v286 = vrot.slane %v285, 2
    %v287 = vadd.f32 %v285, %v286
    %v288 = vrot.slane %v287, 1
    %v289 = vadd.f32 %v287, %v288
    %v290 = vsel %vm128, %v119, 0.0
    %v291 = vrot.slane %v290, 4
    %v292 = vadd.f32 %v290, %v291
    %v293 = vrot.slane %v292, 2
    %v294 = vadd.f32 %v292, %v293
    %v295 = vrot.slane %v294, 1
    %v296 = vadd.f32 %v294, %v295
    %v297 = vsel %vm128, %v120, 0.0
    %v298 = vrot.slane %v297, 4
    %v299 = vadd.f32 %v297, %v298
    %v300 = vrot.slane %v299, 2
    %v301 = vadd.f32 %v299, %v300
    %v302 = vrot.slane %v301, 1
    %v303 = vadd.f32 %v301, %v302
    %v304 = vsel %vm128, %v121, 0.0
    %v305 = vrot.slane %v304, 4
    %v306 = vadd.f32 %v304, %v305
    %v307 = vrot.slane %v306, 2
    %v308 = vadd.f32 %v306, %v307
    %v309 = vrot.slane %v308, 1
    %v310 = vadd.f32 %v308, %v309
    %v311 = vsel %vm128, %v122, 0.0
    %v312 = vrot.slane %v311, 4
    %v313 = vadd.f32 %v311, %v312
    %v314 = vrot.slane %v313, 2
    %v315 = vadd.f32 %v313, %v314
    %v316 = vrot.slane %v315, 1
    %v317 = vadd.f32 %v315, %v316
    %v318 = vsel %vm128, %v123, 0.0
    %v319 = vrot.slane %v318, 4
    %v320 = vadd.f32 %v318, %v319
    %v321 = vrot.slane %v320, 2
    %v322 = vadd.f32 %v320, %v321
    %v323 = vrot.slane %v322, 1
    %v324 = vadd.f32 %v322, %v323
    %v325 = vsel %vm128, %v124, 0.0
    %v326 = vrot.slane %v325, 4
    %v327 = vadd.f32 %v325, %v326
    %v328 = vrot.slane %v327, 2
    %v329 = vadd.f32 %v327, %v328
    %v330 = vrot.slane %v329, 1
    %v331 = vadd.f32 %v329, %v330
    %v332 = vsel %vm128, %v125, 0.0
    %v333 = vrot.slane %v332, 4
    %v334 = vadd.f32 %v332, %v333
    %v335 = vrot.slane %v334, 2
    %v336 = vadd.f32 %v334, %v335
    %v337 = vrot.slane %v336, 1
    %v338 = vadd.f32 %v336, %v337
    %v339 = vsel %vm128, %v126, 0.0
    %v340 = vrot.slane %v339, 4
    %v341 = vadd.f32 %v339, %v340
    %v342 = vrot.slane %v341, 2
    %v343 = vadd.f32 %v341, %v342
    %v344 = vrot.slane %v343, 1
    %v345 = vadd.f32 %v343, %v344
    %v346 = vsel %vm128, %v127, 0.0
    %v347 = vrot.slane %v346, 4
    %v348 = vadd.f32 %v346, %v347
    %v349 = vrot.slane %v348, 2
    %v350 = vadd.f32 %v348, %v349
    %v351 = vrot.slane %v350, 1
    %v352 = vadd.f32 %v350, %v351
    %v353 = vld [vmem:[#allocation2] sm:$0xff]
    %v354 = vld [vmem:[#allocation2 + $0x8] sm:$0xff]
    %v355 = vld [vmem:[#allocation2 + $0x10] sm:$0xff]
    %v356 = vld [vmem:[#allocation2 + $0x18] sm:$0xff]
    %v357 = vld [vmem:[#allocation2 + $0x20] sm:$0xff]
    %v358 = vld [vmem:[#allocation2 + $0x28] sm:$0xff]
    %v359 = vld [vmem:[#allocation2 + $0x30] sm:$0xff]
    %v360 = vld [vmem:[#allocation2 + $0x38] sm:$0xff]
    %v361 = vld [vmem:[#allocation2 + $0x40] sm:$0xff]
    %v362 = vld [vmem:[#allocation2 + $0x48] sm:$0xff]
    %v363 = vld [vmem:[#allocation2 + $0x50] sm:$0xff]
    %v364 = vld [vmem:[#allocation2 + $0x58] sm:$0xff]
    %v365 = vld [vmem:[#allocation2 + $0x60] sm:$0xff]
    %v366 = vld [vmem:[#allocation2 + $0x68] sm:$0xff]
    %v367 = vld [vmem:[#allocation2 + $0x70] sm:$0xff]
    %v368 = vld [vmem:[#allocation2 + $0x78] sm:$0xff]
    %v369 = vld [vmem:[#allocation2 + $0x80] sm:$0xff]
    %v370 = vld [vmem:[#allocation2 + $0x88] sm:$0xff]
    %v371 = vld [vmem:[#allocation2 + $0x90] sm:$0xff]
    %v372 = vld [vmem:[#allocation2 + $0x98] sm:$0xff]
    %v373 = vld [vmem:[#allocation2 + $0xa0] sm:$0xff]
    %v374 = vld [vmem:[#allocation2 + $0xa8] sm:$0xff]
    %v375 = vld [vmem:[#allocation2 + $0xb0] sm:$0xff]
    %v376 = vld [vmem:[#allocation2 + $0xb8] sm:$0xff]
    %v377 = vld [vmem:[#allocation2 + $0xc0] sm:$0xff]
    %v378 = vld [vmem:[#allocation2 + $0xc8] sm:$0xff]
    %v379 = vld [vmem:[#allocation2 + $0xd0] sm:$0xff]
    %v380 = vld [vmem:[#allocation2 + $0xd8] sm:$0xff]
    %v381 = vld [vmem:[#allocation2 + $0xe0] sm:$0xff]
    %v382 = vld [vmem:[#allocation2 + $0xe8] sm:$0xff]
    %v383 = vld [vmem:[#allocation2 + $0xf0] sm:$0xff]
    %v384 = vld [vmem:[#allocation2 + $0xf8] sm:$0xff]
    %v385 = vld [vmem:[#allocation2 + $0x100] sm:$0xff]
    %v386 = vld [vmem:[#allocation2 + $0x108] sm:$0xff]
    %v387 = vld [vmem:[#allocation2 + $0x110] sm:$0xff]
    %v388 = vld [vmem:[#allocation2 + $0x118] sm:$0xff]
    %v389 = vld [vmem:[#allocation2 + $0x120] sm:$0xff]
    %v390 = vld [vmem:[#allocation2 + $0x128] sm:$0xff]
    %v391 = vld [vmem:[#allocation2 + $0x130] sm:$0xff]
    %v392 = vld [vmem:[#allocation2 + $0x138] sm:$0xff]
    %v393 = vld [vmem:[#allocation2 + $0x140] sm:$0xff]
    %v394 = vld [vmem:[#allocation2 + $0x148] sm:$0xff]
    %v395 = vld [vmem:[#allocation2 + $0x150] sm:$0xff]
    %v396 = vld [vmem:[#allocation2 + $0x158] sm:$0xff]
    %v397 = vld [vmem:[#allocation2 + $0x160] sm:$0xff]
    %v398 = vld [vmem:[#allocation2 + $0x168] sm:$0xff]
    %v399 = vld [vmem:[#allocation2 + $0x170] sm:$0xff]
    %v400 = vld [vmem:[#allocation2 + $0x178] sm:$0xff]
    %v401 = vld [vmem:[#allocation2 + $0x180] sm:$0xff]
    %v402 = vld [vmem:[#allocation2 + $0x188] sm:$0xff]
    %v403 = vld [vmem:[#allocation2 + $0x190] sm:$0xff]
    %v404 = vld [vmem:[#allocation2 + $0x198] sm:$0xff]
    %v405 = vld [vmem:[#allocation2 + $0x1a0] sm:$0xff]
    %v406 = vld [vmem:[#allocation2 + $0x1a8] sm:$0xff]
    %v407 = vld [vmem:[#allocation2 + $0x1b0] sm:$0xff]
    %v408 = vld [vmem:[#allocation2 + $0x1b8] sm:$0xff]
    %v409 = vld [vmem:[#allocation2 + $0x1c0] sm:$0xff]
    %v410 = vld [vmem:[#allocation2 + $0x1c8] sm:$0xff]
    %v411 = vld [vmem:[#allocation2 + $0x1d0] sm:$0xff]
    %v412 = vld [vmem:[#allocation2 + $0x1d8] sm:$0xff]
    %v413 = vld [vmem:[#allocation2 + $0x1e0] sm:$0xff]
    %v414 = vld [vmem:[#allocation2 + $0x1e8] sm:$0xff]
    %v415 = vld [vmem:[#allocation2 + $0x1f0] sm:$0xff]
    %v416 = vld [vmem:[#allocation2 + $0x1f8] sm:$0xff]
    %v417 = vld [vmem:[#allocation2 + $0x200] sm:$0xff]
    %v418 = vld [vmem:[#allocation2 + $0x208] sm:$0xff]
    %v419 = vld [vmem:[#allocation2 + $0x210] sm:$0xff]
    %v420 = vld [vmem:[#allocation2 + $0x218] sm:$0xff]
    %v421 = vld [vmem:[#allocation2 + $0x220] sm:$0xff]
    %v422 = vld [vmem:[#allocation2 + $0x228] sm:$0xff]
    %v423 = vld [vmem:[#allocation2 + $0x230] sm:$0xff]
    %v424 = vld [vmem:[#allocation2 + $0x238] sm:$0xff]
    %v425 = vld [vmem:[#allocation2 + $0x240] sm:$0xff]
    %v426 = vld [vmem:[#allocation2 + $0x248] sm:$0xff]
    %v427 = vld [vmem:[#allocation2 + $0x250] sm:$0xff]
    %v428 = vld [vmem:[#allocation2 + $0x258] sm:$0xff]
    %v429 = vld [vmem:[#allocation2 + $0x260] sm:$0xff]
    %v430 = vld [vmem:[#allocation2 + $0x268] sm:$0xff]
    %v431 = vld [vmem:[#allocation2 + $0x270] sm:$0xff]
    %v432 = vld [vmem:[#allocation2 + $0x278] sm:$0xff]
    %v433 = vld [vmem:[#allocation2 + $0x280] sm:$0xff]
    %v434 = vld [vmem:[#allocation2 + $0x288] sm:$0xff]
    %v435 = vld [vmem:[#allocation2 + $0x290] sm:$0xff]
    %v436 = vld [vmem:[#allocation2 + $0x298] sm:$0xff]
    %v437 = vld [vmem:[#allocation2 + $0x2a0] sm:$0xff]
    %v438 = vld [vmem:[#allocation2 + $0x2a8] sm:$0xff]
    %v439 = vld [vmem:[#allocation2 + $0x2b0] sm:$0xff]
    %v440 = vld [vmem:[#allocation2 + $0x2b8] sm:$0xff]
    %v441 = vld [vmem:[#allocation2 + $0x2c0] sm:$0xff]
    %v442 = vld [vmem:[#allocation2 + $0x2c8] sm:$0xff]
    %v443 = vld [vmem:[#allocation2 + $0x2d0] sm:$0xff]
    %v444 = vld [vmem:[#allocation2 + $0x2d8] sm:$0xff]
    %v445 = vld [vmem:[#allocation2 + $0x2e0] sm:$0xff]
    %v446 = vld [vmem:[#allocation2 + $0x2e8] sm:$0xff]
    %v447 = vld [vmem:[#allocation2 + $0x2f0] sm:$0xff]
    %v448 = vld [vmem:[#allocation2 + $0x2f8] sm:$0xff]
    %v449 = vld [vmem:[#allocation2 + $0x300] sm:$0xff]
    %v450 = vld [vmem:[#allocation2 + $0x308] sm:$0xff]
    %v451 = vld [vmem:[#allocation2 + $0x310] sm:$0xff]
    %v452 = vld [vmem:[#allocation2 + $0x318] sm:$0xff]
    %v453 = vld [vmem:[#allocation2 + $0x320] sm:$0xff]
    %v454 = vld [vmem:[#allocation2 + $0x328] sm:$0xff]
    %v455 = vld [vmem:[#allocation2 + $0x330] sm:$0xff]
    %v456 = vld [vmem:[#allocation2 + $0x338] sm:$0xff]
    %v457 = vld [vmem:[#allocation2 + $0x340] sm:$0xff]
    %v458 = vld [vmem:[#allocation2 + $0x348] sm:$0xff]
    %v459 = vld [vmem:[#allocation2 + $0x350] sm:$0xff]
    %v460 = vld [vmem:[#allocation2 + $0x358] sm:$0xff]
    %v461 = vld [vmem:[#allocation2 + $0x360] sm:$0xff]
    %v462 = vld [vmem:[#allocation2 + $0x368] sm:$0xff]
    %v463 = vld [vmem:[#allocation2 + $0x370] sm:$0xff]
    %v464 = vld [vmem:[#allocation2 + $0x378] sm:$0xff]
    %v465 = vld [vmem:[#allocation2 + $0x380] sm:$0xff]
    %v466 = vld [vmem:[#allocation2 + $0x388] sm:$0xff]
    %v467 = vld [vmem:[#allocation2 + $0x390] sm:$0xff]
    %v468 = vld [vmem:[#allocation2 + $0x398] sm:$0xff]
    %v469 = vld [vmem:[#allocation2 + $0x3a0] sm:$0xff]
    %v470 = vld [vmem:[#allocation2 + $0x3a8] sm:$0xff]
    %v471 = vld [vmem:[#allocation2 + $0x3b0] sm:$0xff]
    %v472 = vld [vmem:[#allocation2 + $0x3b8] sm:$0xff]
    %v473 = vld [vmem:[#allocation2 + $0x3c0] sm:$0xff]
    %v474 = vld [vmem:[#allocation2 + $0x3c8] sm:$0xff]
    %v475 = vld [vmem:[#allocation2 + $0x3d0] sm:$0xff]
    %v476 = vld [vmem:[#allocation2 + $0x3d8] sm:$0xff]
    %v477 = vld [vmem:[#allocation2 + $0x3e0] sm:$0xff]
    %v478 = vld [vmem:[#allocation2 + $0x3e8] sm:$0xff]
    %v479 = vld [vmem:[#allocation2 + $0x3f0] sm:$0xff]
    %v480 = vld [vmem:[#allocation2 + $0x3f8] sm:$0xff]
    %v481 = vld [vmem:[#allocation2 + $0x400] sm:$0xff]
    %v482 = vld [vmem:[#allocation2 + $0x408] sm:$0xff]
    %v483 = vld [vmem:[#allocation2 + $0x410] sm:$0xff]
    %v484 = vld [vmem:[#allocation2 + $0x418] sm:$0xff]
    %v485 = vld [vmem:[#allocation2 + $0x420] sm:$0xff]
    %v486 = vld [vmem:[#allocation2 + $0x428] sm:$0xff]
    %v487 = vld [vmem:[#allocation2 + $0x430] sm:$0xff]
    %v488 = vld [vmem:[#allocation2 + $0x438] sm:$0xff]
    %v489 = vld [vmem:[#allocation2 + $0x440] sm:$0xff]
    %v490 = vld [vmem:[#allocation2 + $0x448] sm:$0xff]
    %v491 = vld [vmem:[#allocation2 + $0x450] sm:$0xff]
    %v492 = vld [vmem:[#allocation2 + $0x458] sm:$0xff]
    %v493 = vld [vmem:[#allocation2 + $0x460] sm:$0xff]
    %v494 = vld [vmem:[#allocation2 + $0x468] sm:$0xff]
    %v495 = vld [vmem:[#allocation2 + $0x470] sm:$0xff]
    %v496 = vld [vmem:[#allocation2 + $0x478] sm:$0xff]
    %v497 = vld [vmem:[#allocation2 + $0x480] sm:$0xff]
    %v498 = vld [vmem:[#allocation2 + $0x488] sm:$0xff]
    %v499 = vld [vmem:[#allocation2 + $0x490] sm:$0xff]
    %v500 = vld [vmem:[#allocation2 + $0x498] sm:$0xff]
    %v501 = vld [vmem:[#allocation2 + $0x4a0] sm:$0xff]
    %v502 = vld [vmem:[#allocation2 + $0x4a8] sm:$0xff]
    %v503 = vld [vmem:[#allocation2 + $0x4b0] sm:$0xff]
    %v504 = vld [vmem:[#allocation2 + $0x4b8] sm:$0xff]
    %v505 = vld [vmem:[#allocation2 + $0x4c0] sm:$0xff]
    %v506 = vld [vmem:[#allocation2 + $0x4c8] sm:$0xff]
    %v507 = vld [vmem:[#allocation2 + $0x4d0] sm:$0xff]
    %v508 = vld [vmem:[#allocation2 + $0x4d8] sm:$0xff]
    %v509 = vld [vmem:[#allocation2 + $0x4e0] sm:$0xff]
    %v510 = vld [vmem:[#allocation2 + $0x4e8] sm:$0xff]
    %v511 = vld [vmem:[#allocation2 + $0x4f0] sm:$0xff]
    %v512 = vld [vmem:[#allocation2 + $0x4f8] sm:$0xff]
    %v513 = vld [vmem:[#allocation2 + $0x500] sm:$0xff]
    %v514 = vld [vmem:[#allocation2 + $0x508] sm:$0xff]
    %v515 = vld [vmem:[#allocation2 + $0x510] sm:$0xff]
    %v516 = vld [vmem:[#allocation2 + $0x518] sm:$0xff]
    %v517 = vld [vmem:[#allocation2 + $0x520] sm:$0xff]
    %v518 = vld [vmem:[#allocation2 + $0x528] sm:$0xff]
    %v519 = vld [vmem:[#allocation2 + $0x530] sm:$0xff]
    %v520 = vld [vmem:[#allocation2 + $0x538] sm:$0xff]
    %v521 = vld [vmem:[#allocation2 + $0x540] sm:$0xff]
    %v522 = vld [vmem:[#allocation2 + $0x548] sm:$0xff]
    %v523 = vld [vmem:[#allocation2 + $0x550] sm:$0xff]
    %v524 = vld [vmem:[#allocation2 + $0x558] sm:$0xff]
    %v525 = vld [vmem:[#allocation2 + $0x560] sm:$0xff]
    %v526 = vld [vmem:[#allocation2 + $0x568] sm:$0xff]
    %v527 = vld [vmem:[#allocation2 + $0x570] sm:$0xff]
    %v528 = vld [vmem:[#allocation2 + $0x578] sm:$0xff]
    %v529 = vld [vmem:[#allocation2 + $0x580] sm:$0xff]
    %v530 = vld [vmem:[#allocation2 + $0x588] sm:$0xff]
    %v531 = vld [vmem:[#allocation2 + $0x590] sm:$0xff]
    %v532 = vld [vmem:[#allocation2 + $0x598] sm:$0xff]
    %v533 = vld [vmem:[#allocation2 + $0x5a0] sm:$0xff]
    %v534 = vld [vmem:[#allocation2 + $0x5a8] sm:$0xff]
    %v535 = vld [vmem:[#allocation2 + $0x5b0] sm:$0xff]
    %v536 = vld [vmem:[#allocation2 + $0x5b8] sm:$0xff]
    %v537 = vld [vmem:[#allocation2 + $0x5c0] sm:$0xff]
    %v538 = vld [vmem:[#allocation2 + $0x5c8] sm:$0xff]
    %v539 = vld [vmem:[#allocation2 + $0x5d0] sm:$0xff]
    %v540 = vld [vmem:[#allocation2 + $0x5d8] sm:$0xff]
    %v541 = vld [vmem:[#allocation2 + $0x5e0] sm:$0xff]
    %v542 = vld [vmem:[#allocation2 + $0x5e8] sm:$0xff]
    %v543 = vld [vmem:[#allocation2 + $0x5f0] sm:$0xff]
    %v544 = vld [vmem:[#allocation2 + $0x5f8] sm:$0xff]
    %v545 = vld [vmem:[#allocation2 + $0x600] sm:$0xff]
    %v546 = vld [vmem:[#allocation2 + $0x608] sm:$0xff]
    %v547 = vld [vmem:[#allocation2 + $0x610] sm:$0xff]
    %v548 = vld [vmem:[#allocation2 + $0x618] sm:$0xff]
    %v549 = vld [vmem:[#allocation2 + $0x620] sm:$0xff]
    %v550 = vld [vmem:[#allocation2 + $0x628] sm:$0xff]
    %v551 = vld [vmem:[#allocation2 + $0x630] sm:$0xff]
    %v552 = vld [vmem:[#allocation2 + $0x638] sm:$0xff]
    %v553 = vld [vmem:[#allocation2 + $0x640] sm:$0xff]
    %v554 = vld [vmem:[#allocation2 + $0x648] sm:$0xff]
    %v555 = vld [vmem:[#allocation2 + $0x650] sm:$0xff]
    %v556 = vld [vmem:[#allocation2 + $0x658] sm:$0xff]
    %v557 = vld [vmem:[#allocation2 + $0x660] sm:$0xff]
    %v558 = vld [vmem:[#allocation2 + $0x668] sm:$0xff]
    %v559 = vld [vmem:[#allocation2 + $0x670] sm:$0xff]
    %v560 = vld [vmem:[#allocation2 + $0x678] sm:$0xff]
    %v561 = vld [vmem:[#allocation2 + $0x680] sm:$0xff]
    %v562 = vld [vmem:[#allocation2 + $0x688] sm:$0xff]
    %v563 = vld [vmem:[#allocation2 + $0x690] sm:$0xff]
    %v564 = vld [vmem:[#allocation2 + $0x698] sm:$0xff]
    %v565 = vld [vmem:[#allocation2 + $0x6a0] sm:$0xff]
    %v566 = vld [vmem:[#allocation2 + $0x6a8] sm:$0xff]
    %v567 = vld [vmem:[#allocation2 + $0x6b0] sm:$0xff]
    %v568 = vld [vmem:[#allocation2 + $0x6b8] sm:$0xff]
    %v569 = vld [vmem:[#allocation2 + $0x6c0] sm:$0xff]
    %v570 = vld [vmem:[#allocation2 + $0x6c8] sm:$0xff]
    %v571 = vld [vmem:[#allocation2 + $0x6d0] sm:$0xff]
    %v572 = vld [vmem:[#allocation2 + $0x6d8] sm:$0xff]
    %v573 = vld [vmem:[#allocation2 + $0x6e0] sm:$0xff]
    %v574 = vld [vmem:[#allocation2 + $0x6e8] sm:$0xff]
    %v575 = vld [vmem:[#allocation2 + $0x6f0] sm:$0xff]
    %v576 = vld [vmem:[#allocation2 + $0x6f8] sm:$0xff]
    %v577 = vld [vmem:[#allocation2 + $0x700] sm:$0xff]
    %v578 = vld [vmem:[#allocation2 + $0x708] sm:$0xff]
    %v579 = vld [vmem:[#allocation2 + $0x710] sm:$0xff]
    %v580 = vld [vmem:[#allocation2 + $0x718] sm:$0xff]
    %v581 = vld [vmem:[#allocation2 + $0x720] sm:$0xff]
    %v582 = vld [vmem:[#allocation2 + $0x728] sm:$0xff]
    %v583 = vld [vmem:[#allocation2 + $0x730] sm:$0xff]
    %v584 = vld [vmem:[#allocation2 + $0x738] sm:$0xff]
    %v585 = vld [vmem:[#allocation2 + $0x740] sm:$0xff]
    %v586 = vld [vmem:[#allocation2 + $0x748] sm:$0xff]
    %v587 = vld [vmem:[#allocation2 + $0x750] sm:$0xff]
    %v588 = vld [vmem:[#allocation2 + $0x758] sm:$0xff]
    %v589 = vld [vmem:[#allocation2 + $0x760] sm:$0xff]
    %v590 = vld [vmem:[#allocation2 + $0x768] sm:$0xff]
    %v591 = vld [vmem:[#allocation2 + $0x770] sm:$0xff]
    %v592 = vld [vmem:[#allocation2 + $0x778] sm:$0xff]
    %v593 = vld [vmem:[#allocation2 + $0x780] sm:$0xff]
    %v594 = vld [vmem:[#allocation2 + $0x788] sm:$0xff]
    %v595 = vld [vmem:[#allocation2 + $0x790] sm:$0xff]
    %v596 = vld [vmem:[#allocation2 + $0x798] sm:$0xff]
    %v597 = vld [vmem:[#allocation2 + $0x7a0] sm:$0xff]
    %v598 = vld [vmem:[#allocation2 + $0x7a8] sm:$0xff]
    %v599 = vld [vmem:[#allocation2 + $0x7b0] sm:$0xff]
    %v600 = vld [vmem:[#allocation2 + $0x7b8] sm:$0xff]
    %v601 = vld [vmem:[#allocation2 + $0x7c0] sm:$0xff]
    %v602 = vld [vmem:[#allocation2 + $0x7c8] sm:$0xff]
    %v603 = vld [vmem:[#allocation2 + $0x7d0] sm:$0xff]
    %v604 = vld [vmem:[#allocation2 + $0x7d8] sm:$0xff]
    %v605 = vld [vmem:[#allocation2 + $0x7e0] sm:$0xff]
    %v606 = vld [vmem:[#allocation2 + $0x7e8] sm:$0xff]
    %v607 = vld [vmem:[#allocation2 + $0x7f0] sm:$0xff]
    %v608 = vld [vmem:[#allocation2 + $0x7f8] sm:$0xff]
    %v609 = vld [vmem:[#allocation2 + $0x800] sm:$0xff]
    %v610 = vld [vmem:[#allocation2 + $0x808] sm:$0xff]
    %v611 = vld [vmem:[#allocation2 + $0x810] sm:$0xff]
    %v612 = vld [vmem:[#allocation2 + $0x818] sm:$0xff]
    %v613 = vld [vmem:[#allocation2 + $0x820] sm:$0xff]
    %v614 = vld [vmem:[#allocation2 + $0x828] sm:$0xff]
    %v615 = vld [vmem:[#allocation2 + $0x830] sm:$0xff]
    %v616 = vld [vmem:[#allocation2 + $0x838] sm:$0xff]
    %v617 = vld [vmem:[#allocation2 + $0x840] sm:$0xff]
    %v618 = vld [vmem:[#allocation2 + $0x848] sm:$0xff]
    %v619 = vld [vmem:[#allocation2 + $0x850] sm:$0xff]
    %v620 = vld [vmem:[#allocation2 + $0x858] sm:$0xff]
    %v621 = vld [vmem:[#allocation2 + $0x860] sm:$0xff]
    %v622 = vld [vmem:[#allocation2 + $0x868] sm:$0xff]
    %v623 = vld [vmem:[#allocation2 + $0x870] sm:$0xff]
    %v624 = vld [vmem:[#allocation2 + $0x878] sm:$0xff]
    %v625 = vld [vmem:[#allocation2 + $0x880] sm:$0xff]
    %v626 = vld [vmem:[#allocation2 + $0x888] sm:$0xff]
    %v627 = vld [vmem:[#allocation2 + $0x890] sm:$0xff]
    %v628 = vld [vmem:[#allocation2 + $0x898] sm:$0xff]
    %v629 = vld [vmem:[#allocation2 + $0x8a0] sm:$0xff]
    %v630 = vld [vmem:[#allocation2 + $0x8a8] sm:$0xff]
    %v631 = vld [vmem:[#allocation2 + $0x8b0] sm:$0xff]
    %v632 = vld [vmem:[#allocation2 + $0x8b8] sm:$0xff]
    %v633 = vld [vmem:[#allocation2 + $0x8c0] sm:$0xff]
    %v634 = vld [vmem:[#allocation2 + $0x8c8] sm:$0xff]
    %v635 = vld [vmem:[#allocation2 + $0x8d0] sm:$0xff]
    %v636 = vld [vmem:[#allocation2 + $0x8d8] sm:$0xff]
    %v637 = vld [vmem:[#allocation2 + $0x8e0] sm:$0xff]
    %v638 = vld [vmem:[#allocation2 + $0x8e8] sm:$0xff]
    %v639 = vld [vmem:[#allocation2 + $0x8f0] sm:$0xff]
    %v640 = vld [vmem:[#allocation2 + $0x8f8] sm:$0xff]
    %v641 = vld [vmem:[#allocation2 + $0x900] sm:$0xff]
    %v642 = vld [vmem:[#allocation2 + $0x908] sm:$0xff]
    %v643 = vld [vmem:[#allocation2 + $0x910] sm:$0xff]
    %v644 = vld [vmem:[#allocation2 + $0x918] sm:$0xff]
    %v645 = vld [vmem:[#allocation2 + $0x920] sm:$0xff]
    %v646 = vld [vmem:[#allocation2 + $0x928] sm:$0xff]
    %v647 = vld [vmem:[#allocation2 + $0x930] sm:$0xff]
    %v648 = vld [vmem:[#allocation2 + $0x938] sm:$0xff]
    %v649 = vld [vmem:[#allocation2 + $0x940] sm:$0xff]
    %v650 = vld [vmem:[#allocation2 + $0x948] sm:$0xff]
    %v651 = vld [vmem:[#allocation2 + $0x950] sm:$0xff]
    %v652 = vld [vmem:[#allocation2 + $0x958] sm:$0xff]
    %v653 = vld [vmem:[#allocation2 + $0x960] sm:$0xff]
    %v654 = vld [vmem:[#allocation2 + $0x968] sm:$0xff]
    %v655 = vld [vmem:[#allocation2 + $0x970] sm:$0xff]
    %v656 = vld [vmem:[#allocation2 + $0x978] sm:$0xff]
    %v657 = vld [vmem:[#allocation2 + $0x980] sm:$0xff]
    %v658 = vld [vmem:[#allocation2 + $0x988] sm:$0xff]
    %v659 = vld [vmem:[#allocation2 + $0x990] sm:$0xff]
    %v660 = vld [vmem:[#allocation2 + $0x998] sm:$0xff]
    %v661 = vld [vmem:[#allocation2 + $0x9a0] sm:$0xff]
    %v662 = vld [vmem:[#allocation2 + $0x9a8] sm:$0xff]
    %v663 = vld [vmem:[#allocation2 + $0x9b0] sm:$0xff]
    %v664 = vld [vmem:[#allocation2 + $0x9b8] sm:$0xff]
    %v665 = vld [vmem:[#allocation2 + $0x9c0] sm:$0xff]
    %v666 = vld [vmem:[#allocation2 + $0x9c8] sm:$0xff]
    %v667 = vld [vmem:[#allocation2 + $0x9d0] sm:$0xff]
    %v668 = vld [vmem:[#allocation2 + $0x9d8] sm:$0xff]
    %v669 = vld [vmem:[#allocation2 + $0x9e0] sm:$0xff]
    %v670 = vld [vmem:[#allocation2 + $0x9e8] sm:$0xff]
    %v671 = vld [vmem:[#allocation2 + $0x9f0] sm:$0xff]
    %v672 = vld [vmem:[#allocation2 + $0x9f8] sm:$0xff]
    %v673 = vld [vmem:[#allocation2 + $0xa00] sm:$0xff]
    %v674 = vld [vmem:[#allocation2 + $0xa08] sm:$0xff]
    %v675 = vld [vmem:[#allocation2 + $0xa10] sm:$0xff]
    %v676 = vld [vmem:[#allocation2 + $0xa18] sm:$0xff]
    %v677 = vld [vmem:[#allocation2 + $0xa20] sm:$0xff]
    %v678 = vld [vmem:[#allocation2 + $0xa28] sm:$0xff]
    %v679 = vld [vmem:[#allocation2 + $0xa30] sm:$0xff]
    %v680 = vld [vmem:[#allocation2 + $0xa38] sm:$0xff]
    %v681 = vld [vmem:[#allocation2 + $0xa40] sm:$0xff]
    %v682 = vld [vmem:[#allocation2 + $0xa48] sm:$0xff]
    %v683 = vld [vmem:[#allocation2 + $0xa50] sm:$0xff]
    %v684 = vld [vmem:[#allocation2 + $0xa58] sm:$0xff]
    %v685 = vld [vmem:[#allocation2 + $0xa60] sm:$0xff]
    %v686 = vld [vmem:[#allocation2 + $0xa68] sm:$0xff]
    %v687 = vld [vmem:[#allocation2 + $0xa70] sm:$0xff]
    %v688 = vld [vmem:[#allocation2 + $0xa78] sm:$0xff]
    %v689 = vld [vmem:[#allocation2 + $0xa80] sm:$0xff]
    %v690 = vld [vmem:[#allocation2 + $0xa88] sm:$0xff]
    %v691 = vld [vmem:[#allocation2 + $0xa90] sm:$0xff]
    %v692 = vld [vmem:[#allocation2 + $0xa98] sm:$0xff]
    %v693 = vld [vmem:[#allocation2 + $0xaa0] sm:$0xff]
    %v694 = vld [vmem:[#allocation2 + $0xaa8] sm:$0xff]
    %v695 = vld [vmem:[#allocation2 + $0xab0] sm:$0xff]
    %v696 = vld [vmem:[#allocation2 + $0xab8] sm:$0xff]
    %v697 = vld [vmem:[#allocation2 + $0xac0] sm:$0xff]
    %v698 = vld [vmem:[#allocation2 + $0xac8] sm:$0xff]
    %v699 = vld [vmem:[#allocation2 + $0xad0] sm:$0xff]
    %v700 = vld [vmem:[#allocation2 + $0xad8] sm:$0xff]
    %v701 = vld [vmem:[#allocation2 + $0xae0] sm:$0xff]
    %v702 = vld [vmem:[#allocation2 + $0xae8] sm:$0xff]
    %v703 = vld [vmem:[#allocation2 + $0xaf0] sm:$0xff]
    %v704 = vld [vmem:[#allocation2 + $0xaf8] sm:$0xff]
    %v705 = vld [vmem:[#allocation2 + $0xb00] sm:$0xff]
    %v706 = vld [vmem:[#allocation2 + $0xb08] sm:$0xff]
    %v707 = vld [vmem:[#allocation2 + $0xb10] sm:$0xff]
    %v708 = vld [vmem:[#allocation2 + $0xb18] sm:$0xff]
    %v709 = vld [vmem:[#allocation2 + $0xb20] sm:$0xff]
    %v710 = vld [vmem:[#allocation2 + $0xb28] sm:$0xff]
    %v711 = vld [vmem:[#allocation2 + $0xb30] sm:$0xff]
    %v712 = vld [vmem:[#allocation2 + $0xb38] sm:$0xff]
    %v713 = vld [vmem:[#allocation2 + $0xb40] sm:$0xff]
    %v714 = vld [vmem:[#allocation2 + $0xb48] sm:$0xff]
    %v715 = vld [vmem:[#allocation2 + $0xb50] sm:$0xff]
    %v716 = vld [vmem:[#allocation2 + $0xb58] sm:$0xff]
    %v717 = vld [vmem:[#allocation2 + $0xb60] sm:$0xff]
    %v718 = vld [vmem:[#allocation2 + $0xb68] sm:$0xff]
    %v719 = vld [vmem:[#allocation2 + $0xb70] sm:$0xff]
    %v720 = vld [vmem:[#allocation2 + $0xb78] sm:$0xff]
    %v721 = vld [vmem:[#allocation2 + $0xb80] sm:$0xff]
    %v722 = vld [vmem:[#allocation2 + $0xb88] sm:$0xff]
    %v723 = vld [vmem:[#allocation2 + $0xb90] sm:$0xff]
    %v724 = vld [vmem:[#allocation2 + $0xb98] sm:$0xff]
    %v725 = vld [vmem:[#allocation2 + $0xba0] sm:$0xff]
    %v726 = vld [vmem:[#allocation2 + $0xba8] sm:$0xff]
    %v727 = vld [vmem:[#allocation2 + $0xbb0] sm:$0xff]
    %v728 = vld [vmem:[#allocation2 + $0xbb8] sm:$0xff]
    %v729 = vld [vmem:[#allocation2 + $0xbc0] sm:$0xff]
    %v730 = vld [vmem:[#allocation2 + $0xbc8] sm:$0xff]
    %v731 = vld [vmem:[#allocation2 + $0xbd0] sm:$0xff]
    %v732 = vld [vmem:[#allocation2 + $0xbd8] sm:$0xff]
    %v733 = vld [vmem:[#allocation2 + $0xbe0] sm:$0xff]
    %v734 = vld [vmem:[#allocation2 + $0xbe8] sm:$0xff]
    %v735 = vld [vmem:[#allocation2 + $0xbf0] sm:$0xff]
    %v736 = vld [vmem:[#allocation2 + $0xbf8] sm:$0xff]
    %v737 = vld [vmem:[#allocation2 + $0xc00] sm:$0xff]
    %v738 = vld [vmem:[#allocation2 + $0xc08] sm:$0xff]
    %v739 = vld [vmem:[#allocation2 + $0xc10] sm:$0xff]
    %v740 = vld [vmem:[#allocation2 + $0xc18] sm:$0xff]
    %v741 = vld [vmem:[#allocation2 + $0xc20] sm:$0xff]
    %v742 = vld [vmem:[#allocation2 + $0xc28] sm:$0xff]
    %v743 = vld [vmem:[#allocation2 + $0xc30] sm:$0xff]
    %v744 = vld [vmem:[#allocation2 + $0xc38] sm:$0xff]
    %v745 = vld [vmem:[#allocation2 + $0xc40] sm:$0xff]
    %v746 = vld [vmem:[#allocation2 + $0xc48] sm:$0xff]
    %v747 = vld [vmem:[#allocation2 + $0xc50] sm:$0xff]
    %v748 = vld [vmem:[#allocation2 + $0xc58] sm:$0xff]
    %v749 = vld [vmem:[#allocation2 + $0xc60] sm:$0xff]
    %v750 = vld [vmem:[#allocation2 + $0xc68] sm:$0xff]
    %v751 = vld [vmem:[#allocation2 + $0xc70] sm:$0xff]
    %v752 = vld [vmem:[#allocation2 + $0xc78] sm:$0xff]
    %v753 = vld [vmem:[#allocation2 + $0xc80] sm:$0xff]
    %v754 = vld [vmem:[#allocation2 + $0xc88] sm:$0xff]
    %v755 = vld [vmem:[#allocation2 + $0xc90] sm:$0xff]
    %v756 = vld [vmem:[#allocation2 + $0xc98] sm:$0xff]
    %v757 = vld [vmem:[#allocation2 + $0xca0] sm:$0xff]
    %v758 = vld [vmem:[#allocation2 + $0xca8] sm:$0xff]
    %v759 = vld [vmem:[#allocation2 + $0xcb0] sm:$0xff]
    %v760 = vld [vmem:[#allocation2 + $0xcb8] sm:$0xff]
    %v761 = vld [vmem:[#allocation2 + $0xcc0] sm:$0xff]
    %v762 = vld [vmem:[#allocation2 + $0xcc8] sm:$0xff]
    %v763 = vld [vmem:[#allocation2 + $0xcd0] sm:$0xff]
    %v764 = vld [vmem:[#allocation2 + $0xcd8] sm:$0xff]
    %v765 = vld [vmem:[#allocation2 + $0xce0] sm:$0xff]
    %v766 = vld [vmem:[#allocation2 + $0xce8] sm:$0xff]
    %v767 = vld [vmem:[#allocation2 + $0xcf0] sm:$0xff]
    %v768 = vld [vmem:[#allocation2 + $0xcf8] sm:$0xff]
    %v769 = vld [vmem:[#allocation2 + $0xd00] sm:$0xff]
    %v770 = vld [vmem:[#allocation2 + $0xd08] sm:$0xff]
    %v771 = vld [vmem:[#allocation2 + $0xd10] sm:$0xff]
    %v772 = vld [vmem:[#allocation2 + $0xd18] sm:$0xff]
    %v773 = vld [vmem:[#allocation2 + $0xd20] sm:$0xff]
    %v774 = vld [vmem:[#allocation2 + $0xd28] sm:$0xff]
    %v775 = vld [vmem:[#allocation2 + $0xd30] sm:$0xff]
    %v776 = vld [vmem:[#allocation2 + $0xd38] sm:$0xff]
    %v777 = vld [vmem:[#allocation2 + $0xd40] sm:$0xff]
    %v778 = vld [vmem:[#allocation2 + $0xd48] sm:$0xff]
    %v779 = vld [vmem:[#allocation2 + $0xd50] sm:$0xff]
    %v780 = vld [vmem:[#allocation2 + $0xd58] sm:$0xff]
    %v781 = vld [vmem:[#allocation2 + $0xd60] sm:$0xff]
    %v782 = vld [vmem:[#allocation2 + $0xd68] sm:$0xff]
    %v783 = vld [vmem:[#allocation2 + $0xd70] sm:$0xff]
    %v784 = vld [vmem:[#allocation2 + $0xd78] sm:$0xff]
    %v785 = vld [vmem:[#allocation2 + $0xd80] sm:$0xff]
    %v786 = vld [vmem:[#allocation2 + $0xd88] sm:$0xff]
    %v787 = vld [vmem:[#allocation2 + $0xd90] sm:$0xff]
    %v788 = vld [vmem:[#allocation2 + $0xd98] sm:$0xff]
    %v789 = vld [vmem:[#allocation2 + $0xda0] sm:$0xff]
    %v790 = vld [vmem:[#allocation2 + $0xda8] sm:$0xff]
    %v791 = vld [vmem:[#allocation2 + $0xdb0] sm:$0xff]
    %v792 = vld [vmem:[#allocation2 + $0xdb8] sm:$0xff]
    %v793 = vld [vmem:[#allocation2 + $0xdc0] sm:$0xff]
    %v794 = vld [vmem:[#allocation2 + $0xdc8] sm:$0xff]
    %v795 = vld [vmem:[#allocation2 + $0xdd0] sm:$0xff]
    %v796 = vld [vmem:[#allocation2 + $0xdd8] sm:$0xff]
    %v797 = vld [vmem:[#allocation2 + $0xde0] sm:$0xff]
    %v798 = vld [vmem:[#allocation2 + $0xde8] sm:$0xff]
    %v799 = vld [vmem:[#allocation2 + $0xdf0] sm:$0xff]
    %v800 = vld [vmem:[#allocation2 + $0xdf8] sm:$0xff]
    %v801 = vld [vmem:[#allocation2 + $0xe00] sm:$0xff]
    %v802 = vld [vmem:[#allocation2 + $0xe08] sm:$0xff]
    %v803 = vld [vmem:[#allocation2 + $0xe10] sm:$0xff]
    %v804 = vld [vmem:[#allocation2 + $0xe18] sm:$0xff]
    %v805 = vld [vmem:[#allocation2 + $0xe20] sm:$0xff]
    %v806 = vld [vmem:[#allocation2 + $0xe28] sm:$0xff]
    %v807 = vld [vmem:[#allocation2 + $0xe30] sm:$0xff]
    %v808 = vld [vmem:[#allocation2 + $0xe38] sm:$0xff]
    %v809 = vld [vmem:[#allocation2 + $0xe40] sm:$0xff]
    %v810 = vld [vmem:[#allocation2 + $0xe48] sm:$0xff]
    %v811 = vld [vmem:[#allocation2 + $0xe50] sm:$0xff]
    %v812 = vld [vmem:[#allocation2 + $0xe58] sm:$0xff]
    %v813 = vld [vmem:[#allocation2 + $0xe60] sm:$0xff]
    %v814 = vld [vmem:[#allocation2 + $0xe68] sm:$0xff]
    %v815 = vld [vmem:[#allocation2 + $0xe70] sm:$0xff]
    %v816 = vld [vmem:[#allocation2 + $0xe78] sm:$0xff]
    %v817 = vld [vmem:[#allocation2 + $0xe80] sm:$0xff]
    %v818 = vld [vmem:[#allocation2 + $0xe88] sm:$0xff]
    %v819 = vld [vmem:[#allocation2 + $0xe90] sm:$0xff]
    %v820 = vld [vmem:[#allocation2 + $0xe98] sm:$0xff]
    %v821 = vld [vmem:[#allocation2 + $0xea0] sm:$0xff]
    %v822 = vld [vmem:[#allocation2 + $0xea8] sm:$0xff]
    %v823 = vld [vmem:[#allocation2 + $0xeb0] sm:$0xff]
    %v824 = vld [vmem:[#allocation2 + $0xeb8] sm:$0xff]
    %v825 = vld [vmem:[#allocation2 + $0xec0] sm:$0xff]
    %v826 = vld [vmem:[#allocation2 + $0xec8] sm:$0xff]
    %v827 = vld [vmem:[#allocation2 + $0xed0] sm:$0xff]
    %v828 = vld [vmem:[#allocation2 + $0xed8] sm:$0xff]
    %v829 = vld [vmem:[#allocation2 + $0xee0] sm:$0xff]
    %v830 = vld [vmem:[#allocation2 + $0xee8] sm:$0xff]
    %v831 = vld [vmem:[#allocation2 + $0xef0] sm:$0xff]
    %v832 = vld [vmem:[#allocation2 + $0xef8] sm:$0xff]
    %v833 = vld [vmem:[#allocation2 + $0xf00] sm:$0xff]
    %v834 = vld [vmem:[#allocation2 + $0xf08] sm:$0xff]
    %v835 = vld [vmem:[#allocation2 + $0xf10] sm:$0xff]
    %v836 = vld [vmem:[#allocation2 + $0xf18] sm:$0xff]
    %v837 = vld [vmem:[#allocation2 + $0xf20] sm:$0xff]
    %v838 = vld [vmem:[#allocation2 + $0xf28] sm:$0xff]
    %v839 = vld [vmem:[#allocation2 + $0xf30] sm:$0xff]
    %v840 = vld [vmem:[#allocation2 + $0xf38] sm:$0xff]
    %v841 = vld [vmem:[#allocation2 + $0xf40] sm:$0xff]
    %v842 = vld [vmem:[#allocation2 + $0xf48] sm:$0xff]
    %v843 = vld [vmem:[#allocation2 + $0xf50] sm:$0xff]
    %v844 = vld [vmem:[#allocation2 + $0xf58] sm:$0xff]
    %v845 = vld [vmem:[#allocation2 + $0xf60] sm:$0xff]
    %v846 = vld [vmem:[#allocation2 + $0xf68] sm:$0xff]
    %v847 = vld [vmem:[#allocation2 + $0xf70] sm:$0xff]
    %v848 = vld [vmem:[#allocation2 + $0xf78] sm:$0xff]
    %v849 = vld [vmem:[#allocation2 + $0xf80] sm:$0xff]
    %v850 = vld [vmem:[#allocation2 + $0xf88] sm:$0xff]
    %v851 = vld [vmem:[#allocation2 + $0xf90] sm:$0xff]
    %v852 = vld [vmem:[#allocation2 + $0xf98] sm:$0xff]
    %v853 = vld [vmem:[#allocation2 + $0xfa0] sm:$0xff]
    %v854 = vld [vmem:[#allocation2 + $0xfa8] sm:$0xff]
    %v855 = vld [vmem:[#allocation2 + $0xfb0] sm:$0xff]
    %v856 = vld [vmem:[#allocation2 + $0xfb8] sm:$0xff]
    %v857 = vld [vmem:[#allocation2 + $0xfc0] sm:$0xff]
    %v858 = vld [vmem:[#allocation2 + $0xfc8] sm:$0xff]
    %v859 = vld [vmem:[#allocation2 + $0xfd0] sm:$0xff]
    %v860 = vld [vmem:[#allocation2 + $0xfd8] sm:$0xff]
    %v861 = vld [vmem:[#allocation2 + $0xfe0] sm:$0xff]
    %v862 = vld [vmem:[#allocation2 + $0xfe8] sm:$0xff]
    %v863 = vld [vmem:[#allocation2 + $0xff0] sm:$0xff]
    %v864 = vld [vmem:[#allocation2 + $0xff8] sm:$0xff]
    %v865 = vld [vmem:[#allocation2 + $0x1000] sm:$0xff]
    %v866 = vld [vmem:[#allocation2 + $0x1008] sm:$0xff]
    %v867 = vld [vmem:[#allocation2 + $0x1010] sm:$0xff]
    %v868 = vld [vmem:[#allocation2 + $0x1018] sm:$0xff]
    %v869 = vld [vmem:[#allocation2 + $0x1020] sm:$0xff]
    %v870 = vld [vmem:[#allocation2 + $0x1028] sm:$0xff]
    %v871 = vld [vmem:[#allocation2 + $0x1030] sm:$0xff]
    %v872 = vld [vmem:[#allocation2 + $0x1038] sm:$0xff]
    %v873 = vld [vmem:[#allocation2 + $0x1040] sm:$0xff]
    %v874 = vld [vmem:[#allocation2 + $0x1048] sm:$0xff]
    %v875 = vld [vmem:[#allocation2 + $0x1050] sm:$0xff]
    %v876 = vld [vmem:[#allocation2 + $0x1058] sm:$0xff]
    %v877 = vld [vmem:[#allocation2 + $0x1060] sm:$0xff]
    %v878 = vld [vmem:[#allocation2 + $0x1068] sm:$0xff]
    %v879 = vld [vmem:[#allocation2 + $0x1070] sm:$0xff]
    %v880 = vld [vmem:[#allocation2 + $0x1078] sm:$0xff]
    %v881 = vld [vmem:[#allocation2 + $0x1080] sm:$0xff]
    %v882 = vld [vmem:[#allocation2 + $0x1088] sm:$0xff]
    %v883 = vld [vmem:[#allocation2 + $0x1090] sm:$0xff]
    %v884 = vld [vmem:[#allocation2 + $0x1098] sm:$0xff]
    %v885 = vld [vmem:[#allocation2 + $0x10a0] sm:$0xff]
    %v886 = vld [vmem:[#allocation2 + $0x10a8] sm:$0xff]
    %v887 = vld [vmem:[#allocation2 + $0x10b0] sm:$0xff]
    %v888 = vld [vmem:[#allocation2 + $0x10b8] sm:$0xff]
    %v889 = vld [vmem:[#allocation2 + $0x10c0] sm:$0xff]
    %v890 = vld [vmem:[#allocation2 + $0x10c8] sm:$0xff]
    %v891 = vld [vmem:[#allocation2 + $0x10d0] sm:$0xff]
    %v892 = vld [vmem:[#allocation2 + $0x10d8] sm:$0xff]
    %v893 = vld [vmem:[#allocation2 + $0x10e0] sm:$0xff]
    %v894 = vld [vmem:[#allocation2 + $0x10e8] sm:$0xff]
    %v895 = vld [vmem:[#allocation2 + $0x10f0] sm:$0xff]
    %v896 = vld [vmem:[#allocation2 + $0x10f8] sm:$0xff]
    %v897 = vld [vmem:[#allocation2 + $0x1100] sm:$0xff]
    %v898 = vld [vmem:[#allocation2 + $0x1108] sm:$0xff]
    %v899 = vld [vmem:[#allocation2 + $0x1110] sm:$0xff]
    %v900 = vld [vmem:[#allocation2 + $0x1118] sm:$0xff]
    %v901 = vld [vmem:[#allocation2 + $0x1120] sm:$0xff]
    %v902 = vld [vmem:[#allocation2 + $0x1128] sm:$0xff]
    %v903 = vld [vmem:[#allocation2 + $0x1130] sm:$0xff]
    %v904 = vld [vmem:[#allocation2 + $0x1138] sm:$0xff]
    %v905 = vld [vmem:[#allocation2 + $0x1140] sm:$0xff]
    %v906 = vld [vmem:[#allocation2 + $0x1148] sm:$0xff]
    %v907 = vld [vmem:[#allocation2 + $0x1150] sm:$0xff]
    %v908 = vld [vmem:[#allocation2 + $0x1158] sm:$0xff]
    %v909 = vld [vmem:[#allocation2 + $0x1160] sm:$0xff]
    %v910 = vld [vmem:[#allocation2 + $0x1168] sm:$0xff]
    %v911 = vld [vmem:[#allocation2 + $0x1170] sm:$0xff]
    %v912 = vld [vmem:[#allocation2 + $0x1178] sm:$0xff]
    %v913 = vld [vmem:[#allocation2 + $0x1180] sm:$0xff]
    %v914 = vld [vmem:[#allocation2 + $0x1188] sm:$0xff]
    %v915 = vld [vmem:[#allocation2 + $0x1190] sm:$0xff]
    %v916 = vld [vmem:[#allocation2 + $0x1198] sm:$0xff]
    %v917 = vld [vmem:[#allocation2 + $0x11a0] sm:$0xff]
    %v918 = vld [vmem:[#allocation2 + $0x11a8] sm:$0xff]
    %v919 = vld [vmem:[#allocation2 + $0x11b0] sm:$0xff]
    %v920 = vld [vmem:[#allocation2 + $0x11b8] sm:$0xff]
    %v921 = vld [vmem:[#allocation2 + $0x11c0] sm:$0xff]
    %v922 = vld [vmem:[#allocation2 + $0x11c8] sm:$0xff]
    %v923 = vld [vmem:[#allocation2 + $0x11d0] sm:$0xff]
    %v924 = vld [vmem:[#allocation2 + $0x11d8] sm:$0xff]
    %v925 = vld [vmem:[#allocation2 + $0x11e0] sm:$0xff]
    %v926 = vld [vmem:[#allocation2 + $0x11e8] sm:$0xff]
    %v927 = vld [vmem:[#allocation2 + $0x11f0] sm:$0xff]
    %v928 = vld [vmem:[#allocation2 + $0x11f8] sm:$0xff]
    %v929 = vld [vmem:[#allocation2 + $0x1200] sm:$0xff]
    %v930 = vld [vmem:[#allocation2 + $0x1208] sm:$0xff]
    %v931 = vld [vmem:[#allocation2 + $0x1210] sm:$0xff]
    %v932 = vld [vmem:[#allocation2 + $0x1218] sm:$0xff]
    %v933 = vld [vmem:[#allocation2 + $0x1220] sm:$0xff]
    %v934 = vld [vmem:[#allocation2 + $0x1228] sm:$0xff]
    %v935 = vld [vmem:[#allocation2 + $0x1230] sm:$0xff]
    %v936 = vld [vmem:[#allocation2 + $0x1238] sm:$0xff]
    %v937 = vld [vmem:[#allocation2 + $0x1240] sm:$0xff]
    %v938 = vld [vmem:[#allocation2 + $0x1248] sm:$0xff]
    %v939 = vld [vmem:[#allocation2 + $0x1250] sm:$0xff]
    %v940 = vld [vmem:[#allocation2 + $0x1258] sm:$0xff]
    %v941 = vld [vmem:[#allocation2 + $0x1260] sm:$0xff]
    %v942 = vld [vmem:[#allocation2 + $0x1268] sm:$0xff]
    %v943 = vld [vmem:[#allocation2 + $0x1270] sm:$0xff]
    %v944 = vld [vmem:[#allocation2 + $0x1278] sm:$0xff]
    %v945 = vld [vmem:[#allocation2 + $0x1280] sm:$0xff]
    %v946 = vld [vmem:[#allocation2 + $0x1288] sm:$0xff]
    %v947 = vld [vmem:[#allocation2 + $0x1290] sm:$0xff]
    %v948 = vld [vmem:[#allocation2 + $0x1298] sm:$0xff]
    %v949 = vld [vmem:[#allocation2 + $0x12a0] sm:$0xff]
    %v950 = vld [vmem:[#allocation2 + $0x12a8] sm:$0xff]
    %v951 = vld [vmem:[#allocation2 + $0x12b0] sm:$0xff]
    %v952 = vld [vmem:[#allocation2 + $0x12b8] sm:$0xff]
    %v953 = vld [vmem:[#allocation2 + $0x12c0] sm:$0xff]
    %v954 = vld [vmem:[#allocation2 + $0x12c8] sm:$0xff]
    %v955 = vld [vmem:[#allocation2 + $0x12d0] sm:$0xff]
    %v956 = vld [vmem:[#allocation2 + $0x12d8] sm:$0xff]
    %v957 = vld [vmem:[#allocation2 + $0x12e0] sm:$0xff]
    %v958 = vld [vmem:[#allocation2 + $0x12e8] sm:$0xff]
    %v959 = vld [vmem:[#allocation2 + $0x12f0] sm:$0xff]
    %v960 = vld [vmem:[#allocation2 + $0x12f8] sm:$0xff]
    %v961 = vld [vmem:[#allocation2 + $0x1300] sm:$0xff]
    %v962 = vld [vmem:[#allocation2 + $0x1308] sm:$0xff]
    %v963 = vld [vmem:[#allocation2 + $0x1310] sm:$0xff]
    %v964 = vld [vmem:[#allocation2 + $0x1318] sm:$0xff]
    %v965 = vld [vmem:[#allocation2 + $0x1320] sm:$0xff]
    %v966 = vld [vmem:[#allocation2 + $0x1328] sm:$0xff]
    %v967 = vld [vmem:[#allocation2 + $0x1330] sm:$0xff]
    %v968 = vld [vmem:[#allocation2 + $0x1338] sm:$0xff]
    %v969 = vld [vmem:[#allocation2 + $0x1340] sm:$0xff]
    %v970 = vld [vmem:[#allocation2 + $0x1348] sm:$0xff]
    %v971 = vld [vmem:[#allocation2 + $0x1350] sm:$0xff]
    %v972 = vld [vmem:[#allocation2 + $0x1358] sm:$0xff]
    %v973 = vld [vmem:[#allocation2 + $0x1360] sm:$0xff]
    %v974 = vld [vmem:[#allocation2 + $0x1368] sm:$0xff]
    %v975 = vld [vmem:[#allocation2 + $0x1370] sm:$0xff]
    %v976 = vld [vmem:[#allocation2 + $0x1378] sm:$0xff]
    %v977 = vld [vmem:[#allocation2 + $0x1380] sm:$0xff]
    %v978 = vld [vmem:[#allocation2 + $0x1388] sm:$0xff]
    %v979 = vld [vmem:[#allocation2 + $0x1390] sm:$0xff]
    %v980 = vld [vmem:[#allocation2 + $0x1398] sm:$0xff]
    %v981 = vld [vmem:[#allocation2 + $0x13a0] sm:$0xff]
    %v982 = vld [vmem:[#allocation2 + $0x13a8] sm:$0xff]
    %v983 = vld [vmem:[#allocation2 + $0x13b0] sm:$0xff]
    %v984 = vld [vmem:[#allocation2 + $0x13b8] sm:$0xff]
    %v985 = vld [vmem:[#allocation2 + $0x13c0] sm:$0xff]
    %v986 = vld [vmem:[#allocation2 + $0x13c8] sm:$0xff]
    %v987 = vld [vmem:[#allocation2 + $0x13d0] sm:$0xff]
    %v988 = vld [vmem:[#allocation2 + $0x13d8] sm:$0xff]
    %v989 = vld [vmem:[#allocation2 + $0x13e0] sm:$0xff]
    %v990 = vld [vmem:[#allocation2 + $0x13e8] sm:$0xff]
    %v991 = vld [vmem:[#allocation2 + $0x13f0] sm:$0xff]
    %v992 = vld [vmem:[#allocation2 + $0x13f8] sm:$0xff]
    %v993 = vld [vmem:[#allocation2 + $0x1400] sm:$0xff]
    %v994 = vld [vmem:[#allocation2 + $0x1408] sm:$0xff]
    %v995 = vld [vmem:[#allocation2 + $0x1410] sm:$0xff]
    %v996 = vld [vmem:[#allocation2 + $0x1418] sm:$0xff]
    %v997 = vld [vmem:[#allocation2 + $0x1420] sm:$0xff]
    %v998 = vld [vmem:[#allocation2 + $0x1428] sm:$0xff]
    %v999 = vld [vmem:[#allocation2 + $0x1430] sm:$0xff]
    %v1000 = vld [vmem:[#allocation2 + $0x1438] sm:$0xff]
    %v1001 = vld [vmem:[#allocation2 + $0x1440] sm:$0xff]
    %v1002 = vld [vmem:[#allocation2 + $0x1448] sm:$0xff]
    %v1003 = vld [vmem:[#allocation2 + $0x1450] sm:$0xff]
    %v1004 = vld [vmem:[#allocation2 + $0x1458] sm:$0xff]
    %v1005 = vld [vmem:[#allocation2 + $0x1460] sm:$0xff]
    %v1006 = vld [vmem:[#allocation2 + $0x1468] sm:$0xff]
    %v1007 = vld [vmem:[#allocation2 + $0x1470] sm:$0xff]
    %v1008 = vld [vmem:[#allocation2 + $0x1478] sm:$0xff]
    %v1009 = vld [vmem:[#allocation2 + $0x1480] sm:$0xff]
    %v1010 = vld [vmem:[#allocation2 + $0x1488] sm:$0xff]
    %v1011 = vld [vmem:[#allocation2 + $0x1490] sm:$0xff]
    %v1012 = vld [vmem:[#allocation2 + $0x1498] sm:$0xff]
    %v1013 = vld [vmem:[#allocation2 + $0x14a0] sm:$0xff]
    %v1014 = vld [vmem:[#allocation2 + $0x14a8] sm:$0xff]
    %v1015 = vld [vmem:[#allocation2 + $0x14b0] sm:$0xff]
    %v1016 = vld [vmem:[#allocation2 + $0x14b8] sm:$0xff]
    %v1017 = vld [vmem:[#allocation2 + $0x14c0] sm:$0xff]
    %v1018 = vld [vmem:[#allocation2 + $0x14c8] sm:$0xff]
    %v1019 = vld [vmem:[#allocation2 + $0x14d0] sm:$0xff]
    %v1020 = vld [vmem:[#allocation2 + $0x14d8] sm:$0xff]
    %v1021 = vld [vmem:[#allocation2 + $0x14e0] sm:$0xff]
    %v1022 = vld [vmem:[#allocation2 + $0x14e8] sm:$0xff]
    %v1023 = vld [vmem:[#allocation2 + $0x14f0] sm:$0xff]
    %v1024 = vld [vmem:[#allocation2 + $0x14f8] sm:$0xff]
    %v1025 = vld [vmem:[#allocation2 + $0x1500] sm:$0xff]
    %v1026 = vld [vmem:[#allocation2 + $0x1508] sm:$0xff]
    %v1027 = vld [vmem:[#allocation2 + $0x1510] sm:$0xff]
    %v1028 = vld [vmem:[#allocation2 + $0x1518] sm:$0xff]
    %v1029 = vld [vmem:[#allocation2 + $0x1520] sm:$0xff]
    %v1030 = vld [vmem:[#allocation2 + $0x1528] sm:$0xff]
    %v1031 = vld [vmem:[#allocation2 + $0x1530] sm:$0xff]
    %v1032 = vld [vmem:[#allocation2 + $0x1538] sm:$0xff]
    %v1033 = vld [vmem:[#allocation2 + $0x1540] sm:$0xff]
    %v1034 = vld [vmem:[#allocation2 + $0x1548] sm:$0xff]
    %v1035 = vld [vmem:[#allocation2 + $0x1550] sm:$0xff]
    %v1036 = vld [vmem:[#allocation2 + $0x1558] sm:$0xff]
    %v1037 = vld [vmem:[#allocation2 + $0x1560] sm:$0xff]
    %v1038 = vld [vmem:[#allocation2 + $0x1568] sm:$0xff]
    %v1039 = vld [vmem:[#allocation2 + $0x1570] sm:$0xff]
    %v1040 = vld [vmem:[#allocation2 + $0x1578] sm:$0xff]
    %v1041 = vld [vmem:[#allocation2 + $0x1580] sm:$0xff]
    %v1042 = vld [vmem:[#allocation2 + $0x1588] sm:$0xff]
    %v1043 = vld [vmem:[#allocation2 + $0x1590] sm:$0xff]
    %v1044 = vld [vmem:[#allocation2 + $0x1598] sm:$0xff]
    %v1045 = vld [vmem:[#allocation2 + $0x15a0] sm:$0xff]
    %v1046 = vld [vmem:[#allocation2 + $0x15a8] sm:$0xff]
    %v1047 = vld [vmem:[#allocation2 + $0x15b0] sm:$0xff]
    %v1048 = vld [vmem:[#allocation2 + $0x15b8] sm:$0xff]
    %v1049 = vld [vmem:[#allocation2 + $0x15c0] sm:$0xff]
    %v1050 = vld [vmem:[#allocation2 + $0x15c8] sm:$0xff]
    %v1051 = vld [vmem:[#allocation2 + $0x15d0] sm:$0xff]
    %v1052 = vld [vmem:[#allocation2 + $0x15d8] sm:$0xff]
    %v1053 = vld [vmem:[#allocation2 + $0x15e0] sm:$0xff]
    %v1054 = vld [vmem:[#allocation2 + $0x15e8] sm:$0xff]
    %v1055 = vld [vmem:[#allocation2 + $0x15f0] sm:$0xff]
    %v1056 = vld [vmem:[#allocation2 + $0x15f8] sm:$0xff]
    %v1057 = vld [vmem:[#allocation2 + $0x1600] sm:$0xff]
    %v1058 = vld [vmem:[#allocation2 + $0x1608] sm:$0xff]
    %v1059 = vld [vmem:[#allocation2 + $0x1610] sm:$0xff]
    %v1060 = vld [vmem:[#allocation2 + $0x1618] sm:$0xff]
    %v1061 = vld [vmem:[#allocation2 + $0x1620] sm:$0xff]
    %v1062 = vld [vmem:[#allocation2 + $0x1628] sm:$0xff]
    %v1063 = vld [vmem:[#allocation2 + $0x1630] sm:$0xff]
    %v1064 = vld [vmem:[#allocation2 + $0x1638] sm:$0xff]
    %v1065 = vld [vmem:[#allocation2 + $0x1640] sm:$0xff]
    %v1066 = vld [vmem:[#allocation2 + $0x1648] sm:$0xff]
    %v1067 = vld [vmem:[#allocation2 + $0x1650] sm:$0xff]
    %v1068 = vld [vmem:[#allocation2 + $0x1658] sm:$0xff]
    %v1069 = vld [vmem:[#allocation2 + $0x1660] sm:$0xff]
    %v1070 = vld [vmem:[#allocation2 + $0x1668] sm:$0xff]
    %v1071 = vld [vmem:[#allocation2 + $0x1670] sm:$0xff]
    %v1072 = vld [vmem:[#allocation2 + $0x1678] sm:$0xff]
    %v1073 = vld [vmem:[#allocation2 + $0x1680] sm:$0xff]
    %v1074 = vld [vmem:[#allocation2 + $0x1688] sm:$0xff]
    %v1075 = vld [vmem:[#allocation2 + $0x1690] sm:$0xff]
    %v1076 = vld [vmem:[#allocation2 + $0x1698] sm:$0xff]
    %v1077 = vld [vmem:[#allocation2 + $0x16a0] sm:$0xff]
    %v1078 = vld [vmem:[#allocation2 + $0x16a8] sm:$0xff]
    %v1079 = vld [vmem:[#allocation2 + $0x16b0] sm:$0xff]
    %v1080 = vld [vmem:[#allocation2 + $0x16b8] sm:$0xff]
    %v1081 = vld [vmem:[#allocation2 + $0x16c0] sm:$0xff]
    %v1082 = vld [vmem:[#allocation2 + $0x16c8] sm:$0xff]
    %v1083 = vld [vmem:[#allocation2 + $0x16d0] sm:$0xff]
    %v1084 = vld [vmem:[#allocation2 + $0x16d8] sm:$0xff]
    %v1085 = vld [vmem:[#allocation2 + $0x16e0] sm:$0xff]
    %v1086 = vld [vmem:[#allocation2 + $0x16e8] sm:$0xff]
    %v1087 = vld [vmem:[#allocation2 + $0x16f0] sm:$0xff]
    %v1088 = vld [vmem:[#allocation2 + $0x16f8] sm:$0xff]
    %v1089 = vld [vmem:[#allocation2 + $0x1700] sm:$0xff]
    %v1090 = vld [vmem:[#allocation2 + $0x1708] sm:$0xff]
    %v1091 = vld [vmem:[#allocation2 + $0x1710] sm:$0xff]
    %v1092 = vld [vmem:[#allocation2 + $0x1718] sm:$0xff]
    %v1093 = vld [vmem:[#allocation2 + $0x1720] sm:$0xff]
    %v1094 = vld [vmem:[#allocation2 + $0x1728] sm:$0xff]
    %v1095 = vld [vmem:[#allocation2 + $0x1730] sm:$0xff]
    %v1096 = vld [vmem:[#allocation2 + $0x1738] sm:$0xff]
    %v1097 = vld [vmem:[#allocation2 + $0x1740] sm:$0xff]
    %v1098 = vld [vmem:[#allocation2 + $0x1748] sm:$0xff]
    %v1099 = vld [vmem:[#allocation2 + $0x1750] sm:$0xff]
    %v1100 = vld [vmem:[#allocation2 + $0x1758] sm:$0xff]
    %v1101 = vld [vmem:[#allocation2 + $0x1760] sm:$0xff]
    %v1102 = vld [vmem:[#allocation2 + $0x1768] sm:$0xff]
    %v1103 = vld [vmem:[#allocation2 + $0x1770] sm:$0xff]
    %v1104 = vld [vmem:[#allocation2 + $0x1778] sm:$0xff]
    %v1105 = vld [vmem:[#allocation2 + $0x1780] sm:$0xff]
    %v1106 = vld [vmem:[#allocation2 + $0x1788] sm:$0xff]
    %v1107 = vld [vmem:[#allocation2 + $0x1790] sm:$0xff]
    %v1108 = vld [vmem:[#allocation2 + $0x1798] sm:$0xff]
    %v1109 = vld [vmem:[#allocation2 + $0x17a0] sm:$0xff]
    %v1110 = vld [vmem:[#allocation2 + $0x17a8] sm:$0xff]
    %v1111 = vld [vmem:[#allocation2 + $0x17b0] sm:$0xff]
    %v1112 = vld [vmem:[#allocation2 + $0x17b8] sm:$0xff]
    %v1113 = vld [vmem:[#allocation2 + $0x17c0] sm:$0xff]
    %v1114 = vld [vmem:[#allocation2 + $0x17c8] sm:$0xff]
    %v1115 = vld [vmem:[#allocation2 + $0x17d0] sm:$0xff]
    %v1116 = vld [vmem:[#allocation2 + $0x17d8] sm:$0xff]
    %v1117 = vld [vmem:[#allocation2 + $0x17e0] sm:$0xff]
    %v1118 = vld [vmem:[#allocation2 + $0x17e8] sm:$0xff]
    %v1119 = vld [vmem:[#allocation2 + $0x17f0] sm:$0xff]
    %v1120 = vld [vmem:[#allocation2 + $0x17f8] sm:$0xff]
    %v1121 = vld [vmem:[#allocation2 + $0x1800] sm:$0xff]
    %v1122 = vld [vmem:[#allocation2 + $0x1808] sm:$0xff]
    %v1123 = vld [vmem:[#allocation2 + $0x1810] sm:$0xff]
    %v1124 = vld [vmem:[#allocation2 + $0x1818] sm:$0xff]
    %v1125 = vld [vmem:[#allocation2 + $0x1820] sm:$0xff]
    %v1126 = vld [vmem:[#allocation2 + $0x1828] sm:$0xff]
    %v1127 = vld [vmem:[#allocation2 + $0x1830] sm:$0xff]
    %v1128 = vld [vmem:[#allocation2 + $0x1838] sm:$0xff]
    %v1129 = vld [vmem:[#allocation2 + $0x1840] sm:$0xff]
    %v1130 = vld [vmem:[#allocation2 + $0x1848] sm:$0xff]
    %v1131 = vld [vmem:[#allocation2 + $0x1850] sm:$0xff]
    %v1132 = vld [vmem:[#allocation2 + $0x1858] sm:$0xff]
    %v1133 = vld [vmem:[#allocation2 + $0x1860] sm:$0xff]
    %v1134 = vld [vmem:[#allocation2 + $0x1868] sm:$0xff]
    %v1135 = vld [vmem:[#allocation2 + $0x1870] sm:$0xff]
    %v1136 = vld [vmem:[#allocation2 + $0x1878] sm:$0xff]
    %v1137 = vld [vmem:[#allocation2 + $0x1880] sm:$0xff]
    %v1138 = vld [vmem:[#allocation2 + $0x1888] sm:$0xff]
    %v1139 = vld [vmem:[#allocation2 + $0x1890] sm:$0xff]
    %v1140 = vld [vmem:[#allocation2 + $0x1898] sm:$0xff]
    %v1141 = vld [vmem:[#allocation2 + $0x18a0] sm:$0xff]
    %v1142 = vld [vmem:[#allocation2 + $0x18a8] sm:$0xff]
    %v1143 = vld [vmem:[#allocation2 + $0x18b0] sm:$0xff]
    %v1144 = vld [vmem:[#allocation2 + $0x18b8] sm:$0xff]
    %v1145 = vld [vmem:[#allocation2 + $0x18c0] sm:$0xff]
    %v1146 = vld [vmem:[#allocation2 + $0x18c8] sm:$0xff]
    %v1147 = vld [vmem:[#allocation2 + $0x18d0] sm:$0xff]
    %v1148 = vld [vmem:[#allocation2 + $0x18d8] sm:$0xff]
    %v1149 = vld [vmem:[#allocation2 + $0x18e0] sm:$0xff]
    %v1150 = vld [vmem:[#allocation2 + $0x18e8] sm:$0xff]
    %v1151 = vld [vmem:[#allocation2 + $0x18f0] sm:$0xff]
    %v1152 = vld [vmem:[#allocation2 + $0x18f8] sm:$0xff]
    %v1153 = vld [vmem:[#allocation2 + $0x1900] sm:$0xff]
    %v1154 = vld [vmem:[#allocation2 + $0x1908] sm:$0xff]
    %v1155 = vld [vmem:[#allocation2 + $0x1910] sm:$0xff]
    %v1156 = vld [vmem:[#allocation2 + $0x1918] sm:$0xff]
    %v1157 = vld [vmem:[#allocation2 + $0x1920] sm:$0xff]
    %v1158 = vld [vmem:[#allocation2 + $0x1928] sm:$0xff]
    %v1159 = vld [vmem:[#allocation2 + $0x1930] sm:$0xff]
    %v1160 = vld [vmem:[#allocation2 + $0x1938] sm:$0xff]
    %v1161 = vld [vmem:[#allocation2 + $0x1940] sm:$0xff]
    %v1162 = vld [vmem:[#allocation2 + $0x1948] sm:$0xff]
    %v1163 = vld [vmem:[#allocation2 + $0x1950] sm:$0xff]
    %v1164 = vld [vmem:[#allocation2 + $0x1958] sm:$0xff]
    %v1165 = vld [vmem:[#allocation2 + $0x1960] sm:$0xff]
    %v1166 = vld [vmem:[#allocation2 + $0x1968] sm:$0xff]
    %v1167 = vld [vmem:[#allocation2 + $0x1970] sm:$0xff]
    %v1168 = vld [vmem:[#allocation2 + $0x1978] sm:$0xff]
    %v1169 = vld [vmem:[#allocation2 + $0x1980] sm:$0xff]
    %v1170 = vld [vmem:[#allocation2 + $0x1988] sm:$0xff]
    %v1171 = vld [vmem:[#allocation2 + $0x1990] sm:$0xff]
    %v1172 = vld [vmem:[#allocation2 + $0x1998] sm:$0xff]
    %v1173 = vld [vmem:[#allocation2 + $0x19a0] sm:$0xff]
    %v1174 = vld [vmem:[#allocation2 + $0x19a8] sm:$0xff]
    %v1175 = vld [vmem:[#allocation2 + $0x19b0] sm:$0xff]
    %v1176 = vld [vmem:[#allocation2 + $0x19b8] sm:$0xff]
    %v1177 = vld [vmem:[#allocation2 + $0x19c0] sm:$0xff]
    %v1178 = vld [vmem:[#allocation2 + $0x19c8] sm:$0xff]
    %v1179 = vld [vmem:[#allocation2 + $0x19d0] sm:$0xff]
    %v1180 = vld [vmem:[#allocation2 + $0x19d8] sm:$0xff]
    %v1181 = vld [vmem:[#allocation2 + $0x19e0] sm:$0xff]
    %v1182 = vld [vmem:[#allocation2 + $0x19e8] sm:$0xff]
    %v1183 = vld [vmem:[#allocation2 + $0x19f0] sm:$0xff]
    %v1184 = vld [vmem:[#allocation2 + $0x19f8] sm:$0xff]
    %v1185 = vld [vmem:[#allocation2 + $0x1a00] sm:$0xff]
    %v1186 = vld [vmem:[#allocation2 + $0x1a08] sm:$0xff]
    %v1187 = vld [vmem:[#allocation2 + $0x1a10] sm:$0xff]
    %v1188 = vld [vmem:[#allocation2 + $0x1a18] sm:$0xff]
    %v1189 = vld [vmem:[#allocation2 + $0x1a20] sm:$0xff]
    %v1190 = vld [vmem:[#allocation2 + $0x1a28] sm:$0xff]
    %v1191 = vld [vmem:[#allocation2 + $0x1a30] sm:$0xff]
    %v1192 = vld [vmem:[#allocation2 + $0x1a38] sm:$0xff]
    %v1193 = vld [vmem:[#allocation2 + $0x1a40] sm:$0xff]
    %v1194 = vld [vmem:[#allocation2 + $0x1a48] sm:$0xff]
    %v1195 = vld [vmem:[#allocation2 + $0x1a50] sm:$0xff]
    %v1196 = vld [vmem:[#allocation2 + $0x1a58] sm:$0xff]
    %v1197 = vld [vmem:[#allocation2 + $0x1a60] sm:$0xff]
    %v1198 = vld [vmem:[#allocation2 + $0x1a68] sm:$0xff]
    %v1199 = vld [vmem:[#allocation2 + $0x1a70] sm:$0xff]
    %v1200 = vld [vmem:[#allocation2 + $0x1a78] sm:$0xff]
    %v1201 = vld [vmem:[#allocation2 + $0x1a80] sm:$0xff]
    %v1202 = vld [vmem:[#allocation2 + $0x1a88] sm:$0xff]
    %v1203 = vld [vmem:[#allocation2 + $0x1a90] sm:$0xff]
    %v1204 = vld [vmem:[#allocation2 + $0x1a98] sm:$0xff]
    %v1205 = vld [vmem:[#allocation2 + $0x1aa0] sm:$0xff]
    %v1206 = vld [vmem:[#allocation2 + $0x1aa8] sm:$0xff]
    %v1207 = vld [vmem:[#allocation2 + $0x1ab0] sm:$0xff]
    %v1208 = vld [vmem:[#allocation2 + $0x1ab8] sm:$0xff]
    %v1209 = vld [vmem:[#allocation2 + $0x1ac0] sm:$0xff]
    %v1210 = vld [vmem:[#allocation2 + $0x1ac8] sm:$0xff]
    %v1211 = vld [vmem:[#allocation2 + $0x1ad0] sm:$0xff]
    %v1212 = vld [vmem:[#allocation2 + $0x1ad8] sm:$0xff]
    %v1213 = vld [vmem:[#allocation2 + $0x1ae0] sm:$0xff]
    %v1214 = vld [vmem:[#allocation2 + $0x1ae8] sm:$0xff]
    %v1215 = vld [vmem:[#allocation2 + $0x1af0] sm:$0xff]
    %v1216 = vld [vmem:[#allocation2 + $0x1af8] sm:$0xff]
    %v1217 = vld [vmem:[#allocation2 + $0x1b00] sm:$0xff]
    %v1218 = vld [vmem:[#allocation2 + $0x1b08] sm:$0xff]
    %v1219 = vld [vmem:[#allocation2 + $0x1b10] sm:$0xff]
    %v1220 = vld [vmem:[#allocation2 + $0x1b18] sm:$0xff]
    %v1221 = vld [vmem:[#allocation2 + $0x1b20] sm:$0xff]
    %v1222 = vld [vmem:[#allocation2 + $0x1b28] sm:$0xff]
    %v1223 = vld [vmem:[#allocation2 + $0x1b30] sm:$0xff]
    %v1224 = vld [vmem:[#allocation2 + $0x1b38] sm:$0xff]
    %v1225 = vld [vmem:[#allocation2 + $0x1b40] sm:$0xff]
    %v1226 = vld [vmem:[#allocation2 + $0x1b48] sm:$0xff]
    %v1227 = vld [vmem:[#allocation2 + $0x1b50] sm:$0xff]
    %v1228 = vld [vmem:[#allocation2 + $0x1b58] sm:$0xff]
    %v1229 = vld [vmem:[#allocation2 + $0x1b60] sm:$0xff]
    %v1230 = vld [vmem:[#allocation2 + $0x1b68] sm:$0xff]
    %v1231 = vld [vmem:[#allocation2 + $0x1b70] sm:$0xff]
    %v1232 = vld [vmem:[#allocation2 + $0x1b78] sm:$0xff]
    %v1233 = vld [vmem:[#allocation2 + $0x1b80] sm:$0xff]
    %v1234 = vld [vmem:[#allocation2 + $0x1b88] sm:$0xff]
    %v1235 = vld [vmem:[#allocation2 + $0x1b90] sm:$0xff]
    %v1236 = vld [vmem:[#allocation2 + $0x1b98] sm:$0xff]
    %v1237 = vld [vmem:[#allocation2 + $0x1ba0] sm:$0xff]
    %v1238 = vld [vmem:[#allocation2 + $0x1ba8] sm:$0xff]
    %v1239 = vld [vmem:[#allocation2 + $0x1bb0] sm:$0xff]
    %v1240 = vld [vmem:[#allocation2 + $0x1bb8] sm:$0xff]
    %v1241 = vld [vmem:[#allocation2 + $0x1bc0] sm:$0xff]
    %v1242 = vld [vmem:[#allocation2 + $0x1bc8] sm:$0xff]
    %v1243 = vld [vmem:[#allocation2 + $0x1bd0] sm:$0xff]
    %v1244 = vld [vmem:[#allocation2 + $0x1bd8] sm:$0xff]
    %v1245 = vld [vmem:[#allocation2 + $0x1be0] sm:$0xff]
    %v1246 = vld [vmem:[#allocation2 + $0x1be8] sm:$0xff]
    %v1247 = vld [vmem:[#allocation2 + $0x1bf0] sm:$0xff]
    %v1248 = vld [vmem:[#allocation2 + $0x1bf8] sm:$0xff]
    %v1249 = vld [vmem:[#allocation2 + $0x1c00] sm:$0xff]
    %v1250 = vld [vmem:[#allocation2 + $0x1c08] sm:$0xff]
    %v1251 = vld [vmem:[#allocation2 + $0x1c10] sm:$0xff]
    %v1252 = vld [vmem:[#allocation2 + $0x1c18] sm:$0xff]
    %v1253 = vld [vmem:[#allocation2 + $0x1c20] sm:$0xff]
    %v1254 = vld [vmem:[#allocation2 + $0x1c28] sm:$0xff]
    %v1255 = vld [vmem:[#allocation2 + $0x1c30] sm:$0xff]
    %v1256 = vld [vmem:[#allocation2 + $0x1c38] sm:$0xff]
    %v1257 = vld [vmem:[#allocation2 + $0x1c40] sm:$0xff]
    %v1258 = vld [vmem:[#allocation2 + $0x1c48] sm:$0xff]
    %v1259 = vld [vmem:[#allocation2 + $0x1c50] sm:$0xff]
    %v1260 = vld [vmem:[#allocation2 + $0x1c58] sm:$0xff]
    %v1261 = vld [vmem:[#allocation2 + $0x1c60] sm:$0xff]
    %v1262 = vld [vmem:[#allocation2 + $0x1c68] sm:$0xff]
    %v1263 = vld [vmem:[#allocation2 + $0x1c70] sm:$0xff]
    %v1264 = vld [vmem:[#allocation2 + $0x1c78] sm:$0xff]
    %v1265 = vld [vmem:[#allocation2 + $0x1c80] sm:$0xff]
    %v1266 = vld [vmem:[#allocation2 + $0x1c88] sm:$0xff]
    %v1267 = vld [vmem:[#allocation2 + $0x1c90] sm:$0xff]
    %v1268 = vld [vmem:[#allocation2 + $0x1c98] sm:$0xff]
    %v1269 = vld [vmem:[#allocation2 + $0x1ca0] sm:$0xff]
    %v1270 = vld [vmem:[#allocation2 + $0x1ca8] sm:$0xff]
    %v1271 = vld [vmem:[#allocation2 + $0x1cb0] sm:$0xff]
    %v1272 = vld [vmem:[#allocation2 + $0x1cb8] sm:$0xff]
    %v1273 = vld [vmem:[#allocation2 + $0x1cc0] sm:$0xff]
    %v1274 = vld [vmem:[#allocation2 + $0x1cc8] sm:$0xff]
    %v1275 = vld [vmem:[#allocation2 + $0x1cd0] sm:$0xff]
    %v1276 = vld [vmem:[#allocation2 + $0x1cd8] sm:$0xff]
    %v1277 = vld [vmem:[#allocation2 + $0x1ce0] sm:$0xff]
    %v1278 = vld [vmem:[#allocation2 + $0x1ce8] sm:$0xff]
    %v1279 = vld [vmem:[#allocation2 + $0x1cf0] sm:$0xff]
    %v1280 = vld [vmem:[#allocation2 + $0x1cf8] sm:$0xff]
    %v1281 = vld [vmem:[#allocation2 + $0x1d00] sm:$0xff]
    %v1282 = vld [vmem:[#allocation2 + $0x1d08] sm:$0xff]
    %v1283 = vld [vmem:[#allocation2 + $0x1d10] sm:$0xff]
    %v1284 = vld [vmem:[#allocation2 + $0x1d18] sm:$0xff]
    %v1285 = vld [vmem:[#allocation2 + $0x1d20] sm:$0xff]
    %v1286 = vld [vmem:[#allocation2 + $0x1d28] sm:$0xff]
    %v1287 = vld [vmem:[#allocation2 + $0x1d30] sm:$0xff]
    %v1288 = vld [vmem:[#allocation2 + $0x1d38] sm:$0xff]
    %v1289 = vld [vmem:[#allocation2 + $0x1d40] sm:$0xff]
    %v1290 = vld [vmem:[#allocation2 + $0x1d48] sm:$0xff]
    %v1291 = vld [vmem:[#allocation2 + $0x1d50] sm:$0xff]
    %v1292 = vld [vmem:[#allocation2 + $0x1d58] sm:$0xff]
    %v1293 = vld [vmem:[#allocation2 + $0x1d60] sm:$0xff]
    %v1294 = vld [vmem:[#allocation2 + $0x1d68] sm:$0xff]
    %v1295 = vld [vmem:[#allocation2 + $0x1d70] sm:$0xff]
    %v1296 = vld [vmem:[#allocation2 + $0x1d78] sm:$0xff]
    %v1297 = vld [vmem:[#allocation2 + $0x1d80] sm:$0xff]
    %v1298 = vld [vmem:[#allocation2 + $0x1d88] sm:$0xff]
    %v1299 = vld [vmem:[#allocation2 + $0x1d90] sm:$0xff]
    %v1300 = vld [vmem:[#allocation2 + $0x1d98] sm:$0xff]
    %v1301 = vld [vmem:[#allocation2 + $0x1da0] sm:$0xff]
    %v1302 = vld [vmem:[#allocation2 + $0x1da8] sm:$0xff]
    %v1303 = vld [vmem:[#allocation2 + $0x1db0] sm:$0xff]
    %v1304 = vld [vmem:[#allocation2 + $0x1db8] sm:$0xff]
    %v1305 = vld [vmem:[#allocation2 + $0x1dc0] sm:$0xff]
    %v1306 = vld [vmem:[#allocation2 + $0x1dc8] sm:$0xff]
    %v1307 = vld [vmem:[#allocation2 + $0x1dd0] sm:$0xff]
    %v1308 = vld [vmem:[#allocation2 + $0x1dd8] sm:$0xff]
    %v1309 = vld [vmem:[#allocation2 + $0x1de0] sm:$0xff]
    %v1310 = vld [vmem:[#allocation2 + $0x1de8] sm:$0xff]
    %v1311 = vld [vmem:[#allocation2 + $0x1df0] sm:$0xff]
    %v1312 = vld [vmem:[#allocation2 + $0x1df8] sm:$0xff]
    %v1313 = vld [vmem:[#allocation2 + $0x1e00] sm:$0xff]
    %v1314 = vld [vmem:[#allocation2 + $0x1e08] sm:$0xff]
    %v1315 = vld [vmem:[#allocation2 + $0x1e10] sm:$0xff]
    %v1316 = vld [vmem:[#allocation2 + $0x1e18] sm:$0xff]
    %v1317 = vld [vmem:[#allocation2 + $0x1e20] sm:$0xff]
    %v1318 = vld [vmem:[#allocation2 + $0x1e28] sm:$0xff]
    %v1319 = vld [vmem:[#allocation2 + $0x1e30] sm:$0xff]
    %v1320 = vld [vmem:[#allocation2 + $0x1e38] sm:$0xff]
    %v1321 = vld [vmem:[#allocation2 + $0x1e40] sm:$0xff]
    %v1322 = vld [vmem:[#allocation2 + $0x1e48] sm:$0xff]
    %v1323 = vld [vmem:[#allocation2 + $0x1e50] sm:$0xff]
    %v1324 = vld [vmem:[#allocation2 + $0x1e58] sm:$0xff]
    %v1325 = vld [vmem:[#allocation2 + $0x1e60] sm:$0xff]
    %v1326 = vld [vmem:[#allocation2 + $0x1e68] sm:$0xff]
    %v1327 = vld [vmem:[#allocation2 + $0x1e70] sm:$0xff]
    %v1328 = vld [vmem:[#allocation2 + $0x1e78] sm:$0xff]
    %v1329 = vld [vmem:[#allocation2 + $0x1e80] sm:$0xff]
    %v1330 = vld [vmem:[#allocation2 + $0x1e88] sm:$0xff]
    %v1331 = vld [vmem:[#allocation2 + $0x1e90] sm:$0xff]
    %v1332 = vld [vmem:[#allocation2 + $0x1e98] sm:$0xff]
    %v1333 = vld [vmem:[#allocation2 + $0x1ea0] sm:$0xff]
    %v1334 = vld [vmem:[#allocation2 + $0x1ea8] sm:$0xff]
    %v1335 = vld [vmem:[#allocation2 + $0x1eb0] sm:$0xff]
    %v1336 = vld [vmem:[#allocation2 + $0x1eb8] sm:$0xff]
    %v1337 = vld [vmem:[#allocation2 + $0x1ec0] sm:$0xff]
    %v1338 = vld [vmem:[#allocation2 + $0x1ec8] sm:$0xff]
    %v1339 = vld [vmem:[#allocation2 + $0x1ed0] sm:$0xff]
    %v1340 = vld [vmem:[#allocation2 + $0x1ed8] sm:$0xff]
    %v1341 = vld [vmem:[#allocation2 + $0x1ee0] sm:$0xff]
    %v1342 = vld [vmem:[#allocation2 + $0x1ee8] sm:$0xff]
    %v1343 = vld [vmem:[#allocation2 + $0x1ef0] sm:$0xff]
    %v1344 = vld [vmem:[#allocation2 + $0x1ef8] sm:$0xff]
    %v1345 = vld [vmem:[#allocation2 + $0x1f00] sm:$0xff]
    %v1346 = vld [vmem:[#allocation2 + $0x1f08] sm:$0xff]
    %v1347 = vld [vmem:[#allocation2 + $0x1f10] sm:$0xff]
    %v1348 = vld [vmem:[#allocation2 + $0x1f18] sm:$0xff]
    %v1349 = vld [vmem:[#allocation2 + $0x1f20] sm:$0xff]
    %v1350 = vld [vmem:[#allocation2 + $0x1f28] sm:$0xff]
    %v1351 = vld [vmem:[#allocation2 + $0x1f30] sm:$0xff]
    %v1352 = vld [vmem:[#allocation2 + $0x1f38] sm:$0xff]
    %v1353 = vld [vmem:[#allocation2 + $0x1f40] sm:$0xff]
    %v1354 = vld [vmem:[#allocation2 + $0x1f48] sm:$0xff]
    %v1355 = vld [vmem:[#allocation2 + $0x1f50] sm:$0xff]
    %v1356 = vld [vmem:[#allocation2 + $0x1f58] sm:$0xff]
    %v1357 = vld [vmem:[#allocation2 + $0x1f60] sm:$0xff]
    %v1358 = vld [vmem:[#allocation2 + $0x1f68] sm:$0xff]
    %v1359 = vld [vmem:[#allocation2 + $0x1f70] sm:$0xff]
    %v1360 = vld [vmem:[#allocation2 + $0x1f78] sm:$0xff]
    %v1361 = vld [vmem:[#allocation2 + $0x1f80] sm:$0xff]
    %v1362 = vld [vmem:[#allocation2 + $0x1f88] sm:$0xff]
    %v1363 = vld [vmem:[#allocation2 + $0x1f90] sm:$0xff]
    %v1364 = vld [vmem:[#allocation2 + $0x1f98] sm:$0xff]
    %v1365 = vld [vmem:[#allocation2 + $0x1fa0] sm:$0xff]
    %v1366 = vld [vmem:[#allocation2 + $0x1fa8] sm:$0xff]
    %v1367 = vld [vmem:[#allocation2 + $0x1fb0] sm:$0xff]
    %v1368 = vld [vmem:[#allocation2 + $0x1fb8] sm:$0xff]
    %v1369 = vld [vmem:[#allocation2 + $0x1fc0] sm:$0xff]
    %v1370 = vld [vmem:[#allocation2 + $0x1fc8] sm:$0xff]
    %v1371 = vld [vmem:[#allocation2 + $0x1fd0] sm:$0xff]
    %v1372 = vld [vmem:[#allocation2 + $0x1fd8] sm:$0xff]
    %v1373 = vld [vmem:[#allocation2 + $0x1fe0] sm:$0xff]
    %v1374 = vld [vmem:[#allocation2 + $0x1fe8] sm:$0xff]
    %v1375 = vld [vmem:[#allocation2 + $0x1ff0] sm:$0xff]
    %v1376 = vld [vmem:[#allocation2 + $0x1ff8] sm:$0xff]
    %v1377 = vunpack.c.l.s8.bf16 %v353
    %v1378 = vunpack.c.l.s8.bf16 %v354
    %v1379 = vunpack.c.l.s8.bf16 %v355
    %v1380 = vunpack.c.l.s8.bf16 %v356
    %v1381 = vunpack.c.l.s8.bf16 %v357
    %v1382 = vunpack.c.l.s8.bf16 %v358
    %v1383 = vunpack.c.l.s8.bf16 %v359
    %v1384 = vunpack.c.l.s8.bf16 %v360
    %v1385 = vunpack.c.l.s8.bf16 %v361
    %v1386 = vunpack.c.l.s8.bf16 %v362
    %v1387 = vunpack.c.l.s8.bf16 %v363
    %v1388 = vunpack.c.l.s8.bf16 %v364
    %v1389 = vunpack.c.l.s8.bf16 %v365
    %v1390 = vunpack.c.l.s8.bf16 %v366
    %v1391 = vunpack.c.l.s8.bf16 %v367
    %v1392 = vunpack.c.l.s8.bf16 %v368
    %v1393 = vunpack.c.h.s8.bf16 %v353
    %v1394 = vunpack.c.h.s8.bf16 %v354
    %v1395 = vunpack.c.h.s8.bf16 %v355
    %v1396 = vunpack.c.h.s8.bf16 %v356
    %v1397 = vunpack.c.h.s8.bf16 %v357
    %v1398 = vunpack.c.h.s8.bf16 %v358
    %v1399 = vunpack.c.h.s8.bf16 %v359
    %v1400 = vunpack.c.h.s8.bf16 %v360
    %v1401 = vunpack.c.h.s8.bf16 %v361
    %v1402 = vunpack.c.h.s8.bf16 %v362
    %v1403 = vunpack.c.h.s8.bf16 %v363
    %v1404 = vunpack.c.h.s8.bf16 %v364
    %v1405 = vunpack.c.h.s8.bf16 %v365
    %v1406 = vunpack.c.h.s8.bf16 %v366
    %v1407 = vunpack.c.h.s8.bf16 %v367
    %v1408 = vunpack.c.h.s8.bf16 %v368
    %v1409 = vunpack.c.l.s8.bf16 %v369
    %v1410 = vunpack.c.l.s8.bf16 %v370
    %v1411 = vunpack.c.l.s8.bf16 %v371
    %v1412 = vunpack.c.l.s8.bf16 %v372
    %v1413 = vunpack.c.l.s8.bf16 %v373
    %v1414 = vunpack.c.l.s8.bf16 %v374
    %v1415 = vunpack.c.l.s8.bf16 %v375
    %v1416 = vunpack.c.l.s8.bf16 %v376
    %v1417 = vunpack.c.l.s8.bf16 %v377
    %v1418 = vunpack.c.l.s8.bf16 %v378
    %v1419 = vunpack.c.l.s8.bf16 %v379
    %v1420 = vunpack.c.l.s8.bf16 %v380
    %v1421 = vunpack.c.l.s8.bf16 %v381
    %v1422 = vunpack.c.l.s8.bf16 %v382
    %v1423 = vunpack.c.l.s8.bf16 %v383
    %v1424 = vunpack.c.l.s8.bf16 %v384
    %v1425 = vunpack.c.h.s8.bf16 %v369
    %v1426 = vunpack.c.h.s8.bf16 %v370
    %v1427 = vunpack.c.h.s8.bf16 %v371
    %v1428 = vunpack.c.h.s8.bf16 %v372
    %v1429 = vunpack.c.h.s8.bf16 %v373
    %v1430 = vunpack.c.h.s8.bf16 %v374
    %v1431 = vunpack.c.h.s8.bf16 %v375
    %v1432 = vunpack.c.h.s8.bf16 %v376
    %v1433 = vunpack.c.h.s8.bf16 %v377
    %v1434 = vunpack.c.h.s8.bf16 %v378
    %v1435 = vunpack.c.h.s8.bf16 %v379
    %v1436 = vunpack.c.h.s8.bf16 %v380
    %v1437 = vunpack.c.h.s8.bf16 %v381
    %v1438 = vunpack.c.h.s8.bf16 %v382
    %v1439 = vunpack.c.h.s8.bf16 %v383
    %v1440 = vunpack.c.h.s8.bf16 %v384
    %v1441 = vunpack.c.l.s8.bf16 %v385
    %v1442 = vunpack.c.l.s8.bf16 %v386
    %v1443 = vunpack.c.l.s8.bf16 %v387
    %v1444 = vunpack.c.l.s8.bf16 %v388
    %v1445 = vunpack.c.l.s8.bf16 %v389
    %v1446 = vunpack.c.l.s8.bf16 %v390
    %v1447 = vunpack.c.l.s8.bf16 %v391
    %v1448 = vunpack.c.l.s8.bf16 %v392
    %v1449 = vunpack.c.l.s8.bf16 %v393
    %v1450 = vunpack.c.l.s8.bf16 %v394
    %v1451 = vunpack.c.l.s8.bf16 %v395
    %v1452 = vunpack.c.l.s8.bf16 %v396
    %v1453 = vunpack.c.l.s8.bf16 %v397
    %v1454 = vunpack.c.l.s8.bf16 %v398
    %v1455 = vunpack.c.l.s8.bf16 %v399
    %v1456 = vunpack.c.l.s8.bf16 %v400
    %v1457 = vunpack.c.h.s8.bf16 %v385
    %v1458 = vunpack.c.h.s8.bf16 %v386
    %v1459 = vunpack.c.h.s8.bf16 %v387
    %v1460 = vunpack.c.h.s8.bf16 %v388
    %v1461 = vunpack.c.h.s8.bf16 %v389
    %v1462 = vunpack.c.h.s8.bf16 %v390
    %v1463 = vunpack.c.h.s8.bf16 %v391
    %v1464 = vunpack.c.h.s8.bf16 %v392
    %v1465 = vunpack.c.h.s8.bf16 %v393
    %v1466 = vunpack.c.h.s8.bf16 %v394
    %v1467 = vunpack.c.h.s8.bf16 %v395
    %v1468 = vunpack.c.h.s8.bf16 %v396
    %v1469 = vunpack.c.h.s8.bf16 %v397
    %v1470 = vunpack.c.h.s8.bf16 %v398
    %v1471 = vunpack.c.h.s8.bf16 %v399
    %v1472 = vunpack.c.h.s8.bf16 %v400
    %v1473 = vunpack.c.l.s8.bf16 %v401
    %v1474 = vunpack.c.l.s8.bf16 %v402
    %v1475 = vunpack.c.l.s8.bf16 %v403
    %v1476 = vunpack.c.l.s8.bf16 %v404
    %v1477 = vunpack.c.l.s8.bf16 %v405
    %v1478 = vunpack.c.l.s8.bf16 %v406
    %v1479 = vunpack.c.l.s8.bf16 %v407
    %v1480 = vunpack.c.l.s8.bf16 %v408
    %v1481 = vunpack.c.l.s8.bf16 %v409
    %v1482 = vunpack.c.l.s8.bf16 %v410
    %v1483 = vunpack.c.l.s8.bf16 %v411
    %v1484 = vunpack.c.l.s8.bf16 %v412
    %v1485 = vunpack.c.l.s8.bf16 %v413
    %v1486 = vunpack.c.l.s8.bf16 %v414
    %v1487 = vunpack.c.l.s8.bf16 %v415
    %v1488 = vunpack.c.l.s8.bf16 %v416
    %v1489 = vunpack.c.h.s8.bf16 %v401
    %v1490 = vunpack.c.h.s8.bf16 %v402
    %v1491 = vunpack.c.h.s8.bf16 %v403
    %v1492 = vunpack.c.h.s8.bf16 %v404
    %v1493 = vunpack.c.h.s8.bf16 %v405
    %v1494 = vunpack.c.h.s8.bf16 %v406
    %v1495 = vunpack.c.h.s8.bf16 %v407
    %v1496 = vunpack.c.h.s8.bf16 %v408
    %v1497 = vunpack.c.h.s8.bf16 %v409
    %v1498 = vunpack.c.h.s8.bf16 %v410
    %v1499 = vunpack.c.h.s8.bf16 %v411
    %v1500 = vunpack.c.h.s8.bf16 %v412
    %v1501 = vunpack.c.h.s8.bf16 %v413
    %v1502 = vunpack.c.h.s8.bf16 %v414
    %v1503 = vunpack.c.h.s8.bf16 %v415
    %v1504 = vunpack.c.h.s8.bf16 %v416
    %v1505 = vunpack.c.l.s8.bf16 %v417
    %v1506 = vunpack.c.l.s8.bf16 %v418
    %v1507 = vunpack.c.l.s8.bf16 %v419
    %v1508 = vunpack.c.l.s8.bf16 %v420
    %v1509 = vunpack.c.l.s8.bf16 %v421
    %v1510 = vunpack.c.l.s8.bf16 %v422
    %v1511 = vunpack.c.l.s8.bf16 %v423
    %v1512 = vunpack.c.l.s8.bf16 %v424
    %v1513 = vunpack.c.l.s8.bf16 %v425
    %v1514 = vunpack.c.l.s8.bf16 %v426
    %v1515 = vunpack.c.l.s8.bf16 %v427
    %v1516 = vunpack.c.l.s8.bf16 %v428
    %v1517 = vunpack.c.l.s8.bf16 %v429
    %v1518 = vunpack.c.l.s8.bf16 %v430
    %v1519 = vunpack.c.l.s8.bf16 %v431
    %v1520 = vunpack.c.l.s8.bf16 %v432
    %v1521 = vunpack.c.h.s8.bf16 %v417
    %v1522 = vunpack.c.h.s8.bf16 %v418
    %v1523 = vunpack.c.h.s8.bf16 %v419
    %v1524 = vunpack.c.h.s8.bf16 %v420
    %v1525 = vunpack.c.h.s8.bf16 %v421
    %v1526 = vunpack.c.h.s8.bf16 %v422
    %v1527 = vunpack.c.h.s8.bf16 %v423
    %v1528 = vunpack.c.h.s8.bf16 %v424
    %v1529 = vunpack.c.h.s8.bf16 %v425
    %v1530 = vunpack.c.h.s8.bf16 %v426
    %v1531 = vunpack.c.h.s8.bf16 %v427
    %v1532 = vunpack.c.h.s8.bf16 %v428
    %v1533 = vunpack.c.h.s8.bf16 %v429
    %v1534 = vunpack.c.h.s8.bf16 %v430
    %v1535 = vunpack.c.h.s8.bf16 %v431
    %v1536 = vunpack.c.h.s8.bf16 %v432
    %v1537 = vunpack.c.l.s8.bf16 %v433
    %v1538 = vunpack.c.l.s8.bf16 %v434
    %v1539 = vunpack.c.l.s8.bf16 %v435
    %v1540 = vunpack.c.l.s8.bf16 %v436
    %v1541 = vunpack.c.l.s8.bf16 %v437
    %v1542 = vunpack.c.l.s8.bf16 %v438
    %v1543 = vunpack.c.l.s8.bf16 %v439
    %v1544 = vunpack.c.l.s8.bf16 %v440
    %v1545 = vunpack.c.l.s8.bf16 %v441
    %v1546 = vunpack.c.l.s8.bf16 %v442
    %v1547 = vunpack.c.l.s8.bf16 %v443
    %v1548 = vunpack.c.l.s8.bf16 %v444
    %v1549 = vunpack.c.l.s8.bf16 %v445
    %v1550 = vunpack.c.l.s8.bf16 %v446
    %v1551 = vunpack.c.l.s8.bf16 %v447
    %v1552 = vunpack.c.l.s8.bf16 %v448
    %v1553 = vunpack.c.h.s8.bf16 %v433
    %v1554 = vunpack.c.h.s8.bf16 %v434
    %v1555 = vunpack.c.h.s8.bf16 %v435
    %v1556 = vunpack.c.h.s8.bf16 %v436
    %v1557 = vunpack.c.h.s8.bf16 %v437
    %v1558 = vunpack.c.h.s8.bf16 %v438
    %v1559 = vunpack.c.h.s8.bf16 %v439
    %v1560 = vunpack.c.h.s8.bf16 %v440
    %v1561 = vunpack.c.h.s8.bf16 %v441
    %v1562 = vunpack.c.h.s8.bf16 %v442
    %v1563 = vunpack.c.h.s8.bf16 %v443
    %v1564 = vunpack.c.h.s8.bf16 %v444
    %v1565 = vunpack.c.h.s8.bf16 %v445
    %v1566 = vunpack.c.h.s8.bf16 %v446
    %v1567 = vunpack.c.h.s8.bf16 %v447
    %v1568 = vunpack.c.h.s8.bf16 %v448
    %v1569 = vunpack.c.l.s8.bf16 %v449
    %v1570 = vunpack.c.l.s8.bf16 %v450
    %v1571 = vunpack.c.l.s8.bf16 %v451
    %v1572 = vunpack.c.l.s8.bf16 %v452
    %v1573 = vunpack.c.l.s8.bf16 %v453
    %v1574 = vunpack.c.l.s8.bf16 %v454
    %v1575 = vunpack.c.l.s8.bf16 %v455
    %v1576 = vunpack.c.l.s8.bf16 %v456
    %v1577 = vunpack.c.l.s8.bf16 %v457
    %v1578 = vunpack.c.l.s8.bf16 %v458
    %v1579 = vunpack.c.l.s8.bf16 %v459
    %v1580 = vunpack.c.l.s8.bf16 %v460
    %v1581 = vunpack.c.l.s8.bf16 %v461
    %v1582 = vunpack.c.l.s8.bf16 %v462
    %v1583 = vunpack.c.l.s8.bf16 %v463
    %v1584 = vunpack.c.l.s8.bf16 %v464
    %v1585 = vunpack.c.h.s8.bf16 %v449
    %v1586 = vunpack.c.h.s8.bf16 %v450
    %v1587 = vunpack.c.h.s8.bf16 %v451
    %v1588 = vunpack.c.h.s8.bf16 %v452
    %v1589 = vunpack.c.h.s8.bf16 %v453
    %v1590 = vunpack.c.h.s8.bf16 %v454
    %v1591 = vunpack.c.h.s8.bf16 %v455
    %v1592 = vunpack.c.h.s8.bf16 %v456
    %v1593 = vunpack.c.h.s8.bf16 %v457
    %v1594 = vunpack.c.h.s8.bf16 %v458
    %v1595 = vunpack.c.h.s8.bf16 %v459
    %v1596 = vunpack.c.h.s8.bf16 %v460
    %v1597 = vunpack.c.h.s8.bf16 %v461
    %v1598 = vunpack.c.h.s8.bf16 %v462
    %v1599 = vunpack.c.h.s8.bf16 %v463
    %v1600 = vunpack.c.h.s8.bf16 %v464
    %v1601 = vunpack.c.l.s8.bf16 %v465
    %v1602 = vunpack.c.l.s8.bf16 %v466
    %v1603 = vunpack.c.l.s8.bf16 %v467
    %v1604 = vunpack.c.l.s8.bf16 %v468
    %v1605 = vunpack.c.l.s8.bf16 %v469
    %v1606 = vunpack.c.l.s8.bf16 %v470
    %v1607 = vunpack.c.l.s8.bf16 %v471
    %v1608 = vunpack.c.l.s8.bf16 %v472
    %v1609 = vunpack.c.l.s8.bf16 %v473
    %v1610 = vunpack.c.l.s8.bf16 %v474
    %v1611 = vunpack.c.l.s8.bf16 %v475
    %v1612 = vunpack.c.l.s8.bf16 %v476
    %v1613 = vunpack.c.l.s8.bf16 %v477
    %v1614 = vunpack.c.l.s8.bf16 %v478
    %v1615 = vunpack.c.l.s8.bf16 %v479
    %v1616 = vunpack.c.l.s8.bf16 %v480
    %v1617 = vunpack.c.h.s8.bf16 %v465
    %v1618 = vunpack.c.h.s8.bf16 %v466
    %v1619 = vunpack.c.h.s8.bf16 %v467
    %v1620 = vunpack.c.h.s8.bf16 %v468
    %v1621 = vunpack.c.h.s8.bf16 %v469
    %v1622 = vunpack.c.h.s8.bf16 %v470
    %v1623 = vunpack.c.h.s8.bf16 %v471
    %v1624 = vunpack.c.h.s8.bf16 %v472
    %v1625 = vunpack.c.h.s8.bf16 %v473
    %v1626 = vunpack.c.h.s8.bf16 %v474
    %v1627 = vunpack.c.h.s8.bf16 %v475
    %v1628 = vunpack.c.h.s8.bf16 %v476
    %v1629 = vunpack.c.h.s8.bf16 %v477
    %v1630 = vunpack.c.h.s8.bf16 %v478
    %v1631 = vunpack.c.h.s8.bf16 %v479
    %v1632 = vunpack.c.h.s8.bf16 %v480
    %v1633 = vunpack.c.l.s8.bf16 %v481
    %v1634 = vunpack.c.l.s8.bf16 %v482
    %v1635 = vunpack.c.l.s8.bf16 %v483
    %v1636 = vunpack.c.l.s8.bf16 %v484
    %v1637 = vunpack.c.l.s8.bf16 %v485
    %v1638 = vunpack.c.l.s8.bf16 %v486
    %v1639 = vunpack.c.l.s8.bf16 %v487
    %v1640 = vunpack.c.l.s8.bf16 %v488
    %v1641 = vunpack.c.l.s8.bf16 %v489
    %v1642 = vunpack.c.l.s8.bf16 %v490
    %v1643 = vunpack.c.l.s8.bf16 %v491
    %v1644 = vunpack.c.l.s8.bf16 %v492
    %v1645 = vunpack.c.l.s8.bf16 %v493
    %v1646 = vunpack.c.l.s8.bf16 %v494
    %v1647 = vunpack.c.l.s8.bf16 %v495
    %v1648 = vunpack.c.l.s8.bf16 %v496
    %v1649 = vunpack.c.h.s8.bf16 %v481
    %v1650 = vunpack.c.h.s8.bf16 %v482
    %v1651 = vunpack.c.h.s8.bf16 %v483
    %v1652 = vunpack.c.h.s8.bf16 %v484
    %v1653 = vunpack.c.h.s8.bf16 %v485
    %v1654 = vunpack.c.h.s8.bf16 %v486
    %v1655 = vunpack.c.h.s8.bf16 %v487
    %v1656 = vunpack.c.h.s8.bf16 %v488
    %v1657 = vunpack.c.h.s8.bf16 %v489
    %v1658 = vunpack.c.h.s8.bf16 %v490
    %v1659 = vunpack.c.h.s8.bf16 %v491
    %v1660 = vunpack.c.h.s8.bf16 %v492
    %v1661 = vunpack.c.h.s8.bf16 %v493
    %v1662 = vunpack.c.h.s8.bf16 %v494
    %v1663 = vunpack.c.h.s8.bf16 %v495
    %v1664 = vunpack.c.h.s8.bf16 %v496
    %v1665 = vunpack.c.l.s8.bf16 %v497
    %v1666 = vunpack.c.l.s8.bf16 %v498
    %v1667 = vunpack.c.l.s8.bf16 %v499
    %v1668 = vunpack.c.l.s8.bf16 %v500
    %v1669 = vunpack.c.l.s8.bf16 %v501
    %v1670 = vunpack.c.l.s8.bf16 %v502
    %v1671 = vunpack.c.l.s8.bf16 %v503
    %v1672 = vunpack.c.l.s8.bf16 %v504
    %v1673 = vunpack.c.l.s8.bf16 %v505
    %v1674 = vunpack.c.l.s8.bf16 %v506
    %v1675 = vunpack.c.l.s8.bf16 %v507
    %v1676 = vunpack.c.l.s8.bf16 %v508
    %v1677 = vunpack.c.l.s8.bf16 %v509
    %v1678 = vunpack.c.l.s8.bf16 %v510
    %v1679 = vunpack.c.l.s8.bf16 %v511
    %v1680 = vunpack.c.l.s8.bf16 %v512
    %v1681 = vunpack.c.h.s8.bf16 %v497
    %v1682 = vunpack.c.h.s8.bf16 %v498
    %v1683 = vunpack.c.h.s8.bf16 %v499
    %v1684 = vunpack.c.h.s8.bf16 %v500
    %v1685 = vunpack.c.h.s8.bf16 %v501
    %v1686 = vunpack.c.h.s8.bf16 %v502
    %v1687 = vunpack.c.h.s8.bf16 %v503
    %v1688 = vunpack.c.h.s8.bf16 %v504
    %v1689 = vunpack.c.h.s8.bf16 %v505
    %v1690 = vunpack.c.h.s8.bf16 %v506
    %v1691 = vunpack.c.h.s8.bf16 %v507
    %v1692 = vunpack.c.h.s8.bf16 %v508
    %v1693 = vunpack.c.h.s8.bf16 %v509
    %v1694 = vunpack.c.h.s8.bf16 %v510
    %v1695 = vunpack.c.h.s8.bf16 %v511
    %v1696 = vunpack.c.h.s8.bf16 %v512
    %v1697 = vunpack.c.l.s8.bf16 %v513
    %v1698 = vunpack.c.l.s8.bf16 %v514
    %v1699 = vunpack.c.l.s8.bf16 %v515
    %v1700 = vunpack.c.l.s8.bf16 %v516
    %v1701 = vunpack.c.l.s8.bf16 %v517
    %v1702 = vunpack.c.l.s8.bf16 %v518
    %v1703 = vunpack.c.l.s8.bf16 %v519
    %v1704 = vunpack.c.l.s8.bf16 %v520
    %v1705 = vunpack.c.l.s8.bf16 %v521
    %v1706 = vunpack.c.l.s8.bf16 %v522
    %v1707 = vunpack.c.l.s8.bf16 %v523
    %v1708 = vunpack.c.l.s8.bf16 %v524
    %v1709 = vunpack.c.l.s8.bf16 %v525
    %v1710 = vunpack.c.l.s8.bf16 %v526
    %v1711 = vunpack.c.l.s8.bf16 %v527
    %v1712 = vunpack.c.l.s8.bf16 %v528
    %v1713 = vunpack.c.h.s8.bf16 %v513
    %v1714 = vunpack.c.h.s8.bf16 %v514
    %v1715 = vunpack.c.h.s8.bf16 %v515
    %v1716 = vunpack.c.h.s8.bf16 %v516
    %v1717 = vunpack.c.h.s8.bf16 %v517
    %v1718 = vunpack.c.h.s8.bf16 %v518
    %v1719 = vunpack.c.h.s8.bf16 %v519
    %v1720 = vunpack.c.h.s8.bf16 %v520
    %v1721 = vunpack.c.h.s8.bf16 %v521
    %v1722 = vunpack.c.h.s8.bf16 %v522
    %v1723 = vunpack.c.h.s8.bf16 %v523
    %v1724 = vunpack.c.h.s8.bf16 %v524
    %v1725 = vunpack.c.h.s8.bf16 %v525
    %v1726 = vunpack.c.h.s8.bf16 %v526
    %v1727 = vunpack.c.h.s8.bf16 %v527
    %v1728 = vunpack.c.h.s8.bf16 %v528
    %v1729 = vunpack.c.l.s8.bf16 %v529
    %v1730 = vunpack.c.l.s8.bf16 %v530
    %v1731 = vunpack.c.l.s8.bf16 %v531
    %v1732 = vunpack.c.l.s8.bf16 %v532
    %v1733 = vunpack.c.l.s8.bf16 %v533
    %v1734 = vunpack.c.l.s8.bf16 %v534
    %v1735 = vunpack.c.l.s8.bf16 %v535
    %v1736 = vunpack.c.l.s8.bf16 %v536
    %v1737 = vunpack.c.l.s8.bf16 %v537
    %v1738 = vunpack.c.l.s8.bf16 %v538
    %v1739 = vunpack.c.l.s8.bf16 %v539
    %v1740 = vunpack.c.l.s8.bf16 %v540
    %v1741 = vunpack.c.l.s8.bf16 %v541
    %v1742 = vunpack.c.l.s8.bf16 %v542
    %v1743 = vunpack.c.l.s8.bf16 %v543
    %v1744 = vunpack.c.l.s8.bf16 %v544
    %v1745 = vunpack.c.h.s8.bf16 %v529
    %v1746 = vunpack.c.h.s8.bf16 %v530
    %v1747 = vunpack.c.h.s8.bf16 %v531
    %v1748 = vunpack.c.h.s8.bf16 %v532
    %v1749 = vunpack.c.h.s8.bf16 %v533
    %v1750 = vunpack.c.h.s8.bf16 %v534
    %v1751 = vunpack.c.h.s8.bf16 %v535
    %v1752 = vunpack.c.h.s8.bf16 %v536
    %v1753 = vunpack.c.h.s8.bf16 %v537
    %v1754 = vunpack.c.h.s8.bf16 %v538
    %v1755 = vunpack.c.h.s8.bf16 %v539
    %v1756 = vunpack.c.h.s8.bf16 %v540
    %v1757 = vunpack.c.h.s8.bf16 %v541
    %v1758 = vunpack.c.h.s8.bf16 %v542
    %v1759 = vunpack.c.h.s8.bf16 %v543
    %v1760 = vunpack.c.h.s8.bf16 %v544
    %v1761 = vunpack.c.l.s8.bf16 %v545
    %v1762 = vunpack.c.l.s8.bf16 %v546
    %v1763 = vunpack.c.l.s8.bf16 %v547
    %v1764 = vunpack.c.l.s8.bf16 %v548
    %v1765 = vunpack.c.l.s8.bf16 %v549
    %v1766 = vunpack.c.l.s8.bf16 %v550
    %v1767 = vunpack.c.l.s8.bf16 %v551
    %v1768 = vunpack.c.l.s8.bf16 %v552
    %v1769 = vunpack.c.l.s8.bf16 %v553
    %v1770 = vunpack.c.l.s8.bf16 %v554
    %v1771 = vunpack.c.l.s8.bf16 %v555
    %v1772 = vunpack.c.l.s8.bf16 %v556
    %v1773 = vunpack.c.l.s8.bf16 %v557
    %v1774 = vunpack.c.l.s8.bf16 %v558
    %v1775 = vunpack.c.l.s8.bf16 %v559
    %v1776 = vunpack.c.l.s8.bf16 %v560
    %v1777 = vunpack.c.h.s8.bf16 %v545
    %v1778 = vunpack.c.h.s8.bf16 %v546
    %v1779 = vunpack.c.h.s8.bf16 %v547
    %v1780 = vunpack.c.h.s8.bf16 %v548
    %v1781 = vunpack.c.h.s8.bf16 %v549
    %v1782 = vunpack.c.h.s8.bf16 %v550
    %v1783 = vunpack.c.h.s8.bf16 %v551
    %v1784 = vunpack.c.h.s8.bf16 %v552
    %v1785 = vunpack.c.h.s8.bf16 %v553
    %v1786 = vunpack.c.h.s8.bf16 %v554
    %v1787 = vunpack.c.h.s8.bf16 %v555
    %v1788 = vunpack.c.h.s8.bf16 %v556
    %v1789 = vunpack.c.h.s8.bf16 %v557
    %v1790 = vunpack.c.h.s8.bf16 %v558
    %v1791 = vunpack.c.h.s8.bf16 %v559
    %v1792 = vunpack.c.h.s8.bf16 %v560
    %v1793 = vunpack.c.l.s8.bf16 %v561
    %v1794 = vunpack.c.l.s8.bf16 %v562
    %v1795 = vunpack.c.l.s8.bf16 %v563
    %v1796 = vunpack.c.l.s8.bf16 %v564
    %v1797 = vunpack.c.l.s8.bf16 %v565
    %v1798 = vunpack.c.l.s8.bf16 %v566
    %v1799 = vunpack.c.l.s8.bf16 %v567
    %v1800 = vunpack.c.l.s8.bf16 %v568
    %v1801 = vunpack.c.l.s8.bf16 %v569
    %v1802 = vunpack.c.l.s8.bf16 %v570
    %v1803 = vunpack.c.l.s8.bf16 %v571
    %v1804 = vunpack.c.l.s8.bf16 %v572
    %v1805 = vunpack.c.l.s8.bf16 %v573
    %v1806 = vunpack.c.l.s8.bf16 %v574
    %v1807 = vunpack.c.l.s8.bf16 %v575
    %v1808 = vunpack.c.l.s8.bf16 %v576
    %v1809 = vunpack.c.h.s8.bf16 %v561
    %v1810 = vunpack.c.h.s8.bf16 %v562
    %v1811 = vunpack.c.h.s8.bf16 %v563
    %v1812 = vunpack.c.h.s8.bf16 %v564
    %v1813 = vunpack.c.h.s8.bf16 %v565
    %v1814 = vunpack.c.h.s8.bf16 %v566
    %v1815 = vunpack.c.h.s8.bf16 %v567
    %v1816 = vunpack.c.h.s8.bf16 %v568
    %v1817 = vunpack.c.h.s8.bf16 %v569
    %v1818 = vunpack.c.h.s8.bf16 %v570
    %v1819 = vunpack.c.h.s8.bf16 %v571
    %v1820 = vunpack.c.h.s8.bf16 %v572
    %v1821 = vunpack.c.h.s8.bf16 %v573
    %v1822 = vunpack.c.h.s8.bf16 %v574
    %v1823 = vunpack.c.h.s8.bf16 %v575
    %v1824 = vunpack.c.h.s8.bf16 %v576
    %v1825 = vunpack.c.l.s8.bf16 %v577
    %v1826 = vunpack.c.l.s8.bf16 %v578
    %v1827 = vunpack.c.l.s8.bf16 %v579
    %v1828 = vunpack.c.l.s8.bf16 %v580
    %v1829 = vunpack.c.l.s8.bf16 %v581
    %v1830 = vunpack.c.l.s8.bf16 %v582
    %v1831 = vunpack.c.l.s8.bf16 %v583
    %v1832 = vunpack.c.l.s8.bf16 %v584
    %v1833 = vunpack.c.l.s8.bf16 %v585
    %v1834 = vunpack.c.l.s8.bf16 %v586
    %v1835 = vunpack.c.l.s8.bf16 %v587
    %v1836 = vunpack.c.l.s8.bf16 %v588
    %v1837 = vunpack.c.l.s8.bf16 %v589
    %v1838 = vunpack.c.l.s8.bf16 %v590
    %v1839 = vunpack.c.l.s8.bf16 %v591
    %v1840 = vunpack.c.l.s8.bf16 %v592
    %v1841 = vunpack.c.h.s8.bf16 %v577
    %v1842 = vunpack.c.h.s8.bf16 %v578
    %v1843 = vunpack.c.h.s8.bf16 %v579
    %v1844 = vunpack.c.h.s8.bf16 %v580
    %v1845 = vunpack.c.h.s8.bf16 %v581
    %v1846 = vunpack.c.h.s8.bf16 %v582
    %v1847 = vunpack.c.h.s8.bf16 %v583
    %v1848 = vunpack.c.h.s8.bf16 %v584
    %v1849 = vunpack.c.h.s8.bf16 %v585
    %v1850 = vunpack.c.h.s8.bf16 %v586
    %v1851 = vunpack.c.h.s8.bf16 %v587
    %v1852 = vunpack.c.h.s8.bf16 %v588
    %v1853 = vunpack.c.h.s8.bf16 %v589
    %v1854 = vunpack.c.h.s8.bf16 %v590
    %v1855 = vunpack.c.h.s8.bf16 %v591
    %v1856 = vunpack.c.h.s8.bf16 %v592
    %v1857 = vunpack.c.l.s8.bf16 %v593
    %v1858 = vunpack.c.l.s8.bf16 %v594
    %v1859 = vunpack.c.l.s8.bf16 %v595
    %v1860 = vunpack.c.l.s8.bf16 %v596
    %v1861 = vunpack.c.l.s8.bf16 %v597
    %v1862 = vunpack.c.l.s8.bf16 %v598
    %v1863 = vunpack.c.l.s8.bf16 %v599
    %v1864 = vunpack.c.l.s8.bf16 %v600
    %v1865 = vunpack.c.l.s8.bf16 %v601
    %v1866 = vunpack.c.l.s8.bf16 %v602
    %v1867 = vunpack.c.l.s8.bf16 %v603
    %v1868 = vunpack.c.l.s8.bf16 %v604
    %v1869 = vunpack.c.l.s8.bf16 %v605
    %v1870 = vunpack.c.l.s8.bf16 %v606
    %v1871 = vunpack.c.l.s8.bf16 %v607
    %v1872 = vunpack.c.l.s8.bf16 %v608
    %v1873 = vunpack.c.h.s8.bf16 %v593
    %v1874 = vunpack.c.h.s8.bf16 %v594
    %v1875 = vunpack.c.h.s8.bf16 %v595
    %v1876 = vunpack.c.h.s8.bf16 %v596
    %v1877 = vunpack.c.h.s8.bf16 %v597
    %v1878 = vunpack.c.h.s8.bf16 %v598
    %v1879 = vunpack.c.h.s8.bf16 %v599
    %v1880 = vunpack.c.h.s8.bf16 %v600
    %v1881 = vunpack.c.h.s8.bf16 %v601
    %v1882 = vunpack.c.h.s8.bf16 %v602
    %v1883 = vunpack.c.h.s8.bf16 %v603
    %v1884 = vunpack.c.h.s8.bf16 %v604
    %v1885 = vunpack.c.h.s8.bf16 %v605
    %v1886 = vunpack.c.h.s8.bf16 %v606
    %v1887 = vunpack.c.h.s8.bf16 %v607
    %v1888 = vunpack.c.h.s8.bf16 %v608
    %v1889 = vunpack.c.l.s8.bf16 %v609
    %v1890 = vunpack.c.l.s8.bf16 %v610
    %v1891 = vunpack.c.l.s8.bf16 %v611
    %v1892 = vunpack.c.l.s8.bf16 %v612
    %v1893 = vunpack.c.l.s8.bf16 %v613
    %v1894 = vunpack.c.l.s8.bf16 %v614
    %v1895 = vunpack.c.l.s8.bf16 %v615
    %v1896 = vunpack.c.l.s8.bf16 %v616
    %v1897 = vunpack.c.l.s8.bf16 %v617
    %v1898 = vunpack.c.l.s8.bf16 %v618
    %v1899 = vunpack.c.l.s8.bf16 %v619
    %v1900 = vunpack.c.l.s8.bf16 %v620
    %v1901 = vunpack.c.l.s8.bf16 %v621
    %v1902 = vunpack.c.l.s8.bf16 %v622
    %v1903 = vunpack.c.l.s8.bf16 %v623
    %v1904 = vunpack.c.l.s8.bf16 %v624
    %v1905 = vunpack.c.h.s8.bf16 %v609
    %v1906 = vunpack.c.h.s8.bf16 %v610
    %v1907 = vunpack.c.h.s8.bf16 %v611
    %v1908 = vunpack.c.h.s8.bf16 %v612
    %v1909 = vunpack.c.h.s8.bf16 %v613
    %v1910 = vunpack.c.h.s8.bf16 %v614
    %v1911 = vunpack.c.h.s8.bf16 %v615
    %v1912 = vunpack.c.h.s8.bf16 %v616
    %v1913 = vunpack.c.h.s8.bf16 %v617
    %v1914 = vunpack.c.h.s8.bf16 %v618
    %v1915 = vunpack.c.h.s8.bf16 %v619
    %v1916 = vunpack.c.h.s8.bf16 %v620
    %v1917 = vunpack.c.h.s8.bf16 %v621
    %v1918 = vunpack.c.h.s8.bf16 %v622
    %v1919 = vunpack.c.h.s8.bf16 %v623
    %v1920 = vunpack.c.h.s8.bf16 %v624
    %v1921 = vunpack.c.l.s8.bf16 %v625
    %v1922 = vunpack.c.l.s8.bf16 %v626
    %v1923 = vunpack.c.l.s8.bf16 %v627
    %v1924 = vunpack.c.l.s8.bf16 %v628
    %v1925 = vunpack.c.l.s8.bf16 %v629
    %v1926 = vunpack.c.l.s8.bf16 %v630
    %v1927 = vunpack.c.l.s8.bf16 %v631
    %v1928 = vunpack.c.l.s8.bf16 %v632
    %v1929 = vunpack.c.l.s8.bf16 %v633
    %v1930 = vunpack.c.l.s8.bf16 %v634
    %v1931 = vunpack.c.l.s8.bf16 %v635
    %v1932 = vunpack.c.l.s8.bf16 %v636
    %v1933 = vunpack.c.l.s8.bf16 %v637
    %v1934 = vunpack.c.l.s8.bf16 %v638
    %v1935 = vunpack.c.l.s8.bf16 %v639
    %v1936 = vunpack.c.l.s8.bf16 %v640
    %v1937 = vunpack.c.h.s8.bf16 %v625
    %v1938 = vunpack.c.h.s8.bf16 %v626
    %v1939 = vunpack.c.h.s8.bf16 %v627
    %v1940 = vunpack.c.h.s8.bf16 %v628
    %v1941 = vunpack.c.h.s8.bf16 %v629
    %v1942 = vunpack.c.h.s8.bf16 %v630
    %v1943 = vunpack.c.h.s8.bf16 %v631
    %v1944 = vunpack.c.h.s8.bf16 %v632
    %v1945 = vunpack.c.h.s8.bf16 %v633
    %v1946 = vunpack.c.h.s8.bf16 %v634
    %v1947 = vunpack.c.h.s8.bf16 %v635
    %v1948 = vunpack.c.h.s8.bf16 %v636
    %v1949 = vunpack.c.h.s8.bf16 %v637
    %v1950 = vunpack.c.h.s8.bf16 %v638
    %v1951 = vunpack.c.h.s8.bf16 %v639
    %v1952 = vunpack.c.h.s8.bf16 %v640
    %v1953 = vunpack.c.l.s8.bf16 %v641
    %v1954 = vunpack.c.l.s8.bf16 %v642
    %v1955 = vunpack.c.l.s8.bf16 %v643
    %v1956 = vunpack.c.l.s8.bf16 %v644
    %v1957 = vunpack.c.l.s8.bf16 %v645
    %v1958 = vunpack.c.l.s8.bf16 %v646
    %v1959 = vunpack.c.l.s8.bf16 %v647
    %v1960 = vunpack.c.l.s8.bf16 %v648
    %v1961 = vunpack.c.l.s8.bf16 %v649
    %v1962 = vunpack.c.l.s8.bf16 %v650
    %v1963 = vunpack.c.l.s8.bf16 %v651
    %v1964 = vunpack.c.l.s8.bf16 %v652
    %v1965 = vunpack.c.l.s8.bf16 %v653
    %v1966 = vunpack.c.l.s8.bf16 %v654
    %v1967 = vunpack.c.l.s8.bf16 %v655
    %v1968 = vunpack.c.l.s8.bf16 %v656
    %v1969 = vunpack.c.h.s8.bf16 %v641
    %v1970 = vunpack.c.h.s8.bf16 %v642
    %v1971 = vunpack.c.h.s8.bf16 %v643
    %v1972 = vunpack.c.h.s8.bf16 %v644
    %v1973 = vunpack.c.h.s8.bf16 %v645
    %v1974 = vunpack.c.h.s8.bf16 %v646
    %v1975 = vunpack.c.h.s8.bf16 %v647
    %v1976 = vunpack.c.h.s8.bf16 %v648
    %v1977 = vunpack.c.h.s8.bf16 %v649
    %v1978 = vunpack.c.h.s8.bf16 %v650
    %v1979 = vunpack.c.h.s8.bf16 %v651
    %v1980 = vunpack.c.h.s8.bf16 %v652
    %v1981 = vunpack.c.h.s8.bf16 %v653
    %v1982 = vunpack.c.h.s8.bf16 %v654
    %v1983 = vunpack.c.h.s8.bf16 %v655
    %v1984 = vunpack.c.h.s8.bf16 %v656
    %v1985 = vunpack.c.l.s8.bf16 %v657
    %v1986 = vunpack.c.l.s8.bf16 %v658
    %v1987 = vunpack.c.l.s8.bf16 %v659
    %v1988 = vunpack.c.l.s8.bf16 %v660
    %v1989 = vunpack.c.l.s8.bf16 %v661
    %v1990 = vunpack.c.l.s8.bf16 %v662
    %v1991 = vunpack.c.l.s8.bf16 %v663
    %v1992 = vunpack.c.l.s8.bf16 %v664
    %v1993 = vunpack.c.l.s8.bf16 %v665
    %v1994 = vunpack.c.l.s8.bf16 %v666
    %v1995 = vunpack.c.l.s8.bf16 %v667
    %v1996 = vunpack.c.l.s8.bf16 %v668
    %v1997 = vunpack.c.l.s8.bf16 %v669
    %v1998 = vunpack.c.l.s8.bf16 %v670
    %v1999 = vunpack.c.l.s8.bf16 %v671
    %v2000 = vunpack.c.l.s8.bf16 %v672
    %v2001 = vunpack.c.h.s8.bf16 %v657
    %v2002 = vunpack.c.h.s8.bf16 %v658
    %v2003 = vunpack.c.h.s8.bf16 %v659
    %v2004 = vunpack.c.h.s8.bf16 %v660
    %v2005 = vunpack.c.h.s8.bf16 %v661
    %v2006 = vunpack.c.h.s8.bf16 %v662
    %v2007 = vunpack.c.h.s8.bf16 %v663
    %v2008 = vunpack.c.h.s8.bf16 %v664
    %v2009 = vunpack.c.h.s8.bf16 %v665
    %v2010 = vunpack.c.h.s8.bf16 %v666
    %v2011 = vunpack.c.h.s8.bf16 %v667
    %v2012 = vunpack.c.h.s8.bf16 %v668
    %v2013 = vunpack.c.h.s8.bf16 %v669
    %v2014 = vunpack.c.h.s8.bf16 %v670
    %v2015 = vunpack.c.h.s8.bf16 %v671
    %v2016 = vunpack.c.h.s8.bf16 %v672
    %v2017 = vunpack.c.l.s8.bf16 %v673
    %v2018 = vunpack.c.l.s8.bf16 %v674
    %v2019 = vunpack.c.l.s8.bf16 %v675
    %v2020 = vunpack.c.l.s8.bf16 %v676
    %v2021 = vunpack.c.l.s8.bf16 %v677
    %v2022 = vunpack.c.l.s8.bf16 %v678
    %v2023 = vunpack.c.l.s8.bf16 %v679
    %v2024 = vunpack.c.l.s8.bf16 %v680
    %v2025 = vunpack.c.l.s8.bf16 %v681
    %v2026 = vunpack.c.l.s8.bf16 %v682
    %v2027 = vunpack.c.l.s8.bf16 %v683
    %v2028 = vunpack.c.l.s8.bf16 %v684
    %v2029 = vunpack.c.l.s8.bf16 %v685
    %v2030 = vunpack.c.l.s8.bf16 %v686
    %v2031 = vunpack.c.l.s8.bf16 %v687
    %v2032 = vunpack.c.l.s8.bf16 %v688
    %v2033 = vunpack.c.h.s8.bf16 %v673
    %v2034 = vunpack.c.h.s8.bf16 %v674
    %v2035 = vunpack.c.h.s8.bf16 %v675
    %v2036 = vunpack.c.h.s8.bf16 %v676
    %v2037 = vunpack.c.h.s8.bf16 %v677
    %v2038 = vunpack.c.h.s8.bf16 %v678
    %v2039 = vunpack.c.h.s8.bf16 %v679
    %v2040 = vunpack.c.h.s8.bf16 %v680
    %v2041 = vunpack.c.h.s8.bf16 %v681
    %v2042 = vunpack.c.h.s8.bf16 %v682
    %v2043 = vunpack.c.h.s8.bf16 %v683
    %v2044 = vunpack.c.h.s8.bf16 %v684
    %v2045 = vunpack.c.h.s8.bf16 %v685
    %v2046 = vunpack.c.h.s8.bf16 %v686
    %v2047 = vunpack.c.h.s8.bf16 %v687
    %v2048 = vunpack.c.h.s8.bf16 %v688
    %v2049 = vunpack.c.l.s8.bf16 %v689
    %v2050 = vunpack.c.l.s8.bf16 %v690
    %v2051 = vunpack.c.l.s8.bf16 %v691
    %v2052 = vunpack.c.l.s8.bf16 %v692
    %v2053 = vunpack.c.l.s8.bf16 %v693
    %v2054 = vunpack.c.l.s8.bf16 %v694
    %v2055 = vunpack.c.l.s8.bf16 %v695
    %v2056 = vunpack.c.l.s8.bf16 %v696
    %v2057 = vunpack.c.l.s8.bf16 %v697
    %v2058 = vunpack.c.l.s8.bf16 %v698
    %v2059 = vunpack.c.l.s8.bf16 %v699
    %v2060 = vunpack.c.l.s8.bf16 %v700
    %v2061 = vunpack.c.l.s8.bf16 %v701
    %v2062 = vunpack.c.l.s8.bf16 %v702
    %v2063 = vunpack.c.l.s8.bf16 %v703
    %v2064 = vunpack.c.l.s8.bf16 %v704
    %v2065 = vunpack.c.h.s8.bf16 %v689
    %v2066 = vunpack.c.h.s8.bf16 %v690
    %v2067 = vunpack.c.h.s8.bf16 %v691
    %v2068 = vunpack.c.h.s8.bf16 %v692
    %v2069 = vunpack.c.h.s8.bf16 %v693
    %v2070 = vunpack.c.h.s8.bf16 %v694
    %v2071 = vunpack.c.h.s8.bf16 %v695
    %v2072 = vunpack.c.h.s8.bf16 %v696
    %v2073 = vunpack.c.h.s8.bf16 %v697
    %v2074 = vunpack.c.h.s8.bf16 %v698
    %v2075 = vunpack.c.h.s8.bf16 %v699
    %v2076 = vunpack.c.h.s8.bf16 %v700
    %v2077 = vunpack.c.h.s8.bf16 %v701
    %v2078 = vunpack.c.h.s8.bf16 %v702
    %v2079 = vunpack.c.h.s8.bf16 %v703
    %v2080 = vunpack.c.h.s8.bf16 %v704
    %v2081 = vunpack.c.l.s8.bf16 %v705
    %v2082 = vunpack.c.l.s8.bf16 %v706
    %v2083 = vunpack.c.l.s8.bf16 %v707
    %v2084 = vunpack.c.l.s8.bf16 %v708
    %v2085 = vunpack.c.l.s8.bf16 %v709
    %v2086 = vunpack.c.l.s8.bf16 %v710
    %v2087 = vunpack.c.l.s8.bf16 %v711
    %v2088 = vunpack.c.l.s8.bf16 %v712
    %v2089 = vunpack.c.l.s8.bf16 %v713
    %v2090 = vunpack.c.l.s8.bf16 %v714
    %v2091 = vunpack.c.l.s8.bf16 %v715
    %v2092 = vunpack.c.l.s8.bf16 %v716
    %v2093 = vunpack.c.l.s8.bf16 %v717
    %v2094 = vunpack.c.l.s8.bf16 %v718
    %v2095 = vunpack.c.l.s8.bf16 %v719
    %v2096 = vunpack.c.l.s8.bf16 %v720
    %v2097 = vunpack.c.h.s8.bf16 %v705
    %v2098 = vunpack.c.h.s8.bf16 %v706
    %v2099 = vunpack.c.h.s8.bf16 %v707
    %v2100 = vunpack.c.h.s8.bf16 %v708
    %v2101 = vunpack.c.h.s8.bf16 %v709
    %v2102 = vunpack.c.h.s8.bf16 %v710
    %v2103 = vunpack.c.h.s8.bf16 %v711
    %v2104 = vunpack.c.h.s8.bf16 %v712
    %v2105 = vunpack.c.h.s8.bf16 %v713
    %v2106 = vunpack.c.h.s8.bf16 %v714
    %v2107 = vunpack.c.h.s8.bf16 %v715
    %v2108 = vunpack.c.h.s8.bf16 %v716
    %v2109 = vunpack.c.h.s8.bf16 %v717
    %v2110 = vunpack.c.h.s8.bf16 %v718
    %v2111 = vunpack.c.h.s8.bf16 %v719
    %v2112 = vunpack.c.h.s8.bf16 %v720
    %v2113 = vunpack.c.l.s8.bf16 %v721
    %v2114 = vunpack.c.l.s8.bf16 %v722
    %v2115 = vunpack.c.l.s8.bf16 %v723
    %v2116 = vunpack.c.l.s8.bf16 %v724
    %v2117 = vunpack.c.l.s8.bf16 %v725
    %v2118 = vunpack.c.l.s8.bf16 %v726
    %v2119 = vunpack.c.l.s8.bf16 %v727
    %v2120 = vunpack.c.l.s8.bf16 %v728
    %v2121 = vunpack.c.l.s8.bf16 %v729
    %v2122 = vunpack.c.l.s8.bf16 %v730
    %v2123 = vunpack.c.l.s8.bf16 %v731
    %v2124 = vunpack.c.l.s8.bf16 %v732
    %v2125 = vunpack.c.l.s8.bf16 %v733
    %v2126 = vunpack.c.l.s8.bf16 %v734
    %v2127 = vunpack.c.l.s8.bf16 %v735
    %v2128 = vunpack.c.l.s8.bf16 %v736
    %v2129 = vunpack.c.h.s8.bf16 %v721
    %v2130 = vunpack.c.h.s8.bf16 %v722
    %v2131 = vunpack.c.h.s8.bf16 %v723
    %v2132 = vunpack.c.h.s8.bf16 %v724
    %v2133 = vunpack.c.h.s8.bf16 %v725
    %v2134 = vunpack.c.h.s8.bf16 %v726
    %v2135 = vunpack.c.h.s8.bf16 %v727
    %v2136 = vunpack.c.h.s8.bf16 %v728
    %v2137 = vunpack.c.h.s8.bf16 %v729
    %v2138 = vunpack.c.h.s8.bf16 %v730
    %v2139 = vunpack.c.h.s8.bf16 %v731
    %v2140 = vunpack.c.h.s8.bf16 %v732
    %v2141 = vunpack.c.h.s8.bf16 %v733
    %v2142 = vunpack.c.h.s8.bf16 %v734
    %v2143 = vunpack.c.h.s8.bf16 %v735
    %v2144 = vunpack.c.h.s8.bf16 %v736
    %v2145 = vunpack.c.l.s8.bf16 %v737
    %v2146 = vunpack.c.l.s8.bf16 %v738
    %v2147 = vunpack.c.l.s8.bf16 %v739
    %v2148 = vunpack.c.l.s8.bf16 %v740
    %v2149 = vunpack.c.l.s8.bf16 %v741
    %v2150 = vunpack.c.l.s8.bf16 %v742
    %v2151 = vunpack.c.l.s8.bf16 %v743
    %v2152 = vunpack.c.l.s8.bf16 %v744
    %v2153 = vunpack.c.l.s8.bf16 %v745
    %v2154 = vunpack.c.l.s8.bf16 %v746
    %v2155 = vunpack.c.l.s8.bf16 %v747
    %v2156 = vunpack.c.l.s8.bf16 %v748
    %v2157 = vunpack.c.l.s8.bf16 %v749
    %v2158 = vunpack.c.l.s8.bf16 %v750
    %v2159 = vunpack.c.l.s8.bf16 %v751
    %v2160 = vunpack.c.l.s8.bf16 %v752
    %v2161 = vunpack.c.h.s8.bf16 %v737
    %v2162 = vunpack.c.h.s8.bf16 %v738
    %v2163 = vunpack.c.h.s8.bf16 %v739
    %v2164 = vunpack.c.h.s8.bf16 %v740
    %v2165 = vunpack.c.h.s8.bf16 %v741
    %v2166 = vunpack.c.h.s8.bf16 %v742
    %v2167 = vunpack.c.h.s8.bf16 %v743
    %v2168 = vunpack.c.h.s8.bf16 %v744
    %v2169 = vunpack.c.h.s8.bf16 %v745
    %v2170 = vunpack.c.h.s8.bf16 %v746
    %v2171 = vunpack.c.h.s8.bf16 %v747
    %v2172 = vunpack.c.h.s8.bf16 %v748
    %v2173 = vunpack.c.h.s8.bf16 %v749
    %v2174 = vunpack.c.h.s8.bf16 %v750
    %v2175 = vunpack.c.h.s8.bf16 %v751
    %v2176 = vunpack.c.h.s8.bf16 %v752
    %v2177 = vunpack.c.l.s8.bf16 %v753
    %v2178 = vunpack.c.l.s8.bf16 %v754
    %v2179 = vunpack.c.l.s8.bf16 %v755
    %v2180 = vunpack.c.l.s8.bf16 %v756
    %v2181 = vunpack.c.l.s8.bf16 %v757
    %v2182 = vunpack.c.l.s8.bf16 %v758
    %v2183 = vunpack.c.l.s8.bf16 %v759
    %v2184 = vunpack.c.l.s8.bf16 %v760
    %v2185 = vunpack.c.l.s8.bf16 %v761
    %v2186 = vunpack.c.l.s8.bf16 %v762
    %v2187 = vunpack.c.l.s8.bf16 %v763
    %v2188 = vunpack.c.l.s8.bf16 %v764
    %v2189 = vunpack.c.l.s8.bf16 %v765
    %v2190 = vunpack.c.l.s8.bf16 %v766
    %v2191 = vunpack.c.l.s8.bf16 %v767
    %v2192 = vunpack.c.l.s8.bf16 %v768
    %v2193 = vunpack.c.h.s8.bf16 %v753
    %v2194 = vunpack.c.h.s8.bf16 %v754
    %v2195 = vunpack.c.h.s8.bf16 %v755
    %v2196 = vunpack.c.h.s8.bf16 %v756
    %v2197 = vunpack.c.h.s8.bf16 %v757
    %v2198 = vunpack.c.h.s8.bf16 %v758
    %v2199 = vunpack.c.h.s8.bf16 %v759
    %v2200 = vunpack.c.h.s8.bf16 %v760
    %v2201 = vunpack.c.h.s8.bf16 %v761
    %v2202 = vunpack.c.h.s8.bf16 %v762
    %v2203 = vunpack.c.h.s8.bf16 %v763
    %v2204 = vunpack.c.h.s8.bf16 %v764
    %v2205 = vunpack.c.h.s8.bf16 %v765
    %v2206 = vunpack.c.h.s8.bf16 %v766
    %v2207 = vunpack.c.h.s8.bf16 %v767
    %v2208 = vunpack.c.h.s8.bf16 %v768
    %v2209 = vunpack.c.l.s8.bf16 %v769
    %v2210 = vunpack.c.l.s8.bf16 %v770
    %v2211 = vunpack.c.l.s8.bf16 %v771
    %v2212 = vunpack.c.l.s8.bf16 %v772
    %v2213 = vunpack.c.l.s8.bf16 %v773
    %v2214 = vunpack.c.l.s8.bf16 %v774
    %v2215 = vunpack.c.l.s8.bf16 %v775
    %v2216 = vunpack.c.l.s8.bf16 %v776
    %v2217 = vunpack.c.l.s8.bf16 %v777
    %v2218 = vunpack.c.l.s8.bf16 %v778
    %v2219 = vunpack.c.l.s8.bf16 %v779
    %v2220 = vunpack.c.l.s8.bf16 %v780
    %v2221 = vunpack.c.l.s8.bf16 %v781
    %v2222 = vunpack.c.l.s8.bf16 %v782
    %v2223 = vunpack.c.l.s8.bf16 %v783
    %v2224 = vunpack.c.l.s8.bf16 %v784
    %v2225 = vunpack.c.h.s8.bf16 %v769
    %v2226 = vunpack.c.h.s8.bf16 %v770
    %v2227 = vunpack.c.h.s8.bf16 %v771
    %v2228 = vunpack.c.h.s8.bf16 %v772
    %v2229 = vunpack.c.h.s8.bf16 %v773
    %v2230 = vunpack.c.h.s8.bf16 %v774
    %v2231 = vunpack.c.h.s8.bf16 %v775
    %v2232 = vunpack.c.h.s8.bf16 %v776
    %v2233 = vunpack.c.h.s8.bf16 %v777
    %v2234 = vunpack.c.h.s8.bf16 %v778
    %v2235 = vunpack.c.h.s8.bf16 %v779
    %v2236 = vunpack.c.h.s8.bf16 %v780
    %v2237 = vunpack.c.h.s8.bf16 %v781
    %v2238 = vunpack.c.h.s8.bf16 %v782
    %v2239 = vunpack.c.h.s8.bf16 %v783
    %v2240 = vunpack.c.h.s8.bf16 %v784
    %v2241 = vunpack.c.l.s8.bf16 %v785
    %v2242 = vunpack.c.l.s8.bf16 %v786
    %v2243 = vunpack.c.l.s8.bf16 %v787
    %v2244 = vunpack.c.l.s8.bf16 %v788
    %v2245 = vunpack.c.l.s8.bf16 %v789
    %v2246 = vunpack.c.l.s8.bf16 %v790
    %v2247 = vunpack.c.l.s8.bf16 %v791
    %v2248 = vunpack.c.l.s8.bf16 %v792
    %v2249 = vunpack.c.l.s8.bf16 %v793
    %v2250 = vunpack.c.l.s8.bf16 %v794
    %v2251 = vunpack.c.l.s8.bf16 %v795
    %v2252 = vunpack.c.l.s8.bf16 %v796
    %v2253 = vunpack.c.l.s8.bf16 %v797
    %v2254 = vunpack.c.l.s8.bf16 %v798
    %v2255 = vunpack.c.l.s8.bf16 %v799
    %v2256 = vunpack.c.l.s8.bf16 %v800
    %v2257 = vunpack.c.h.s8.bf16 %v785
    %v2258 = vunpack.c.h.s8.bf16 %v786
    %v2259 = vunpack.c.h.s8.bf16 %v787
    %v2260 = vunpack.c.h.s8.bf16 %v788
    %v2261 = vunpack.c.h.s8.bf16 %v789
    %v2262 = vunpack.c.h.s8.bf16 %v790
    %v2263 = vunpack.c.h.s8.bf16 %v791
    %v2264 = vunpack.c.h.s8.bf16 %v792
    %v2265 = vunpack.c.h.s8.bf16 %v793
    %v2266 = vunpack.c.h.s8.bf16 %v794
    %v2267 = vunpack.c.h.s8.bf16 %v795
    %v2268 = vunpack.c.h.s8.bf16 %v796
    %v2269 = vunpack.c.h.s8.bf16 %v797
    %v2270 = vunpack.c.h.s8.bf16 %v798
    %v2271 = vunpack.c.h.s8.bf16 %v799
    %v2272 = vunpack.c.h.s8.bf16 %v800
    %v2273 = vunpack.c.l.s8.bf16 %v801
    %v2274 = vunpack.c.l.s8.bf16 %v802
    %v2275 = vunpack.c.l.s8.bf16 %v803
    %v2276 = vunpack.c.l.s8.bf16 %v804
    %v2277 = vunpack.c.l.s8.bf16 %v805
    %v2278 = vunpack.c.l.s8.bf16 %v806
    %v2279 = vunpack.c.l.s8.bf16 %v807
    %v2280 = vunpack.c.l.s8.bf16 %v808
    %v2281 = vunpack.c.l.s8.bf16 %v809
    %v2282 = vunpack.c.l.s8.bf16 %v810
    %v2283 = vunpack.c.l.s8.bf16 %v811
    %v2284 = vunpack.c.l.s8.bf16 %v812
    %v2285 = vunpack.c.l.s8.bf16 %v813
    %v2286 = vunpack.c.l.s8.bf16 %v814
    %v2287 = vunpack.c.l.s8.bf16 %v815
    %v2288 = vunpack.c.l.s8.bf16 %v816
    %v2289 = vunpack.c.h.s8.bf16 %v801
    %v2290 = vunpack.c.h.s8.bf16 %v802
    %v2291 = vunpack.c.h.s8.bf16 %v803
    %v2292 = vunpack.c.h.s8.bf16 %v804
    %v2293 = vunpack.c.h.s8.bf16 %v805
    %v2294 = vunpack.c.h.s8.bf16 %v806
    %v2295 = vunpack.c.h.s8.bf16 %v807
    %v2296 = vunpack.c.h.s8.bf16 %v808
    %v2297 = vunpack.c.h.s8.bf16 %v809
    %v2298 = vunpack.c.h.s8.bf16 %v810
    %v2299 = vunpack.c.h.s8.bf16 %v811
    %v2300 = vunpack.c.h.s8.bf16 %v812
    %v2301 = vunpack.c.h.s8.bf16 %v813
    %v2302 = vunpack.c.h.s8.bf16 %v814
    %v2303 = vunpack.c.h.s8.bf16 %v815
    %v2304 = vunpack.c.h.s8.bf16 %v816
    %v2305 = vunpack.c.l.s8.bf16 %v817
    %v2306 = vunpack.c.l.s8.bf16 %v818
    %v2307 = vunpack.c.l.s8.bf16 %v819
    %v2308 = vunpack.c.l.s8.bf16 %v820
    %v2309 = vunpack.c.l.s8.bf16 %v821
    %v2310 = vunpack.c.l.s8.bf16 %v822
    %v2311 = vunpack.c.l.s8.bf16 %v823
    %v2312 = vunpack.c.l.s8.bf16 %v824
    %v2313 = vunpack.c.l.s8.bf16 %v825
    %v2314 = vunpack.c.l.s8.bf16 %v826
    %v2315 = vunpack.c.l.s8.bf16 %v827
    %v2316 = vunpack.c.l.s8.bf16 %v828
    %v2317 = vunpack.c.l.s8.bf16 %v829
    %v2318 = vunpack.c.l.s8.bf16 %v830
    %v2319 = vunpack.c.l.s8.bf16 %v831
    %v2320 = vunpack.c.l.s8.bf16 %v832
    %v2321 = vunpack.c.h.s8.bf16 %v817
    %v2322 = vunpack.c.h.s8.bf16 %v818
    %v2323 = vunpack.c.h.s8.bf16 %v819
    %v2324 = vunpack.c.h.s8.bf16 %v820
    %v2325 = vunpack.c.h.s8.bf16 %v821
    %v2326 = vunpack.c.h.s8.bf16 %v822
    %v2327 = vunpack.c.h.s8.bf16 %v823
    %v2328 = vunpack.c.h.s8.bf16 %v824
    %v2329 = vunpack.c.h.s8.bf16 %v825
    %v2330 = vunpack.c.h.s8.bf16 %v826
    %v2331 = vunpack.c.h.s8.bf16 %v827
    %v2332 = vunpack.c.h.s8.bf16 %v828
    %v2333 = vunpack.c.h.s8.bf16 %v829
    %v2334 = vunpack.c.h.s8.bf16 %v830
    %v2335 = vunpack.c.h.s8.bf16 %v831
    %v2336 = vunpack.c.h.s8.bf16 %v832
    %v2337 = vunpack.c.l.s8.bf16 %v833
    %v2338 = vunpack.c.l.s8.bf16 %v834
    %v2339 = vunpack.c.l.s8.bf16 %v835
    %v2340 = vunpack.c.l.s8.bf16 %v836
    %v2341 = vunpack.c.l.s8.bf16 %v837
    %v2342 = vunpack.c.l.s8.bf16 %v838
    %v2343 = vunpack.c.l.s8.bf16 %v839
    %v2344 = vunpack.c.l.s8.bf16 %v840
    %v2345 = vunpack.c.l.s8.bf16 %v841
    %v2346 = vunpack.c.l.s8.bf16 %v842
    %v2347 = vunpack.c.l.s8.bf16 %v843
    %v2348 = vunpack.c.l.s8.bf16 %v844
    %v2349 = vunpack.c.l.s8.bf16 %v845
    %v2350 = vunpack.c.l.s8.bf16 %v846
    %v2351 = vunpack.c.l.s8.bf16 %v847
    %v2352 = vunpack.c.l.s8.bf16 %v848
    %v2353 = vunpack.c.h.s8.bf16 %v833
    %v2354 = vunpack.c.h.s8.bf16 %v834
    %v2355 = vunpack.c.h.s8.bf16 %v835
    %v2356 = vunpack.c.h.s8.bf16 %v836
    %v2357 = vunpack.c.h.s8.bf16 %v837
    %v2358 = vunpack.c.h.s8.bf16 %v838
    %v2359 = vunpack.c.h.s8.bf16 %v839
    %v2360 = vunpack.c.h.s8.bf16 %v840
    %v2361 = vunpack.c.h.s8.bf16 %v841
    %v2362 = vunpack.c.h.s8.bf16 %v842
    %v2363 = vunpack.c.h.s8.bf16 %v843
    %v2364 = vunpack.c.h.s8.bf16 %v844
    %v2365 = vunpack.c.h.s8.bf16 %v845
    %v2366 = vunpack.c.h.s8.bf16 %v846
    %v2367 = vunpack.c.h.s8.bf16 %v847
    %v2368 = vunpack.c.h.s8.bf16 %v848
    %v2369 = vunpack.c.l.s8.bf16 %v849
    %v2370 = vunpack.c.l.s8.bf16 %v850
    %v2371 = vunpack.c.l.s8.bf16 %v851
    %v2372 = vunpack.c.l.s8.bf16 %v852
    %v2373 = vunpack.c.l.s8.bf16 %v853
    %v2374 = vunpack.c.l.s8.bf16 %v854
    %v2375 = vunpack.c.l.s8.bf16 %v855
    %v2376 = vunpack.c.l.s8.bf16 %v856
    %v2377 = vunpack.c.l.s8.bf16 %v857
    %v2378 = vunpack.c.l.s8.bf16 %v858
    %v2379 = vunpack.c.l.s8.bf16 %v859
    %v2380 = vunpack.c.l.s8.bf16 %v860
    %v2381 = vunpack.c.l.s8.bf16 %v861
    %v2382 = vunpack.c.l.s8.bf16 %v862
    %v2383 = vunpack.c.l.s8.bf16 %v863
    %v2384 = vunpack.c.l.s8.bf16 %v864
    %v2385 = vunpack.c.h.s8.bf16 %v849
    %v2386 = vunpack.c.h.s8.bf16 %v850
    %v2387 = vunpack.c.h.s8.bf16 %v851
    %v2388 = vunpack.c.h.s8.bf16 %v852
    %v2389 = vunpack.c.h.s8.bf16 %v853
    %v2390 = vunpack.c.h.s8.bf16 %v854
    %v2391 = vunpack.c.h.s8.bf16 %v855
    %v2392 = vunpack.c.h.s8.bf16 %v856
    %v2393 = vunpack.c.h.s8.bf16 %v857
    %v2394 = vunpack.c.h.s8.bf16 %v858
    %v2395 = vunpack.c.h.s8.bf16 %v859
    %v2396 = vunpack.c.h.s8.bf16 %v860
    %v2397 = vunpack.c.h.s8.bf16 %v861
    %v2398 = vunpack.c.h.s8.bf16 %v862
    %v2399 = vunpack.c.h.s8.bf16 %v863
    %v2400 = vunpack.c.h.s8.bf16 %v864
    %v2401 = vunpack.c.l.s8.bf16 %v865
    %v2402 = vunpack.c.l.s8.bf16 %v866
    %v2403 = vunpack.c.l.s8.bf16 %v867
    %v2404 = vunpack.c.l.s8.bf16 %v868
    %v2405 = vunpack.c.l.s8.bf16 %v869
    %v2406 = vunpack.c.l.s8.bf16 %v870
    %v2407 = vunpack.c.l.s8.bf16 %v871
    %v2408 = vunpack.c.l.s8.bf16 %v872
    %v2409 = vunpack.c.l.s8.bf16 %v873
    %v2410 = vunpack.c.l.s8.bf16 %v874
    %v2411 = vunpack.c.l.s8.bf16 %v875
    %v2412 = vunpack.c.l.s8.bf16 %v876
    %v2413 = vunpack.c.l.s8.bf16 %v877
    %v2414 = vunpack.c.l.s8.bf16 %v878
    %v2415 = vunpack.c.l.s8.bf16 %v879
    %v2416 = vunpack.c.l.s8.bf16 %v880
    %v2417 = vunpack.c.h.s8.bf16 %v865
    %v2418 = vunpack.c.h.s8.bf16 %v866
    %v2419 = vunpack.c.h.s8.bf16 %v867
    %v2420 = vunpack.c.h.s8.bf16 %v868
    %v2421 = vunpack.c.h.s8.bf16 %v869
    %v2422 = vunpack.c.h.s8.bf16 %v870
    %v2423 = vunpack.c.h.s8.bf16 %v871
    %v2424 = vunpack.c.h.s8.bf16 %v872
    %v2425 = vunpack.c.h.s8.bf16 %v873
    %v2426 = vunpack.c.h.s8.bf16 %v874
    %v2427 = vunpack.c.h.s8.bf16 %v875
    %v2428 = vunpack.c.h.s8.bf16 %v876
    %v2429 = vunpack.c.h.s8.bf16 %v877
    %v2430 = vunpack.c.h.s8.bf16 %v878
    %v2431 = vunpack.c.h.s8.bf16 %v879
    %v2432 = vunpack.c.h.s8.bf16 %v880
    %v2433 = vunpack.c.l.s8.bf16 %v881
    %v2434 = vunpack.c.l.s8.bf16 %v882
    %v2435 = vunpack.c.l.s8.bf16 %v883
    %v2436 = vunpack.c.l.s8.bf16 %v884
    %v2437 = vunpack.c.l.s8.bf16 %v885
    %v2438 = vunpack.c.l.s8.bf16 %v886
    %v2439 = vunpack.c.l.s8.bf16 %v887
    %v2440 = vunpack.c.l.s8.bf16 %v888
    %v2441 = vunpack.c.l.s8.bf16 %v889
    %v2442 = vunpack.c.l.s8.bf16 %v890
    %v2443 = vunpack.c.l.s8.bf16 %v891
    %v2444 = vunpack.c.l.s8.bf16 %v892
    %v2445 = vunpack.c.l.s8.bf16 %v893
    %v2446 = vunpack.c.l.s8.bf16 %v894
    %v2447 = vunpack.c.l.s8.bf16 %v895
    %v2448 = vunpack.c.l.s8.bf16 %v896
    %v2449 = vunpack.c.h.s8.bf16 %v881
    %v2450 = vunpack.c.h.s8.bf16 %v882
    %v2451 = vunpack.c.h.s8.bf16 %v883
    %v2452 = vunpack.c.h.s8.bf16 %v884
    %v2453 = vunpack.c.h.s8.bf16 %v885
    %v2454 = vunpack.c.h.s8.bf16 %v886
    %v2455 = vunpack.c.h.s8.bf16 %v887
    %v2456 = vunpack.c.h.s8.bf16 %v888
    %v2457 = vunpack.c.h.s8.bf16 %v889
    %v2458 = vunpack.c.h.s8.bf16 %v890
    %v2459 = vunpack.c.h.s8.bf16 %v891
    %v2460 = vunpack.c.h.s8.bf16 %v892
    %v2461 = vunpack.c.h.s8.bf16 %v893
    %v2462 = vunpack.c.h.s8.bf16 %v894
    %v2463 = vunpack.c.h.s8.bf16 %v895
    %v2464 = vunpack.c.h.s8.bf16 %v896
    %v2465 = vunpack.c.l.s8.bf16 %v897
    %v2466 = vunpack.c.l.s8.bf16 %v898
    %v2467 = vunpack.c.l.s8.bf16 %v899
    %v2468 = vunpack.c.l.s8.bf16 %v900
    %v2469 = vunpack.c.l.s8.bf16 %v901
    %v2470 = vunpack.c.l.s8.bf16 %v902
    %v2471 = vunpack.c.l.s8.bf16 %v903
    %v2472 = vunpack.c.l.s8.bf16 %v904
    %v2473 = vunpack.c.l.s8.bf16 %v905
    %v2474 = vunpack.c.l.s8.bf16 %v906
    %v2475 = vunpack.c.l.s8.bf16 %v907
    %v2476 = vunpack.c.l.s8.bf16 %v908
    %v2477 = vunpack.c.l.s8.bf16 %v909
    %v2478 = vunpack.c.l.s8.bf16 %v910
    %v2479 = vunpack.c.l.s8.bf16 %v911
    %v2480 = vunpack.c.l.s8.bf16 %v912
    %v2481 = vunpack.c.h.s8.bf16 %v897
    %v2482 = vunpack.c.h.s8.bf16 %v898
    %v2483 = vunpack.c.h.s8.bf16 %v899
    %v2484 = vunpack.c.h.s8.bf16 %v900
    %v2485 = vunpack.c.h.s8.bf16 %v901
    %v2486 = vunpack.c.h.s8.bf16 %v902
    %v2487 = vunpack.c.h.s8.bf16 %v903
    %v2488 = vunpack.c.h.s8.bf16 %v904
    %v2489 = vunpack.c.h.s8.bf16 %v905
    %v2490 = vunpack.c.h.s8.bf16 %v906
    %v2491 = vunpack.c.h.s8.bf16 %v907
    %v2492 = vunpack.c.h.s8.bf16 %v908
    %v2493 = vunpack.c.h.s8.bf16 %v909
    %v2494 = vunpack.c.h.s8.bf16 %v910
    %v2495 = vunpack.c.h.s8.bf16 %v911
    %v2496 = vunpack.c.h.s8.bf16 %v912
    %v2497 = vunpack.c.l.s8.bf16 %v913
    %v2498 = vunpack.c.l.s8.bf16 %v914
    %v2499 = vunpack.c.l.s8.bf16 %v915
    %v2500 = vunpack.c.l.s8.bf16 %v916
    %v2501 = vunpack.c.l.s8.bf16 %v917
    %v2502 = vunpack.c.l.s8.bf16 %v918
    %v2503 = vunpack.c.l.s8.bf16 %v919
    %v2504 = vunpack.c.l.s8.bf16 %v920
    %v2505 = vunpack.c.l.s8.bf16 %v921
    %v2506 = vunpack.c.l.s8.bf16 %v922
    %v2507 = vunpack.c.l.s8.bf16 %v923
    %v2508 = vunpack.c.l.s8.bf16 %v924
    %v2509 = vunpack.c.l.s8.bf16 %v925
    %v2510 = vunpack.c.l.s8.bf16 %v926
    %v2511 = vunpack.c.l.s8.bf16 %v927
    %v2512 = vunpack.c.l.s8.bf16 %v928
    %v2513 = vunpack.c.h.s8.bf16 %v913
    %v2514 = vunpack.c.h.s8.bf16 %v914
    %v2515 = vunpack.c.h.s8.bf16 %v915
    %v2516 = vunpack.c.h.s8.bf16 %v916
    %v2517 = vunpack.c.h.s8.bf16 %v917
    %v2518 = vunpack.c.h.s8.bf16 %v918
    %v2519 = vunpack.c.h.s8.bf16 %v919
    %v2520 = vunpack.c.h.s8.bf16 %v920
    %v2521 = vunpack.c.h.s8.bf16 %v921
    %v2522 = vunpack.c.h.s8.bf16 %v922
    %v2523 = vunpack.c.h.s8.bf16 %v923
    %v2524 = vunpack.c.h.s8.bf16 %v924
    %v2525 = vunpack.c.h.s8.bf16 %v925
    %v2526 = vunpack.c.h.s8.bf16 %v926
    %v2527 = vunpack.c.h.s8.bf16 %v927
    %v2528 = vunpack.c.h.s8.bf16 %v928
    %v2529 = vunpack.c.l.s8.bf16 %v929
    %v2530 = vunpack.c.l.s8.bf16 %v930
    %v2531 = vunpack.c.l.s8.bf16 %v931
    %v2532 = vunpack.c.l.s8.bf16 %v932
    %v2533 = vunpack.c.l.s8.bf16 %v933
    %v2534 = vunpack.c.l.s8.bf16 %v934
    %v2535 = vunpack.c.l.s8.bf16 %v935
    %v2536 = vunpack.c.l.s8.bf16 %v936
    %v2537 = vunpack.c.l.s8.bf16 %v937
    %v2538 = vunpack.c.l.s8.bf16 %v938
    %v2539 = vunpack.c.l.s8.bf16 %v939
    %v2540 = vunpack.c.l.s8.bf16 %v940
    %v2541 = vunpack.c.l.s8.bf16 %v941
    %v2542 = vunpack.c.l.s8.bf16 %v942
    %v2543 = vunpack.c.l.s8.bf16 %v943
    %v2544 = vunpack.c.l.s8.bf16 %v944
    %v2545 = vunpack.c.h.s8.bf16 %v929
    %v2546 = vunpack.c.h.s8.bf16 %v930
    %v2547 = vunpack.c.h.s8.bf16 %v931
    %v2548 = vunpack.c.h.s8.bf16 %v932
    %v2549 = vunpack.c.h.s8.bf16 %v933
    %v2550 = vunpack.c.h.s8.bf16 %v934
    %v2551 = vunpack.c.h.s8.bf16 %v935
    %v2552 = vunpack.c.h.s8.bf16 %v936
    %v2553 = vunpack.c.h.s8.bf16 %v937
    %v2554 = vunpack.c.h.s8.bf16 %v938
    %v2555 = vunpack.c.h.s8.bf16 %v939
    %v2556 = vunpack.c.h.s8.bf16 %v940
    %v2557 = vunpack.c.h.s8.bf16 %v941
    %v2558 = vunpack.c.h.s8.bf16 %v942
    %v2559 = vunpack.c.h.s8.bf16 %v943
    %v2560 = vunpack.c.h.s8.bf16 %v944
    %v2561 = vunpack.c.l.s8.bf16 %v945
    %v2562 = vunpack.c.l.s8.bf16 %v946
    %v2563 = vunpack.c.l.s8.bf16 %v947
    %v2564 = vunpack.c.l.s8.bf16 %v948
    %v2565 = vunpack.c.l.s8.bf16 %v949
    %v2566 = vunpack.c.l.s8.bf16 %v950
    %v2567 = vunpack.c.l.s8.bf16 %v951
    %v2568 = vunpack.c.l.s8.bf16 %v952
    %v2569 = vunpack.c.l.s8.bf16 %v953
    %v2570 = vunpack.c.l.s8.bf16 %v954
    %v2571 = vunpack.c.l.s8.bf16 %v955
    %v2572 = vunpack.c.l.s8.bf16 %v956
    %v2573 = vunpack.c.l.s8.bf16 %v957
    %v2574 = vunpack.c.l.s8.bf16 %v958
    %v2575 = vunpack.c.l.s8.bf16 %v959
    %v2576 = vunpack.c.l.s8.bf16 %v960
    %v2577 = vunpack.c.h.s8.bf16 %v945
    %v2578 = vunpack.c.h.s8.bf16 %v946
    %v2579 = vunpack.c.h.s8.bf16 %v947
    %v2580 = vunpack.c.h.s8.bf16 %v948
    %v2581 = vunpack.c.h.s8.bf16 %v949
    %v2582 = vunpack.c.h.s8.bf16 %v950
    %v2583 = vunpack.c.h.s8.bf16 %v951
    %v2584 = vunpack.c.h.s8.bf16 %v952
    %v2585 = vunpack.c.h.s8.bf16 %v953
    %v2586 = vunpack.c.h.s8.bf16 %v954
    %v2587 = vunpack.c.h.s8.bf16 %v955
    %v2588 = vunpack.c.h.s8.bf16 %v956
    %v2589 = vunpack.c.h.s8.bf16 %v957
    %v2590 = vunpack.c.h.s8.bf16 %v958
    %v2591 = vunpack.c.h.s8.bf16 %v959
    %v2592 = vunpack.c.h.s8.bf16 %v960
    %v2593 = vunpack.c.l.s8.bf16 %v961
    %v2594 = vunpack.c.l.s8.bf16 %v962
    %v2595 = vunpack.c.l.s8.bf16 %v963
    %v2596 = vunpack.c.l.s8.bf16 %v964
    %v2597 = vunpack.c.l.s8.bf16 %v965
    %v2598 = vunpack.c.l.s8.bf16 %v966
    %v2599 = vunpack.c.l.s8.bf16 %v967
    %v2600 = vunpack.c.l.s8.bf16 %v968
    %v2601 = vunpack.c.l.s8.bf16 %v969
    %v2602 = vunpack.c.l.s8.bf16 %v970
    %v2603 = vunpack.c.l.s8.bf16 %v971
    %v2604 = vunpack.c.l.s8.bf16 %v972
    %v2605 = vunpack.c.l.s8.bf16 %v973
    %v2606 = vunpack.c.l.s8.bf16 %v974
    %v2607 = vunpack.c.l.s8.bf16 %v975
    %v2608 = vunpack.c.l.s8.bf16 %v976
    %v2609 = vunpack.c.h.s8.bf16 %v961
    %v2610 = vunpack.c.h.s8.bf16 %v962
    %v2611 = vunpack.c.h.s8.bf16 %v963
    %v2612 = vunpack.c.h.s8.bf16 %v964
    %v2613 = vunpack.c.h.s8.bf16 %v965
    %v2614 = vunpack.c.h.s8.bf16 %v966
    %v2615 = vunpack.c.h.s8.bf16 %v967
    %v2616 = vunpack.c.h.s8.bf16 %v968
    %v2617 = vunpack.c.h.s8.bf16 %v969
    %v2618 = vunpack.c.h.s8.bf16 %v970
    %v2619 = vunpack.c.h.s8.bf16 %v971
    %v2620 = vunpack.c.h.s8.bf16 %v972
    %v2621 = vunpack.c.h.s8.bf16 %v973
    %v2622 = vunpack.c.h.s8.bf16 %v974
    %v2623 = vunpack.c.h.s8.bf16 %v975
    %v2624 = vunpack.c.h.s8.bf16 %v976
    %v2625 = vunpack.c.l.s8.bf16 %v977
    %v2626 = vunpack.c.l.s8.bf16 %v978
    %v2627 = vunpack.c.l.s8.bf16 %v979
    %v2628 = vunpack.c.l.s8.bf16 %v980
    %v2629 = vunpack.c.l.s8.bf16 %v981
    %v2630 = vunpack.c.l.s8.bf16 %v982
    %v2631 = vunpack.c.l.s8.bf16 %v983
    %v2632 = vunpack.c.l.s8.bf16 %v984
    %v2633 = vunpack.c.l.s8.bf16 %v985
    %v2634 = vunpack.c.l.s8.bf16 %v986
    %v2635 = vunpack.c.l.s8.bf16 %v987
    %v2636 = vunpack.c.l.s8.bf16 %v988
    %v2637 = vunpack.c.l.s8.bf16 %v989
    %v2638 = vunpack.c.l.s8.bf16 %v990
    %v2639 = vunpack.c.l.s8.bf16 %v991
    %v2640 = vunpack.c.l.s8.bf16 %v992
    %v2641 = vunpack.c.h.s8.bf16 %v977
    %v2642 = vunpack.c.h.s8.bf16 %v978
    %v2643 = vunpack.c.h.s8.bf16 %v979
    %v2644 = vunpack.c.h.s8.bf16 %v980
    %v2645 = vunpack.c.h.s8.bf16 %v981
    %v2646 = vunpack.c.h.s8.bf16 %v982
    %v2647 = vunpack.c.h.s8.bf16 %v983
    %v2648 = vunpack.c.h.s8.bf16 %v984
    %v2649 = vunpack.c.h.s8.bf16 %v985
    %v2650 = vunpack.c.h.s8.bf16 %v986
    %v2651 = vunpack.c.h.s8.bf16 %v987
    %v2652 = vunpack.c.h.s8.bf16 %v988
    %v2653 = vunpack.c.h.s8.bf16 %v989
    %v2654 = vunpack.c.h.s8.bf16 %v990
    %v2655 = vunpack.c.h.s8.bf16 %v991
    %v2656 = vunpack.c.h.s8.bf16 %v992
    %v2657 = vunpack.c.l.s8.bf16 %v993
    %v2658 = vunpack.c.l.s8.bf16 %v994
    %v2659 = vunpack.c.l.s8.bf16 %v995
    %v2660 = vunpack.c.l.s8.bf16 %v996
    %v2661 = vunpack.c.l.s8.bf16 %v997
    %v2662 = vunpack.c.l.s8.bf16 %v998
    %v2663 = vunpack.c.l.s8.bf16 %v999
    %v2664 = vunpack.c.l.s8.bf16 %v1000
    %v2665 = vunpack.c.l.s8.bf16 %v1001
    %v2666 = vunpack.c.l.s8.bf16 %v1002
    %v2667 = vunpack.c.l.s8.bf16 %v1003
    %v2668 = vunpack.c.l.s8.bf16 %v1004
    %v2669 = vunpack.c.l.s8.bf16 %v1005
    %v2670 = vunpack.c.l.s8.bf16 %v1006
    %v2671 = vunpack.c.l.s8.bf16 %v1007
    %v2672 = vunpack.c.l.s8.bf16 %v1008
    %v2673 = vunpack.c.h.s8.bf16 %v993
    %v2674 = vunpack.c.h.s8.bf16 %v994
    %v2675 = vunpack.c.h.s8.bf16 %v995
    %v2676 = vunpack.c.h.s8.bf16 %v996
    %v2677 = vunpack.c.h.s8.bf16 %v997
    %v2678 = vunpack.c.h.s8.bf16 %v998
    %v2679 = vunpack.c.h.s8.bf16 %v999
    %v2680 = vunpack.c.h.s8.bf16 %v1000
    %v2681 = vunpack.c.h.s8.bf16 %v1001
    %v2682 = vunpack.c.h.s8.bf16 %v1002
    %v2683 = vunpack.c.h.s8.bf16 %v1003
    %v2684 = vunpack.c.h.s8.bf16 %v1004
    %v2685 = vunpack.c.h.s8.bf16 %v1005
    %v2686 = vunpack.c.h.s8.bf16 %v1006
    %v2687 = vunpack.c.h.s8.bf16 %v1007
    %v2688 = vunpack.c.h.s8.bf16 %v1008
    %v2689 = vunpack.c.l.s8.bf16 %v1009
    %v2690 = vunpack.c.l.s8.bf16 %v1010
    %v2691 = vunpack.c.l.s8.bf16 %v1011
    %v2692 = vunpack.c.l.s8.bf16 %v1012
    %v2693 = vunpack.c.l.s8.bf16 %v1013
    %v2694 = vunpack.c.l.s8.bf16 %v1014
    %v2695 = vunpack.c.l.s8.bf16 %v1015
    %v2696 = vunpack.c.l.s8.bf16 %v1016
    %v2697 = vunpack.c.l.s8.bf16 %v1017
    %v2698 = vunpack.c.l.s8.bf16 %v1018
    %v2699 = vunpack.c.l.s8.bf16 %v1019
    %v2700 = vunpack.c.l.s8.bf16 %v1020
    %v2701 = vunpack.c.l.s8.bf16 %v1021
    %v2702 = vunpack.c.l.s8.bf16 %v1022
    %v2703 = vunpack.c.l.s8.bf16 %v1023
    %v2704 = vunpack.c.l.s8.bf16 %v1024
    %v2705 = vunpack.c.h.s8.bf16 %v1009
    %v2706 = vunpack.c.h.s8.bf16 %v1010
    %v2707 = vunpack.c.h.s8.bf16 %v1011
    %v2708 = vunpack.c.h.s8.bf16 %v1012
    %v2709 = vunpack.c.h.s8.bf16 %v1013
    %v2710 = vunpack.c.h.s8.bf16 %v1014
    %v2711 = vunpack.c.h.s8.bf16 %v1015
    %v2712 = vunpack.c.h.s8.bf16 %v1016
    %v2713 = vunpack.c.h.s8.bf16 %v1017
    %v2714 = vunpack.c.h.s8.bf16 %v1018
    %v2715 = vunpack.c.h.s8.bf16 %v1019
    %v2716 = vunpack.c.h.s8.bf16 %v1020
    %v2717 = vunpack.c.h.s8.bf16 %v1021
    %v2718 = vunpack.c.h.s8.bf16 %v1022
    %v2719 = vunpack.c.h.s8.bf16 %v1023
    %v2720 = vunpack.c.h.s8.bf16 %v1024
    %v2721 = vunpack.c.l.s8.bf16 %v1025
    %v2722 = vunpack.c.l.s8.bf16 %v1026
    %v2723 = vunpack.c.l.s8.bf16 %v1027
    %v2724 = vunpack.c.l.s8.bf16 %v1028
    %v2725 = vunpack.c.l.s8.bf16 %v1029
    %v2726 = vunpack.c.l.s8.bf16 %v1030
    %v2727 = vunpack.c.l.s8.bf16 %v1031
    %v2728 = vunpack.c.l.s8.bf16 %v1032
    %v2729 = vunpack.c.l.s8.bf16 %v1033
    %v2730 = vunpack.c.l.s8.bf16 %v1034
    %v2731 = vunpack.c.l.s8.bf16 %v1035
    %v2732 = vunpack.c.l.s8.bf16 %v1036
    %v2733 = vunpack.c.l.s8.bf16 %v1037
    %v2734 = vunpack.c.l.s8.bf16 %v1038
    %v2735 = vunpack.c.l.s8.bf16 %v1039
    %v2736 = vunpack.c.l.s8.bf16 %v1040
    %v2737 = vunpack.c.h.s8.bf16 %v1025
    %v2738 = vunpack.c.h.s8.bf16 %v1026
    %v2739 = vunpack.c.h.s8.bf16 %v1027
    %v2740 = vunpack.c.h.s8.bf16 %v1028
    %v2741 = vunpack.c.h.s8.bf16 %v1029
    %v2742 = vunpack.c.h.s8.bf16 %v1030
    %v2743 = vunpack.c.h.s8.bf16 %v1031
    %v2744 = vunpack.c.h.s8.bf16 %v1032
    %v2745 = vunpack.c.h.s8.bf16 %v1033
    %v2746 = vunpack.c.h.s8.bf16 %v1034
    %v2747 = vunpack.c.h.s8.bf16 %v1035
    %v2748 = vunpack.c.h.s8.bf16 %v1036
    %v2749 = vunpack.c.h.s8.bf16 %v1037
    %v2750 = vunpack.c.h.s8.bf16 %v1038
    %v2751 = vunpack.c.h.s8.bf16 %v1039
    %v2752 = vunpack.c.h.s8.bf16 %v1040
    %v2753 = vunpack.c.l.s8.bf16 %v1041
    %v2754 = vunpack.c.l.s8.bf16 %v1042
    %v2755 = vunpack.c.l.s8.bf16 %v1043
    %v2756 = vunpack.c.l.s8.bf16 %v1044
    %v2757 = vunpack.c.l.s8.bf16 %v1045
    %v2758 = vunpack.c.l.s8.bf16 %v1046
    %v2759 = vunpack.c.l.s8.bf16 %v1047
    %v2760 = vunpack.c.l.s8.bf16 %v1048
    %v2761 = vunpack.c.l.s8.bf16 %v1049
    %v2762 = vunpack.c.l.s8.bf16 %v1050
    %v2763 = vunpack.c.l.s8.bf16 %v1051
    %v2764 = vunpack.c.l.s8.bf16 %v1052
    %v2765 = vunpack.c.l.s8.bf16 %v1053
    %v2766 = vunpack.c.l.s8.bf16 %v1054
    %v2767 = vunpack.c.l.s8.bf16 %v1055
    %v2768 = vunpack.c.l.s8.bf16 %v1056
    %v2769 = vunpack.c.h.s8.bf16 %v1041
    %v2770 = vunpack.c.h.s8.bf16 %v1042
    %v2771 = vunpack.c.h.s8.bf16 %v1043
    %v2772 = vunpack.c.h.s8.bf16 %v1044
    %v2773 = vunpack.c.h.s8.bf16 %v1045
    %v2774 = vunpack.c.h.s8.bf16 %v1046
    %v2775 = vunpack.c.h.s8.bf16 %v1047
    %v2776 = vunpack.c.h.s8.bf16 %v1048
    %v2777 = vunpack.c.h.s8.bf16 %v1049
    %v2778 = vunpack.c.h.s8.bf16 %v1050
    %v2779 = vunpack.c.h.s8.bf16 %v1051
    %v2780 = vunpack.c.h.s8.bf16 %v1052
    %v2781 = vunpack.c.h.s8.bf16 %v1053
    %v2782 = vunpack.c.h.s8.bf16 %v1054
    %v2783 = vunpack.c.h.s8.bf16 %v1055
    %v2784 = vunpack.c.h.s8.bf16 %v1056
    %v2785 = vunpack.c.l.s8.bf16 %v1057
    %v2786 = vunpack.c.l.s8.bf16 %v1058
    %v2787 = vunpack.c.l.s8.bf16 %v1059
    %v2788 = vunpack.c.l.s8.bf16 %v1060
    %v2789 = vunpack.c.l.s8.bf16 %v1061
    %v2790 = vunpack.c.l.s8.bf16 %v1062
    %v2791 = vunpack.c.l.s8.bf16 %v1063
    %v2792 = vunpack.c.l.s8.bf16 %v1064
    %v2793 = vunpack.c.l.s8.bf16 %v1065
    %v2794 = vunpack.c.l.s8.bf16 %v1066
    %v2795 = vunpack.c.l.s8.bf16 %v1067
    %v2796 = vunpack.c.l.s8.bf16 %v1068
    %v2797 = vunpack.c.l.s8.bf16 %v1069
    %v2798 = vunpack.c.l.s8.bf16 %v1070
    %v2799 = vunpack.c.l.s8.bf16 %v1071
    %v2800 = vunpack.c.l.s8.bf16 %v1072
    %v2801 = vunpack.c.h.s8.bf16 %v1057
    %v2802 = vunpack.c.h.s8.bf16 %v1058
    %v2803 = vunpack.c.h.s8.bf16 %v1059
    %v2804 = vunpack.c.h.s8.bf16 %v1060
    %v2805 = vunpack.c.h.s8.bf16 %v1061
    %v2806 = vunpack.c.h.s8.bf16 %v1062
    %v2807 = vunpack.c.h.s8.bf16 %v1063
    %v2808 = vunpack.c.h.s8.bf16 %v1064
    %v2809 = vunpack.c.h.s8.bf16 %v1065
    %v2810 = vunpack.c.h.s8.bf16 %v1066
    %v2811 = vunpack.c.h.s8.bf16 %v1067
    %v2812 = vunpack.c.h.s8.bf16 %v1068
    %v2813 = vunpack.c.h.s8.bf16 %v1069
    %v2814 = vunpack.c.h.s8.bf16 %v1070
    %v2815 = vunpack.c.h.s8.bf16 %v1071
    %v2816 = vunpack.c.h.s8.bf16 %v1072
    %v2817 = vunpack.c.l.s8.bf16 %v1073
    %v2818 = vunpack.c.l.s8.bf16 %v1074
    %v2819 = vunpack.c.l.s8.bf16 %v1075
    %v2820 = vunpack.c.l.s8.bf16 %v1076
    %v2821 = vunpack.c.l.s8.bf16 %v1077
    %v2822 = vunpack.c.l.s8.bf16 %v1078
    %v2823 = vunpack.c.l.s8.bf16 %v1079
    %v2824 = vunpack.c.l.s8.bf16 %v1080
    %v2825 = vunpack.c.l.s8.bf16 %v1081
    %v2826 = vunpack.c.l.s8.bf16 %v1082
    %v2827 = vunpack.c.l.s8.bf16 %v1083
    %v2828 = vunpack.c.l.s8.bf16 %v1084
    %v2829 = vunpack.c.l.s8.bf16 %v1085
    %v2830 = vunpack.c.l.s8.bf16 %v1086
    %v2831 = vunpack.c.l.s8.bf16 %v1087
    %v2832 = vunpack.c.l.s8.bf16 %v1088
    %v2833 = vunpack.c.h.s8.bf16 %v1073
    %v2834 = vunpack.c.h.s8.bf16 %v1074
    %v2835 = vunpack.c.h.s8.bf16 %v1075
    %v2836 = vunpack.c.h.s8.bf16 %v1076
    %v2837 = vunpack.c.h.s8.bf16 %v1077
    %v2838 = vunpack.c.h.s8.bf16 %v1078
    %v2839 = vunpack.c.h.s8.bf16 %v1079
    %v2840 = vunpack.c.h.s8.bf16 %v1080
    %v2841 = vunpack.c.h.s8.bf16 %v1081
    %v2842 = vunpack.c.h.s8.bf16 %v1082
    %v2843 = vunpack.c.h.s8.bf16 %v1083
    %v2844 = vunpack.c.h.s8.bf16 %v1084
    %v2845 = vunpack.c.h.s8.bf16 %v1085
    %v2846 = vunpack.c.h.s8.bf16 %v1086
    %v2847 = vunpack.c.h.s8.bf16 %v1087
    %v2848 = vunpack.c.h.s8.bf16 %v1088
    %v2849 = vunpack.c.l.s8.bf16 %v1089
    %v2850 = vunpack.c.l.s8.bf16 %v1090
    %v2851 = vunpack.c.l.s8.bf16 %v1091
    %v2852 = vunpack.c.l.s8.bf16 %v1092
    %v2853 = vunpack.c.l.s8.bf16 %v1093
    %v2854 = vunpack.c.l.s8.bf16 %v1094
    %v2855 = vunpack.c.l.s8.bf16 %v1095
    %v2856 = vunpack.c.l.s8.bf16 %v1096
    %v2857 = vunpack.c.l.s8.bf16 %v1097
    %v2858 = vunpack.c.l.s8.bf16 %v1098
    %v2859 = vunpack.c.l.s8.bf16 %v1099
    %v2860 = vunpack.c.l.s8.bf16 %v1100
    %v2861 = vunpack.c.l.s8.bf16 %v1101
    %v2862 = vunpack.c.l.s8.bf16 %v1102
    %v2863 = vunpack.c.l.s8.bf16 %v1103
    %v2864 = vunpack.c.l.s8.bf16 %v1104
    %v2865 = vunpack.c.h.s8.bf16 %v1089
    %v2866 = vunpack.c.h.s8.bf16 %v1090
    %v2867 = vunpack.c.h.s8.bf16 %v1091
    %v2868 = vunpack.c.h.s8.bf16 %v1092
    %v2869 = vunpack.c.h.s8.bf16 %v1093
    %v2870 = vunpack.c.h.s8.bf16 %v1094
    %v2871 = vunpack.c.h.s8.bf16 %v1095
    %v2872 = vunpack.c.h.s8.bf16 %v1096
    %v2873 = vunpack.c.h.s8.bf16 %v1097
    %v2874 = vunpack.c.h.s8.bf16 %v1098
    %v2875 = vunpack.c.h.s8.bf16 %v1099
    %v2876 = vunpack.c.h.s8.bf16 %v1100
    %v2877 = vunpack.c.h.s8.bf16 %v1101
    %v2878 = vunpack.c.h.s8.bf16 %v1102
    %v2879 = vunpack.c.h.s8.bf16 %v1103
    %v2880 = vunpack.c.h.s8.bf16 %v1104
    %v2881 = vunpack.c.l.s8.bf16 %v1105
    %v2882 = vunpack.c.l.s8.bf16 %v1106
    %v2883 = vunpack.c.l.s8.bf16 %v1107
    %v2884 = vunpack.c.l.s8.bf16 %v1108
    %v2885 = vunpack.c.l.s8.bf16 %v1109
    %v2886 = vunpack.c.l.s8.bf16 %v1110
    %v2887 = vunpack.c.l.s8.bf16 %v1111
    %v2888 = vunpack.c.l.s8.bf16 %v1112
    %v2889 = vunpack.c.l.s8.bf16 %v1113
    %v2890 = vunpack.c.l.s8.bf16 %v1114
    %v2891 = vunpack.c.l.s8.bf16 %v1115
    %v2892 = vunpack.c.l.s8.bf16 %v1116
    %v2893 = vunpack.c.l.s8.bf16 %v1117
    %v2894 = vunpack.c.l.s8.bf16 %v1118
    %v2895 = vunpack.c.l.s8.bf16 %v1119
    %v2896 = vunpack.c.l.s8.bf16 %v1120
    %v2897 = vunpack.c.h.s8.bf16 %v1105
    %v2898 = vunpack.c.h.s8.bf16 %v1106
    %v2899 = vunpack.c.h.s8.bf16 %v1107
    %v2900 = vunpack.c.h.s8.bf16 %v1108
    %v2901 = vunpack.c.h.s8.bf16 %v1109
    %v2902 = vunpack.c.h.s8.bf16 %v1110
    %v2903 = vunpack.c.h.s8.bf16 %v1111
    %v2904 = vunpack.c.h.s8.bf16 %v1112
    %v2905 = vunpack.c.h.s8.bf16 %v1113
    %v2906 = vunpack.c.h.s8.bf16 %v1114
    %v2907 = vunpack.c.h.s8.bf16 %v1115
    %v2908 = vunpack.c.h.s8.bf16 %v1116
    %v2909 = vunpack.c.h.s8.bf16 %v1117
    %v2910 = vunpack.c.h.s8.bf16 %v1118
    %v2911 = vunpack.c.h.s8.bf16 %v1119
    %v2912 = vunpack.c.h.s8.bf16 %v1120
    %v2913 = vunpack.c.l.s8.bf16 %v1121
    %v2914 = vunpack.c.l.s8.bf16 %v1122
    %v2915 = vunpack.c.l.s8.bf16 %v1123
    %v2916 = vunpack.c.l.s8.bf16 %v1124
    %v2917 = vunpack.c.l.s8.bf16 %v1125
    %v2918 = vunpack.c.l.s8.bf16 %v1126
    %v2919 = vunpack.c.l.s8.bf16 %v1127
    %v2920 = vunpack.c.l.s8.bf16 %v1128
    %v2921 = vunpack.c.l.s8.bf16 %v1129
    %v2922 = vunpack.c.l.s8.bf16 %v1130
    %v2923 = vunpack.c.l.s8.bf16 %v1131
    %v2924 = vunpack.c.l.s8.bf16 %v1132
    %v2925 = vunpack.c.l.s8.bf16 %v1133
    %v2926 = vunpack.c.l.s8.bf16 %v1134
    %v2927 = vunpack.c.l.s8.bf16 %v1135
    %v2928 = vunpack.c.l.s8.bf16 %v1136
    %v2929 = vunpack.c.h.s8.bf16 %v1121
    %v2930 = vunpack.c.h.s8.bf16 %v1122
    %v2931 = vunpack.c.h.s8.bf16 %v1123
    %v2932 = vunpack.c.h.s8.bf16 %v1124
    %v2933 = vunpack.c.h.s8.bf16 %v1125
    %v2934 = vunpack.c.h.s8.bf16 %v1126
    %v2935 = vunpack.c.h.s8.bf16 %v1127
    %v2936 = vunpack.c.h.s8.bf16 %v1128
    %v2937 = vunpack.c.h.s8.bf16 %v1129
    %v2938 = vunpack.c.h.s8.bf16 %v1130
    %v2939 = vunpack.c.h.s8.bf16 %v1131
    %v2940 = vunpack.c.h.s8.bf16 %v1132
    %v2941 = vunpack.c.h.s8.bf16 %v1133
    %v2942 = vunpack.c.h.s8.bf16 %v1134
    %v2943 = vunpack.c.h.s8.bf16 %v1135
    %v2944 = vunpack.c.h.s8.bf16 %v1136
    %v2945 = vunpack.c.l.s8.bf16 %v1137
    %v2946 = vunpack.c.l.s8.bf16 %v1138
    %v2947 = vunpack.c.l.s8.bf16 %v1139
    %v2948 = vunpack.c.l.s8.bf16 %v1140
    %v2949 = vunpack.c.l.s8.bf16 %v1141
    %v2950 = vunpack.c.l.s8.bf16 %v1142
    %v2951 = vunpack.c.l.s8.bf16 %v1143
    %v2952 = vunpack.c.l.s8.bf16 %v1144
    %v2953 = vunpack.c.l.s8.bf16 %v1145
    %v2954 = vunpack.c.l.s8.bf16 %v1146
    %v2955 = vunpack.c.l.s8.bf16 %v1147
    %v2956 = vunpack.c.l.s8.bf16 %v1148
    %v2957 = vunpack.c.l.s8.bf16 %v1149
    %v2958 = vunpack.c.l.s8.bf16 %v1150
    %v2959 = vunpack.c.l.s8.bf16 %v1151
    %v2960 = vunpack.c.l.s8.bf16 %v1152
    %v2961 = vunpack.c.h.s8.bf16 %v1137
    %v2962 = vunpack.c.h.s8.bf16 %v1138
    %v2963 = vunpack.c.h.s8.bf16 %v1139
    %v2964 = vunpack.c.h.s8.bf16 %v1140
    %v2965 = vunpack.c.h.s8.bf16 %v1141
    %v2966 = vunpack.c.h.s8.bf16 %v1142
    %v2967 = vunpack.c.h.s8.bf16 %v1143
    %v2968 = vunpack.c.h.s8.bf16 %v1144
    %v2969 = vunpack.c.h.s8.bf16 %v1145
    %v2970 = vunpack.c.h.s8.bf16 %v1146
    %v2971 = vunpack.c.h.s8.bf16 %v1147
    %v2972 = vunpack.c.h.s8.bf16 %v1148
    %v2973 = vunpack.c.h.s8.bf16 %v1149
    %v2974 = vunpack.c.h.s8.bf16 %v1150
    %v2975 = vunpack.c.h.s8.bf16 %v1151
    %v2976 = vunpack.c.h.s8.bf16 %v1152
    %v2977 = vunpack.c.l.s8.bf16 %v1153
    %v2978 = vunpack.c.l.s8.bf16 %v1154
    %v2979 = vunpack.c.l.s8.bf16 %v1155
    %v2980 = vunpack.c.l.s8.bf16 %v1156
    %v2981 = vunpack.c.l.s8.bf16 %v1157
    %v2982 = vunpack.c.l.s8.bf16 %v1158
    %v2983 = vunpack.c.l.s8.bf16 %v1159
    %v2984 = vunpack.c.l.s8.bf16 %v1160
    %v2985 = vunpack.c.l.s8.bf16 %v1161
    %v2986 = vunpack.c.l.s8.bf16 %v1162
    %v2987 = vunpack.c.l.s8.bf16 %v1163
    %v2988 = vunpack.c.l.s8.bf16 %v1164
    %v2989 = vunpack.c.l.s8.bf16 %v1165
    %v2990 = vunpack.c.l.s8.bf16 %v1166
    %v2991 = vunpack.c.l.s8.bf16 %v1167
    %v2992 = vunpack.c.l.s8.bf16 %v1168
    %v2993 = vunpack.c.h.s8.bf16 %v1153
    %v2994 = vunpack.c.h.s8.bf16 %v1154
    %v2995 = vunpack.c.h.s8.bf16 %v1155
    %v2996 = vunpack.c.h.s8.bf16 %v1156
    %v2997 = vunpack.c.h.s8.bf16 %v1157
    %v2998 = vunpack.c.h.s8.bf16 %v1158
    %v2999 = vunpack.c.h.s8.bf16 %v1159
    %v3000 = vunpack.c.h.s8.bf16 %v1160
    %v3001 = vunpack.c.h.s8.bf16 %v1161
    %v3002 = vunpack.c.h.s8.bf16 %v1162
    %v3003 = vunpack.c.h.s8.bf16 %v1163
    %v3004 = vunpack.c.h.s8.bf16 %v1164
    %v3005 = vunpack.c.h.s8.bf16 %v1165
    %v3006 = vunpack.c.h.s8.bf16 %v1166
    %v3007 = vunpack.c.h.s8.bf16 %v1167
    %v3008 = vunpack.c.h.s8.bf16 %v1168
    %v3009 = vunpack.c.l.s8.bf16 %v1169
    %v3010 = vunpack.c.l.s8.bf16 %v1170
    %v3011 = vunpack.c.l.s8.bf16 %v1171
    %v3012 = vunpack.c.l.s8.bf16 %v1172
    %v3013 = vunpack.c.l.s8.bf16 %v1173
    %v3014 = vunpack.c.l.s8.bf16 %v1174
    %v3015 = vunpack.c.l.s8.bf16 %v1175
    %v3016 = vunpack.c.l.s8.bf16 %v1176
    %v3017 = vunpack.c.l.s8.bf16 %v1177
    %v3018 = vunpack.c.l.s8.bf16 %v1178
    %v3019 = vunpack.c.l.s8.bf16 %v1179
    %v3020 = vunpack.c.l.s8.bf16 %v1180
    %v3021 = vunpack.c.l.s8.bf16 %v1181
    %v3022 = vunpack.c.l.s8.bf16 %v1182
    %v3023 = vunpack.c.l.s8.bf16 %v1183
    %v3024 = vunpack.c.l.s8.bf16 %v1184
    %v3025 = vunpack.c.h.s8.bf16 %v1169
    %v3026 = vunpack.c.h.s8.bf16 %v1170
    %v3027 = vunpack.c.h.s8.bf16 %v1171
    %v3028 = vunpack.c.h.s8.bf16 %v1172
    %v3029 = vunpack.c.h.s8.bf16 %v1173
    %v3030 = vunpack.c.h.s8.bf16 %v1174
    %v3031 = vunpack.c.h.s8.bf16 %v1175
    %v3032 = vunpack.c.h.s8.bf16 %v1176
    %v3033 = vunpack.c.h.s8.bf16 %v1177
    %v3034 = vunpack.c.h.s8.bf16 %v1178
    %v3035 = vunpack.c.h.s8.bf16 %v1179
    %v3036 = vunpack.c.h.s8.bf16 %v1180
    %v3037 = vunpack.c.h.s8.bf16 %v1181
    %v3038 = vunpack.c.h.s8.bf16 %v1182
    %v3039 = vunpack.c.h.s8.bf16 %v1183
    %v3040 = vunpack.c.h.s8.bf16 %v1184
    %v3041 = vunpack.c.l.s8.bf16 %v1185
    %v3042 = vunpack.c.l.s8.bf16 %v1186
    %v3043 = vunpack.c.l.s8.bf16 %v1187
    %v3044 = vunpack.c.l.s8.bf16 %v1188
    %v3045 = vunpack.c.l.s8.bf16 %v1189
    %v3046 = vunpack.c.l.s8.bf16 %v1190
    %v3047 = vunpack.c.l.s8.bf16 %v1191
    %v3048 = vunpack.c.l.s8.bf16 %v1192
    %v3049 = vunpack.c.l.s8.bf16 %v1193
    %v3050 = vunpack.c.l.s8.bf16 %v1194
    %v3051 = vunpack.c.l.s8.bf16 %v1195
    %v3052 = vunpack.c.l.s8.bf16 %v1196
    %v3053 = vunpack.c.l.s8.bf16 %v1197
    %v3054 = vunpack.c.l.s8.bf16 %v1198
    %v3055 = vunpack.c.l.s8.bf16 %v1199
    %v3056 = vunpack.c.l.s8.bf16 %v1200
    %v3057 = vunpack.c.h.s8.bf16 %v1185
    %v3058 = vunpack.c.h.s8.bf16 %v1186
    %v3059 = vunpack.c.h.s8.bf16 %v1187
    %v3060 = vunpack.c.h.s8.bf16 %v1188
    %v3061 = vunpack.c.h.s8.bf16 %v1189
    %v3062 = vunpack.c.h.s8.bf16 %v1190
    %v3063 = vunpack.c.h.s8.bf16 %v1191
    %v3064 = vunpack.c.h.s8.bf16 %v1192
    %v3065 = vunpack.c.h.s8.bf16 %v1193
    %v3066 = vunpack.c.h.s8.bf16 %v1194
    %v3067 = vunpack.c.h.s8.bf16 %v1195
    %v3068 = vunpack.c.h.s8.bf16 %v1196
    %v3069 = vunpack.c.h.s8.bf16 %v1197
    %v3070 = vunpack.c.h.s8.bf16 %v1198
    %v3071 = vunpack.c.h.s8.bf16 %v1199
    %v3072 = vunpack.c.h.s8.bf16 %v1200
    %v3073 = vunpack.c.l.s8.bf16 %v1201
    %v3074 = vunpack.c.l.s8.bf16 %v1202
    %v3075 = vunpack.c.l.s8.bf16 %v1203
    %v3076 = vunpack.c.l.s8.bf16 %v1204
    %v3077 = vunpack.c.l.s8.bf16 %v1205
    %v3078 = vunpack.c.l.s8.bf16 %v1206
    %v3079 = vunpack.c.l.s8.bf16 %v1207
    %v3080 = vunpack.c.l.s8.bf16 %v1208
    %v3081 = vunpack.c.l.s8.bf16 %v1209
    %v3082 = vunpack.c.l.s8.bf16 %v1210
    %v3083 = vunpack.c.l.s8.bf16 %v1211
    %v3084 = vunpack.c.l.s8.bf16 %v1212
    %v3085 = vunpack.c.l.s8.bf16 %v1213
    %v3086 = vunpack.c.l.s8.bf16 %v1214
    %v3087 = vunpack.c.l.s8.bf16 %v1215
    %v3088 = vunpack.c.l.s8.bf16 %v1216
    %v3089 = vunpack.c.h.s8.bf16 %v1201
    %v3090 = vunpack.c.h.s8.bf16 %v1202
    %v3091 = vunpack.c.h.s8.bf16 %v1203
    %v3092 = vunpack.c.h.s8.bf16 %v1204
    %v3093 = vunpack.c.h.s8.bf16 %v1205
    %v3094 = vunpack.c.h.s8.bf16 %v1206
    %v3095 = vunpack.c.h.s8.bf16 %v1207
    %v3096 = vunpack.c.h.s8.bf16 %v1208
    %v3097 = vunpack.c.h.s8.bf16 %v1209
    %v3098 = vunpack.c.h.s8.bf16 %v1210
    %v3099 = vunpack.c.h.s8.bf16 %v1211
    %v3100 = vunpack.c.h.s8.bf16 %v1212
    %v3101 = vunpack.c.h.s8.bf16 %v1213
    %v3102 = vunpack.c.h.s8.bf16 %v1214
    %v3103 = vunpack.c.h.s8.bf16 %v1215
    %v3104 = vunpack.c.h.s8.bf16 %v1216
    %v3105 = vunpack.c.l.s8.bf16 %v1217
    %v3106 = vunpack.c.l.s8.bf16 %v1218
    %v3107 = vunpack.c.l.s8.bf16 %v1219
    %v3108 = vunpack.c.l.s8.bf16 %v1220
    %v3109 = vunpack.c.l.s8.bf16 %v1221
    %v3110 = vunpack.c.l.s8.bf16 %v1222
    %v3111 = vunpack.c.l.s8.bf16 %v1223
    %v3112 = vunpack.c.l.s8.bf16 %v1224
    %v3113 = vunpack.c.l.s8.bf16 %v1225
    %v3114 = vunpack.c.l.s8.bf16 %v1226
    %v3115 = vunpack.c.l.s8.bf16 %v1227
    %v3116 = vunpack.c.l.s8.bf16 %v1228
    %v3117 = vunpack.c.l.s8.bf16 %v1229
    %v3118 = vunpack.c.l.s8.bf16 %v1230
    %v3119 = vunpack.c.l.s8.bf16 %v1231
    %v3120 = vunpack.c.l.s8.bf16 %v1232
    %v3121 = vunpack.c.h.s8.bf16 %v1217
    %v3122 = vunpack.c.h.s8.bf16 %v1218
    %v3123 = vunpack.c.h.s8.bf16 %v1219
    %v3124 = vunpack.c.h.s8.bf16 %v1220
    %v3125 = vunpack.c.h.s8.bf16 %v1221
    %v3126 = vunpack.c.h.s8.bf16 %v1222
    %v3127 = vunpack.c.h.s8.bf16 %v1223
    %v3128 = vunpack.c.h.s8.bf16 %v1224
    %v3129 = vunpack.c.h.s8.bf16 %v1225
    %v3130 = vunpack.c.h.s8.bf16 %v1226
    %v3131 = vunpack.c.h.s8.bf16 %v1227
    %v3132 = vunpack.c.h.s8.bf16 %v1228
    %v3133 = vunpack.c.h.s8.bf16 %v1229
    %v3134 = vunpack.c.h.s8.bf16 %v1230
    %v3135 = vunpack.c.h.s8.bf16 %v1231
    %v3136 = vunpack.c.h.s8.bf16 %v1232
    %v3137 = vunpack.c.l.s8.bf16 %v1233
    %v3138 = vunpack.c.l.s8.bf16 %v1234
    %v3139 = vunpack.c.l.s8.bf16 %v1235
    %v3140 = vunpack.c.l.s8.bf16 %v1236
    %v3141 = vunpack.c.l.s8.bf16 %v1237
    %v3142 = vunpack.c.l.s8.bf16 %v1238
    %v3143 = vunpack.c.l.s8.bf16 %v1239
    %v3144 = vunpack.c.l.s8.bf16 %v1240
    %v3145 = vunpack.c.l.s8.bf16 %v1241
    %v3146 = vunpack.c.l.s8.bf16 %v1242
    %v3147 = vunpack.c.l.s8.bf16 %v1243
    %v3148 = vunpack.c.l.s8.bf16 %v1244
    %v3149 = vunpack.c.l.s8.bf16 %v1245
    %v3150 = vunpack.c.l.s8.bf16 %v1246
    %v3151 = vunpack.c.l.s8.bf16 %v1247
    %v3152 = vunpack.c.l.s8.bf16 %v1248
    %v3153 = vunpack.c.h.s8.bf16 %v1233
    %v3154 = vunpack.c.h.s8.bf16 %v1234
    %v3155 = vunpack.c.h.s8.bf16 %v1235
    %v3156 = vunpack.c.h.s8.bf16 %v1236
    %v3157 = vunpack.c.h.s8.bf16 %v1237
    %v3158 = vunpack.c.h.s8.bf16 %v1238
    %v3159 = vunpack.c.h.s8.bf16 %v1239
    %v3160 = vunpack.c.h.s8.bf16 %v1240
    %v3161 = vunpack.c.h.s8.bf16 %v1241
    %v3162 = vunpack.c.h.s8.bf16 %v1242
    %v3163 = vunpack.c.h.s8.bf16 %v1243
    %v3164 = vunpack.c.h.s8.bf16 %v1244
    %v3165 = vunpack.c.h.s8.bf16 %v1245
    %v3166 = vunpack.c.h.s8.bf16 %v1246
    %v3167 = vunpack.c.h.s8.bf16 %v1247
    %v3168 = vunpack.c.h.s8.bf16 %v1248
    %v3169 = vunpack.c.l.s8.bf16 %v1249
    %v3170 = vunpack.c.l.s8.bf16 %v1250
    %v3171 = vunpack.c.l.s8.bf16 %v1251
    %v3172 = vunpack.c.l.s8.bf16 %v1252
    %v3173 = vunpack.c.l.s8.bf16 %v1253
    %v3174 = vunpack.c.l.s8.bf16 %v1254
    %v3175 = vunpack.c.l.s8.bf16 %v1255
    %v3176 = vunpack.c.l.s8.bf16 %v1256
    %v3177 = vunpack.c.l.s8.bf16 %v1257
    %v3178 = vunpack.c.l.s8.bf16 %v1258
    %v3179 = vunpack.c.l.s8.bf16 %v1259
    %v3180 = vunpack.c.l.s8.bf16 %v1260
    %v3181 = vunpack.c.l.s8.bf16 %v1261
    %v3182 = vunpack.c.l.s8.bf16 %v1262
    %v3183 = vunpack.c.l.s8.bf16 %v1263
    %v3184 = vunpack.c.l.s8.bf16 %v1264
    %v3185 = vunpack.c.h.s8.bf16 %v1249
    %v3186 = vunpack.c.h.s8.bf16 %v1250
    %v3187 = vunpack.c.h.s8.bf16 %v1251
    %v3188 = vunpack.c.h.s8.bf16 %v1252
    %v3189 = vunpack.c.h.s8.bf16 %v1253
    %v3190 = vunpack.c.h.s8.bf16 %v1254
    %v3191 = vunpack.c.h.s8.bf16 %v1255
    %v3192 = vunpack.c.h.s8.bf16 %v1256
    %v3193 = vunpack.c.h.s8.bf16 %v1257
    %v3194 = vunpack.c.h.s8.bf16 %v1258
    %v3195 = vunpack.c.h.s8.bf16 %v1259
    %v3196 = vunpack.c.h.s8.bf16 %v1260
    %v3197 = vunpack.c.h.s8.bf16 %v1261
    %v3198 = vunpack.c.h.s8.bf16 %v1262
    %v3199 = vunpack.c.h.s8.bf16 %v1263
    %v3200 = vunpack.c.h.s8.bf16 %v1264
    %v3201 = vunpack.c.l.s8.bf16 %v1265
    %v3202 = vunpack.c.l.s8.bf16 %v1266
    %v3203 = vunpack.c.l.s8.bf16 %v1267
    %v3204 = vunpack.c.l.s8.bf16 %v1268
    %v3205 = vunpack.c.l.s8.bf16 %v1269
    %v3206 = vunpack.c.l.s8.bf16 %v1270
    %v3207 = vunpack.c.l.s8.bf16 %v1271
    %v3208 = vunpack.c.l.s8.bf16 %v1272
    %v3209 = vunpack.c.l.s8.bf16 %v1273
    %v3210 = vunpack.c.l.s8.bf16 %v1274
    %v3211 = vunpack.c.l.s8.bf16 %v1275
    %v3212 = vunpack.c.l.s8.bf16 %v1276
    %v3213 = vunpack.c.l.s8.bf16 %v1277
    %v3214 = vunpack.c.l.s8.bf16 %v1278
    %v3215 = vunpack.c.l.s8.bf16 %v1279
    %v3216 = vunpack.c.l.s8.bf16 %v1280
    %v3217 = vunpack.c.h.s8.bf16 %v1265
    %v3218 = vunpack.c.h.s8.bf16 %v1266
    %v3219 = vunpack.c.h.s8.bf16 %v1267
    %v3220 = vunpack.c.h.s8.bf16 %v1268
    %v3221 = vunpack.c.h.s8.bf16 %v1269
    %v3222 = vunpack.c.h.s8.bf16 %v1270
    %v3223 = vunpack.c.h.s8.bf16 %v1271
    %v3224 = vunpack.c.h.s8.bf16 %v1272
    %v3225 = vunpack.c.h.s8.bf16 %v1273
    %v3226 = vunpack.c.h.s8.bf16 %v1274
    %v3227 = vunpack.c.h.s8.bf16 %v1275
    %v3228 = vunpack.c.h.s8.bf16 %v1276
    %v3229 = vunpack.c.h.s8.bf16 %v1277
    %v3230 = vunpack.c.h.s8.bf16 %v1278
    %v3231 = vunpack.c.h.s8.bf16 %v1279
    %v3232 = vunpack.c.h.s8.bf16 %v1280
    %v3233 = vunpack.c.l.s8.bf16 %v1281
    %v3234 = vunpack.c.l.s8.bf16 %v1282
    %v3235 = vunpack.c.l.s8.bf16 %v1283
    %v3236 = vunpack.c.l.s8.bf16 %v1284
    %v3237 = vunpack.c.l.s8.bf16 %v1285
    %v3238 = vunpack.c.l.s8.bf16 %v1286
    %v3239 = vunpack.c.l.s8.bf16 %v1287
    %v3240 = vunpack.c.l.s8.bf16 %v1288
    %v3241 = vunpack.c.l.s8.bf16 %v1289
    %v3242 = vunpack.c.l.s8.bf16 %v1290
    %v3243 = vunpack.c.l.s8.bf16 %v1291
    %v3244 = vunpack.c.l.s8.bf16 %v1292
    %v3245 = vunpack.c.l.s8.bf16 %v1293
    %v3246 = vunpack.c.l.s8.bf16 %v1294
    %v3247 = vunpack.c.l.s8.bf16 %v1295
    %v3248 = vunpack.c.l.s8.bf16 %v1296
    %v3249 = vunpack.c.h.s8.bf16 %v1281
    %v3250 = vunpack.c.h.s8.bf16 %v1282
    %v3251 = vunpack.c.h.s8.bf16 %v1283
    %v3252 = vunpack.c.h.s8.bf16 %v1284
    %v3253 = vunpack.c.h.s8.bf16 %v1285
    %v3254 = vunpack.c.h.s8.bf16 %v1286
    %v3255 = vunpack.c.h.s8.bf16 %v1287
    %v3256 = vunpack.c.h.s8.bf16 %v1288
    %v3257 = vunpack.c.h.s8.bf16 %v1289
    %v3258 = vunpack.c.h.s8.bf16 %v1290
    %v3259 = vunpack.c.h.s8.bf16 %v1291
    %v3260 = vunpack.c.h.s8.bf16 %v1292
    %v3261 = vunpack.c.h.s8.bf16 %v1293
    %v3262 = vunpack.c.h.s8.bf16 %v1294
    %v3263 = vunpack.c.h.s8.bf16 %v1295
    %v3264 = vunpack.c.h.s8.bf16 %v1296
    %v3265 = vunpack.c.l.s8.bf16 %v1297
    %v3266 = vunpack.c.l.s8.bf16 %v1298
    %v3267 = vunpack.c.l.s8.bf16 %v1299
    %v3268 = vunpack.c.l.s8.bf16 %v1300
    %v3269 = vunpack.c.l.s8.bf16 %v1301
    %v3270 = vunpack.c.l.s8.bf16 %v1302
    %v3271 = vunpack.c.l.s8.bf16 %v1303
    %v3272 = vunpack.c.l.s8.bf16 %v1304
    %v3273 = vunpack.c.l.s8.bf16 %v1305
    %v3274 = vunpack.c.l.s8.bf16 %v1306
    %v3275 = vunpack.c.l.s8.bf16 %v1307
    %v3276 = vunpack.c.l.s8.bf16 %v1308
    %v3277 = vunpack.c.l.s8.bf16 %v1309
    %v3278 = vunpack.c.l.s8.bf16 %v1310
    %v3279 = vunpack.c.l.s8.bf16 %v1311
    %v3280 = vunpack.c.l.s8.bf16 %v1312
    %v3281 = vunpack.c.h.s8.bf16 %v1297
    %v3282 = vunpack.c.h.s8.bf16 %v1298
    %v3283 = vunpack.c.h.s8.bf16 %v1299
    %v3284 = vunpack.c.h.s8.bf16 %v1300
    %v3285 = vunpack.c.h.s8.bf16 %v1301
    %v3286 = vunpack.c.h.s8.bf16 %v1302
    %v3287 = vunpack.c.h.s8.bf16 %v1303
    %v3288 = vunpack.c.h.s8.bf16 %v1304
    %v3289 = vunpack.c.h.s8.bf16 %v1305
    %v3290 = vunpack.c.h.s8.bf16 %v1306
    %v3291 = vunpack.c.h.s8.bf16 %v1307
    %v3292 = vunpack.c.h.s8.bf16 %v1308
    %v3293 = vunpack.c.h.s8.bf16 %v1309
    %v3294 = vunpack.c.h.s8.bf16 %v1310
    %v3295 = vunpack.c.h.s8.bf16 %v1311
    %v3296 = vunpack.c.h.s8.bf16 %v1312
    %v3297 = vunpack.c.l.s8.bf16 %v1313
    %v3298 = vunpack.c.l.s8.bf16 %v1314
    %v3299 = vunpack.c.l.s8.bf16 %v1315
    %v3300 = vunpack.c.l.s8.bf16 %v1316
    %v3301 = vunpack.c.l.s8.bf16 %v1317
    %v3302 = vunpack.c.l.s8.bf16 %v1318
    %v3303 = vunpack.c.l.s8.bf16 %v1319
    %v3304 = vunpack.c.l.s8.bf16 %v1320
    %v3305 = vunpack.c.l.s8.bf16 %v1321
    %v3306 = vunpack.c.l.s8.bf16 %v1322
    %v3307 = vunpack.c.l.s8.bf16 %v1323
    %v3308 = vunpack.c.l.s8.bf16 %v1324
    %v3309 = vunpack.c.l.s8.bf16 %v1325
    %v3310 = vunpack.c.l.s8.bf16 %v1326
    %v3311 = vunpack.c.l.s8.bf16 %v1327
    %v3312 = vunpack.c.l.s8.bf16 %v1328
    %v3313 = vunpack.c.h.s8.bf16 %v1313
    %v3314 = vunpack.c.h.s8.bf16 %v1314
    %v3315 = vunpack.c.h.s8.bf16 %v1315
    %v3316 = vunpack.c.h.s8.bf16 %v1316
    %v3317 = vunpack.c.h.s8.bf16 %v1317
    %v3318 = vunpack.c.h.s8.bf16 %v1318
    %v3319 = vunpack.c.h.s8.bf16 %v1319
    %v3320 = vunpack.c.h.s8.bf16 %v1320
    %v3321 = vunpack.c.h.s8.bf16 %v1321
    %v3322 = vunpack.c.h.s8.bf16 %v1322
    %v3323 = vunpack.c.h.s8.bf16 %v1323
    %v3324 = vunpack.c.h.s8.bf16 %v1324
    %v3325 = vunpack.c.h.s8.bf16 %v1325
    %v3326 = vunpack.c.h.s8.bf16 %v1326
    %v3327 = vunpack.c.h.s8.bf16 %v1327
    %v3328 = vunpack.c.h.s8.bf16 %v1328
    %v3329 = vunpack.c.l.s8.bf16 %v1329
    %v3330 = vunpack.c.l.s8.bf16 %v1330
    %v3331 = vunpack.c.l.s8.bf16 %v1331
    %v3332 = vunpack.c.l.s8.bf16 %v1332
    %v3333 = vunpack.c.l.s8.bf16 %v1333
    %v3334 = vunpack.c.l.s8.bf16 %v1334
    %v3335 = vunpack.c.l.s8.bf16 %v1335
    %v3336 = vunpack.c.l.s8.bf16 %v1336
    %v3337 = vunpack.c.l.s8.bf16 %v1337
    %v3338 = vunpack.c.l.s8.bf16 %v1338
    %v3339 = vunpack.c.l.s8.bf16 %v1339
    %v3340 = vunpack.c.l.s8.bf16 %v1340
    %v3341 = vunpack.c.l.s8.bf16 %v1341
    %v3342 = vunpack.c.l.s8.bf16 %v1342
    %v3343 = vunpack.c.l.s8.bf16 %v1343
    %v3344 = vunpack.c.l.s8.bf16 %v1344
    %v3345 = vunpack.c.h.s8.bf16 %v1329
    %v3346 = vunpack.c.h.s8.bf16 %v1330
    %v3347 = vunpack.c.h.s8.bf16 %v1331
    %v3348 = vunpack.c.h.s8.bf16 %v1332
    %v3349 = vunpack.c.h.s8.bf16 %v1333
    %v3350 = vunpack.c.h.s8.bf16 %v1334
    %v3351 = vunpack.c.h.s8.bf16 %v1335
    %v3352 = vunpack.c.h.s8.bf16 %v1336
    %v3353 = vunpack.c.h.s8.bf16 %v1337
    %v3354 = vunpack.c.h.s8.bf16 %v1338
    %v3355 = vunpack.c.h.s8.bf16 %v1339
    %v3356 = vunpack.c.h.s8.bf16 %v1340
    %v3357 = vunpack.c.h.s8.bf16 %v1341
    %v3358 = vunpack.c.h.s8.bf16 %v1342
    %v3359 = vunpack.c.h.s8.bf16 %v1343
    %v3360 = vunpack.c.h.s8.bf16 %v1344
    %v3361 = vunpack.c.l.s8.bf16 %v1345
    %v3362 = vunpack.c.l.s8.bf16 %v1346
    %v3363 = vunpack.c.l.s8.bf16 %v1347
    %v3364 = vunpack.c.l.s8.bf16 %v1348
    %v3365 = vunpack.c.l.s8.bf16 %v1349
    %v3366 = vunpack.c.l.s8.bf16 %v1350
    %v3367 = vunpack.c.l.s8.bf16 %v1351
    %v3368 = vunpack.c.l.s8.bf16 %v1352
    %v3369 = vunpack.c.l.s8.bf16 %v1353
    %v3370 = vunpack.c.l.s8.bf16 %v1354
    %v3371 = vunpack.c.l.s8.bf16 %v1355
    %v3372 = vunpack.c.l.s8.bf16 %v1356
    %v3373 = vunpack.c.l.s8.bf16 %v1357
    %v3374 = vunpack.c.l.s8.bf16 %v1358
    %v3375 = vunpack.c.l.s8.bf16 %v1359
    %v3376 = vunpack.c.l.s8.bf16 %v1360
    %v3377 = vunpack.c.h.s8.bf16 %v1345
    %v3378 = vunpack.c.h.s8.bf16 %v1346
    %v3379 = vunpack.c.h.s8.bf16 %v1347
    %v3380 = vunpack.c.h.s8.bf16 %v1348
    %v3381 = vunpack.c.h.s8.bf16 %v1349
    %v3382 = vunpack.c.h.s8.bf16 %v1350
    %v3383 = vunpack.c.h.s8.bf16 %v1351
    %v3384 = vunpack.c.h.s8.bf16 %v1352
    %v3385 = vunpack.c.h.s8.bf16 %v1353
    %v3386 = vunpack.c.h.s8.bf16 %v1354
    %v3387 = vunpack.c.h.s8.bf16 %v1355
    %v3388 = vunpack.c.h.s8.bf16 %v1356
    %v3389 = vunpack.c.h.s8.bf16 %v1357
    %v3390 = vunpack.c.h.s8.bf16 %v1358
    %v3391 = vunpack.c.h.s8.bf16 %v1359
    %v3392 = vunpack.c.h.s8.bf16 %v1360
    %v3393 = vunpack.c.l.s8.bf16 %v1361
    %v3394 = vunpack.c.l.s8.bf16 %v1362
    %v3395 = vunpack.c.l.s8.bf16 %v1363
    %v3396 = vunpack.c.l.s8.bf16 %v1364
    %v3397 = vunpack.c.l.s8.bf16 %v1365
    %v3398 = vunpack.c.l.s8.bf16 %v1366
    %v3399 = vunpack.c.l.s8.bf16 %v1367
    %v3400 = vunpack.c.l.s8.bf16 %v1368
    %v3401 = vunpack.c.l.s8.bf16 %v1369
    %v3402 = vunpack.c.l.s8.bf16 %v1370
    %v3403 = vunpack.c.l.s8.bf16 %v1371
    %v3404 = vunpack.c.l.s8.bf16 %v1372
    %v3405 = vunpack.c.l.s8.bf16 %v1373
    %v3406 = vunpack.c.l.s8.bf16 %v1374
    %v3407 = vunpack.c.l.s8.bf16 %v1375
    %v3408 = vunpack.c.l.s8.bf16 %v1376
    %v3409 = vunpack.c.h.s8.bf16 %v1361
    %v3410 = vunpack.c.h.s8.bf16 %v1362
    %v3411 = vunpack.c.h.s8.bf16 %v1363
    %v3412 = vunpack.c.h.s8.bf16 %v1364
    %v3413 = vunpack.c.h.s8.bf16 %v1365
    %v3414 = vunpack.c.h.s8.bf16 %v1366
    %v3415 = vunpack.c.h.s8.bf16 %v1367
    %v3416 = vunpack.c.h.s8.bf16 %v1368
    %v3417 = vunpack.c.h.s8.bf16 %v1369
    %v3418 = vunpack.c.h.s8.bf16 %v1370
    %v3419 = vunpack.c.h.s8.bf16 %v1371
    %v3420 = vunpack.c.h.s8.bf16 %v1372
    %v3421 = vunpack.c.h.s8.bf16 %v1373
    %v3422 = vunpack.c.h.s8.bf16 %v1374
    %v3423 = vunpack.c.h.s8.bf16 %v1375
    %v3424 = vunpack.c.h.s8.bf16 %v1376
    %v3425 = vpack.c.bf16 %v135, %v135
    %v3426 = vpack.c.bf16 %v142, %v142
    %v3427 = vpack.c.bf16 %v149, %v149
    %v3428 = vpack.c.bf16 %v156, %v156
    %v3429 = vpack.c.bf16 %v163, %v163
    %v3430 = vpack.c.bf16 %v170, %v170
    %v3431 = vpack.c.bf16 %v177, %v177
    %v3432 = vpack.c.bf16 %v184, %v184
    %v3433 = vpack.c.bf16 %v191, %v191
    %v3434 = vpack.c.bf16 %v198, %v198
    %v3435 = vpack.c.bf16 %v205, %v205
    %v3436 = vpack.c.bf16 %v212, %v212
    %v3437 = vpack.c.bf16 %v219, %v219
    %v3438 = vpack.c.bf16 %v226, %v226
    %v3439 = vpack.c.bf16 %v233, %v233
    %v3440 = vpack.c.bf16 %v240, %v240
    %v3441 = vpack.c.bf16 %v247, %v247
    %v3442 = vpack.c.bf16 %v254, %v254
    %v3443 = vpack.c.bf16 %v261, %v261
    %v3444 = vpack.c.bf16 %v268, %v268
    %v3445 = vpack.c.bf16 %v275, %v275
    %v3446 = vpack.c.bf16 %v282, %v282
    %v3447 = vpack.c.bf16 %v289, %v289
    %v3448 = vpack.c.bf16 %v296, %v296
    %v3449 = vpack.c.bf16 %v303, %v303
    %v3450 = vpack.c.bf16 %v310, %v310
    %v3451 = vpack.c.bf16 %v317, %v317
    %v3452 = vpack.c.bf16 %v324, %v324
    %v3453 = vpack.c.bf16 %v331, %v331
    %v3454 = vpack.c.bf16 %v338, %v338
    %v3455 = vpack.c.bf16 %v345, %v345
    %v3456 = vpack.c.bf16 %v352, %v352
    %v3489 = vunpack.c.l.b16 %v3425
    %v3490 = vunpack.c.l.b16 %v3426
    %v3491 = vunpack.c.l.b16 %v3427
    %v3492 = vunpack.c.l.b16 %v3428
    %v3493 = vunpack.c.l.b16 %v3429
    %v3494 = vunpack.c.l.b16 %v3430
    %v3495 = vunpack.c.l.b16 %v3431
    %v3496 = vunpack.c.l.b16 %v3432
    %v3497 = vunpack.c.l.b16 %v3433
    %v3498 = vunpack.c.l.b16 %v3434
    %v3499 = vunpack.c.l.b16 %v3435
    %v3500 = vunpack.c.l.b16 %v3436
    %v3501 = vunpack.c.l.b16 %v3437
    %v3502 = vunpack.c.l.b16 %v3438
    %v3503 = vunpack.c.l.b16 %v3439
    %v3504 = vunpack.c.l.b16 %v3440
    %v3505 = vunpack.c.l.b16 %v3441
    %v3506 = vunpack.c.l.b16 %v3442
    %v3507 = vunpack.c.l.b16 %v3443
    %v3508 = vunpack.c.l.b16 %v3444
    %v3509 = vunpack.c.l.b16 %v3445
    %v3510 = vunpack.c.l.b16 %v3446
    %v3511 = vunpack.c.l.b16 %v3447
    %v3512 = vunpack.c.l.b16 %v3448
    %v3513 = vunpack.c.l.b16 %v3449
    %v3514 = vunpack.c.l.b16 %v3450
    %v3515 = vunpack.c.l.b16 %v3451
    %v3516 = vunpack.c.l.b16 %v3452
    %v3517 = vunpack.c.l.b16 %v3453
    %v3518 = vunpack.c.l.b16 %v3454
    %v3519 = vunpack.c.l.b16 %v3455
    %v3520 = vunpack.c.l.b16 %v3456
    %vm3521 = vcmask 1041409
    %v3522 = vsel %vm3521, %v3505, %v3489
    %v3523 = vsel %vm3521, %v3506, %v3490
    %v3524 = vsel %vm3521, %v3507, %v3491
    %v3525 = vsel %vm3521, %v3508, %v3492
    %v3526 = vsel %vm3521, %v3509, %v3493
    %v3527 = vsel %vm3521, %v3510, %v3494
    %v3528 = vsel %vm3521, %v3511, %v3495
    %v3529 = vsel %vm3521, %v3512, %v3496
    %v3530 = vsel %vm3521, %v3513, %v3497
    %v3531 = vsel %vm3521, %v3514, %v3498
    %v3532 = vsel %vm3521, %v3515, %v3499
    %v3533 = vsel %vm3521, %v3516, %v3500
    %v3534 = vsel %vm3521, %v3517, %v3501
    %v3535 = vsel %vm3521, %v3518, %v3502
    %v3536 = vsel %vm3521, %v3519, %v3503
    %v3537 = vsel %vm3521, %v3520, %v3504
    %v3538 = vpack.c.b16 %v3522, %v3522
    %v3539 = vpack.c.b16 %v3523, %v3523
    %v3540 = vpack.c.b16 %v3524, %v3524
    %v3541 = vpack.c.b16 %v3525, %v3525
    %v3542 = vpack.c.b16 %v3526, %v3526
    %v3543 = vpack.c.b16 %v3527, %v3527
    %v3544 = vpack.c.b16 %v3528, %v3528
    %v3545 = vpack.c.b16 %v3529, %v3529
    %v3546 = vpack.c.b16 %v3530, %v3530
    %v3547 = vpack.c.b16 %v3531, %v3531
    %v3548 = vpack.c.b16 %v3532, %v3532
    %v3549 = vpack.c.b16 %v3533, %v3533
    %v3550 = vpack.c.b16 %v3534, %v3534
    %v3551 = vpack.c.b16 %v3535, %v3535
    %v3552 = vpack.c.b16 %v3536, %v3536
    %v3553 = vpack.c.b16 %v3537, %v3537
    %3570 = vmatprep.subr.bf16.mxu0 %v1490
    %3571 = vmatpush1.bf16.msra.mxu0 %v1489
    %3572 = vmatprep.subr.bf16.mxu0 %v1474
    %3573 = vmatpush1.bf16.msra.mxu0 %v1473
    %3574 = vmatprep.subr.bf16.mxu0 %v1458
    %3575 = vmatpush1.bf16.msra.mxu0 %v1457
    %3576 = vmatprep.subr.bf16.mxu0 %v1442
    %3577 = vmatpush1.bf16.msra.mxu0 %v1441
    %3578 = vmatprep.subr.bf16.mxu0 %v1426
    %3579 = vmatpush1.bf16.msra.mxu0 %v1425
    %3580 = vmatprep.subr.bf16.mxu0 %v1410
    %3581 = vmatpush1.bf16.msra.mxu0 %v1409
    %3582 = vmatprep.subr.bf16.mxu0 %v1394
    %3583 = vmatpush1.bf16.msra.mxu0 %v1393
    %3584 = vmatprep.subr.bf16.mxu0 %v1378
    %3585 = vmatpush1.bf16.msra.mxu0 %v1377
    %3586 = vmatprep.subr.bf16.mxu0 %v1618
    %3587 = vmatpush2.bf16.msra.mxu0 %v1617
    %3588 = vmatprep.subr.bf16.mxu0 %v1602
    %3589 = vmatpush2.bf16.msra.mxu0 %v1601
    %3590 = vmatprep.subr.bf16.mxu0 %v1586
    %3591 = vmatpush2.bf16.msra.mxu0 %v1585
    %3592 = vmatprep.subr.bf16.mxu0 %v1570
    %3593 = vmatpush2.bf16.msra.mxu0 %v1569
    %3594 = vmatprep.subr.bf16.mxu0 %v1554
    %3595 = vmatpush2.bf16.msra.mxu0 %v1553
    %3596 = vmatprep.subr.bf16.mxu0 %v1538
    %3597 = vmatpush2.bf16.msra.mxu0 %v1537
    %3598 = vmatprep.subr.bf16.mxu0 %v1522
    %3599 = vmatpush2.bf16.msra.mxu0 %v1521
    %3600 = vmatprep.subr.bf16.mxu0 %v1506
    %3601 = vmatpush2.bf16.msra.mxu0 %v1505
    %3602 = vmatprep.mubr.bf16.mxu0 %v3539
    %3603 = vmatmul.mubr.bf16.gmra.mxu0 %v3538
    %v3604 = vpop.f32.mrf.mxu0
    %v3605 = vadd.f32 0.0, %v3604
    %v3606 = vpop.f32.mrf.mxu0
    %v3607 = vadd.f32 0.0, %v3606
    %v3608 = vpop.f32.mrf.mxu0
    %v3609 = vpop.f32.mrf.mxu0
    %3610 = vdwg.mxu0
    %3611 = vmatprep.subr.bf16.mxu0 %v1746
    %3612 = vmatpush1.bf16.msra.mxu0 %v1745
    %3613 = vmatprep.subr.bf16.mxu0 %v1730
    %3614 = vmatpush1.bf16.msra.mxu0 %v1729
    %3615 = vmatprep.subr.bf16.mxu0 %v1714
    %3616 = vmatpush1.bf16.msra.mxu0 %v1713
    %3617 = vmatprep.subr.bf16.mxu0 %v1698
    %3618 = vmatpush1.bf16.msra.mxu0 %v1697
    %3619 = vmatprep.subr.bf16.mxu0 %v1682
    %3620 = vmatpush1.bf16.msra.mxu0 %v1681
    %3621 = vmatprep.subr.bf16.mxu0 %v1666
    %3622 = vmatpush1.bf16.msra.mxu0 %v1665
    %3623 = vmatprep.subr.bf16.mxu0 %v1650
    %3624 = vmatpush1.bf16.msra.mxu0 %v1649
    %3625 = vmatprep.subr.bf16.mxu0 %v1634
    %3626 = vmatpush1.bf16.msra.mxu0 %v1633
    %3627 = vmatprep.subr.bf16.mxu0 %v1874
    %3628 = vmatpush2.bf16.msra.mxu0 %v1873
    %3629 = vmatprep.subr.bf16.mxu0 %v1858
    %3630 = vmatpush2.bf16.msra.mxu0 %v1857
    %3631 = vmatprep.subr.bf16.mxu0 %v1842
    %3632 = vmatpush2.bf16.msra.mxu0 %v1841
    %3633 = vmatprep.subr.bf16.mxu0 %v1826
    %3634 = vmatpush2.bf16.msra.mxu0 %v1825
    %3635 = vmatprep.subr.bf16.mxu0 %v1810
    %3636 = vmatpush2.bf16.msra.mxu0 %v1809
    %3637 = vmatprep.subr.bf16.mxu0 %v1794
    %3638 = vmatpush2.bf16.msra.mxu0 %v1793
    %3639 = vmatprep.subr.bf16.mxu0 %v1778
    %3640 = vmatpush2.bf16.msra.mxu0 %v1777
    %3641 = vmatprep.subr.bf16.mxu0 %v1762
    %3642 = vmatpush2.bf16.msra.mxu0 %v1761
    %3643 = vmatprep.mubr.bf16.mxu0 %v3541
    %3644 = vmatmul.mubr.bf16.gmra.mxu0 %v3540
    %v3645 = vpop.f32.mrf.mxu0
    %v3646 = vadd.f32 %v3605, %v3645
    %v3647 = vpop.f32.mrf.mxu0
    %v3648 = vadd.f32 %v3607, %v3647
    %v3649 = vpop.f32.mrf.mxu0
    %v3650 = vpop.f32.mrf.mxu0
    %3651 = vdwg.mxu0
    %3652 = vmatprep.subr.bf16.mxu0 %v2002
    %3653 = vmatpush1.bf16.msra.mxu0 %v2001
    %3654 = vmatprep.subr.bf16.mxu0 %v1986
    %3655 = vmatpush1.bf16.msra.mxu0 %v1985
    %3656 = vmatprep.subr.bf16.mxu0 %v1970
    %3657 = vmatpush1.bf16.msra.mxu0 %v1969
    %3658 = vmatprep.subr.bf16.mxu0 %v1954
    %3659 = vmatpush1.bf16.msra.mxu0 %v1953
    %3660 = vmatprep.subr.bf16.mxu0 %v1938
    %3661 = vmatpush1.bf16.msra.mxu0 %v1937
    %3662 = vmatprep.subr.bf16.mxu0 %v1922
    %3663 = vmatpush1.bf16.msra.mxu0 %v1921
    %3664 = vmatprep.subr.bf16.mxu0 %v1906
    %3665 = vmatpush1.bf16.msra.mxu0 %v1905
    %3666 = vmatprep.subr.bf16.mxu0 %v1890
    %3667 = vmatpush1.bf16.msra.mxu0 %v1889
    %3668 = vmatprep.subr.bf16.mxu0 %v2130
    %3669 = vmatpush2.bf16.msra.mxu0 %v2129
    %3670 = vmatprep.subr.bf16.mxu0 %v2114
    %3671 = vmatpush2.bf16.msra.mxu0 %v2113
    %3672 = vmatprep.subr.bf16.mxu0 %v2098
    %3673 = vmatpush2.bf16.msra.mxu0 %v2097
    %3674 = vmatprep.subr.bf16.mxu0 %v2082
    %3675 = vmatpush2.bf16.msra.mxu0 %v2081
    %3676 = vmatprep.subr.bf16.mxu0 %v2066
    %3677 = vmatpush2.bf16.msra.mxu0 %v2065
    %3678 = vmatprep.subr.bf16.mxu0 %v2050
    %3679 = vmatpush2.bf16.msra.mxu0 %v2049
    %3680 = vmatprep.subr.bf16.mxu0 %v2034
    %3681 = vmatpush2.bf16.msra.mxu0 %v2033
    %3682 = vmatprep.subr.bf16.mxu0 %v2018
    %3683 = vmatpush2.bf16.msra.mxu0 %v2017
    %3684 = vmatprep.mubr.bf16.mxu0 %v3543
    %3685 = vmatmul.mubr.bf16.gmra.mxu0 %v3542
    %v3686 = vpop.f32.mrf.mxu0
    %v3687 = vadd.f32 %v3646, %v3686
    %v3688 = vpop.f32.mrf.mxu0
    %v3689 = vadd.f32 %v3648, %v3688
    %v3690 = vpop.f32.mrf.mxu0
    %v3691 = vpop.f32.mrf.mxu0
    %3692 = vdwg.mxu0
    %3693 = vmatprep.subr.bf16.mxu0 %v2258
    %3694 = vmatpush1.bf16.msra.mxu0 %v2257
    %3695 = vmatprep.subr.bf16.mxu0 %v2242
    %3696 = vmatpush1.bf16.msra.mxu0 %v2241
    %3697 = vmatprep.subr.bf16.mxu0 %v2226
    %3698 = vmatpush1.bf16.msra.mxu0 %v2225
    %3699 = vmatprep.subr.bf16.mxu0 %v2210
    %3700 = vmatpush1.bf16.msra.mxu0 %v2209
    %3701 = vmatprep.subr.bf16.mxu0 %v2194
    %3702 = vmatpush1.bf16.msra.mxu0 %v2193
    %3703 = vmatprep.subr.bf16.mxu0 %v2178
    %3704 = vmatpush1.bf16.msra.mxu0 %v2177
    %3705 = vmatprep.subr.bf16.mxu0 %v2162
    %3706 = vmatpush1.bf16.msra.mxu0 %v2161
    %3707 = vmatprep.subr.bf16.mxu0 %v2146
    %3708 = vmatpush1.bf16.msra.mxu0 %v2145
    %3709 = vmatprep.subr.bf16.mxu0 %v2386
    %3710 = vmatpush2.bf16.msra.mxu0 %v2385
    %3711 = vmatprep.subr.bf16.mxu0 %v2370
    %3712 = vmatpush2.bf16.msra.mxu0 %v2369
    %3713 = vmatprep.subr.bf16.mxu0 %v2354
    %3714 = vmatpush2.bf16.msra.mxu0 %v2353
    %3715 = vmatprep.subr.bf16.mxu0 %v2338
    %3716 = vmatpush2.bf16.msra.mxu0 %v2337
    %3717 = vmatprep.subr.bf16.mxu0 %v2322
    %3718 = vmatpush2.bf16.msra.mxu0 %v2321
    %3719 = vmatprep.subr.bf16.mxu0 %v2306
    %3720 = vmatpush2.bf16.msra.mxu0 %v2305
    %3721 = vmatprep.subr.bf16.mxu0 %v2290
    %3722 = vmatpush2.bf16.msra.mxu0 %v2289
    %3723 = vmatprep.subr.bf16.mxu0 %v2274
    %3724 = vmatpush2.bf16.msra.mxu0 %v2273
    %3725 = vmatprep.mubr.bf16.mxu0 %v3545
    %3726 = vmatmul.mubr.bf16.gmra.mxu0 %v3544
    %v3727 = vpop.f32.mrf.mxu0
    %v3728 = vadd.f32 %v3687, %v3727
    %v3729 = vpop.f32.mrf.mxu0
    %v3730 = vadd.f32 %v3689, %v3729
    %v3731 = vpop.f32.mrf.mxu0
    %v3732 = vpop.f32.mrf.mxu0
    %3733 = vdwg.mxu0
    %3734 = vmatprep.subr.bf16.mxu0 %v2514
    %3735 = vmatpush1.bf16.msra.mxu0 %v2513
    %3736 = vmatprep.subr.bf16.mxu0 %v2498
    %3737 = vmatpush1.bf16.msra.mxu0 %v2497
    %3738 = vmatprep.subr.bf16.mxu0 %v2482
    %3739 = vmatpush1.bf16.msra.mxu0 %v2481
    %3740 = vmatprep.subr.bf16.mxu0 %v2466
    %3741 = vmatpush1.bf16.msra.mxu0 %v2465
    %3742 = vmatprep.subr.bf16.mxu0 %v2450
    %3743 = vmatpush1.bf16.msra.mxu0 %v2449
    %3744 = vmatprep.subr.bf16.mxu0 %v2434
    %3745 = vmatpush1.bf16.msra.mxu0 %v2433
    %3746 = vmatprep.subr.bf16.mxu0 %v2418
    %3747 = vmatpush1.bf16.msra.mxu0 %v2417
    %3748 = vmatprep.subr.bf16.mxu0 %v2402
    %3749 = vmatpush1.bf16.msra.mxu0 %v2401
    %3750 = vmatprep.subr.bf16.mxu0 %v2642
    %3751 = vmatpush2.bf16.msra.mxu0 %v2641
    %3752 = vmatprep.subr.bf16.mxu0 %v2626
    %3753 = vmatpush2.bf16.msra.mxu0 %v2625
    %3754 = vmatprep.subr.bf16.mxu0 %v2610
    %3755 = vmatpush2.bf16.msra.mxu0 %v2609
    %3756 = vmatprep.subr.bf16.mxu0 %v2594
    %3757 = vmatpush2.bf16.msra.mxu0 %v2593
    %3758 = vmatprep.subr.bf16.mxu0 %v2578
    %3759 = vmatpush2.bf16.msra.mxu0 %v2577
    %3760 = vmatprep.subr.bf16.mxu0 %v2562
    %3761 = vmatpush2.bf16.msra.mxu0 %v2561
    %3762 = vmatprep.subr.bf16.mxu0 %v2546
    %3763 = vmatpush2.bf16.msra.mxu0 %v2545
    %3764 = vmatprep.subr.bf16.mxu0 %v2530
    %3765 = vmatpush2.bf16.msra.mxu0 %v2529
    %3766 = vmatprep.mubr.bf16.mxu0 %v3547
    %3767 = vmatmul.mubr.bf16.gmra.mxu0 %v3546
    %v3768 = vpop.f32.mrf.mxu0
    %v3769 = vadd.f32 %v3728, %v3768
    %v3770 = vpop.f32.mrf.mxu0
    %v3771 = vadd.f32 %v3730, %v3770
    %v3772 = vpop.f32.mrf.mxu0
    %v3773 = vpop.f32.mrf.mxu0
    %3774 = vdwg.mxu0
    %3775 = vmatprep.subr.bf16.mxu0 %v2770
    %3776 = vmatpush1.bf16.msra.mxu0 %v2769
    %3777 = vmatprep.subr.bf16.mxu0 %v2754
    %3778 = vmatpush1.bf16.msra.mxu0 %v2753
    %3779 = vmatprep.subr.bf16.mxu0 %v2738
    %3780 = vmatpush1.bf16.msra.mxu0 %v2737
    %3781 = vmatprep.subr.bf16.mxu0 %v2722
    %3782 = vmatpush1.bf16.msra.mxu0 %v2721
    %3783 = vmatprep.subr.bf16.mxu0 %v2706
    %3784 = vmatpush1.bf16.msra.mxu0 %v2705
    %3785 = vmatprep.subr.bf16.mxu0 %v2690
    %3786 = vmatpush1.bf16.msra.mxu0 %v2689
    %3787 = vmatprep.subr.bf16.mxu0 %v2674
    %3788 = vmatpush1.bf16.msra.mxu0 %v2673
    %3789 = vmatprep.subr.bf16.mxu0 %v2658
    %3790 = vmatpush1.bf16.msra.mxu0 %v2657
    %3791 = vmatprep.subr.bf16.mxu0 %v2898
    %3792 = vmatpush2.bf16.msra.mxu0 %v2897
    %3793 = vmatprep.subr.bf16.mxu0 %v2882
    %3794 = vmatpush2.bf16.msra.mxu0 %v2881
    %3795 = vmatprep.subr.bf16.mxu0 %v2866
    %3796 = vmatpush2.bf16.msra.mxu0 %v2865
    %3797 = vmatprep.subr.bf16.mxu0 %v2850
    %3798 = vmatpush2.bf16.msra.mxu0 %v2849
    %3799 = vmatprep.subr.bf16.mxu0 %v2834
    %3800 = vmatpush2.bf16.msra.mxu0 %v2833
    %3801 = vmatprep.subr.bf16.mxu0 %v2818
    %3802 = vmatpush2.bf16.msra.mxu0 %v2817
    %3803 = vmatprep.subr.bf16.mxu0 %v2802
    %3804 = vmatpush2.bf16.msra.mxu0 %v2801
    %3805 = vmatprep.subr.bf16.mxu0 %v2786
    %3806 = vmatpush2.bf16.msra.mxu0 %v2785
    %3807 = vmatprep.mubr.bf16.mxu0 %v3549
    %3808 = vmatmul.mubr.bf16.gmra.mxu0 %v3548
    %v3809 = vpop.f32.mrf.mxu0
    %v3810 = vadd.f32 %v3769, %v3809
    %v3811 = vpop.f32.mrf.mxu0
    %v3812 = vadd.f32 %v3771, %v3811
    %v3813 = vpop.f32.mrf.mxu0
    %v3814 = vpop.f32.mrf.mxu0
    %3815 = vdwg.mxu0
    %3816 = vmatprep.subr.bf16.mxu0 %v3026
    %3817 = vmatpush1.bf16.msra.mxu0 %v3025
    %3818 = vmatprep.subr.bf16.mxu0 %v3010
    %3819 = vmatpush1.bf16.msra.mxu0 %v3009
    %3820 = vmatprep.subr.bf16.mxu0 %v2994
    %3821 = vmatpush1.bf16.msra.mxu0 %v2993
    %3822 = vmatprep.subr.bf16.mxu0 %v2978
    %3823 = vmatpush1.bf16.msra.mxu0 %v2977
    %3824 = vmatprep.subr.bf16.mxu0 %v2962
    %3825 = vmatpush1.bf16.msra.mxu0 %v2961
    %3826 = vmatprep.subr.bf16.mxu0 %v2946
    %3827 = vmatpush1.bf16.msra.mxu0 %v2945
    %3828 = vmatprep.subr.bf16.mxu0 %v2930
    %3829 = vmatpush1.bf16.msra.mxu0 %v2929
    %3830 = vmatprep.subr.bf16.mxu0 %v2914
    %3831 = vmatpush1.bf16.msra.mxu0 %v2913
    %3832 = vmatprep.subr.bf16.mxu0 %v3154
    %3833 = vmatpush2.bf16.msra.mxu0 %v3153
    %3834 = vmatprep.subr.bf16.mxu0 %v3138
    %3835 = vmatpush2.bf16.msra.mxu0 %v3137
    %3836 = vmatprep.subr.bf16.mxu0 %v3122
    %3837 = vmatpush2.bf16.msra.mxu0 %v3121
    %3838 = vmatprep.subr.bf16.mxu0 %v3106
    %3839 = vmatpush2.bf16.msra.mxu0 %v3105
    %3840 = vmatprep.subr.bf16.mxu0 %v3090
    %3841 = vmatpush2.bf16.msra.mxu0 %v3089
    %3842 = vmatprep.subr.bf16.mxu0 %v3074
    %3843 = vmatpush2.bf16.msra.mxu0 %v3073
    %3844 = vmatprep.subr.bf16.mxu0 %v3058
    %3845 = vmatpush2.bf16.msra.mxu0 %v3057
    %3846 = vmatprep.subr.bf16.mxu0 %v3042
    %3847 = vmatpush2.bf16.msra.mxu0 %v3041
    %3848 = vmatprep.mubr.bf16.mxu0 %v3551
    %3849 = vmatmul.mubr.bf16.gmra.mxu0 %v3550
    %v3850 = vpop.f32.mrf.mxu0
    %v3851 = vadd.f32 %v3810, %v3850
    %v3852 = vpop.f32.mrf.mxu0
    %v3853 = vadd.f32 %v3812, %v3852
    %v3854 = vpop.f32.mrf.mxu0
    %v3855 = vpop.f32.mrf.mxu0
    %3856 = vdwg.mxu0
    %3857 = vmatprep.subr.bf16.mxu0 %v3282
    %3858 = vmatpush1.bf16.msra.mxu0 %v3281
    %3859 = vmatprep.subr.bf16.mxu0 %v3266
    %3860 = vmatpush1.bf16.msra.mxu0 %v3265
    %3861 = vmatprep.subr.bf16.mxu0 %v3250
    %3862 = vmatpush1.bf16.msra.mxu0 %v3249
    %3863 = vmatprep.subr.bf16.mxu0 %v3234
    %3864 = vmatpush1.bf16.msra.mxu0 %v3233
    %3865 = vmatprep.subr.bf16.mxu0 %v3218
    %3866 = vmatpush1.bf16.msra.mxu0 %v3217
    %3867 = vmatprep.subr.bf16.mxu0 %v3202
    %3868 = vmatpush1.bf16.msra.mxu0 %v3201
    %3869 = vmatprep.subr.bf16.mxu0 %v3186
    %3870 = vmatpush1.bf16.msra.mxu0 %v3185
    %3871 = vmatprep.subr.bf16.mxu0 %v3170
    %3872 = vmatpush1.bf16.msra.mxu0 %v3169
    %3873 = vmatprep.subr.bf16.mxu0 %v3410
    %3874 = vmatpush2.bf16.msra.mxu0 %v3409
    %3875 = vmatprep.subr.bf16.mxu0 %v3394
    %3876 = vmatpush2.bf16.msra.mxu0 %v3393
    %3877 = vmatprep.subr.bf16.mxu0 %v3378
    %3878 = vmatpush2.bf16.msra.mxu0 %v3377
    %3879 = vmatprep.subr.bf16.mxu0 %v3362
    %3880 = vmatpush2.bf16.msra.mxu0 %v3361
    %3881 = vmatprep.subr.bf16.mxu0 %v3346
    %3882 = vmatpush2.bf16.msra.mxu0 %v3345
    %3883 = vmatprep.subr.bf16.mxu0 %v3330
    %3884 = vmatpush2.bf16.msra.mxu0 %v3329
    %3885 = vmatprep.subr.bf16.mxu0 %v3314
    %3886 = vmatpush2.bf16.msra.mxu0 %v3313
    %3887 = vmatprep.subr.bf16.mxu0 %v3298
    %3888 = vmatpush2.bf16.msra.mxu0 %v3297
    %3889 = vmatprep.mubr.bf16.mxu0 %v3553
    %3890 = vmatmul.mubr.bf16.gmra.mxu0 %v3552
    %v3891 = vpop.f32.mrf.mxu0
    %v3892 = vadd.f32 %v3851, %v3891
    %v3893 = vpop.f32.mrf.mxu0
    %v3894 = vadd.f32 %v3853, %v3893
    %v3895 = vpop.f32.mrf.mxu0
    %v3896 = vpop.f32.mrf.mxu0
    %3897 = vdwg.mxu0
    %3898 = vmatprep.subr.bf16.mxu0 %v1492
    %3899 = vmatpush1.bf16.msra.mxu0 %v1491
    %3900 = vmatprep.subr.bf16.mxu0 %v1476
    %3901 = vmatpush1.bf16.msra.mxu0 %v1475
    %3902 = vmatprep.subr.bf16.mxu0 %v1460
    %3903 = vmatpush1.bf16.msra.mxu0 %v1459
    %3904 = vmatprep.subr.bf16.mxu0 %v1444
    %3905 = vmatpush1.bf16.msra.mxu0 %v1443
    %3906 = vmatprep.subr.bf16.mxu0 %v1428
    %3907 = vmatpush1.bf16.msra.mxu0 %v1427
    %3908 = vmatprep.subr.bf16.mxu0 %v1412
    %3909 = vmatpush1.bf16.msra.mxu0 %v1411
    %3910 = vmatprep.subr.bf16.mxu0 %v1396
    %3911 = vmatpush1.bf16.msra.mxu0 %v1395
    %3912 = vmatprep.subr.bf16.mxu0 %v1380
    %3913 = vmatpush1.bf16.msra.mxu0 %v1379
    %3914 = vmatprep.subr.bf16.mxu0 %v1620
    %3915 = vmatpush2.bf16.msra.mxu0 %v1619
    %3916 = vmatprep.subr.bf16.mxu0 %v1604
    %3917 = vmatpush2.bf16.msra.mxu0 %v1603
    %3918 = vmatprep.subr.bf16.mxu0 %v1588
    %3919 = vmatpush2.bf16.msra.mxu0 %v1587
    %3920 = vmatprep.subr.bf16.mxu0 %v1572
    %3921 = vmatpush2.bf16.msra.mxu0 %v1571
    %3922 = vmatprep.subr.bf16.mxu0 %v1556
    %3923 = vmatpush2.bf16.msra.mxu0 %v1555
    %3924 = vmatprep.subr.bf16.mxu0 %v1540
    %3925 = vmatpush2.bf16.msra.mxu0 %v1539
    %3926 = vmatprep.subr.bf16.mxu0 %v1524
    %3927 = vmatpush2.bf16.msra.mxu0 %v1523
    %3928 = vmatprep.subr.bf16.mxu0 %v1508
    %3929 = vmatpush2.bf16.msra.mxu0 %v1507
    %3930 = vmatprep.mubr.bf16.mxu0 %v3539
    %3931 = vmatmul.mubr.bf16.gmra.mxu0 %v3538
    %v3932 = vpop.f32.mrf.mxu0
    %v3933 = vadd.f32 0.0, %v3932
    %v3934 = vpop.f32.mrf.mxu0
    %v3935 = vadd.f32 0.0, %v3934
    %v3936 = vpop.f32.mrf.mxu0
    %v3937 = vpop.f32.mrf.mxu0
    %3938 = vdwg.mxu0
    %3939 = vmatprep.subr.bf16.mxu0 %v1748
    %3940 = vmatpush1.bf16.msra.mxu0 %v1747
    %3941 = vmatprep.subr.bf16.mxu0 %v1732
    %3942 = vmatpush1.bf16.msra.mxu0 %v1731
    %3943 = vmatprep.subr.bf16.mxu0 %v1716
    %3944 = vmatpush1.bf16.msra.mxu0 %v1715
    %3945 = vmatprep.subr.bf16.mxu0 %v1700
    %3946 = vmatpush1.bf16.msra.mxu0 %v1699
    %3947 = vmatprep.subr.bf16.mxu0 %v1684
    %3948 = vmatpush1.bf16.msra.mxu0 %v1683
    %3949 = vmatprep.subr.bf16.mxu0 %v1668
    %3950 = vmatpush1.bf16.msra.mxu0 %v1667
    %3951 = vmatprep.subr.bf16.mxu0 %v1652
    %3952 = vmatpush1.bf16.msra.mxu0 %v1651
    %3953 = vmatprep.subr.bf16.mxu0 %v1636
    %3954 = vmatpush1.bf16.msra.mxu0 %v1635
    %3955 = vmatprep.subr.bf16.mxu0 %v1876
    %3956 = vmatpush2.bf16.msra.mxu0 %v1875
    %3957 = vmatprep.subr.bf16.mxu0 %v1860
    %3958 = vmatpush2.bf16.msra.mxu0 %v1859
    %3959 = vmatprep.subr.bf16.mxu0 %v1844
    %3960 = vmatpush2.bf16.msra.mxu0 %v1843
    %3961 = vmatprep.subr.bf16.mxu0 %v1828
    %3962 = vmatpush2.bf16.msra.mxu0 %v1827
    %3963 = vmatprep.subr.bf16.mxu0 %v1812
    %3964 = vmatpush2.bf16.msra.mxu0 %v1811
    %3965 = vmatprep.subr.bf16.mxu0 %v1796
    %3966 = vmatpush2.bf16.msra.mxu0 %v1795
    %3967 = vmatprep.subr.bf16.mxu0 %v1780
    %3968 = vmatpush2.bf16.msra.mxu0 %v1779
    %3969 = vmatprep.subr.bf16.mxu0 %v1764
    %3970 = vmatpush2.bf16.msra.mxu0 %v1763
    %3971 = vmatprep.mubr.bf16.mxu0 %v3541
    %3972 = vmatmul.mubr.bf16.gmra.mxu0 %v3540
    %v3973 = vpop.f32.mrf.mxu0
    %v3974 = vadd.f32 %v3933, %v3973
    %v3975 = vpop.f32.mrf.mxu0
    %v3976 = vadd.f32 %v3935, %v3975
    %v3977 = vpop.f32.mrf.mxu0
    %v3978 = vpop.f32.mrf.mxu0
    %3979 = vdwg.mxu0
    %3980 = vmatprep.subr.bf16.mxu0 %v2004
    %3981 = vmatpush1.bf16.msra.mxu0 %v2003
    %3982 = vmatprep.subr.bf16.mxu0 %v1988
    %3983 = vmatpush1.bf16.msra.mxu0 %v1987
    %3984 = vmatprep.subr.bf16.mxu0 %v1972
    %3985 = vmatpush1.bf16.msra.mxu0 %v1971
    %3986 = vmatprep.subr.bf16.mxu0 %v1956
    %3987 = vmatpush1.bf16.msra.mxu0 %v1955
    %3988 = vmatprep.subr.bf16.mxu0 %v1940
    %3989 = vmatpush1.bf16.msra.mxu0 %v1939
    %3990 = vmatprep.subr.bf16.mxu0 %v1924
    %3991 = vmatpush1.bf16.msra.mxu0 %v1923
    %3992 = vmatprep.subr.bf16.mxu0 %v1908
    %3993 = vmatpush1.bf16.msra.mxu0 %v1907
    %3994 = vmatprep.subr.bf16.mxu0 %v1892
    %3995 = vmatpush1.bf16.msra.mxu0 %v1891
    %3996 = vmatprep.subr.bf16.mxu0 %v2132
    %3997 = vmatpush2.bf16.msra.mxu0 %v2131
    %3998 = vmatprep.subr.bf16.mxu0 %v2116
    %3999 = vmatpush2.bf16.msra.mxu0 %v2115
    %4000 = vmatprep.subr.bf16.mxu0 %v2100
    %4001 = vmatpush2.bf16.msra.mxu0 %v2099
    %4002 = vmatprep.subr.bf16.mxu0 %v2084
    %4003 = vmatpush2.bf16.msra.mxu0 %v2083
    %4004 = vmatprep.subr.bf16.mxu0 %v2068
    %4005 = vmatpush2.bf16.msra.mxu0 %v2067
    %4006 = vmatprep.subr.bf16.mxu0 %v2052
    %4007 = vmatpush2.bf16.msra.mxu0 %v2051
    %4008 = vmatprep.subr.bf16.mxu0 %v2036
    %4009 = vmatpush2.bf16.msra.mxu0 %v2035
    %4010 = vmatprep.subr.bf16.mxu0 %v2020
    %4011 = vmatpush2.bf16.msra.mxu0 %v2019
    %4012 = vmatprep.mubr.bf16.mxu0 %v3543
    %4013 = vmatmul.mubr.bf16.gmra.mxu0 %v3542
    %v4014 = vpop.f32.mrf.mxu0
    %v4015 = vadd.f32 %v3974, %v4014
    %v4016 = vpop.f32.mrf.mxu0
    %v4017 = vadd.f32 %v3976, %v4016
    %v4018 = vpop.f32.mrf.mxu0
    %v4019 = vpop.f32.mrf.mxu0
    %4020 = vdwg.mxu0
    %4021 = vmatprep.subr.bf16.mxu0 %v2260
    %4022 = vmatpush1.bf16.msra.mxu0 %v2259
    %4023 = vmatprep.subr.bf16.mxu0 %v2244
    %4024 = vmatpush1.bf16.msra.mxu0 %v2243
    %4025 = vmatprep.subr.bf16.mxu0 %v2228
    %4026 = vmatpush1.bf16.msra.mxu0 %v2227
    %4027 = vmatprep.subr.bf16.mxu0 %v2212
    %4028 = vmatpush1.bf16.msra.mxu0 %v2211
    %4029 = vmatprep.subr.bf16.mxu0 %v2196
    %4030 = vmatpush1.bf16.msra.mxu0 %v2195
    %4031 = vmatprep.subr.bf16.mxu0 %v2180
    %4032 = vmatpush1.bf16.msra.mxu0 %v2179
    %4033 = vmatprep.subr.bf16.mxu0 %v2164
    %4034 = vmatpush1.bf16.msra.mxu0 %v2163
    %4035 = vmatprep.subr.bf16.mxu0 %v2148
    %4036 = vmatpush1.bf16.msra.mxu0 %v2147
    %4037 = vmatprep.subr.bf16.mxu0 %v2388
    %4038 = vmatpush2.bf16.msra.mxu0 %v2387
    %4039 = vmatprep.subr.bf16.mxu0 %v2372
    %4040 = vmatpush2.bf16.msra.mxu0 %v2371
    %4041 = vmatprep.subr.bf16.mxu0 %v2356
    %4042 = vmatpush2.bf16.msra.mxu0 %v2355
    %4043 = vmatprep.subr.bf16.mxu0 %v2340
    %4044 = vmatpush2.bf16.msra.mxu0 %v2339
    %4045 = vmatprep.subr.bf16.mxu0 %v2324
    %4046 = vmatpush2.bf16.msra.mxu0 %v2323
    %4047 = vmatprep.subr.bf16.mxu0 %v2308
    %4048 = vmatpush2.bf16.msra.mxu0 %v2307
    %4049 = vmatprep.subr.bf16.mxu0 %v2292
    %4050 = vmatpush2.bf16.msra.mxu0 %v2291
    %4051 = vmatprep.subr.bf16.mxu0 %v2276
    %4052 = vmatpush2.bf16.msra.mxu0 %v2275
    %4053 = vmatprep.mubr.bf16.mxu0 %v3545
    %4054 = vmatmul.mubr.bf16.gmra.mxu0 %v3544
    %v4055 = vpop.f32.mrf.mxu0
    %v4056 = vadd.f32 %v4015, %v4055
    %v4057 = vpop.f32.mrf.mxu0
    %v4058 = vadd.f32 %v4017, %v4057
    %v4059 = vpop.f32.mrf.mxu0
    %v4060 = vpop.f32.mrf.mxu0
    %4061 = vdwg.mxu0
    %4062 = vmatprep.subr.bf16.mxu0 %v2516
    %4063 = vmatpush1.bf16.msra.mxu0 %v2515
    %4064 = vmatprep.subr.bf16.mxu0 %v2500
    %4065 = vmatpush1.bf16.msra.mxu0 %v2499
    %4066 = vmatprep.subr.bf16.mxu0 %v2484
    %4067 = vmatpush1.bf16.msra.mxu0 %v2483
    %4068 = vmatprep.subr.bf16.mxu0 %v2468
    %4069 = vmatpush1.bf16.msra.mxu0 %v2467
    %4070 = vmatprep.subr.bf16.mxu0 %v2452
    %4071 = vmatpush1.bf16.msra.mxu0 %v2451
    %4072 = vmatprep.subr.bf16.mxu0 %v2436
    %4073 = vmatpush1.bf16.msra.mxu0 %v2435
    %4074 = vmatprep.subr.bf16.mxu0 %v2420
    %4075 = vmatpush1.bf16.msra.mxu0 %v2419
    %4076 = vmatprep.subr.bf16.mxu0 %v2404
    %4077 = vmatpush1.bf16.msra.mxu0 %v2403
    %4078 = vmatprep.subr.bf16.mxu0 %v2644
    %4079 = vmatpush2.bf16.msra.mxu0 %v2643
    %4080 = vmatprep.subr.bf16.mxu0 %v2628
    %4081 = vmatpush2.bf16.msra.mxu0 %v2627
    %4082 = vmatprep.subr.bf16.mxu0 %v2612
    %4083 = vmatpush2.bf16.msra.mxu0 %v2611
    %4084 = vmatprep.subr.bf16.mxu0 %v2596
    %4085 = vmatpush2.bf16.msra.mxu0 %v2595
    %4086 = vmatprep.subr.bf16.mxu0 %v2580
    %4087 = vmatpush2.bf16.msra.mxu0 %v2579
    %4088 = vmatprep.subr.bf16.mxu0 %v2564
    %4089 = vmatpush2.bf16.msra.mxu0 %v2563
    %4090 = vmatprep.subr.bf16.mxu0 %v2548
    %4091 = vmatpush2.bf16.msra.mxu0 %v2547
    %4092 = vmatprep.subr.bf16.mxu0 %v2532
    %4093 = vmatpush2.bf16.msra.mxu0 %v2531
    %4094 = vmatprep.mubr.bf16.mxu0 %v3547
    %4095 = vmatmul.mubr.bf16.gmra.mxu0 %v3546
    %v4096 = vpop.f32.mrf.mxu0
    %v4097 = vadd.f32 %v4056, %v4096
    %v4098 = vpop.f32.mrf.mxu0
    %v4099 = vadd.f32 %v4058, %v4098
    %v4100 = vpop.f32.mrf.mxu0
    %v4101 = vpop.f32.mrf.mxu0
    %4102 = vdwg.mxu0
    %4103 = vmatprep.subr.bf16.mxu0 %v2772
    %4104 = vmatpush1.bf16.msra.mxu0 %v2771
    %4105 = vmatprep.subr.bf16.mxu0 %v2756
    %4106 = vmatpush1.bf16.msra.mxu0 %v2755
    %4107 = vmatprep.subr.bf16.mxu0 %v2740
    %4108 = vmatpush1.bf16.msra.mxu0 %v2739
    %4109 = vmatprep.subr.bf16.mxu0 %v2724
    %4110 = vmatpush1.bf16.msra.mxu0 %v2723
    %4111 = vmatprep.subr.bf16.mxu0 %v2708
    %4112 = vmatpush1.bf16.msra.mxu0 %v2707
    %4113 = vmatprep.subr.bf16.mxu0 %v2692
    %4114 = vmatpush1.bf16.msra.mxu0 %v2691
    %4115 = vmatprep.subr.bf16.mxu0 %v2676
    %4116 = vmatpush1.bf16.msra.mxu0 %v2675
    %4117 = vmatprep.subr.bf16.mxu0 %v2660
    %4118 = vmatpush1.bf16.msra.mxu0 %v2659
    %4119 = vmatprep.subr.bf16.mxu0 %v2900
    %4120 = vmatpush2.bf16.msra.mxu0 %v2899
    %4121 = vmatprep.subr.bf16.mxu0 %v2884
    %4122 = vmatpush2.bf16.msra.mxu0 %v2883
    %4123 = vmatprep.subr.bf16.mxu0 %v2868
    %4124 = vmatpush2.bf16.msra.mxu0 %v2867
    %4125 = vmatprep.subr.bf16.mxu0 %v2852
    %4126 = vmatpush2.bf16.msra.mxu0 %v2851
    %4127 = vmatprep.subr.bf16.mxu0 %v2836
    %4128 = vmatpush2.bf16.msra.mxu0 %v2835
    %4129 = vmatprep.subr.bf16.mxu0 %v2820
    %4130 = vmatpush2.bf16.msra.mxu0 %v2819
    %4131 = vmatprep.subr.bf16.mxu0 %v2804
    %4132 = vmatpush2.bf16.msra.mxu0 %v2803
    %4133 = vmatprep.subr.bf16.mxu0 %v2788
    %4134 = vmatpush2.bf16.msra.mxu0 %v2787
    %4135 = vmatprep.mubr.bf16.mxu0 %v3549
    %4136 = vmatmul.mubr.bf16.gmra.mxu0 %v3548
    %v4137 = vpop.f32.mrf.mxu0
    %v4138 = vadd.f32 %v4097, %v4137
    %v4139 = vpop.f32.mrf.mxu0
    %v4140 = vadd.f32 %v4099, %v4139
    %v4141 = vpop.f32.mrf.mxu0
    %v4142 = vpop.f32.mrf.mxu0
    %4143 = vdwg.mxu0
    %4144 = vmatprep.subr.bf16.mxu0 %v3028
    %4145 = vmatpush1.bf16.msra.mxu0 %v3027
    %4146 = vmatprep.subr.bf16.mxu0 %v3012
    %4147 = vmatpush1.bf16.msra.mxu0 %v3011
    %4148 = vmatprep.subr.bf16.mxu0 %v2996
    %4149 = vmatpush1.bf16.msra.mxu0 %v2995
    %4150 = vmatprep.subr.bf16.mxu0 %v2980
    %4151 = vmatpush1.bf16.msra.mxu0 %v2979
    %4152 = vmatprep.subr.bf16.mxu0 %v2964
    %4153 = vmatpush1.bf16.msra.mxu0 %v2963
    %4154 = vmatprep.subr.bf16.mxu0 %v2948
    %4155 = vmatpush1.bf16.msra.mxu0 %v2947
    %4156 = vmatprep.subr.bf16.mxu0 %v2932
    %4157 = vmatpush1.bf16.msra.mxu0 %v2931
    %4158 = vmatprep.subr.bf16.mxu0 %v2916
    %4159 = vmatpush1.bf16.msra.mxu0 %v2915
    %4160 = vmatprep.subr.bf16.mxu0 %v3156
    %4161 = vmatpush2.bf16.msra.mxu0 %v3155
    %4162 = vmatprep.subr.bf16.mxu0 %v3140
    %4163 = vmatpush2.bf16.msra.mxu0 %v3139
    %4164 = vmatprep.subr.bf16.mxu0 %v3124
    %4165 = vmatpush2.bf16.msra.mxu0 %v3123
    %4166 = vmatprep.subr.bf16.mxu0 %v3108
    %4167 = vmatpush2.bf16.msra.mxu0 %v3107
    %4168 = vmatprep.subr.bf16.mxu0 %v3092
    %4169 = vmatpush2.bf16.msra.mxu0 %v3091
    %4170 = vmatprep.subr.bf16.mxu0 %v3076
    %4171 = vmatpush2.bf16.msra.mxu0 %v3075
    %4172 = vmatprep.subr.bf16.mxu0 %v3060
    %4173 = vmatpush2.bf16.msra.mxu0 %v3059
    %4174 = vmatprep.subr.bf16.mxu0 %v3044
    %4175 = vmatpush2.bf16.msra.mxu0 %v3043
    %4176 = vmatprep.mubr.bf16.mxu0 %v3551
    %4177 = vmatmul.mubr.bf16.gmra.mxu0 %v3550
    %v4178 = vpop.f32.mrf.mxu0
    %v4179 = vadd.f32 %v4138, %v4178
    %v4180 = vpop.f32.mrf.mxu0
    %v4181 = vadd.f32 %v4140, %v4180
    %v4182 = vpop.f32.mrf.mxu0
    %v4183 = vpop.f32.mrf.mxu0
    %4184 = vdwg.mxu0
    %4185 = vmatprep.subr.bf16.mxu0 %v3284
    %4186 = vmatpush1.bf16.msra.mxu0 %v3283
    %4187 = vmatprep.subr.bf16.mxu0 %v3268
    %4188 = vmatpush1.bf16.msra.mxu0 %v3267
    %4189 = vmatprep.subr.bf16.mxu0 %v3252
    %4190 = vmatpush1.bf16.msra.mxu0 %v3251
    %4191 = vmatprep.subr.bf16.mxu0 %v3236
    %4192 = vmatpush1.bf16.msra.mxu0 %v3235
    %4193 = vmatprep.subr.bf16.mxu0 %v3220
    %4194 = vmatpush1.bf16.msra.mxu0 %v3219
    %4195 = vmatprep.subr.bf16.mxu0 %v3204
    %4196 = vmatpush1.bf16.msra.mxu0 %v3203
    %4197 = vmatprep.subr.bf16.mxu0 %v3188
    %4198 = vmatpush1.bf16.msra.mxu0 %v3187
    %4199 = vmatprep.subr.bf16.mxu0 %v3172
    %4200 = vmatpush1.bf16.msra.mxu0 %v3171
    %4201 = vmatprep.subr.bf16.mxu0 %v3412
    %4202 = vmatpush2.bf16.msra.mxu0 %v3411
    %4203 = vmatprep.subr.bf16.mxu0 %v3396
    %4204 = vmatpush2.bf16.msra.mxu0 %v3395
    %4205 = vmatprep.subr.bf16.mxu0 %v3380
    %4206 = vmatpush2.bf16.msra.mxu0 %v3379
    %4207 = vmatprep.subr.bf16.mxu0 %v3364
    %4208 = vmatpush2.bf16.msra.mxu0 %v3363
    %4209 = vmatprep.subr.bf16.mxu0 %v3348
    %4210 = vmatpush2.bf16.msra.mxu0 %v3347
    %4211 = vmatprep.subr.bf16.mxu0 %v3332
    %4212 = vmatpush2.bf16.msra.mxu0 %v3331
    %4213 = vmatprep.subr.bf16.mxu0 %v3316
    %4214 = vmatpush2.bf16.msra.mxu0 %v3315
    %4215 = vmatprep.subr.bf16.mxu0 %v3300
    %4216 = vmatpush2.bf16.msra.mxu0 %v3299
    %4217 = vmatprep.mubr.bf16.mxu0 %v3553
    %4218 = vmatmul.mubr.bf16.gmra.mxu0 %v3552
    %v4219 = vpop.f32.mrf.mxu0
    %v4220 = vadd.f32 %v4179, %v4219
    %v4221 = vpop.f32.mrf.mxu0
    %v4222 = vadd.f32 %v4181, %v4221
    %v4223 = vpop.f32.mrf.mxu0
    %v4224 = vpop.f32.mrf.mxu0
    %4225 = vdwg.mxu0
    %4226 = vmatprep.subr.bf16.mxu0 %v1494
    %4227 = vmatpush1.bf16.msra.mxu0 %v1493
    %4228 = vmatprep.subr.bf16.mxu0 %v1478
    %4229 = vmatpush1.bf16.msra.mxu0 %v1477
    %4230 = vmatprep.subr.bf16.mxu0 %v1462
    %4231 = vmatpush1.bf16.msra.mxu0 %v1461
    %4232 = vmatprep.subr.bf16.mxu0 %v1446
    %4233 = vmatpush1.bf16.msra.mxu0 %v1445
    %4234 = vmatprep.subr.bf16.mxu0 %v1430
    %4235 = vmatpush1.bf16.msra.mxu0 %v1429
    %4236 = vmatprep.subr.bf16.mxu0 %v1414
    %4237 = vmatpush1.bf16.msra.mxu0 %v1413
    %4238 = vmatprep.subr.bf16.mxu0 %v1398
    %4239 = vmatpush1.bf16.msra.mxu0 %v1397
    %4240 = vmatprep.subr.bf16.mxu0 %v1382
    %4241 = vmatpush1.bf16.msra.mxu0 %v1381
    %4242 = vmatprep.subr.bf16.mxu0 %v1622
    %4243 = vmatpush2.bf16.msra.mxu0 %v1621
    %4244 = vmatprep.subr.bf16.mxu0 %v1606
    %4245 = vmatpush2.bf16.msra.mxu0 %v1605
    %4246 = vmatprep.subr.bf16.mxu0 %v1590
    %4247 = vmatpush2.bf16.msra.mxu0 %v1589
    %4248 = vmatprep.subr.bf16.mxu0 %v1574
    %4249 = vmatpush2.bf16.msra.mxu0 %v1573
    %4250 = vmatprep.subr.bf16.mxu0 %v1558
    %4251 = vmatpush2.bf16.msra.mxu0 %v1557
    %4252 = vmatprep.subr.bf16.mxu0 %v1542
    %4253 = vmatpush2.bf16.msra.mxu0 %v1541
    %4254 = vmatprep.subr.bf16.mxu0 %v1526
    %4255 = vmatpush2.bf16.msra.mxu0 %v1525
    %4256 = vmatprep.subr.bf16.mxu0 %v1510
    %4257 = vmatpush2.bf16.msra.mxu0 %v1509
    %4258 = vmatprep.mubr.bf16.mxu0 %v3539
    %4259 = vmatmul.mubr.bf16.gmra.mxu0 %v3538
    %v4260 = vpop.f32.mrf.mxu0
    %v4261 = vadd.f32 0.0, %v4260
    %v4262 = vpop.f32.mrf.mxu0
    %v4263 = vadd.f32 0.0, %v4262
    %v4264 = vpop.f32.mrf.mxu0
    %v4265 = vpop.f32.mrf.mxu0
    %4266 = vdwg.mxu0
    %4267 = vmatprep.subr.bf16.mxu0 %v1750
    %4268 = vmatpush1.bf16.msra.mxu0 %v1749
    %4269 = vmatprep.subr.bf16.mxu0 %v1734
    %4270 = vmatpush1.bf16.msra.mxu0 %v1733
    %4271 = vmatprep.subr.bf16.mxu0 %v1718
    %4272 = vmatpush1.bf16.msra.mxu0 %v1717
    %4273 = vmatprep.subr.bf16.mxu0 %v1702
    %4274 = vmatpush1.bf16.msra.mxu0 %v1701
    %4275 = vmatprep.subr.bf16.mxu0 %v1686
    %4276 = vmatpush1.bf16.msra.mxu0 %v1685
    %4277 = vmatprep.subr.bf16.mxu0 %v1670
    %4278 = vmatpush1.bf16.msra.mxu0 %v1669
    %4279 = vmatprep.subr.bf16.mxu0 %v1654
    %4280 = vmatpush1.bf16.msra.mxu0 %v1653
    %4281 = vmatprep.subr.bf16.mxu0 %v1638
    %4282 = vmatpush1.bf16.msra.mxu0 %v1637
    %4283 = vmatprep.subr.bf16.mxu0 %v1878
    %4284 = vmatpush2.bf16.msra.mxu0 %v1877
    %4285 = vmatprep.subr.bf16.mxu0 %v1862
    %4286 = vmatpush2.bf16.msra.mxu0 %v1861
    %4287 = vmatprep.subr.bf16.mxu0 %v1846
    %4288 = vmatpush2.bf16.msra.mxu0 %v1845
    %4289 = vmatprep.subr.bf16.mxu0 %v1830
    %4290 = vmatpush2.bf16.msra.mxu0 %v1829
    %4291 = vmatprep.subr.bf16.mxu0 %v1814
    %4292 = vmatpush2.bf16.msra.mxu0 %v1813
    %4293 = vmatprep.subr.bf16.mxu0 %v1798
    %4294 = vmatpush2.bf16.msra.mxu0 %v1797
    %4295 = vmatprep.subr.bf16.mxu0 %v1782
    %4296 = vmatpush2.bf16.msra.mxu0 %v1781
    %4297 = vmatprep.subr.bf16.mxu0 %v1766
    %4298 = vmatpush2.bf16.msra.mxu0 %v1765
    %4299 = vmatprep.mubr.bf16.mxu0 %v3541
    %4300 = vmatmul.mubr.bf16.gmra.mxu0 %v3540
    %v4301 = vpop.f32.mrf.mxu0
    %v4302 = vadd.f32 %v4261, %v4301
    %v4303 = vpop.f32.mrf.mxu0
    %v4304 = vadd.f32 %v4263, %v4303
    %v4305 = vpop.f32.mrf.mxu0
    %v4306 = vpop.f32.mrf.mxu0
    %4307 = vdwg.mxu0
    %4308 = vmatprep.subr.bf16.mxu0 %v2006
    %4309 = vmatpush1.bf16.msra.mxu0 %v2005
    %4310 = vmatprep.subr.bf16.mxu0 %v1990
    %4311 = vmatpush1.bf16.msra.mxu0 %v1989
    %4312 = vmatprep.subr.bf16.mxu0 %v1974
    %4313 = vmatpush1.bf16.msra.mxu0 %v1973
    %4314 = vmatprep.subr.bf16.mxu0 %v1958
    %4315 = vmatpush1.bf16.msra.mxu0 %v1957
    %4316 = vmatprep.subr.bf16.mxu0 %v1942
    %4317 = vmatpush1.bf16.msra.mxu0 %v1941
    %4318 = vmatprep.subr.bf16.mxu0 %v1926
    %4319 = vmatpush1.bf16.msra.mxu0 %v1925
    %4320 = vmatprep.subr.bf16.mxu0 %v1910
    %4321 = vmatpush1.bf16.msra.mxu0 %v1909
    %4322 = vmatprep.subr.bf16.mxu0 %v1894
    %4323 = vmatpush1.bf16.msra.mxu0 %v1893
    %4324 = vmatprep.subr.bf16.mxu0 %v2134
    %4325 = vmatpush2.bf16.msra.mxu0 %v2133
    %4326 = vmatprep.subr.bf16.mxu0 %v2118
    %4327 = vmatpush2.bf16.msra.mxu0 %v2117
    %4328 = vmatprep.subr.bf16.mxu0 %v2102
    %4329 = vmatpush2.bf16.msra.mxu0 %v2101
    %4330 = vmatprep.subr.bf16.mxu0 %v2086
    %4331 = vmatpush2.bf16.msra.mxu0 %v2085
    %4332 = vmatprep.subr.bf16.mxu0 %v2070
    %4333 = vmatpush2.bf16.msra.mxu0 %v2069
    %4334 = vmatprep.subr.bf16.mxu0 %v2054
    %4335 = vmatpush2.bf16.msra.mxu0 %v2053
    %4336 = vmatprep.subr.bf16.mxu0 %v2038
    %4337 = vmatpush2.bf16.msra.mxu0 %v2037
    %4338 = vmatprep.subr.bf16.mxu0 %v2022
    %4339 = vmatpush2.bf16.msra.mxu0 %v2021
    %4340 = vmatprep.mubr.bf16.mxu0 %v3543
    %4341 = vmatmul.mubr.bf16.gmra.mxu0 %v3542
    %v4342 = vpop.f32.mrf.mxu0
    %v4343 = vadd.f32 %v4302, %v4342
    %v4344 = vpop.f32.mrf.mxu0
    %v4345 = vadd.f32 %v4304, %v4344
    %v4346 = vpop.f32.mrf.mxu0
    %v4347 = vpop.f32.mrf.mxu0
    %4348 = vdwg.mxu0
    %4349 = vmatprep.subr.bf16.mxu0 %v2262
    %4350 = vmatpush1.bf16.msra.mxu0 %v2261
    %4351 = vmatprep.subr.bf16.mxu0 %v2246
    %4352 = vmatpush1.bf16.msra.mxu0 %v2245
    %4353 = vmatprep.subr.bf16.mxu0 %v2230
    %4354 = vmatpush1.bf16.msra.mxu0 %v2229
    %4355 = vmatprep.subr.bf16.mxu0 %v2214
    %4356 = vmatpush1.bf16.msra.mxu0 %v2213
    %4357 = vmatprep.subr.bf16.mxu0 %v2198
    %4358 = vmatpush1.bf16.msra.mxu0 %v2197
    %4359 = vmatprep.subr.bf16.mxu0 %v2182
    %4360 = vmatpush1.bf16.msra.mxu0 %v2181
    %4361 = vmatprep.subr.bf16.mxu0 %v2166
    %4362 = vmatpush1.bf16.msra.mxu0 %v2165
    %4363 = vmatprep.subr.bf16.mxu0 %v2150
    %4364 = vmatpush1.bf16.msra.mxu0 %v2149
    %4365 = vmatprep.subr.bf16.mxu0 %v2390
    %4366 = vmatpush2.bf16.msra.mxu0 %v2389
    %4367 = vmatprep.subr.bf16.mxu0 %v2374
    %4368 = vmatpush2.bf16.msra.mxu0 %v2373
    %4369 = vmatprep.subr.bf16.mxu0 %v2358
    %4370 = vmatpush2.bf16.msra.mxu0 %v2357
    %4371 = vmatprep.subr.bf16.mxu0 %v2342
    %4372 = vmatpush2.bf16.msra.mxu0 %v2341
    %4373 = vmatprep.subr.bf16.mxu0 %v2326
    %4374 = vmatpush2.bf16.msra.mxu0 %v2325
    %4375 = vmatprep.subr.bf16.mxu0 %v2310
    %4376 = vmatpush2.bf16.msra.mxu0 %v2309
    %4377 = vmatprep.subr.bf16.mxu0 %v2294
    %4378 = vmatpush2.bf16.msra.mxu0 %v2293
    %4379 = vmatprep.subr.bf16.mxu0 %v2278
    %4380 = vmatpush2.bf16.msra.mxu0 %v2277
    %4381 = vmatprep.mubr.bf16.mxu0 %v3545
    %4382 = vmatmul.mubr.bf16.gmra.mxu0 %v3544
    %v4383 = vpop.f32.mrf.mxu0
    %v4384 = vadd.f32 %v4343, %v4383
    %v4385 = vpop.f32.mrf.mxu0
    %v4386 = vadd.f32 %v4345, %v4385
    %v4387 = vpop.f32.mrf.mxu0
    %v4388 = vpop.f32.mrf.mxu0
    %4389 = vdwg.mxu0
    %4390 = vmatprep.subr.bf16.mxu0 %v2518
    %4391 = vmatpush1.bf16.msra.mxu0 %v2517
    %4392 = vmatprep.subr.bf16.mxu0 %v2502
    %4393 = vmatpush1.bf16.msra.mxu0 %v2501
    %4394 = vmatprep.subr.bf16.mxu0 %v2486
    %4395 = vmatpush1.bf16.msra.mxu0 %v2485
    %4396 = vmatprep.subr.bf16.mxu0 %v2470
    %4397 = vmatpush1.bf16.msra.mxu0 %v2469
    %4398 = vmatprep.subr.bf16.mxu0 %v2454
    %4399 = vmatpush1.bf16.msra.mxu0 %v2453
    %4400 = vmatprep.subr.bf16.mxu0 %v2438
    %4401 = vmatpush1.bf16.msra.mxu0 %v2437
    %4402 = vmatprep.subr.bf16.mxu0 %v2422
    %4403 = vmatpush1.bf16.msra.mxu0 %v2421
    %4404 = vmatprep.subr.bf16.mxu0 %v2406
    %4405 = vmatpush1.bf16.msra.mxu0 %v2405
    %4406 = vmatprep.subr.bf16.mxu0 %v2646
    %4407 = vmatpush2.bf16.msra.mxu0 %v2645
    %4408 = vmatprep.subr.bf16.mxu0 %v2630
    %4409 = vmatpush2.bf16.msra.mxu0 %v2629
    %4410 = vmatprep.subr.bf16.mxu0 %v2614
    %4411 = vmatpush2.bf16.msra.mxu0 %v2613
    %4412 = vmatprep.subr.bf16.mxu0 %v2598
    %4413 = vmatpush2.bf16.msra.mxu0 %v2597
    %4414 = vmatprep.subr.bf16.mxu0 %v2582
    %4415 = vmatpush2.bf16.msra.mxu0 %v2581
    %4416 = vmatprep.subr.bf16.mxu0 %v2566
    %4417 = vmatpush2.bf16.msra.mxu0 %v2565
    %4418 = vmatprep.subr.bf16.mxu0 %v2550
    %4419 = vmatpush2.bf16.msra.mxu0 %v2549
    %4420 = vmatprep.subr.bf16.mxu0 %v2534
    %4421 = vmatpush2.bf16.msra.mxu0 %v2533
    %4422 = vmatprep.mubr.bf16.mxu0 %v3547
    %4423 = vmatmul.mubr.bf16.gmra.mxu0 %v3546
    %v4424 = vpop.f32.mrf.mxu0
    %v4425 = vadd.f32 %v4384, %v4424
    %v4426 = vpop.f32.mrf.mxu0
    %v4427 = vadd.f32 %v4386, %v4426
    %v4428 = vpop.f32.mrf.mxu0
    %v4429 = vpop.f32.mrf.mxu0
    %4430 = vdwg.mxu0
    %4431 = vmatprep.subr.bf16.mxu0 %v2774
    %4432 = vmatpush1.bf16.msra.mxu0 %v2773
    %4433 = vmatprep.subr.bf16.mxu0 %v2758
    %4434 = vmatpush1.bf16.msra.mxu0 %v2757
    %4435 = vmatprep.subr.bf16.mxu0 %v2742
    %4436 = vmatpush1.bf16.msra.mxu0 %v2741
    %4437 = vmatprep.subr.bf16.mxu0 %v2726
    %4438 = vmatpush1.bf16.msra.mxu0 %v2725
    %4439 = vmatprep.subr.bf16.mxu0 %v2710
    %4440 = vmatpush1.bf16.msra.mxu0 %v2709
    %4441 = vmatprep.subr.bf16.mxu0 %v2694
    %4442 = vmatpush1.bf16.msra.mxu0 %v2693
    %4443 = vmatprep.subr.bf16.mxu0 %v2678
    %4444 = vmatpush1.bf16.msra.mxu0 %v2677
    %4445 = vmatprep.subr.bf16.mxu0 %v2662
    %4446 = vmatpush1.bf16.msra.mxu0 %v2661
    %4447 = vmatprep.subr.bf16.mxu0 %v2902
    %4448 = vmatpush2.bf16.msra.mxu0 %v2901
    %4449 = vmatprep.subr.bf16.mxu0 %v2886
    %4450 = vmatpush2.bf16.msra.mxu0 %v2885
    %4451 = vmatprep.subr.bf16.mxu0 %v2870
    %4452 = vmatpush2.bf16.msra.mxu0 %v2869
    %4453 = vmatprep.subr.bf16.mxu0 %v2854
    %4454 = vmatpush2.bf16.msra.mxu0 %v2853
    %4455 = vmatprep.subr.bf16.mxu0 %v2838
    %4456 = vmatpush2.bf16.msra.mxu0 %v2837
    %4457 = vmatprep.subr.bf16.mxu0 %v2822
    %4458 = vmatpush2.bf16.msra.mxu0 %v2821
    %4459 = vmatprep.subr.bf16.mxu0 %v2806
    %4460 = vmatpush2.bf16.msra.mxu0 %v2805
    %4461 = vmatprep.subr.bf16.mxu0 %v2790
    %4462 = vmatpush2.bf16.msra.mxu0 %v2789
    %4463 = vmatprep.mubr.bf16.mxu0 %v3549
    %4464 = vmatmul.mubr.bf16.gmra.mxu0 %v3548
    %v4465 = vpop.f32.mrf.mxu0
    %v4466 = vadd.f32 %v4425, %v4465
    %v4467 = vpop.f32.mrf.mxu0
    %v4468 = vadd.f32 %v4427, %v4467
    %v4469 = vpop.f32.mrf.mxu0
    %v4470 = vpop.f32.mrf.mxu0
    %4471 = vdwg.mxu0
    %4472 = vmatprep.subr.bf16.mxu0 %v3030
    %4473 = vmatpush1.bf16.msra.mxu0 %v3029
    %4474 = vmatprep.subr.bf16.mxu0 %v3014
    %4475 = vmatpush1.bf16.msra.mxu0 %v3013
    %4476 = vmatprep.subr.bf16.mxu0 %v2998
    %4477 = vmatpush1.bf16.msra.mxu0 %v2997
    %4478 = vmatprep.subr.bf16.mxu0 %v2982
    %4479 = vmatpush1.bf16.msra.mxu0 %v2981
    %4480 = vmatprep.subr.bf16.mxu0 %v2966
    %4481 = vmatpush1.bf16.msra.mxu0 %v2965
    %4482 = vmatprep.subr.bf16.mxu0 %v2950
    %4483 = vmatpush1.bf16.msra.mxu0 %v2949
    %4484 = vmatprep.subr.bf16.mxu0 %v2934
    %4485 = vmatpush1.bf16.msra.mxu0 %v2933
    %4486 = vmatprep.subr.bf16.mxu0 %v2918
    %4487 = vmatpush1.bf16.msra.mxu0 %v2917
    %4488 = vmatprep.subr.bf16.mxu0 %v3158
    %4489 = vmatpush2.bf16.msra.mxu0 %v3157
    %4490 = vmatprep.subr.bf16.mxu0 %v3142
    %4491 = vmatpush2.bf16.msra.mxu0 %v3141
    %4492 = vmatprep.subr.bf16.mxu0 %v3126
    %4493 = vmatpush2.bf16.msra.mxu0 %v3125
    %4494 = vmatprep.subr.bf16.mxu0 %v3110
    %4495 = vmatpush2.bf16.msra.mxu0 %v3109
    %4496 = vmatprep.subr.bf16.mxu0 %v3094
    %4497 = vmatpush2.bf16.msra.mxu0 %v3093
    %4498 = vmatprep.subr.bf16.mxu0 %v3078
    %4499 = vmatpush2.bf16.msra.mxu0 %v3077
    %4500 = vmatprep.subr.bf16.mxu0 %v3062
    %4501 = vmatpush2.bf16.msra.mxu0 %v3061
    %4502 = vmatprep.subr.bf16.mxu0 %v3046
    %4503 = vmatpush2.bf16.msra.mxu0 %v3045
    %4504 = vmatprep.mubr.bf16.mxu0 %v3551
    %4505 = vmatmul.mubr.bf16.gmra.mxu0 %v3550
    %v4506 = vpop.f32.mrf.mxu0
    %v4507 = vadd.f32 %v4466, %v4506
    %v4508 = vpop.f32.mrf.mxu0
    %v4509 = vadd.f32 %v4468, %v4508
    %v4510 = vpop.f32.mrf.mxu0
    %v4511 = vpop.f32.mrf.mxu0
    %4512 = vdwg.mxu0
    %4513 = vmatprep.subr.bf16.mxu0 %v3286
    %4514 = vmatpush1.bf16.msra.mxu0 %v3285
    %4515 = vmatprep.subr.bf16.mxu0 %v3270
    %4516 = vmatpush1.bf16.msra.mxu0 %v3269
    %4517 = vmatprep.subr.bf16.mxu0 %v3254
    %4518 = vmatpush1.bf16.msra.mxu0 %v3253
    %4519 = vmatprep.subr.bf16.mxu0 %v3238
    %4520 = vmatpush1.bf16.msra.mxu0 %v3237
    %4521 = vmatprep.subr.bf16.mxu0 %v3222
    %4522 = vmatpush1.bf16.msra.mxu0 %v3221
    %4523 = vmatprep.subr.bf16.mxu0 %v3206
    %4524 = vmatpush1.bf16.msra.mxu0 %v3205
    %4525 = vmatprep.subr.bf16.mxu0 %v3190
    %4526 = vmatpush1.bf16.msra.mxu0 %v3189
    %4527 = vmatprep.subr.bf16.mxu0 %v3174
    %4528 = vmatpush1.bf16.msra.mxu0 %v3173
    %4529 = vmatprep.subr.bf16.mxu0 %v3414
    %4530 = vmatpush2.bf16.msra.mxu0 %v3413
    %4531 = vmatprep.subr.bf16.mxu0 %v3398
    %4532 = vmatpush2.bf16.msra.mxu0 %v3397
    %4533 = vmatprep.subr.bf16.mxu0 %v3382
    %4534 = vmatpush2.bf16.msra.mxu0 %v3381
    %4535 = vmatprep.subr.bf16.mxu0 %v3366
    %4536 = vmatpush2.bf16.msra.mxu0 %v3365
    %4537 = vmatprep.subr.bf16.mxu0 %v3350
    %4538 = vmatpush2.bf16.msra.mxu0 %v3349
    %4539 = vmatprep.subr.bf16.mxu0 %v3334
    %4540 = vmatpush2.bf16.msra.mxu0 %v3333
    %4541 = vmatprep.subr.bf16.mxu0 %v3318
    %4542 = vmatpush2.bf16.msra.mxu0 %v3317
    %4543 = vmatprep.subr.bf16.mxu0 %v3302
    %4544 = vmatpush2.bf16.msra.mxu0 %v3301
    %4545 = vmatprep.mubr.bf16.mxu0 %v3553
    %4546 = vmatmul.mubr.bf16.gmra.mxu0 %v3552
    %v4547 = vpop.f32.mrf.mxu0
    %v4548 = vadd.f32 %v4507, %v4547
    %v4549 = vpop.f32.mrf.mxu0
    %v4550 = vadd.f32 %v4509, %v4549
    %v4551 = vpop.f32.mrf.mxu0
    %v4552 = vpop.f32.mrf.mxu0
    %4553 = vdwg.mxu0
    %4554 = vmatprep.subr.bf16.mxu0 %v1496
    %4555 = vmatpush1.bf16.msra.mxu0 %v1495
    %4556 = vmatprep.subr.bf16.mxu0 %v1480
    %4557 = vmatpush1.bf16.msra.mxu0 %v1479
    %4558 = vmatprep.subr.bf16.mxu0 %v1464
    %4559 = vmatpush1.bf16.msra.mxu0 %v1463
    %4560 = vmatprep.subr.bf16.mxu0 %v1448
    %4561 = vmatpush1.bf16.msra.mxu0 %v1447
    %4562 = vmatprep.subr.bf16.mxu0 %v1432
    %4563 = vmatpush1.bf16.msra.mxu0 %v1431
    %4564 = vmatprep.subr.bf16.mxu0 %v1416
    %4565 = vmatpush1.bf16.msra.mxu0 %v1415
    %4566 = vmatprep.subr.bf16.mxu0 %v1400
    %4567 = vmatpush1.bf16.msra.mxu0 %v1399
    %4568 = vmatprep.subr.bf16.mxu0 %v1384
    %4569 = vmatpush1.bf16.msra.mxu0 %v1383
    %4570 = vmatprep.subr.bf16.mxu0 %v1624
    %4571 = vmatpush2.bf16.msra.mxu0 %v1623
    %4572 = vmatprep.subr.bf16.mxu0 %v1608
    %4573 = vmatpush2.bf16.msra.mxu0 %v1607
    %4574 = vmatprep.subr.bf16.mxu0 %v1592
    %4575 = vmatpush2.bf16.msra.mxu0 %v1591
    %4576 = vmatprep.subr.bf16.mxu0 %v1576
    %4577 = vmatpush2.bf16.msra.mxu0 %v1575
    %4578 = vmatprep.subr.bf16.mxu0 %v1560
    %4579 = vmatpush2.bf16.msra.mxu0 %v1559
    %4580 = vmatprep.subr.bf16.mxu0 %v1544
    %4581 = vmatpush2.bf16.msra.mxu0 %v1543
    %4582 = vmatprep.subr.bf16.mxu0 %v1528
    %4583 = vmatpush2.bf16.msra.mxu0 %v1527
    %4584 = vmatprep.subr.bf16.mxu0 %v1512
    %4585 = vmatpush2.bf16.msra.mxu0 %v1511
    %4586 = vmatprep.mubr.bf16.mxu0 %v3539
    %4587 = vmatmul.mubr.bf16.gmra.mxu0 %v3538
    %v4588 = vpop.f32.mrf.mxu0
    %v4589 = vadd.f32 0.0, %v4588
    %v4590 = vpop.f32.mrf.mxu0
    %v4591 = vadd.f32 0.0, %v4590
    %v4592 = vpop.f32.mrf.mxu0
    %v4593 = vpop.f32.mrf.mxu0
    %4594 = vdwg.mxu0
    %4595 = vmatprep.subr.bf16.mxu0 %v1752
    %4596 = vmatpush1.bf16.msra.mxu0 %v1751
    %4597 = vmatprep.subr.bf16.mxu0 %v1736
    %4598 = vmatpush1.bf16.msra.mxu0 %v1735
    %4599 = vmatprep.subr.bf16.mxu0 %v1720
    %4600 = vmatpush1.bf16.msra.mxu0 %v1719
    %4601 = vmatprep.subr.bf16.mxu0 %v1704
    %4602 = vmatpush1.bf16.msra.mxu0 %v1703
    %4603 = vmatprep.subr.bf16.mxu0 %v1688
    %4604 = vmatpush1.bf16.msra.mxu0 %v1687
    %4605 = vmatprep.subr.bf16.mxu0 %v1672
    %4606 = vmatpush1.bf16.msra.mxu0 %v1671
    %4607 = vmatprep.subr.bf16.mxu0 %v1656
    %4608 = vmatpush1.bf16.msra.mxu0 %v1655
    %4609 = vmatprep.subr.bf16.mxu0 %v1640
    %4610 = vmatpush1.bf16.msra.mxu0 %v1639
    %4611 = vmatprep.subr.bf16.mxu0 %v1880
    %4612 = vmatpush2.bf16.msra.mxu0 %v1879
    %4613 = vmatprep.subr.bf16.mxu0 %v1864
    %4614 = vmatpush2.bf16.msra.mxu0 %v1863
    %4615 = vmatprep.subr.bf16.mxu0 %v1848
    %4616 = vmatpush2.bf16.msra.mxu0 %v1847
    %4617 = vmatprep.subr.bf16.mxu0 %v1832
    %4618 = vmatpush2.bf16.msra.mxu0 %v1831
    %4619 = vmatprep.subr.bf16.mxu0 %v1816
    %4620 = vmatpush2.bf16.msra.mxu0 %v1815
    %4621 = vmatprep.subr.bf16.mxu0 %v1800
    %4622 = vmatpush2.bf16.msra.mxu0 %v1799
    %4623 = vmatprep.subr.bf16.mxu0 %v1784
    %4624 = vmatpush2.bf16.msra.mxu0 %v1783
    %4625 = vmatprep.subr.bf16.mxu0 %v1768
    %4626 = vmatpush2.bf16.msra.mxu0 %v1767
    %4627 = vmatprep.mubr.bf16.mxu0 %v3541
    %4628 = vmatmul.mubr.bf16.gmra.mxu0 %v3540
    %v4629 = vpop.f32.mrf.mxu0
    %v4630 = vadd.f32 %v4589, %v4629
    %v4631 = vpop.f32.mrf.mxu0
    %v4632 = vadd.f32 %v4591, %v4631
    %v4633 = vpop.f32.mrf.mxu0
    %v4634 = vpop.f32.mrf.mxu0
    %4635 = vdwg.mxu0
    %4636 = vmatprep.subr.bf16.mxu0 %v2008
    %4637 = vmatpush1.bf16.msra.mxu0 %v2007
    %4638 = vmatprep.subr.bf16.mxu0 %v1992
    %4639 = vmatpush1.bf16.msra.mxu0 %v1991
    %4640 = vmatprep.subr.bf16.mxu0 %v1976
    %4641 = vmatpush1.bf16.msra.mxu0 %v1975
    %4642 = vmatprep.subr.bf16.mxu0 %v1960
    %4643 = vmatpush1.bf16.msra.mxu0 %v1959
    %4644 = vmatprep.subr.bf16.mxu0 %v1944
    %4645 = vmatpush1.bf16.msra.mxu0 %v1943
    %4646 = vmatprep.subr.bf16.mxu0 %v1928
    %4647 = vmatpush1.bf16.msra.mxu0 %v1927
    %4648 = vmatprep.subr.bf16.mxu0 %v1912
    %4649 = vmatpush1.bf16.msra.mxu0 %v1911
    %4650 = vmatprep.subr.bf16.mxu0 %v1896
    %4651 = vmatpush1.bf16.msra.mxu0 %v1895
    %4652 = vmatprep.subr.bf16.mxu0 %v2136
    %4653 = vmatpush2.bf16.msra.mxu0 %v2135
    %4654 = vmatprep.subr.bf16.mxu0 %v2120
    %4655 = vmatpush2.bf16.msra.mxu0 %v2119
    %4656 = vmatprep.subr.bf16.mxu0 %v2104
    %4657 = vmatpush2.bf16.msra.mxu0 %v2103
    %4658 = vmatprep.subr.bf16.mxu0 %v2088
    %4659 = vmatpush2.bf16.msra.mxu0 %v2087
    %4660 = vmatprep.subr.bf16.mxu0 %v2072
    %4661 = vmatpush2.bf16.msra.mxu0 %v2071
    %4662 = vmatprep.subr.bf16.mxu0 %v2056
    %4663 = vmatpush2.bf16.msra.mxu0 %v2055
    %4664 = vmatprep.subr.bf16.mxu0 %v2040
    %4665 = vmatpush2.bf16.msra.mxu0 %v2039
    %4666 = vmatprep.subr.bf16.mxu0 %v2024
    %4667 = vmatpush2.bf16.msra.mxu0 %v2023
    %4668 = vmatprep.mubr.bf16.mxu0 %v3543
    %4669 = vmatmul.mubr.bf16.gmra.mxu0 %v3542
    %v4670 = vpop.f32.mrf.mxu0
    %v4671 = vadd.f32 %v4630, %v4670
    %v4672 = vpop.f32.mrf.mxu0
    %v4673 = vadd.f32 %v4632, %v4672
    %v4674 = vpop.f32.mrf.mxu0
    %v4675 = vpop.f32.mrf.mxu0
    %4676 = vdwg.mxu0
    %4677 = vmatprep.subr.bf16.mxu0 %v2264
    %4678 = vmatpush1.bf16.msra.mxu0 %v2263
    %4679 = vmatprep.subr.bf16.mxu0 %v2248
    %4680 = vmatpush1.bf16.msra.mxu0 %v2247
    %4681 = vmatprep.subr.bf16.mxu0 %v2232
    %4682 = vmatpush1.bf16.msra.mxu0 %v2231
    %4683 = vmatprep.subr.bf16.mxu0 %v2216
    %4684 = vmatpush1.bf16.msra.mxu0 %v2215
    %4685 = vmatprep.subr.bf16.mxu0 %v2200
    %4686 = vmatpush1.bf16.msra.mxu0 %v2199
    %4687 = vmatprep.subr.bf16.mxu0 %v2184
    %4688 = vmatpush1.bf16.msra.mxu0 %v2183
    %4689 = vmatprep.subr.bf16.mxu0 %v2168
    %4690 = vmatpush1.bf16.msra.mxu0 %v2167
    %4691 = vmatprep.subr.bf16.mxu0 %v2152
    %4692 = vmatpush1.bf16.msra.mxu0 %v2151
    %4693 = vmatprep.subr.bf16.mxu0 %v2392
    %4694 = vmatpush2.bf16.msra.mxu0 %v2391
    %4695 = vmatprep.subr.bf16.mxu0 %v2376
    %4696 = vmatpush2.bf16.msra.mxu0 %v2375
    %4697 = vmatprep.subr.bf16.mxu0 %v2360
    %4698 = vmatpush2.bf16.msra.mxu0 %v2359
    %4699 = vmatprep.subr.bf16.mxu0 %v2344
    %4700 = vmatpush2.bf16.msra.mxu0 %v2343
    %4701 = vmatprep.subr.bf16.mxu0 %v2328
    %4702 = vmatpush2.bf16.msra.mxu0 %v2327
    %4703 = vmatprep.subr.bf16.mxu0 %v2312
    %4704 = vmatpush2.bf16.msra.mxu0 %v2311
    %4705 = vmatprep.subr.bf16.mxu0 %v2296
    %4706 = vmatpush2.bf16.msra.mxu0 %v2295
    %4707 = vmatprep.subr.bf16.mxu0 %v2280
    %4708 = vmatpush2.bf16.msra.mxu0 %v2279
    %4709 = vmatprep.mubr.bf16.mxu0 %v3545
    %4710 = vmatmul.mubr.bf16.gmra.mxu0 %v3544
    %v4711 = vpop.f32.mrf.mxu0
    %v4712 = vadd.f32 %v4671, %v4711
    %v4713 = vpop.f32.mrf.mxu0
    %v4714 = vadd.f32 %v4673, %v4713
    %v4715 = vpop.f32.mrf.mxu0
    %v4716 = vpop.f32.mrf.mxu0
    %4717 = vdwg.mxu0
    %4718 = vmatprep.subr.bf16.mxu0 %v2520
    %4719 = vmatpush1.bf16.msra.mxu0 %v2519
    %4720 = vmatprep.subr.bf16.mxu0 %v2504
    %4721 = vmatpush1.bf16.msra.mxu0 %v2503
    %4722 = vmatprep.subr.bf16.mxu0 %v2488
    %4723 = vmatpush1.bf16.msra.mxu0 %v2487
    %4724 = vmatprep.subr.bf16.mxu0 %v2472
    %4725 = vmatpush1.bf16.msra.mxu0 %v2471
    %4726 = vmatprep.subr.bf16.mxu0 %v2456
    %4727 = vmatpush1.bf16.msra.mxu0 %v2455
    %4728 = vmatprep.subr.bf16.mxu0 %v2440
    %4729 = vmatpush1.bf16.msra.mxu0 %v2439
    %4730 = vmatprep.subr.bf16.mxu0 %v2424
    %4731 = vmatpush1.bf16.msra.mxu0 %v2423
    %4732 = vmatprep.subr.bf16.mxu0 %v2408
    %4733 = vmatpush1.bf16.msra.mxu0 %v2407
    %4734 = vmatprep.subr.bf16.mxu0 %v2648
    %4735 = vmatpush2.bf16.msra.mxu0 %v2647
    %4736 = vmatprep.subr.bf16.mxu0 %v2632
    %4737 = vmatpush2.bf16.msra.mxu0 %v2631
    %4738 = vmatprep.subr.bf16.mxu0 %v2616
    %4739 = vmatpush2.bf16.msra.mxu0 %v2615
    %4740 = vmatprep.subr.bf16.mxu0 %v2600
    %4741 = vmatpush2.bf16.msra.mxu0 %v2599
    %4742 = vmatprep.subr.bf16.mxu0 %v2584
    %4743 = vmatpush2.bf16.msra.mxu0 %v2583
    %4744 = vmatprep.subr.bf16.mxu0 %v2568
    %4745 = vmatpush2.bf16.msra.mxu0 %v2567
    %4746 = vmatprep.subr.bf16.mxu0 %v2552
    %4747 = vmatpush2.bf16.msra.mxu0 %v2551
    %4748 = vmatprep.subr.bf16.mxu0 %v2536
    %4749 = vmatpush2.bf16.msra.mxu0 %v2535
    %4750 = vmatprep.mubr.bf16.mxu0 %v3547
    %4751 = vmatmul.mubr.bf16.gmra.mxu0 %v3546
    %v4752 = vpop.f32.mrf.mxu0
    %v4753 = vadd.f32 %v4712, %v4752
    %v4754 = vpop.f32.mrf.mxu0
    %v4755 = vadd.f32 %v4714, %v4754
    %v4756 = vpop.f32.mrf.mxu0
    %v4757 = vpop.f32.mrf.mxu0
    %4758 = vdwg.mxu0
    %4759 = vmatprep.subr.bf16.mxu0 %v2776
    %4760 = vmatpush1.bf16.msra.mxu0 %v2775
    %4761 = vmatprep.subr.bf16.mxu0 %v2760
    %4762 = vmatpush1.bf16.msra.mxu0 %v2759
    %4763 = vmatprep.subr.bf16.mxu0 %v2744
    %4764 = vmatpush1.bf16.msra.mxu0 %v2743
    %4765 = vmatprep.subr.bf16.mxu0 %v2728
    %4766 = vmatpush1.bf16.msra.mxu0 %v2727
    %4767 = vmatprep.subr.bf16.mxu0 %v2712
    %4768 = vmatpush1.bf16.msra.mxu0 %v2711
    %4769 = vmatprep.subr.bf16.mxu0 %v2696
    %4770 = vmatpush1.bf16.msra.mxu0 %v2695
    %4771 = vmatprep.subr.bf16.mxu0 %v2680
    %4772 = vmatpush1.bf16.msra.mxu0 %v2679
    %4773 = vmatprep.subr.bf16.mxu0 %v2664
    %4774 = vmatpush1.bf16.msra.mxu0 %v2663
    %4775 = vmatprep.subr.bf16.mxu0 %v2904
    %4776 = vmatpush2.bf16.msra.mxu0 %v2903
    %4777 = vmatprep.subr.bf16.mxu0 %v2888
    %4778 = vmatpush2.bf16.msra.mxu0 %v2887
    %4779 = vmatprep.subr.bf16.mxu0 %v2872
    %4780 = vmatpush2.bf16.msra.mxu0 %v2871
    %4781 = vmatprep.subr.bf16.mxu0 %v2856
    %4782 = vmatpush2.bf16.msra.mxu0 %v2855
    %4783 = vmatprep.subr.bf16.mxu0 %v2840
    %4784 = vmatpush2.bf16.msra.mxu0 %v2839
    %4785 = vmatprep.subr.bf16.mxu0 %v2824
    %4786 = vmatpush2.bf16.msra.mxu0 %v2823
    %4787 = vmatprep.subr.bf16.mxu0 %v2808
    %4788 = vmatpush2.bf16.msra.mxu0 %v2807
    %4789 = vmatprep.subr.bf16.mxu0 %v2792
    %4790 = vmatpush2.bf16.msra.mxu0 %v2791
    %4791 = vmatprep.mubr.bf16.mxu0 %v3549
    %4792 = vmatmul.mubr.bf16.gmra.mxu0 %v3548
    %v4793 = vpop.f32.mrf.mxu0
    %v4794 = vadd.f32 %v4753, %v4793
    %v4795 = vpop.f32.mrf.mxu0
    %v4796 = vadd.f32 %v4755, %v4795
    %v4797 = vpop.f32.mrf.mxu0
    %v4798 = vpop.f32.mrf.mxu0
    %4799 = vdwg.mxu0
    %4800 = vmatprep.subr.bf16.mxu0 %v3032
    %4801 = vmatpush1.bf16.msra.mxu0 %v3031
    %4802 = vmatprep.subr.bf16.mxu0 %v3016
    %4803 = vmatpush1.bf16.msra.mxu0 %v3015
    %4804 = vmatprep.subr.bf16.mxu0 %v3000
    %4805 = vmatpush1.bf16.msra.mxu0 %v2999
    %4806 = vmatprep.subr.bf16.mxu0 %v2984
    %4807 = vmatpush1.bf16.msra.mxu0 %v2983
    %4808 = vmatprep.subr.bf16.mxu0 %v2968
    %4809 = vmatpush1.bf16.msra.mxu0 %v2967
    %4810 = vmatprep.subr.bf16.mxu0 %v2952
    %4811 = vmatpush1.bf16.msra.mxu0 %v2951
    %4812 = vmatprep.subr.bf16.mxu0 %v2936
    %4813 = vmatpush1.bf16.msra.mxu0 %v2935
    %4814 = vmatprep.subr.bf16.mxu0 %v2920
    %4815 = vmatpush1.bf16.msra.mxu0 %v2919
    %4816 = vmatprep.subr.bf16.mxu0 %v3160
    %4817 = vmatpush2.bf16.msra.mxu0 %v3159
    %4818 = vmatprep.subr.bf16.mxu0 %v3144
    %4819 = vmatpush2.bf16.msra.mxu0 %v3143
    %4820 = vmatprep.subr.bf16.mxu0 %v3128
    %4821 = vmatpush2.bf16.msra.mxu0 %v3127
    %4822 = vmatprep.subr.bf16.mxu0 %v3112
    %4823 = vmatpush2.bf16.msra.mxu0 %v3111
    %4824 = vmatprep.subr.bf16.mxu0 %v3096
    %4825 = vmatpush2.bf16.msra.mxu0 %v3095
    %4826 = vmatprep.subr.bf16.mxu0 %v3080
    %4827 = vmatpush2.bf16.msra.mxu0 %v3079
    %4828 = vmatprep.subr.bf16.mxu0 %v3064
    %4829 = vmatpush2.bf16.msra.mxu0 %v3063
    %4830 = vmatprep.subr.bf16.mxu0 %v3048
    %4831 = vmatpush2.bf16.msra.mxu0 %v3047
    %4832 = vmatprep.mubr.bf16.mxu0 %v3551
    %4833 = vmatmul.mubr.bf16.gmra.mxu0 %v3550
    %v4834 = vpop.f32.mrf.mxu0
    %v4835 = vadd.f32 %v4794, %v4834
    %v4836 = vpop.f32.mrf.mxu0
    %v4837 = vadd.f32 %v4796, %v4836
    %v4838 = vpop.f32.mrf.mxu0
    %v4839 = vpop.f32.mrf.mxu0
    %4840 = vdwg.mxu0
    %4841 = vmatprep.subr.bf16.mxu0 %v3288
    %4842 = vmatpush1.bf16.msra.mxu0 %v3287
    %4843 = vmatprep.subr.bf16.mxu0 %v3272
    %4844 = vmatpush1.bf16.msra.mxu0 %v3271
    %4845 = vmatprep.subr.bf16.mxu0 %v3256
    %4846 = vmatpush1.bf16.msra.mxu0 %v3255
    %4847 = vmatprep.subr.bf16.mxu0 %v3240
    %4848 = vmatpush1.bf16.msra.mxu0 %v3239
    %4849 = vmatprep.subr.bf16.mxu0 %v3224
    %4850 = vmatpush1.bf16.msra.mxu0 %v3223
    %4851 = vmatprep.subr.bf16.mxu0 %v3208
    %4852 = vmatpush1.bf16.msra.mxu0 %v3207
    %4853 = vmatprep.subr.bf16.mxu0 %v3192
    %4854 = vmatpush1.bf16.msra.mxu0 %v3191
    %4855 = vmatprep.subr.bf16.mxu0 %v3176
    %4856 = vmatpush1.bf16.msra.mxu0 %v3175
    %4857 = vmatprep.subr.bf16.mxu0 %v3416
    %4858 = vmatpush2.bf16.msra.mxu0 %v3415
    %4859 = vmatprep.subr.bf16.mxu0 %v3400
    %4860 = vmatpush2.bf16.msra.mxu0 %v3399
    %4861 = vmatprep.subr.bf16.mxu0 %v3384
    %4862 = vmatpush2.bf16.msra.mxu0 %v3383
    %4863 = vmatprep.subr.bf16.mxu0 %v3368
    %4864 = vmatpush2.bf16.msra.mxu0 %v3367
    %4865 = vmatprep.subr.bf16.mxu0 %v3352
    %4866 = vmatpush2.bf16.msra.mxu0 %v3351
    %4867 = vmatprep.subr.bf16.mxu0 %v3336
    %4868 = vmatpush2.bf16.msra.mxu0 %v3335
    %4869 = vmatprep.subr.bf16.mxu0 %v3320
    %4870 = vmatpush2.bf16.msra.mxu0 %v3319
    %4871 = vmatprep.subr.bf16.mxu0 %v3304
    %4872 = vmatpush2.bf16.msra.mxu0 %v3303
    %4873 = vmatprep.mubr.bf16.mxu0 %v3553
    %4874 = vmatmul.mubr.bf16.gmra.mxu0 %v3552
    %v4875 = vpop.f32.mrf.mxu0
    %v4876 = vadd.f32 %v4835, %v4875
    %v4877 = vpop.f32.mrf.mxu0
    %v4878 = vadd.f32 %v4837, %v4877
    %v4879 = vpop.f32.mrf.mxu0
    %v4880 = vpop.f32.mrf.mxu0
    %4881 = vdwg.mxu0
    %4882 = vmatprep.subr.bf16.mxu0 %v1498
    %4883 = vmatpush1.bf16.msra.mxu0 %v1497
    %4884 = vmatprep.subr.bf16.mxu0 %v1482
    %4885 = vmatpush1.bf16.msra.mxu0 %v1481
    %4886 = vmatprep.subr.bf16.mxu0 %v1466
    %4887 = vmatpush1.bf16.msra.mxu0 %v1465
    %4888 = vmatprep.subr.bf16.mxu0 %v1450
    %4889 = vmatpush1.bf16.msra.mxu0 %v1449
    %4890 = vmatprep.subr.bf16.mxu0 %v1434
    %4891 = vmatpush1.bf16.msra.mxu0 %v1433
    %4892 = vmatprep.subr.bf16.mxu0 %v1418
    %4893 = vmatpush1.bf16.msra.mxu0 %v1417
    %4894 = vmatprep.subr.bf16.mxu0 %v1402
    %4895 = vmatpush1.bf16.msra.mxu0 %v1401
    %4896 = vmatprep.subr.bf16.mxu0 %v1386
    %4897 = vmatpush1.bf16.msra.mxu0 %v1385
    %4898 = vmatprep.subr.bf16.mxu0 %v1626
    %4899 = vmatpush2.bf16.msra.mxu0 %v1625
    %4900 = vmatprep.subr.bf16.mxu0 %v1610
    %4901 = vmatpush2.bf16.msra.mxu0 %v1609
    %4902 = vmatprep.subr.bf16.mxu0 %v1594
    %4903 = vmatpush2.bf16.msra.mxu0 %v1593
    %4904 = vmatprep.subr.bf16.mxu0 %v1578
    %4905 = vmatpush2.bf16.msra.mxu0 %v1577
    %4906 = vmatprep.subr.bf16.mxu0 %v1562
    %4907 = vmatpush2.bf16.msra.mxu0 %v1561
    %4908 = vmatprep.subr.bf16.mxu0 %v1546
    %4909 = vmatpush2.bf16.msra.mxu0 %v1545
    %4910 = vmatprep.subr.bf16.mxu0 %v1530
    %4911 = vmatpush2.bf16.msra.mxu0 %v1529
    %4912 = vmatprep.subr.bf16.mxu0 %v1514
    %4913 = vmatpush2.bf16.msra.mxu0 %v1513
    %4914 = vmatprep.mubr.bf16.mxu0 %v3539
    %4915 = vmatmul.mubr.bf16.gmra.mxu0 %v3538
    %v4916 = vpop.f32.mrf.mxu0
    %v4917 = vadd.f32 0.0, %v4916
    %v4918 = vpop.f32.mrf.mxu0
    %v4919 = vadd.f32 0.0, %v4918
    %v4920 = vpop.f32.mrf.mxu0
    %v4921 = vpop.f32.mrf.mxu0
    %4922 = vdwg.mxu0
    %4923 = vmatprep.subr.bf16.mxu0 %v1754
    %4924 = vmatpush1.bf16.msra.mxu0 %v1753
    %4925 = vmatprep.subr.bf16.mxu0 %v1738
    %4926 = vmatpush1.bf16.msra.mxu0 %v1737
    %4927 = vmatprep.subr.bf16.mxu0 %v1722
    %4928 = vmatpush1.bf16.msra.mxu0 %v1721
    %4929 = vmatprep.subr.bf16.mxu0 %v1706
    %4930 = vmatpush1.bf16.msra.mxu0 %v1705
    %4931 = vmatprep.subr.bf16.mxu0 %v1690
    %4932 = vmatpush1.bf16.msra.mxu0 %v1689
    %4933 = vmatprep.subr.bf16.mxu0 %v1674
    %4934 = vmatpush1.bf16.msra.mxu0 %v1673
    %4935 = vmatprep.subr.bf16.mxu0 %v1658
    %4936 = vmatpush1.bf16.msra.mxu0 %v1657
    %4937 = vmatprep.subr.bf16.mxu0 %v1642
    %4938 = vmatpush1.bf16.msra.mxu0 %v1641
    %4939 = vmatprep.subr.bf16.mxu0 %v1882
    %4940 = vmatpush2.bf16.msra.mxu0 %v1881
    %4941 = vmatprep.subr.bf16.mxu0 %v1866
    %4942 = vmatpush2.bf16.msra.mxu0 %v1865
    %4943 = vmatprep.subr.bf16.mxu0 %v1850
    %4944 = vmatpush2.bf16.msra.mxu0 %v1849
    %4945 = vmatprep.subr.bf16.mxu0 %v1834
    %4946 = vmatpush2.bf16.msra.mxu0 %v1833
    %4947 = vmatprep.subr.bf16.mxu0 %v1818
    %4948 = vmatpush2.bf16.msra.mxu0 %v1817
    %4949 = vmatprep.subr.bf16.mxu0 %v1802
    %4950 = vmatpush2.bf16.msra.mxu0 %v1801
    %4951 = vmatprep.subr.bf16.mxu0 %v1786
    %4952 = vmatpush2.bf16.msra.mxu0 %v1785
    %4953 = vmatprep.subr.bf16.mxu0 %v1770
    %4954 = vmatpush2.bf16.msra.mxu0 %v1769
    %4955 = vmatprep.mubr.bf16.mxu0 %v3541
    %4956 = vmatmul.mubr.bf16.gmra.mxu0 %v3540
    %v4957 = vpop.f32.mrf.mxu0
    %v4958 = vadd.f32 %v4917, %v4957
    %v4959 = vpop.f32.mrf.mxu0
    %v4960 = vadd.f32 %v4919, %v4959
    %v4961 = vpop.f32.mrf.mxu0
    %v4962 = vpop.f32.mrf.mxu0
    %4963 = vdwg.mxu0
    %4964 = vmatprep.subr.bf16.mxu0 %v2010
    %4965 = vmatpush1.bf16.msra.mxu0 %v2009
    %4966 = vmatprep.subr.bf16.mxu0 %v1994
    %4967 = vmatpush1.bf16.msra.mxu0 %v1993
    %4968 = vmatprep.subr.bf16.mxu0 %v1978
    %4969 = vmatpush1.bf16.msra.mxu0 %v1977
    %4970 = vmatprep.subr.bf16.mxu0 %v1962
    %4971 = vmatpush1.bf16.msra.mxu0 %v1961
    %4972 = vmatprep.subr.bf16.mxu0 %v1946
    %4973 = vmatpush1.bf16.msra.mxu0 %v1945
    %4974 = vmatprep.subr.bf16.mxu0 %v1930
    %4975 = vmatpush1.bf16.msra.mxu0 %v1929
    %4976 = vmatprep.subr.bf16.mxu0 %v1914
    %4977 = vmatpush1.bf16.msra.mxu0 %v1913
    %4978 = vmatprep.subr.bf16.mxu0 %v1898
    %4979 = vmatpush1.bf16.msra.mxu0 %v1897
    %4980 = vmatprep.subr.bf16.mxu0 %v2138
    %4981 = vmatpush2.bf16.msra.mxu0 %v2137
    %4982 = vmatprep.subr.bf16.mxu0 %v2122
    %4983 = vmatpush2.bf16.msra.mxu0 %v2121
    %4984 = vmatprep.subr.bf16.mxu0 %v2106
    %4985 = vmatpush2.bf16.msra.mxu0 %v2105
    %4986 = vmatprep.subr.bf16.mxu0 %v2090
    %4987 = vmatpush2.bf16.msra.mxu0 %v2089
    %4988 = vmatprep.subr.bf16.mxu0 %v2074
    %4989 = vmatpush2.bf16.msra.mxu0 %v2073
    %4990 = vmatprep.subr.bf16.mxu0 %v2058
    %4991 = vmatpush2.bf16.msra.mxu0 %v2057
    %4992 = vmatprep.subr.bf16.mxu0 %v2042
    %4993 = vmatpush2.bf16.msra.mxu0 %v2041
    %4994 = vmatprep.subr.bf16.mxu0 %v2026
    %4995 = vmatpush2.bf16.msra.mxu0 %v2025
    %4996 = vmatprep.mubr.bf16.mxu0 %v3543
    %4997 = vmatmul.mubr.bf16.gmra.mxu0 %v3542
    %v4998 = vpop.f32.mrf.mxu0
    %v4999 = vadd.f32 %v4958, %v4998
    %v5000 = vpop.f32.mrf.mxu0
    %v5001 = vadd.f32 %v4960, %v5000
    %v5002 = vpop.f32.mrf.mxu0
    %v5003 = vpop.f32.mrf.mxu0
    %5004 = vdwg.mxu0
    %5005 = vmatprep.subr.bf16.mxu0 %v2266
    %5006 = vmatpush1.bf16.msra.mxu0 %v2265
    %5007 = vmatprep.subr.bf16.mxu0 %v2250
    %5008 = vmatpush1.bf16.msra.mxu0 %v2249
    %5009 = vmatprep.subr.bf16.mxu0 %v2234
    %5010 = vmatpush1.bf16.msra.mxu0 %v2233
    %5011 = vmatprep.subr.bf16.mxu0 %v2218
    %5012 = vmatpush1.bf16.msra.mxu0 %v2217
    %5013 = vmatprep.subr.bf16.mxu0 %v2202
    %5014 = vmatpush1.bf16.msra.mxu0 %v2201
    %5015 = vmatprep.subr.bf16.mxu0 %v2186
    %5016 = vmatpush1.bf16.msra.mxu0 %v2185
    %5017 = vmatprep.subr.bf16.mxu0 %v2170
    %5018 = vmatpush1.bf16.msra.mxu0 %v2169
    %5019 = vmatprep.subr.bf16.mxu0 %v2154
    %5020 = vmatpush1.bf16.msra.mxu0 %v2153
    %5021 = vmatprep.subr.bf16.mxu0 %v2394
    %5022 = vmatpush2.bf16.msra.mxu0 %v2393
    %5023 = vmatprep.subr.bf16.mxu0 %v2378
    %5024 = vmatpush2.bf16.msra.mxu0 %v2377
    %5025 = vmatprep.subr.bf16.mxu0 %v2362
    %5026 = vmatpush2.bf16.msra.mxu0 %v2361
    %5027 = vmatprep.subr.bf16.mxu0 %v2346
    %5028 = vmatpush2.bf16.msra.mxu0 %v2345
    %5029 = vmatprep.subr.bf16.mxu0 %v2330
    %5030 = vmatpush2.bf16.msra.mxu0 %v2329
    %5031 = vmatprep.subr.bf16.mxu0 %v2314
    %5032 = vmatpush2.bf16.msra.mxu0 %v2313
    %5033 = vmatprep.subr.bf16.mxu0 %v2298
    %5034 = vmatpush2.bf16.msra.mxu0 %v2297
    %5035 = vmatprep.subr.bf16.mxu0 %v2282
    %5036 = vmatpush2.bf16.msra.mxu0 %v2281
    %5037 = vmatprep.mubr.bf16.mxu0 %v3545
    %5038 = vmatmul.mubr.bf16.gmra.mxu0 %v3544
    %v5039 = vpop.f32.mrf.mxu0
    %v5040 = vadd.f32 %v4999, %v5039
    %v5041 = vpop.f32.mrf.mxu0
    %v5042 = vadd.f32 %v5001, %v5041
    %v5043 = vpop.f32.mrf.mxu0
    %v5044 = vpop.f32.mrf.mxu0
    %5045 = vdwg.mxu0
    %5046 = vmatprep.subr.bf16.mxu0 %v2522
    %5047 = vmatpush1.bf16.msra.mxu0 %v2521
    %5048 = vmatprep.subr.bf16.mxu0 %v2506
    %5049 = vmatpush1.bf16.msra.mxu0 %v2505
    %5050 = vmatprep.subr.bf16.mxu0 %v2490
    %5051 = vmatpush1.bf16.msra.mxu0 %v2489
    %5052 = vmatprep.subr.bf16.mxu0 %v2474
    %5053 = vmatpush1.bf16.msra.mxu0 %v2473
    %5054 = vmatprep.subr.bf16.mxu0 %v2458
    %5055 = vmatpush1.bf16.msra.mxu0 %v2457
    %5056 = vmatprep.subr.bf16.mxu0 %v2442
    %5057 = vmatpush1.bf16.msra.mxu0 %v2441
    %5058 = vmatprep.subr.bf16.mxu0 %v2426
    %5059 = vmatpush1.bf16.msra.mxu0 %v2425
    %5060 = vmatprep.subr.bf16.mxu0 %v2410
    %5061 = vmatpush1.bf16.msra.mxu0 %v2409
    %5062 = vmatprep.subr.bf16.mxu0 %v2650
    %5063 = vmatpush2.bf16.msra.mxu0 %v2649
    %5064 = vmatprep.subr.bf16.mxu0 %v2634
    %5065 = vmatpush2.bf16.msra.mxu0 %v2633
    %5066 = vmatprep.subr.bf16.mxu0 %v2618
    %5067 = vmatpush2.bf16.msra.mxu0 %v2617
    %5068 = vmatprep.subr.bf16.mxu0 %v2602
    %5069 = vmatpush2.bf16.msra.mxu0 %v2601
    %5070 = vmatprep.subr.bf16.mxu0 %v2586
    %5071 = vmatpush2.bf16.msra.mxu0 %v2585
    %5072 = vmatprep.subr.bf16.mxu0 %v2570
    %5073 = vmatpush2.bf16.msra.mxu0 %v2569
    %5074 = vmatprep.subr.bf16.mxu0 %v2554
    %5075 = vmatpush2.bf16.msra.mxu0 %v2553
    %5076 = vmatprep.subr.bf16.mxu0 %v2538
    %5077 = vmatpush2.bf16.msra.mxu0 %v2537
    %5078 = vmatprep.mubr.bf16.mxu0 %v3547
    %5079 = vmatmul.mubr.bf16.gmra.mxu0 %v3546
    %v5080 = vpop.f32.mrf.mxu0
    %v5081 = vadd.f32 %v5040, %v5080
    %v5082 = vpop.f32.mrf.mxu0
    %v5083 = vadd.f32 %v5042, %v5082
    %v5084 = vpop.f32.mrf.mxu0
    %v5085 = vpop.f32.mrf.mxu0
    %5086 = vdwg.mxu0
    %5087 = vmatprep.subr.bf16.mxu0 %v2778
    %5088 = vmatpush1.bf16.msra.mxu0 %v2777
    %5089 = vmatprep.subr.bf16.mxu0 %v2762
    %5090 = vmatpush1.bf16.msra.mxu0 %v2761
    %5091 = vmatprep.subr.bf16.mxu0 %v2746
    %5092 = vmatpush1.bf16.msra.mxu0 %v2745
    %5093 = vmatprep.subr.bf16.mxu0 %v2730
    %5094 = vmatpush1.bf16.msra.mxu0 %v2729
    %5095 = vmatprep.subr.bf16.mxu0 %v2714
    %5096 = vmatpush1.bf16.msra.mxu0 %v2713
    %5097 = vmatprep.subr.bf16.mxu0 %v2698
    %5098 = vmatpush1.bf16.msra.mxu0 %v2697
    %5099 = vmatprep.subr.bf16.mxu0 %v2682
    %5100 = vmatpush1.bf16.msra.mxu0 %v2681
    %5101 = vmatprep.subr.bf16.mxu0 %v2666
    %5102 = vmatpush1.bf16.msra.mxu0 %v2665
    %5103 = vmatprep.subr.bf16.mxu0 %v2906
    %5104 = vmatpush2.bf16.msra.mxu0 %v2905
    %5105 = vmatprep.subr.bf16.mxu0 %v2890
    %5106 = vmatpush2.bf16.msra.mxu0 %v2889
    %5107 = vmatprep.subr.bf16.mxu0 %v2874
    %5108 = vmatpush2.bf16.msra.mxu0 %v2873
    %5109 = vmatprep.subr.bf16.mxu0 %v2858
    %5110 = vmatpush2.bf16.msra.mxu0 %v2857
    %5111 = vmatprep.subr.bf16.mxu0 %v2842
    %5112 = vmatpush2.bf16.msra.mxu0 %v2841
    %5113 = vmatprep.subr.bf16.mxu0 %v2826
    %5114 = vmatpush2.bf16.msra.mxu0 %v2825
    %5115 = vmatprep.subr.bf16.mxu0 %v2810
    %5116 = vmatpush2.bf16.msra.mxu0 %v2809
    %5117 = vmatprep.subr.bf16.mxu0 %v2794
    %5118 = vmatpush2.bf16.msra.mxu0 %v2793
    %5119 = vmatprep.mubr.bf16.mxu0 %v3549
    %5120 = vmatmul.mubr.bf16.gmra.mxu0 %v3548
    %v5121 = vpop.f32.mrf.mxu0
    %v5122 = vadd.f32 %v5081, %v5121
    %v5123 = vpop.f32.mrf.mxu0
    %v5124 = vadd.f32 %v5083, %v5123
    %v5125 = vpop.f32.mrf.mxu0
    %v5126 = vpop.f32.mrf.mxu0
    %5127 = vdwg.mxu0
    %5128 = vmatprep.subr.bf16.mxu0 %v3034
    %5129 = vmatpush1.bf16.msra.mxu0 %v3033
    %5130 = vmatprep.subr.bf16.mxu0 %v3018
    %5131 = vmatpush1.bf16.msra.mxu0 %v3017
    %5132 = vmatprep.subr.bf16.mxu0 %v3002
    %5133 = vmatpush1.bf16.msra.mxu0 %v3001
    %5134 = vmatprep.subr.bf16.mxu0 %v2986
    %5135 = vmatpush1.bf16.msra.mxu0 %v2985
    %5136 = vmatprep.subr.bf16.mxu0 %v2970
    %5137 = vmatpush1.bf16.msra.mxu0 %v2969
    %5138 = vmatprep.subr.bf16.mxu0 %v2954
    %5139 = vmatpush1.bf16.msra.mxu0 %v2953
    %5140 = vmatprep.subr.bf16.mxu0 %v2938
    %5141 = vmatpush1.bf16.msra.mxu0 %v2937
    %5142 = vmatprep.subr.bf16.mxu0 %v2922
    %5143 = vmatpush1.bf16.msra.mxu0 %v2921
    %5144 = vmatprep.subr.bf16.mxu0 %v3162
    %5145 = vmatpush2.bf16.msra.mxu0 %v3161
    %5146 = vmatprep.subr.bf16.mxu0 %v3146
    %5147 = vmatpush2.bf16.msra.mxu0 %v3145
    %5148 = vmatprep.subr.bf16.mxu0 %v3130
    %5149 = vmatpush2.bf16.msra.mxu0 %v3129
    %5150 = vmatprep.subr.bf16.mxu0 %v3114
    %5151 = vmatpush2.bf16.msra.mxu0 %v3113
    %5152 = vmatprep.subr.bf16.mxu0 %v3098
    %5153 = vmatpush2.bf16.msra.mxu0 %v3097
    %5154 = vmatprep.subr.bf16.mxu0 %v3082
    %5155 = vmatpush2.bf16.msra.mxu0 %v3081
    %5156 = vmatprep.subr.bf16.mxu0 %v3066
    %5157 = vmatpush2.bf16.msra.mxu0 %v3065
    %5158 = vmatprep.subr.bf16.mxu0 %v3050
    %5159 = vmatpush2.bf16.msra.mxu0 %v3049
    %5160 = vmatprep.mubr.bf16.mxu0 %v3551
    %5161 = vmatmul.mubr.bf16.gmra.mxu0 %v3550
    %v5162 = vpop.f32.mrf.mxu0
    %v5163 = vadd.f32 %v5122, %v5162
    %v5164 = vpop.f32.mrf.mxu0
    %v5165 = vadd.f32 %v5124, %v5164
    %v5166 = vpop.f32.mrf.mxu0
    %v5167 = vpop.f32.mrf.mxu0
    %5168 = vdwg.mxu0
    %5169 = vmatprep.subr.bf16.mxu0 %v3290
    %5170 = vmatpush1.bf16.msra.mxu0 %v3289
    %5171 = vmatprep.subr.bf16.mxu0 %v3274
    %5172 = vmatpush1.bf16.msra.mxu0 %v3273
    %5173 = vmatprep.subr.bf16.mxu0 %v3258
    %5174 = vmatpush1.bf16.msra.mxu0 %v3257
    %5175 = vmatprep.subr.bf16.mxu0 %v3242
    %5176 = vmatpush1.bf16.msra.mxu0 %v3241
    %5177 = vmatprep.subr.bf16.mxu0 %v3226
    %5178 = vmatpush1.bf16.msra.mxu0 %v3225
    %5179 = vmatprep.subr.bf16.mxu0 %v3210
    %5180 = vmatpush1.bf16.msra.mxu0 %v3209
    %5181 = vmatprep.subr.bf16.mxu0 %v3194
    %5182 = vmatpush1.bf16.msra.mxu0 %v3193
    %5183 = vmatprep.subr.bf16.mxu0 %v3178
    %5184 = vmatpush1.bf16.msra.mxu0 %v3177
    %5185 = vmatprep.subr.bf16.mxu0 %v3418
    %5186 = vmatpush2.bf16.msra.mxu0 %v3417
    %5187 = vmatprep.subr.bf16.mxu0 %v3402
    %5188 = vmatpush2.bf16.msra.mxu0 %v3401
    %5189 = vmatprep.subr.bf16.mxu0 %v3386
    %5190 = vmatpush2.bf16.msra.mxu0 %v3385
    %5191 = vmatprep.subr.bf16.mxu0 %v3370
    %5192 = vmatpush2.bf16.msra.mxu0 %v3369
    %5193 = vmatprep.subr.bf16.mxu0 %v3354
    %5194 = vmatpush2.bf16.msra.mxu0 %v3353
    %5195 = vmatprep.subr.bf16.mxu0 %v3338
    %5196 = vmatpush2.bf16.msra.mxu0 %v3337
    %5197 = vmatprep.subr.bf16.mxu0 %v3322
    %5198 = vmatpush2.bf16.msra.mxu0 %v3321
    %5199 = vmatprep.subr.bf16.mxu0 %v3306
    %5200 = vmatpush2.bf16.msra.mxu0 %v3305
    %5201 = vmatprep.mubr.bf16.mxu0 %v3553
    %5202 = vmatmul.mubr.bf16.gmra.mxu0 %v3552
    %v5203 = vpop.f32.mrf.mxu0
    %v5204 = vadd.f32 %v5163, %v5203
    %v5205 = vpop.f32.mrf.mxu0
    %v5206 = vadd.f32 %v5165, %v5205
    %v5207 = vpop.f32.mrf.mxu0
    %v5208 = vpop.f32.mrf.mxu0
    %5209 = vdwg.mxu0
    %5210 = vmatprep.subr.bf16.mxu0 %v1500
    %5211 = vmatpush1.bf16.msra.mxu0 %v1499
    %5212 = vmatprep.subr.bf16.mxu0 %v1484
    %5213 = vmatpush1.bf16.msra.mxu0 %v1483
    %5214 = vmatprep.subr.bf16.mxu0 %v1468
    %5215 = vmatpush1.bf16.msra.mxu0 %v1467
    %5216 = vmatprep.subr.bf16.mxu0 %v1452
    %5217 = vmatpush1.bf16.msra.mxu0 %v1451
    %5218 = vmatprep.subr.bf16.mxu0 %v1436
    %5219 = vmatpush1.bf16.msra.mxu0 %v1435
    %5220 = vmatprep.subr.bf16.mxu0 %v1420
    %5221 = vmatpush1.bf16.msra.mxu0 %v1419
    %5222 = vmatprep.subr.bf16.mxu0 %v1404
    %5223 = vmatpush1.bf16.msra.mxu0 %v1403
    %5224 = vmatprep.subr.bf16.mxu0 %v1388
    %5225 = vmatpush1.bf16.msra.mxu0 %v1387
    %5226 = vmatprep.subr.bf16.mxu0 %v1628
    %5227 = vmatpush2.bf16.msra.mxu0 %v1627
    %5228 = vmatprep.subr.bf16.mxu0 %v1612
    %5229 = vmatpush2.bf16.msra.mxu0 %v1611
    %5230 = vmatprep.subr.bf16.mxu0 %v1596
    %5231 = vmatpush2.bf16.msra.mxu0 %v1595
    %5232 = vmatprep.subr.bf16.mxu0 %v1580
    %5233 = vmatpush2.bf16.msra.mxu0 %v1579
    %5234 = vmatprep.subr.bf16.mxu0 %v1564
    %5235 = vmatpush2.bf16.msra.mxu0 %v1563
    %5236 = vmatprep.subr.bf16.mxu0 %v1548
    %5237 = vmatpush2.bf16.msra.mxu0 %v1547
    %5238 = vmatprep.subr.bf16.mxu0 %v1532
    %5239 = vmatpush2.bf16.msra.mxu0 %v1531
    %5240 = vmatprep.subr.bf16.mxu0 %v1516
    %5241 = vmatpush2.bf16.msra.mxu0 %v1515
    %5242 = vmatprep.mubr.bf16.mxu0 %v3539
    %5243 = vmatmul.mubr.bf16.gmra.mxu0 %v3538
    %v5244 = vpop.f32.mrf.mxu0
    %v5245 = vadd.f32 0.0, %v5244
    %v5246 = vpop.f32.mrf.mxu0
    %v5247 = vadd.f32 0.0, %v5246
    %v5248 = vpop.f32.mrf.mxu0
    %v5249 = vpop.f32.mrf.mxu0
    %5250 = vdwg.mxu0
    %5251 = vmatprep.subr.bf16.mxu0 %v1756
    %5252 = vmatpush1.bf16.msra.mxu0 %v1755
    %5253 = vmatprep.subr.bf16.mxu0 %v1740
    %5254 = vmatpush1.bf16.msra.mxu0 %v1739
    %5255 = vmatprep.subr.bf16.mxu0 %v1724
    %5256 = vmatpush1.bf16.msra.mxu0 %v1723
    %5257 = vmatprep.subr.bf16.mxu0 %v1708
    %5258 = vmatpush1.bf16.msra.mxu0 %v1707
    %5259 = vmatprep.subr.bf16.mxu0 %v1692
    %5260 = vmatpush1.bf16.msra.mxu0 %v1691
    %5261 = vmatprep.subr.bf16.mxu0 %v1676
    %5262 = vmatpush1.bf16.msra.mxu0 %v1675
    %5263 = vmatprep.subr.bf16.mxu0 %v1660
    %5264 = vmatpush1.bf16.msra.mxu0 %v1659
    %5265 = vmatprep.subr.bf16.mxu0 %v1644
    %5266 = vmatpush1.bf16.msra.mxu0 %v1643
    %5267 = vmatprep.subr.bf16.mxu0 %v1884
    %5268 = vmatpush2.bf16.msra.mxu0 %v1883
    %5269 = vmatprep.subr.bf16.mxu0 %v1868
    %5270 = vmatpush2.bf16.msra.mxu0 %v1867
    %5271 = vmatprep.subr.bf16.mxu0 %v1852
    %5272 = vmatpush2.bf16.msra.mxu0 %v1851
    %5273 = vmatprep.subr.bf16.mxu0 %v1836
    %5274 = vmatpush2.bf16.msra.mxu0 %v1835
    %5275 = vmatprep.subr.bf16.mxu0 %v1820
    %5276 = vmatpush2.bf16.msra.mxu0 %v1819
    %5277 = vmatprep.subr.bf16.mxu0 %v1804
    %5278 = vmatpush2.bf16.msra.mxu0 %v1803
    %5279 = vmatprep.subr.bf16.mxu0 %v1788
    %5280 = vmatpush2.bf16.msra.mxu0 %v1787
    %5281 = vmatprep.subr.bf16.mxu0 %v1772
    %5282 = vmatpush2.bf16.msra.mxu0 %v1771
    %5283 = vmatprep.mubr.bf16.mxu0 %v3541
    %5284 = vmatmul.mubr.bf16.gmra.mxu0 %v3540
    %v5285 = vpop.f32.mrf.mxu0
    %v5286 = vadd.f32 %v5245, %v5285
    %v5287 = vpop.f32.mrf.mxu0
    %v5288 = vadd.f32 %v5247, %v5287
    %v5289 = vpop.f32.mrf.mxu0
    %v5290 = vpop.f32.mrf.mxu0
    %5291 = vdwg.mxu0
    %5292 = vmatprep.subr.bf16.mxu0 %v2012
    %5293 = vmatpush1.bf16.msra.mxu0 %v2011
    %5294 = vmatprep.subr.bf16.mxu0 %v1996
    %5295 = vmatpush1.bf16.msra.mxu0 %v1995
    %5296 = vmatprep.subr.bf16.mxu0 %v1980
    %5297 = vmatpush1.bf16.msra.mxu0 %v1979
    %5298 = vmatprep.subr.bf16.mxu0 %v1964
    %5299 = vmatpush1.bf16.msra.mxu0 %v1963
    %5300 = vmatprep.subr.bf16.mxu0 %v1948
    %5301 = vmatpush1.bf16.msra.mxu0 %v1947
    %5302 = vmatprep.subr.bf16.mxu0 %v1932
    %5303 = vmatpush1.bf16.msra.mxu0 %v1931
    %5304 = vmatprep.subr.bf16.mxu0 %v1916
    %5305 = vmatpush1.bf16.msra.mxu0 %v1915
    %5306 = vmatprep.subr.bf16.mxu0 %v1900
    %5307 = vmatpush1.bf16.msra.mxu0 %v1899
    %5308 = vmatprep.subr.bf16.mxu0 %v2140
    %5309 = vmatpush2.bf16.msra.mxu0 %v2139
    %5310 = vmatprep.subr.bf16.mxu0 %v2124
    %5311 = vmatpush2.bf16.msra.mxu0 %v2123
    %5312 = vmatprep.subr.bf16.mxu0 %v2108
    %5313 = vmatpush2.bf16.msra.mxu0 %v2107
    %5314 = vmatprep.subr.bf16.mxu0 %v2092
    %5315 = vmatpush2.bf16.msra.mxu0 %v2091
    %5316 = vmatprep.subr.bf16.mxu0 %v2076
    %5317 = vmatpush2.bf16.msra.mxu0 %v2075
    %5318 = vmatprep.subr.bf16.mxu0 %v2060
    %5319 = vmatpush2.bf16.msra.mxu0 %v2059
    %5320 = vmatprep.subr.bf16.mxu0 %v2044
    %5321 = vmatpush2.bf16.msra.mxu0 %v2043
    %5322 = vmatprep.subr.bf16.mxu0 %v2028
    %5323 = vmatpush2.bf16.msra.mxu0 %v2027
    %5324 = vmatprep.mubr.bf16.mxu0 %v3543
    %5325 = vmatmul.mubr.bf16.gmra.mxu0 %v3542
    %v5326 = vpop.f32.mrf.mxu0
    %v5327 = vadd.f32 %v5286, %v5326
    %v5328 = vpop.f32.mrf.mxu0
    %v5329 = vadd.f32 %v5288, %v5328
    %v5330 = vpop.f32.mrf.mxu0
    %v5331 = vpop.f32.mrf.mxu0
    %5332 = vdwg.mxu0
    %5333 = vmatprep.subr.bf16.mxu0 %v2268
    %5334 = vmatpush1.bf16.msra.mxu0 %v2267
    %5335 = vmatprep.subr.bf16.mxu0 %v2252
    %5336 = vmatpush1.bf16.msra.mxu0 %v2251
    %5337 = vmatprep.subr.bf16.mxu0 %v2236
    %5338 = vmatpush1.bf16.msra.mxu0 %v2235
    %5339 = vmatprep.subr.bf16.mxu0 %v2220
    %5340 = vmatpush1.bf16.msra.mxu0 %v2219
    %5341 = vmatprep.subr.bf16.mxu0 %v2204
    %5342 = vmatpush1.bf16.msra.mxu0 %v2203
    %5343 = vmatprep.subr.bf16.mxu0 %v2188
    %5344 = vmatpush1.bf16.msra.mxu0 %v2187
    %5345 = vmatprep.subr.bf16.mxu0 %v2172
    %5346 = vmatpush1.bf16.msra.mxu0 %v2171
    %5347 = vmatprep.subr.bf16.mxu0 %v2156
    %5348 = vmatpush1.bf16.msra.mxu0 %v2155
    %5349 = vmatprep.subr.bf16.mxu0 %v2396
    %5350 = vmatpush2.bf16.msra.mxu0 %v2395
    %5351 = vmatprep.subr.bf16.mxu0 %v2380
    %5352 = vmatpush2.bf16.msra.mxu0 %v2379
    %5353 = vmatprep.subr.bf16.mxu0 %v2364
    %5354 = vmatpush2.bf16.msra.mxu0 %v2363
    %5355 = vmatprep.subr.bf16.mxu0 %v2348
    %5356 = vmatpush2.bf16.msra.mxu0 %v2347
    %5357 = vmatprep.subr.bf16.mxu0 %v2332
    %5358 = vmatpush2.bf16.msra.mxu0 %v2331
    %5359 = vmatprep.subr.bf16.mxu0 %v2316
    %5360 = vmatpush2.bf16.msra.mxu0 %v2315
    %5361 = vmatprep.subr.bf16.mxu0 %v2300
    %5362 = vmatpush2.bf16.msra.mxu0 %v2299
    %5363 = vmatprep.subr.bf16.mxu0 %v2284
    %5364 = vmatpush2.bf16.msra.mxu0 %v2283
    %5365 = vmatprep.mubr.bf16.mxu0 %v3545
    %5366 = vmatmul.mubr.bf16.gmra.mxu0 %v3544
    %v5367 = vpop.f32.mrf.mxu0
    %v5368 = vadd.f32 %v5327, %v5367
    %v5369 = vpop.f32.mrf.mxu0
    %v5370 = vadd.f32 %v5329, %v5369
    %v5371 = vpop.f32.mrf.mxu0
    %v5372 = vpop.f32.mrf.mxu0
    %5373 = vdwg.mxu0
    %5374 = vmatprep.subr.bf16.mxu0 %v2524
    %5375 = vmatpush1.bf16.msra.mxu0 %v2523
    %5376 = vmatprep.subr.bf16.mxu0 %v2508
    %5377 = vmatpush1.bf16.msra.mxu0 %v2507
    %5378 = vmatprep.subr.bf16.mxu0 %v2492
    %5379 = vmatpush1.bf16.msra.mxu0 %v2491
    %5380 = vmatprep.subr.bf16.mxu0 %v2476
    %5381 = vmatpush1.bf16.msra.mxu0 %v2475
    %5382 = vmatprep.subr.bf16.mxu0 %v2460
    %5383 = vmatpush1.bf16.msra.mxu0 %v2459
    %5384 = vmatprep.subr.bf16.mxu0 %v2444
    %5385 = vmatpush1.bf16.msra.mxu0 %v2443
    %5386 = vmatprep.subr.bf16.mxu0 %v2428
    %5387 = vmatpush1.bf16.msra.mxu0 %v2427
    %5388 = vmatprep.subr.bf16.mxu0 %v2412
    %5389 = vmatpush1.bf16.msra.mxu0 %v2411
    %5390 = vmatprep.subr.bf16.mxu0 %v2652
    %5391 = vmatpush2.bf16.msra.mxu0 %v2651
    %5392 = vmatprep.subr.bf16.mxu0 %v2636
    %5393 = vmatpush2.bf16.msra.mxu0 %v2635
    %5394 = vmatprep.subr.bf16.mxu0 %v2620
    %5395 = vmatpush2.bf16.msra.mxu0 %v2619
    %5396 = vmatprep.subr.bf16.mxu0 %v2604
    %5397 = vmatpush2.bf16.msra.mxu0 %v2603
    %5398 = vmatprep.subr.bf16.mxu0 %v2588
    %5399 = vmatpush2.bf16.msra.mxu0 %v2587
    %5400 = vmatprep.subr.bf16.mxu0 %v2572
    %5401 = vmatpush2.bf16.msra.mxu0 %v2571
    %5402 = vmatprep.subr.bf16.mxu0 %v2556
    %5403 = vmatpush2.bf16.msra.mxu0 %v2555
    %5404 = vmatprep.subr.bf16.mxu0 %v2540
    %5405 = vmatpush2.bf16.msra.mxu0 %v2539
    %5406 = vmatprep.mubr.bf16.mxu0 %v3547
    %5407 = vmatmul.mubr.bf16.gmra.mxu0 %v3546
    %v5408 = vpop.f32.mrf.mxu0
    %v5409 = vadd.f32 %v5368, %v5408
    %v5410 = vpop.f32.mrf.mxu0
    %v5411 = vadd.f32 %v5370, %v5410
    %v5412 = vpop.f32.mrf.mxu0
    %v5413 = vpop.f32.mrf.mxu0
    %5414 = vdwg.mxu0
    %5415 = vmatprep.subr.bf16.mxu0 %v2780
    %5416 = vmatpush1.bf16.msra.mxu0 %v2779
    %5417 = vmatprep.subr.bf16.mxu0 %v2764
    %5418 = vmatpush1.bf16.msra.mxu0 %v2763
    %5419 = vmatprep.subr.bf16.mxu0 %v2748
    %5420 = vmatpush1.bf16.msra.mxu0 %v2747
    %5421 = vmatprep.subr.bf16.mxu0 %v2732
    %5422 = vmatpush1.bf16.msra.mxu0 %v2731
    %5423 = vmatprep.subr.bf16.mxu0 %v2716
    %5424 = vmatpush1.bf16.msra.mxu0 %v2715
    %5425 = vmatprep.subr.bf16.mxu0 %v2700
    %5426 = vmatpush1.bf16.msra.mxu0 %v2699
    %5427 = vmatprep.subr.bf16.mxu0 %v2684
    %5428 = vmatpush1.bf16.msra.mxu0 %v2683
    %5429 = vmatprep.subr.bf16.mxu0 %v2668
    %5430 = vmatpush1.bf16.msra.mxu0 %v2667
    %5431 = vmatprep.subr.bf16.mxu0 %v2908
    %5432 = vmatpush2.bf16.msra.mxu0 %v2907
    %5433 = vmatprep.subr.bf16.mxu0 %v2892
    %5434 = vmatpush2.bf16.msra.mxu0 %v2891
    %5435 = vmatprep.subr.bf16.mxu0 %v2876
    %5436 = vmatpush2.bf16.msra.mxu0 %v2875
    %5437 = vmatprep.subr.bf16.mxu0 %v2860
    %5438 = vmatpush2.bf16.msra.mxu0 %v2859
    %5439 = vmatprep.subr.bf16.mxu0 %v2844
    %5440 = vmatpush2.bf16.msra.mxu0 %v2843
    %5441 = vmatprep.subr.bf16.mxu0 %v2828
    %5442 = vmatpush2.bf16.msra.mxu0 %v2827
    %5443 = vmatprep.subr.bf16.mxu0 %v2812
    %5444 = vmatpush2.bf16.msra.mxu0 %v2811
    %5445 = vmatprep.subr.bf16.mxu0 %v2796
    %5446 = vmatpush2.bf16.msra.mxu0 %v2795
    %5447 = vmatprep.mubr.bf16.mxu0 %v3549
    %5448 = vmatmul.mubr.bf16.gmra.mxu0 %v3548
    %v5449 = vpop.f32.mrf.mxu0
    %v5450 = vadd.f32 %v5409, %v5449
    %v5451 = vpop.f32.mrf.mxu0
    %v5452 = vadd.f32 %v5411, %v5451
    %v5453 = vpop.f32.mrf.mxu0
    %v5454 = vpop.f32.mrf.mxu0
    %5455 = vdwg.mxu0
    %5456 = vmatprep.subr.bf16.mxu0 %v3036
    %5457 = vmatpush1.bf16.msra.mxu0 %v3035
    %5458 = vmatprep.subr.bf16.mxu0 %v3020
    %5459 = vmatpush1.bf16.msra.mxu0 %v3019
    %5460 = vmatprep.subr.bf16.mxu0 %v3004
    %5461 = vmatpush1.bf16.msra.mxu0 %v3003
    %5462 = vmatprep.subr.bf16.mxu0 %v2988
    %5463 = vmatpush1.bf16.msra.mxu0 %v2987
    %5464 = vmatprep.subr.bf16.mxu0 %v2972
    %5465 = vmatpush1.bf16.msra.mxu0 %v2971
    %5466 = vmatprep.subr.bf16.mxu0 %v2956
    %5467 = vmatpush1.bf16.msra.mxu0 %v2955
    %5468 = vmatprep.subr.bf16.mxu0 %v2940
    %5469 = vmatpush1.bf16.msra.mxu0 %v2939
    %5470 = vmatprep.subr.bf16.mxu0 %v2924
    %5471 = vmatpush1.bf16.msra.mxu0 %v2923
    %5472 = vmatprep.subr.bf16.mxu0 %v3164
    %5473 = vmatpush2.bf16.msra.mxu0 %v3163
    %5474 = vmatprep.subr.bf16.mxu0 %v3148
    %5475 = vmatpush2.bf16.msra.mxu0 %v3147
    %5476 = vmatprep.subr.bf16.mxu0 %v3132
    %5477 = vmatpush2.bf16.msra.mxu0 %v3131
    %5478 = vmatprep.subr.bf16.mxu0 %v3116
    %5479 = vmatpush2.bf16.msra.mxu0 %v3115
    %5480 = vmatprep.subr.bf16.mxu0 %v3100
    %5481 = vmatpush2.bf16.msra.mxu0 %v3099
    %5482 = vmatprep.subr.bf16.mxu0 %v3084
    %5483 = vmatpush2.bf16.msra.mxu0 %v3083
    %5484 = vmatprep.subr.bf16.mxu0 %v3068
    %5485 = vmatpush2.bf16.msra.mxu0 %v3067
    %5486 = vmatprep.subr.bf16.mxu0 %v3052
    %5487 = vmatpush2.bf16.msra.mxu0 %v3051
    %5488 = vmatprep.mubr.bf16.mxu0 %v3551
    %5489 = vmatmul.mubr.bf16.gmra.mxu0 %v3550
    %v5490 = vpop.f32.mrf.mxu0
    %v5491 = vadd.f32 %v5450, %v5490
    %v5492 = vpop.f32.mrf.mxu0
    %v5493 = vadd.f32 %v5452, %v5492
    %v5494 = vpop.f32.mrf.mxu0
    %v5495 = vpop.f32.mrf.mxu0
    %5496 = vdwg.mxu0
    %5497 = vmatprep.subr.bf16.mxu0 %v3292
    %5498 = vmatpush1.bf16.msra.mxu0 %v3291
    %5499 = vmatprep.subr.bf16.mxu0 %v3276
    %5500 = vmatpush1.bf16.msra.mxu0 %v3275
    %5501 = vmatprep.subr.bf16.mxu0 %v3260
    %5502 = vmatpush1.bf16.msra.mxu0 %v3259
    %5503 = vmatprep.subr.bf16.mxu0 %v3244
    %5504 = vmatpush1.bf16.msra.mxu0 %v3243
    %5505 = vmatprep.subr.bf16.mxu0 %v3228
    %5506 = vmatpush1.bf16.msra.mxu0 %v3227
    %5507 = vmatprep.subr.bf16.mxu0 %v3212
    %5508 = vmatpush1.bf16.msra.mxu0 %v3211
    %5509 = vmatprep.subr.bf16.mxu0 %v3196
    %5510 = vmatpush1.bf16.msra.mxu0 %v3195
    %5511 = vmatprep.subr.bf16.mxu0 %v3180
    %5512 = vmatpush1.bf16.msra.mxu0 %v3179
    %5513 = vmatprep.subr.bf16.mxu0 %v3420
    %5514 = vmatpush2.bf16.msra.mxu0 %v3419
    %5515 = vmatprep.subr.bf16.mxu0 %v3404
    %5516 = vmatpush2.bf16.msra.mxu0 %v3403
    %5517 = vmatprep.subr.bf16.mxu0 %v3388
    %5518 = vmatpush2.bf16.msra.mxu0 %v3387
    %5519 = vmatprep.subr.bf16.mxu0 %v3372
    %5520 = vmatpush2.bf16.msra.mxu0 %v3371
    %5521 = vmatprep.subr.bf16.mxu0 %v3356
    %5522 = vmatpush2.bf16.msra.mxu0 %v3355
    %5523 = vmatprep.subr.bf16.mxu0 %v3340
    %5524 = vmatpush2.bf16.msra.mxu0 %v3339
    %5525 = vmatprep.subr.bf16.mxu0 %v3324
    %5526 = vmatpush2.bf16.msra.mxu0 %v3323
    %5527 = vmatprep.subr.bf16.mxu0 %v3308
    %5528 = vmatpush2.bf16.msra.mxu0 %v3307
    %5529 = vmatprep.mubr.bf16.mxu0 %v3553
    %5530 = vmatmul.mubr.bf16.gmra.mxu0 %v3552
    %v5531 = vpop.f32.mrf.mxu0
    %v5532 = vadd.f32 %v5491, %v5531
    %v5533 = vpop.f32.mrf.mxu0
    %v5534 = vadd.f32 %v5493, %v5533
    %v5535 = vpop.f32.mrf.mxu0
    %v5536 = vpop.f32.mrf.mxu0
    %5537 = vdwg.mxu0
    %5538 = vmatprep.subr.bf16.mxu0 %v1502
    %5539 = vmatpush1.bf16.msra.mxu0 %v1501
    %5540 = vmatprep.subr.bf16.mxu0 %v1486
    %5541 = vmatpush1.bf16.msra.mxu0 %v1485
    %5542 = vmatprep.subr.bf16.mxu0 %v1470
    %5543 = vmatpush1.bf16.msra.mxu0 %v1469
    %5544 = vmatprep.subr.bf16.mxu0 %v1454
    %5545 = vmatpush1.bf16.msra.mxu0 %v1453
    %5546 = vmatprep.subr.bf16.mxu0 %v1438
    %5547 = vmatpush1.bf16.msra.mxu0 %v1437
    %5548 = vmatprep.subr.bf16.mxu0 %v1422
    %5549 = vmatpush1.bf16.msra.mxu0 %v1421
    %5550 = vmatprep.subr.bf16.mxu0 %v1406
    %5551 = vmatpush1.bf16.msra.mxu0 %v1405
    %5552 = vmatprep.subr.bf16.mxu0 %v1390
    %5553 = vmatpush1.bf16.msra.mxu0 %v1389
    %5554 = vmatprep.subr.bf16.mxu0 %v1630
    %5555 = vmatpush2.bf16.msra.mxu0 %v1629
    %5556 = vmatprep.subr.bf16.mxu0 %v1614
    %5557 = vmatpush2.bf16.msra.mxu0 %v1613
    %5558 = vmatprep.subr.bf16.mxu0 %v1598
    %5559 = vmatpush2.bf16.msra.mxu0 %v1597
    %5560 = vmatprep.subr.bf16.mxu0 %v1582
    %5561 = vmatpush2.bf16.msra.mxu0 %v1581
    %5562 = vmatprep.subr.bf16.mxu0 %v1566
    %5563 = vmatpush2.bf16.msra.mxu0 %v1565
    %5564 = vmatprep.subr.bf16.mxu0 %v1550
    %5565 = vmatpush2.bf16.msra.mxu0 %v1549
    %5566 = vmatprep.subr.bf16.mxu0 %v1534
    %5567 = vmatpush2.bf16.msra.mxu0 %v1533
    %5568 = vmatprep.subr.bf16.mxu0 %v1518
    %5569 = vmatpush2.bf16.msra.mxu0 %v1517
    %5570 = vmatprep.mubr.bf16.mxu0 %v3539
    %5571 = vmatmul.mubr.bf16.gmra.mxu0 %v3538
    %v5572 = vpop.f32.mrf.mxu0
    %v5573 = vadd.f32 0.0, %v5572
    %v5574 = vpop.f32.mrf.mxu0
    %v5575 = vadd.f32 0.0, %v5574
    %v5576 = vpop.f32.mrf.mxu0
    %v5577 = vpop.f32.mrf.mxu0
    %5578 = vdwg.mxu0
    %5579 = vmatprep.subr.bf16.mxu0 %v1758
    %5580 = vmatpush1.bf16.msra.mxu0 %v1757
    %5581 = vmatprep.subr.bf16.mxu0 %v1742
    %5582 = vmatpush1.bf16.msra.mxu0 %v1741
    %5583 = vmatprep.subr.bf16.mxu0 %v1726
    %5584 = vmatpush1.bf16.msra.mxu0 %v1725
    %5585 = vmatprep.subr.bf16.mxu0 %v1710
    %5586 = vmatpush1.bf16.msra.mxu0 %v1709
    %5587 = vmatprep.subr.bf16.mxu0 %v1694
    %5588 = vmatpush1.bf16.msra.mxu0 %v1693
    %5589 = vmatprep.subr.bf16.mxu0 %v1678
    %5590 = vmatpush1.bf16.msra.mxu0 %v1677
    %5591 = vmatprep.subr.bf16.mxu0 %v1662
    %5592 = vmatpush1.bf16.msra.mxu0 %v1661
    %5593 = vmatprep.subr.bf16.mxu0 %v1646
    %5594 = vmatpush1.bf16.msra.mxu0 %v1645
    %5595 = vmatprep.subr.bf16.mxu0 %v1886
    %5596 = vmatpush2.bf16.msra.mxu0 %v1885
    %5597 = vmatprep.subr.bf16.mxu0 %v1870
    %5598 = vmatpush2.bf16.msra.mxu0 %v1869
    %5599 = vmatprep.subr.bf16.mxu0 %v1854
    %5600 = vmatpush2.bf16.msra.mxu0 %v1853
    %5601 = vmatprep.subr.bf16.mxu0 %v1838
    %5602 = vmatpush2.bf16.msra.mxu0 %v1837
    %5603 = vmatprep.subr.bf16.mxu0 %v1822
    %5604 = vmatpush2.bf16.msra.mxu0 %v1821
    %5605 = vmatprep.subr.bf16.mxu0 %v1806
    %5606 = vmatpush2.bf16.msra.mxu0 %v1805
    %5607 = vmatprep.subr.bf16.mxu0 %v1790
    %5608 = vmatpush2.bf16.msra.mxu0 %v1789
    %5609 = vmatprep.subr.bf16.mxu0 %v1774
    %5610 = vmatpush2.bf16.msra.mxu0 %v1773
    %5611 = vmatprep.mubr.bf16.mxu0 %v3541
    %5612 = vmatmul.mubr.bf16.gmra.mxu0 %v3540
    %v5613 = vpop.f32.mrf.mxu0
    %v5614 = vadd.f32 %v5573, %v5613
    %v5615 = vpop.f32.mrf.mxu0
    %v5616 = vadd.f32 %v5575, %v5615
    %v5617 = vpop.f32.mrf.mxu0
    %v5618 = vpop.f32.mrf.mxu0
    %5619 = vdwg.mxu0
    %5620 = vmatprep.subr.bf16.mxu0 %v2014
    %5621 = vmatpush1.bf16.msra.mxu0 %v2013
    %5622 = vmatprep.subr.bf16.mxu0 %v1998
    %5623 = vmatpush1.bf16.msra.mxu0 %v1997
    %5624 = vmatprep.subr.bf16.mxu0 %v1982
    %5625 = vmatpush1.bf16.msra.mxu0 %v1981
    %5626 = vmatprep.subr.bf16.mxu0 %v1966
    %5627 = vmatpush1.bf16.msra.mxu0 %v1965
    %5628 = vmatprep.subr.bf16.mxu0 %v1950
    %5629 = vmatpush1.bf16.msra.mxu0 %v1949
    %5630 = vmatprep.subr.bf16.mxu0 %v1934
    %5631 = vmatpush1.bf16.msra.mxu0 %v1933
    %5632 = vmatprep.subr.bf16.mxu0 %v1918
    %5633 = vmatpush1.bf16.msra.mxu0 %v1917
    %5634 = vmatprep.subr.bf16.mxu0 %v1902
    %5635 = vmatpush1.bf16.msra.mxu0 %v1901
    %5636 = vmatprep.subr.bf16.mxu0 %v2142
    %5637 = vmatpush2.bf16.msra.mxu0 %v2141
    %5638 = vmatprep.subr.bf16.mxu0 %v2126
    %5639 = vmatpush2.bf16.msra.mxu0 %v2125
    %5640 = vmatprep.subr.bf16.mxu0 %v2110
    %5641 = vmatpush2.bf16.msra.mxu0 %v2109
    %5642 = vmatprep.subr.bf16.mxu0 %v2094
    %5643 = vmatpush2.bf16.msra.mxu0 %v2093
    %5644 = vmatprep.subr.bf16.mxu0 %v2078
    %5645 = vmatpush2.bf16.msra.mxu0 %v2077
    %5646 = vmatprep.subr.bf16.mxu0 %v2062
    %5647 = vmatpush2.bf16.msra.mxu0 %v2061
    %5648 = vmatprep.subr.bf16.mxu0 %v2046
    %5649 = vmatpush2.bf16.msra.mxu0 %v2045
    %5650 = vmatprep.subr.bf16.mxu0 %v2030
    %5651 = vmatpush2.bf16.msra.mxu0 %v2029
    %5652 = vmatprep.mubr.bf16.mxu0 %v3543
    %5653 = vmatmul.mubr.bf16.gmra.mxu0 %v3542
    %v5654 = vpop.f32.mrf.mxu0
    %v5655 = vadd.f32 %v5614, %v5654
    %v5656 = vpop.f32.mrf.mxu0
    %v5657 = vadd.f32 %v5616, %v5656
    %v5658 = vpop.f32.mrf.mxu0
    %v5659 = vpop.f32.mrf.mxu0
    %5660 = vdwg.mxu0
    %5661 = vmatprep.subr.bf16.mxu0 %v2270
    %5662 = vmatpush1.bf16.msra.mxu0 %v2269
    %5663 = vmatprep.subr.bf16.mxu0 %v2254
    %5664 = vmatpush1.bf16.msra.mxu0 %v2253
    %5665 = vmatprep.subr.bf16.mxu0 %v2238
    %5666 = vmatpush1.bf16.msra.mxu0 %v2237
    %5667 = vmatprep.subr.bf16.mxu0 %v2222
    %5668 = vmatpush1.bf16.msra.mxu0 %v2221
    %5669 = vmatprep.subr.bf16.mxu0 %v2206
    %5670 = vmatpush1.bf16.msra.mxu0 %v2205
    %5671 = vmatprep.subr.bf16.mxu0 %v2190
    %5672 = vmatpush1.bf16.msra.mxu0 %v2189
    %5673 = vmatprep.subr.bf16.mxu0 %v2174
    %5674 = vmatpush1.bf16.msra.mxu0 %v2173
    %5675 = vmatprep.subr.bf16.mxu0 %v2158
    %5676 = vmatpush1.bf16.msra.mxu0 %v2157
    %5677 = vmatprep.subr.bf16.mxu0 %v2398
    %5678 = vmatpush2.bf16.msra.mxu0 %v2397
    %5679 = vmatprep.subr.bf16.mxu0 %v2382
    %5680 = vmatpush2.bf16.msra.mxu0 %v2381
    %5681 = vmatprep.subr.bf16.mxu0 %v2366
    %5682 = vmatpush2.bf16.msra.mxu0 %v2365
    %5683 = vmatprep.subr.bf16.mxu0 %v2350
    %5684 = vmatpush2.bf16.msra.mxu0 %v2349
    %5685 = vmatprep.subr.bf16.mxu0 %v2334
    %5686 = vmatpush2.bf16.msra.mxu0 %v2333
    %5687 = vmatprep.subr.bf16.mxu0 %v2318
    %5688 = vmatpush2.bf16.msra.mxu0 %v2317
    %5689 = vmatprep.subr.bf16.mxu0 %v2302
    %5690 = vmatpush2.bf16.msra.mxu0 %v2301
    %5691 = vmatprep.subr.bf16.mxu0 %v2286
    %5692 = vmatpush2.bf16.msra.mxu0 %v2285
    %5693 = vmatprep.mubr.bf16.mxu0 %v3545
    %5694 = vmatmul.mubr.bf16.gmra.mxu0 %v3544
    %v5695 = vpop.f32.mrf.mxu0
    %v5696 = vadd.f32 %v5655, %v5695
    %v5697 = vpop.f32.mrf.mxu0
    %v5698 = vadd.f32 %v5657, %v5697
    %v5699 = vpop.f32.mrf.mxu0
    %v5700 = vpop.f32.mrf.mxu0
    %5701 = vdwg.mxu0
    %5702 = vmatprep.subr.bf16.mxu0 %v2526
    %5703 = vmatpush1.bf16.msra.mxu0 %v2525
    %5704 = vmatprep.subr.bf16.mxu0 %v2510
    %5705 = vmatpush1.bf16.msra.mxu0 %v2509
    %5706 = vmatprep.subr.bf16.mxu0 %v2494
    %5707 = vmatpush1.bf16.msra.mxu0 %v2493
    %5708 = vmatprep.subr.bf16.mxu0 %v2478
    %5709 = vmatpush1.bf16.msra.mxu0 %v2477
    %5710 = vmatprep.subr.bf16.mxu0 %v2462
    %5711 = vmatpush1.bf16.msra.mxu0 %v2461
    %5712 = vmatprep.subr.bf16.mxu0 %v2446
    %5713 = vmatpush1.bf16.msra.mxu0 %v2445
    %5714 = vmatprep.subr.bf16.mxu0 %v2430
    %5715 = vmatpush1.bf16.msra.mxu0 %v2429
    %5716 = vmatprep.subr.bf16.mxu0 %v2414
    %5717 = vmatpush1.bf16.msra.mxu0 %v2413
    %5718 = vmatprep.subr.bf16.mxu0 %v2654
    %5719 = vmatpush2.bf16.msra.mxu0 %v2653
    %5720 = vmatprep.subr.bf16.mxu0 %v2638
    %5721 = vmatpush2.bf16.msra.mxu0 %v2637
    %5722 = vmatprep.subr.bf16.mxu0 %v2622
    %5723 = vmatpush2.bf16.msra.mxu0 %v2621
    %5724 = vmatprep.subr.bf16.mxu0 %v2606
    %5725 = vmatpush2.bf16.msra.mxu0 %v2605
    %5726 = vmatprep.subr.bf16.mxu0 %v2590
    %5727 = vmatpush2.bf16.msra.mxu0 %v2589
    %5728 = vmatprep.subr.bf16.mxu0 %v2574
    %5729 = vmatpush2.bf16.msra.mxu0 %v2573
    %5730 = vmatprep.subr.bf16.mxu0 %v2558
    %5731 = vmatpush2.bf16.msra.mxu0 %v2557
    %5732 = vmatprep.subr.bf16.mxu0 %v2542
    %5733 = vmatpush2.bf16.msra.mxu0 %v2541
    %5734 = vmatprep.mubr.bf16.mxu0 %v3547
    %5735 = vmatmul.mubr.bf16.gmra.mxu0 %v3546
    %v5736 = vpop.f32.mrf.mxu0
    %v5737 = vadd.f32 %v5696, %v5736
    %v5738 = vpop.f32.mrf.mxu0
    %v5739 = vadd.f32 %v5698, %v5738
    %v5740 = vpop.f32.mrf.mxu0
    %v5741 = vpop.f32.mrf.mxu0
    %5742 = vdwg.mxu0
    %5743 = vmatprep.subr.bf16.mxu0 %v2782
    %5744 = vmatpush1.bf16.msra.mxu0 %v2781
    %5745 = vmatprep.subr.bf16.mxu0 %v2766
    %5746 = vmatpush1.bf16.msra.mxu0 %v2765
    %5747 = vmatprep.subr.bf16.mxu0 %v2750
    %5748 = vmatpush1.bf16.msra.mxu0 %v2749
    %5749 = vmatprep.subr.bf16.mxu0 %v2734
    %5750 = vmatpush1.bf16.msra.mxu0 %v2733
    %5751 = vmatprep.subr.bf16.mxu0 %v2718
    %5752 = vmatpush1.bf16.msra.mxu0 %v2717
    %5753 = vmatprep.subr.bf16.mxu0 %v2702
    %5754 = vmatpush1.bf16.msra.mxu0 %v2701
    %5755 = vmatprep.subr.bf16.mxu0 %v2686
    %5756 = vmatpush1.bf16.msra.mxu0 %v2685
    %5757 = vmatprep.subr.bf16.mxu0 %v2670
    %5758 = vmatpush1.bf16.msra.mxu0 %v2669
    %5759 = vmatprep.subr.bf16.mxu0 %v2910
    %5760 = vmatpush2.bf16.msra.mxu0 %v2909
    %5761 = vmatprep.subr.bf16.mxu0 %v2894
    %5762 = vmatpush2.bf16.msra.mxu0 %v2893
    %5763 = vmatprep.subr.bf16.mxu0 %v2878
    %5764 = vmatpush2.bf16.msra.mxu0 %v2877
    %5765 = vmatprep.subr.bf16.mxu0 %v2862
    %5766 = vmatpush2.bf16.msra.mxu0 %v2861
    %5767 = vmatprep.subr.bf16.mxu0 %v2846
    %5768 = vmatpush2.bf16.msra.mxu0 %v2845
    %5769 = vmatprep.subr.bf16.mxu0 %v2830
    %5770 = vmatpush2.bf16.msra.mxu0 %v2829
    %5771 = vmatprep.subr.bf16.mxu0 %v2814
    %5772 = vmatpush2.bf16.msra.mxu0 %v2813
    %5773 = vmatprep.subr.bf16.mxu0 %v2798
    %5774 = vmatpush2.bf16.msra.mxu0 %v2797
    %5775 = vmatprep.mubr.bf16.mxu0 %v3549
    %5776 = vmatmul.mubr.bf16.gmra.mxu0 %v3548
    %v5777 = vpop.f32.mrf.mxu0
    %v5778 = vadd.f32 %v5737, %v5777
    %v5779 = vpop.f32.mrf.mxu0
    %v5780 = vadd.f32 %v5739, %v5779
    %v5781 = vpop.f32.mrf.mxu0
    %v5782 = vpop.f32.mrf.mxu0
    %5783 = vdwg.mxu0
    %5784 = vmatprep.subr.bf16.mxu0 %v3038
    %5785 = vmatpush1.bf16.msra.mxu0 %v3037
    %5786 = vmatprep.subr.bf16.mxu0 %v3022
    %5787 = vmatpush1.bf16.msra.mxu0 %v3021
    %5788 = vmatprep.subr.bf16.mxu0 %v3006
    %5789 = vmatpush1.bf16.msra.mxu0 %v3005
    %5790 = vmatprep.subr.bf16.mxu0 %v2990
    %5791 = vmatpush1.bf16.msra.mxu0 %v2989
    %5792 = vmatprep.subr.bf16.mxu0 %v2974
    %5793 = vmatpush1.bf16.msra.mxu0 %v2973
    %5794 = vmatprep.subr.bf16.mxu0 %v2958
    %5795 = vmatpush1.bf16.msra.mxu0 %v2957
    %5796 = vmatprep.subr.bf16.mxu0 %v2942
    %5797 = vmatpush1.bf16.msra.mxu0 %v2941
    %5798 = vmatprep.subr.bf16.mxu0 %v2926
    %5799 = vmatpush1.bf16.msra.mxu0 %v2925
    %5800 = vmatprep.subr.bf16.mxu0 %v3166
    %5801 = vmatpush2.bf16.msra.mxu0 %v3165
    %5802 = vmatprep.subr.bf16.mxu0 %v3150
    %5803 = vmatpush2.bf16.msra.mxu0 %v3149
    %5804 = vmatprep.subr.bf16.mxu0 %v3134
    %5805 = vmatpush2.bf16.msra.mxu0 %v3133
    %5806 = vmatprep.subr.bf16.mxu0 %v3118
    %5807 = vmatpush2.bf16.msra.mxu0 %v3117
    %5808 = vmatprep.subr.bf16.mxu0 %v3102
    %5809 = vmatpush2.bf16.msra.mxu0 %v3101
    %5810 = vmatprep.subr.bf16.mxu0 %v3086
    %5811 = vmatpush2.bf16.msra.mxu0 %v3085
    %5812 = vmatprep.subr.bf16.mxu0 %v3070
    %5813 = vmatpush2.bf16.msra.mxu0 %v3069
    %5814 = vmatprep.subr.bf16.mxu0 %v3054
    %5815 = vmatpush2.bf16.msra.mxu0 %v3053
    %5816 = vmatprep.mubr.bf16.mxu0 %v3551
    %5817 = vmatmul.mubr.bf16.gmra.mxu0 %v3550
    %v5818 = vpop.f32.mrf.mxu0
    %v5819 = vadd.f32 %v5778, %v5818
    %v5820 = vpop.f32.mrf.mxu0
    %v5821 = vadd.f32 %v5780, %v5820
    %v5822 = vpop.f32.mrf.mxu0
    %v5823 = vpop.f32.mrf.mxu0
    %5824 = vdwg.mxu0
    %5825 = vmatprep.subr.bf16.mxu0 %v3294
    %5826 = vmatpush1.bf16.msra.mxu0 %v3293
    %5827 = vmatprep.subr.bf16.mxu0 %v3278
    %5828 = vmatpush1.bf16.msra.mxu0 %v3277
    %5829 = vmatprep.subr.bf16.mxu0 %v3262
    %5830 = vmatpush1.bf16.msra.mxu0 %v3261
    %5831 = vmatprep.subr.bf16.mxu0 %v3246
    %5832 = vmatpush1.bf16.msra.mxu0 %v3245
    %5833 = vmatprep.subr.bf16.mxu0 %v3230
    %5834 = vmatpush1.bf16.msra.mxu0 %v3229
    %5835 = vmatprep.subr.bf16.mxu0 %v3214
    %5836 = vmatpush1.bf16.msra.mxu0 %v3213
    %5837 = vmatprep.subr.bf16.mxu0 %v3198
    %5838 = vmatpush1.bf16.msra.mxu0 %v3197
    %5839 = vmatprep.subr.bf16.mxu0 %v3182
    %5840 = vmatpush1.bf16.msra.mxu0 %v3181
    %5841 = vmatprep.subr.bf16.mxu0 %v3422
    %5842 = vmatpush2.bf16.msra.mxu0 %v3421
    %5843 = vmatprep.subr.bf16.mxu0 %v3406
    %5844 = vmatpush2.bf16.msra.mxu0 %v3405
    %5845 = vmatprep.subr.bf16.mxu0 %v3390
    %5846 = vmatpush2.bf16.msra.mxu0 %v3389
    %5847 = vmatprep.subr.bf16.mxu0 %v3374
    %5848 = vmatpush2.bf16.msra.mxu0 %v3373
    %5849 = vmatprep.subr.bf16.mxu0 %v3358
    %5850 = vmatpush2.bf16.msra.mxu0 %v3357
    %5851 = vmatprep.subr.bf16.mxu0 %v3342
    %5852 = vmatpush2.bf16.msra.mxu0 %v3341
    %5853 = vmatprep.subr.bf16.mxu0 %v3326
    %5854 = vmatpush2.bf16.msra.mxu0 %v3325
    %5855 = vmatprep.subr.bf16.mxu0 %v3310
    %5856 = vmatpush2.bf16.msra.mxu0 %v3309
    %5857 = vmatprep.mubr.bf16.mxu0 %v3553
    %5858 = vmatmul.mubr.bf16.gmra.mxu0 %v3552
    %v5859 = vpop.f32.mrf.mxu0
    %v5860 = vadd.f32 %v5819, %v5859
    %v5861 = vpop.f32.mrf.mxu0
    %v5862 = vadd.f32 %v5821, %v5861
    %v5863 = vpop.f32.mrf.mxu0
    %v5864 = vpop.f32.mrf.mxu0
    %5865 = vdwg.mxu0
    %5866 = vmatprep.subr.bf16.mxu0 %v1504
    %5867 = vmatpush1.bf16.msra.mxu0 %v1503
    %5868 = vmatprep.subr.bf16.mxu0 %v1488
    %5869 = vmatpush1.bf16.msra.mxu0 %v1487
    %5870 = vmatprep.subr.bf16.mxu0 %v1472
    %5871 = vmatpush1.bf16.msra.mxu0 %v1471
    %5872 = vmatprep.subr.bf16.mxu0 %v1456
    %5873 = vmatpush1.bf16.msra.mxu0 %v1455
    %5874 = vmatprep.subr.bf16.mxu0 %v1440
    %5875 = vmatpush1.bf16.msra.mxu0 %v1439
    %5876 = vmatprep.subr.bf16.mxu0 %v1424
    %5877 = vmatpush1.bf16.msra.mxu0 %v1423
    %5878 = vmatprep.subr.bf16.mxu0 %v1408
    %5879 = vmatpush1.bf16.msra.mxu0 %v1407
    %5880 = vmatprep.subr.bf16.mxu0 %v1392
    %5881 = vmatpush1.bf16.msra.mxu0 %v1391
    %5882 = vmatprep.subr.bf16.mxu0 %v1632
    %5883 = vmatpush2.bf16.msra.mxu0 %v1631
    %5884 = vmatprep.subr.bf16.mxu0 %v1616
    %5885 = vmatpush2.bf16.msra.mxu0 %v1615
    %5886 = vmatprep.subr.bf16.mxu0 %v1600
    %5887 = vmatpush2.bf16.msra.mxu0 %v1599
    %5888 = vmatprep.subr.bf16.mxu0 %v1584
    %5889 = vmatpush2.bf16.msra.mxu0 %v1583
    %5890 = vmatprep.subr.bf16.mxu0 %v1568
    %5891 = vmatpush2.bf16.msra.mxu0 %v1567
    %5892 = vmatprep.subr.bf16.mxu0 %v1552
    %5893 = vmatpush2.bf16.msra.mxu0 %v1551
    %5894 = vmatprep.subr.bf16.mxu0 %v1536
    %5895 = vmatpush2.bf16.msra.mxu0 %v1535
    %5896 = vmatprep.subr.bf16.mxu0 %v1520
    %5897 = vmatpush2.bf16.msra.mxu0 %v1519
    %5898 = vmatprep.mubr.bf16.mxu0 %v3539
    %5899 = vmatmul.mubr.bf16.gmra.mxu0 %v3538
    %v5900 = vpop.f32.mrf.mxu0
    %v5901 = vadd.f32 0.0, %v5900
    %v5902 = vpop.f32.mrf.mxu0
    %v5903 = vadd.f32 0.0, %v5902
    %v5904 = vpop.f32.mrf.mxu0
    %v5905 = vpop.f32.mrf.mxu0
    %5906 = vdwg.mxu0
    %5907 = vmatprep.subr.bf16.mxu0 %v1760
    %5908 = vmatpush1.bf16.msra.mxu0 %v1759
    %5909 = vmatprep.subr.bf16.mxu0 %v1744
    %5910 = vmatpush1.bf16.msra.mxu0 %v1743
    %5911 = vmatprep.subr.bf16.mxu0 %v1728
    %5912 = vmatpush1.bf16.msra.mxu0 %v1727
    %5913 = vmatprep.subr.bf16.mxu0 %v1712
    %5914 = vmatpush1.bf16.msra.mxu0 %v1711
    %5915 = vmatprep.subr.bf16.mxu0 %v1696
    %5916 = vmatpush1.bf16.msra.mxu0 %v1695
    %5917 = vmatprep.subr.bf16.mxu0 %v1680
    %5918 = vmatpush1.bf16.msra.mxu0 %v1679
    %5919 = vmatprep.subr.bf16.mxu0 %v1664
    %5920 = vmatpush1.bf16.msra.mxu0 %v1663
    %5921 = vmatprep.subr.bf16.mxu0 %v1648
    %5922 = vmatpush1.bf16.msra.mxu0 %v1647
    %5923 = vmatprep.subr.bf16.mxu0 %v1888
    %5924 = vmatpush2.bf16.msra.mxu0 %v1887
    %5925 = vmatprep.subr.bf16.mxu0 %v1872
    %5926 = vmatpush2.bf16.msra.mxu0 %v1871
    %5927 = vmatprep.subr.bf16.mxu0 %v1856
    %5928 = vmatpush2.bf16.msra.mxu0 %v1855
    %5929 = vmatprep.subr.bf16.mxu0 %v1840
    %5930 = vmatpush2.bf16.msra.mxu0 %v1839
    %5931 = vmatprep.subr.bf16.mxu0 %v1824
    %5932 = vmatpush2.bf16.msra.mxu0 %v1823
    %5933 = vmatprep.subr.bf16.mxu0 %v1808
    %5934 = vmatpush2.bf16.msra.mxu0 %v1807
    %5935 = vmatprep.subr.bf16.mxu0 %v1792
    %5936 = vmatpush2.bf16.msra.mxu0 %v1791
    %5937 = vmatprep.subr.bf16.mxu0 %v1776
    %5938 = vmatpush2.bf16.msra.mxu0 %v1775
    %5939 = vmatprep.mubr.bf16.mxu0 %v3541
    %5940 = vmatmul.mubr.bf16.gmra.mxu0 %v3540
    %v5941 = vpop.f32.mrf.mxu0
    %v5942 = vadd.f32 %v5901, %v5941
    %v5943 = vpop.f32.mrf.mxu0
    %v5944 = vadd.f32 %v5903, %v5943
    %v5945 = vpop.f32.mrf.mxu0
    %v5946 = vpop.f32.mrf.mxu0
    %5947 = vdwg.mxu0
    %5948 = vmatprep.subr.bf16.mxu0 %v2016
    %5949 = vmatpush1.bf16.msra.mxu0 %v2015
    %5950 = vmatprep.subr.bf16.mxu0 %v2000
    %5951 = vmatpush1.bf16.msra.mxu0 %v1999
    %5952 = vmatprep.subr.bf16.mxu0 %v1984
    %5953 = vmatpush1.bf16.msra.mxu0 %v1983
    %5954 = vmatprep.subr.bf16.mxu0 %v1968
    %5955 = vmatpush1.bf16.msra.mxu0 %v1967
    %5956 = vmatprep.subr.bf16.mxu0 %v1952
    %5957 = vmatpush1.bf16.msra.mxu0 %v1951
    %5958 = vmatprep.subr.bf16.mxu0 %v1936
    %5959 = vmatpush1.bf16.msra.mxu0 %v1935
    %5960 = vmatprep.subr.bf16.mxu0 %v1920
    %5961 = vmatpush1.bf16.msra.mxu0 %v1919
    %5962 = vmatprep.subr.bf16.mxu0 %v1904
    %5963 = vmatpush1.bf16.msra.mxu0 %v1903
    %5964 = vmatprep.subr.bf16.mxu0 %v2144
    %5965 = vmatpush2.bf16.msra.mxu0 %v2143
    %5966 = vmatprep.subr.bf16.mxu0 %v2128
    %5967 = vmatpush2.bf16.msra.mxu0 %v2127
    %5968 = vmatprep.subr.bf16.mxu0 %v2112
    %5969 = vmatpush2.bf16.msra.mxu0 %v2111
    %5970 = vmatprep.subr.bf16.mxu0 %v2096
    %5971 = vmatpush2.bf16.msra.mxu0 %v2095
    %5972 = vmatprep.subr.bf16.mxu0 %v2080
    %5973 = vmatpush2.bf16.msra.mxu0 %v2079
    %5974 = vmatprep.subr.bf16.mxu0 %v2064
    %5975 = vmatpush2.bf16.msra.mxu0 %v2063
    %5976 = vmatprep.subr.bf16.mxu0 %v2048
    %5977 = vmatpush2.bf16.msra.mxu0 %v2047
    %5978 = vmatprep.subr.bf16.mxu0 %v2032
    %5979 = vmatpush2.bf16.msra.mxu0 %v2031
    %5980 = vmatprep.mubr.bf16.mxu0 %v3543
    %5981 = vmatmul.mubr.bf16.gmra.mxu0 %v3542
    %v5982 = vpop.f32.mrf.mxu0
    %v5983 = vadd.f32 %v5942, %v5982
    %v5984 = vpop.f32.mrf.mxu0
    %v5985 = vadd.f32 %v5944, %v5984
    %v5986 = vpop.f32.mrf.mxu0
    %v5987 = vpop.f32.mrf.mxu0
    %5988 = vdwg.mxu0
    %5989 = vmatprep.subr.bf16.mxu0 %v2272
    %5990 = vmatpush1.bf16.msra.mxu0 %v2271
    %5991 = vmatprep.subr.bf16.mxu0 %v2256
    %5992 = vmatpush1.bf16.msra.mxu0 %v2255
    %5993 = vmatprep.subr.bf16.mxu0 %v2240
    %5994 = vmatpush1.bf16.msra.mxu0 %v2239
    %5995 = vmatprep.subr.bf16.mxu0 %v2224
    %5996 = vmatpush1.bf16.msra.mxu0 %v2223
    %5997 = vmatprep.subr.bf16.mxu0 %v2208
    %5998 = vmatpush1.bf16.msra.mxu0 %v2207
    %5999 = vmatprep.subr.bf16.mxu0 %v2192
    %6000 = vmatpush1.bf16.msra.mxu0 %v2191
    %6001 = vmatprep.subr.bf16.mxu0 %v2176
    %6002 = vmatpush1.bf16.msra.mxu0 %v2175
    %6003 = vmatprep.subr.bf16.mxu0 %v2160
    %6004 = vmatpush1.bf16.msra.mxu0 %v2159
    %6005 = vmatprep.subr.bf16.mxu0 %v2400
    %6006 = vmatpush2.bf16.msra.mxu0 %v2399
    %6007 = vmatprep.subr.bf16.mxu0 %v2384
    %6008 = vmatpush2.bf16.msra.mxu0 %v2383
    %6009 = vmatprep.subr.bf16.mxu0 %v2368
    %6010 = vmatpush2.bf16.msra.mxu0 %v2367
    %6011 = vmatprep.subr.bf16.mxu0 %v2352
    %6012 = vmatpush2.bf16.msra.mxu0 %v2351
    %6013 = vmatprep.subr.bf16.mxu0 %v2336
    %6014 = vmatpush2.bf16.msra.mxu0 %v2335
    %6015 = vmatprep.subr.bf16.mxu0 %v2320
    %6016 = vmatpush2.bf16.msra.mxu0 %v2319
    %6017 = vmatprep.subr.bf16.mxu0 %v2304
    %6018 = vmatpush2.bf16.msra.mxu0 %v2303
    %6019 = vmatprep.subr.bf16.mxu0 %v2288
    %6020 = vmatpush2.bf16.msra.mxu0 %v2287
    %6021 = vmatprep.mubr.bf16.mxu0 %v3545
    %6022 = vmatmul.mubr.bf16.gmra.mxu0 %v3544
    %v6023 = vpop.f32.mrf.mxu0
    %v6024 = vadd.f32 %v5983, %v6023
    %v6025 = vpop.f32.mrf.mxu0
    %v6026 = vadd.f32 %v5985, %v6025
    %v6027 = vpop.f32.mrf.mxu0
    %v6028 = vpop.f32.mrf.mxu0
    %6029 = vdwg.mxu0
    %6030 = vmatprep.subr.bf16.mxu0 %v2528
    %6031 = vmatpush1.bf16.msra.mxu0 %v2527
    %6032 = vmatprep.subr.bf16.mxu0 %v2512
    %6033 = vmatpush1.bf16.msra.mxu0 %v2511
    %6034 = vmatprep.subr.bf16.mxu0 %v2496
    %6035 = vmatpush1.bf16.msra.mxu0 %v2495
    %6036 = vmatprep.subr.bf16.mxu0 %v2480
    %6037 = vmatpush1.bf16.msra.mxu0 %v2479
    %6038 = vmatprep.subr.bf16.mxu0 %v2464
    %6039 = vmatpush1.bf16.msra.mxu0 %v2463
    %6040 = vmatprep.subr.bf16.mxu0 %v2448
    %6041 = vmatpush1.bf16.msra.mxu0 %v2447
    %6042 = vmatprep.subr.bf16.mxu0 %v2432
    %6043 = vmatpush1.bf16.msra.mxu0 %v2431
    %6044 = vmatprep.subr.bf16.mxu0 %v2416
    %6045 = vmatpush1.bf16.msra.mxu0 %v2415
    %6046 = vmatprep.subr.bf16.mxu0 %v2656
    %6047 = vmatpush2.bf16.msra.mxu0 %v2655
    %6048 = vmatprep.subr.bf16.mxu0 %v2640
    %6049 = vmatpush2.bf16.msra.mxu0 %v2639
    %6050 = vmatprep.subr.bf16.mxu0 %v2624
    %6051 = vmatpush2.bf16.msra.mxu0 %v2623
    %6052 = vmatprep.subr.bf16.mxu0 %v2608
    %6053 = vmatpush2.bf16.msra.mxu0 %v2607
    %6054 = vmatprep.subr.bf16.mxu0 %v2592
    %6055 = vmatpush2.bf16.msra.mxu0 %v2591
    %6056 = vmatprep.subr.bf16.mxu0 %v2576
    %6057 = vmatpush2.bf16.msra.mxu0 %v2575
    %6058 = vmatprep.subr.bf16.mxu0 %v2560
    %6059 = vmatpush2.bf16.msra.mxu0 %v2559
    %6060 = vmatprep.subr.bf16.mxu0 %v2544
    %6061 = vmatpush2.bf16.msra.mxu0 %v2543
    %6062 = vmatprep.mubr.bf16.mxu0 %v3547
    %6063 = vmatmul.mubr.bf16.gmra.mxu0 %v3546
    %v6064 = vpop.f32.mrf.mxu0
    %v6065 = vadd.f32 %v6024, %v6064
    %v6066 = vpop.f32.mrf.mxu0
    %v6067 = vadd.f32 %v6026, %v6066
    %v6068 = vpop.f32.mrf.mxu0
    %v6069 = vpop.f32.mrf.mxu0
    %6070 = vdwg.mxu0
    %6071 = vmatprep.subr.bf16.mxu0 %v2784
    %6072 = vmatpush1.bf16.msra.mxu0 %v2783
    %6073 = vmatprep.subr.bf16.mxu0 %v2768
    %6074 = vmatpush1.bf16.msra.mxu0 %v2767
    %6075 = vmatprep.subr.bf16.mxu0 %v2752
    %6076 = vmatpush1.bf16.msra.mxu0 %v2751
    %6077 = vmatprep.subr.bf16.mxu0 %v2736
    %6078 = vmatpush1.bf16.msra.mxu0 %v2735
    %6079 = vmatprep.subr.bf16.mxu0 %v2720
    %6080 = vmatpush1.bf16.msra.mxu0 %v2719
    %6081 = vmatprep.subr.bf16.mxu0 %v2704
    %6082 = vmatpush1.bf16.msra.mxu0 %v2703
    %6083 = vmatprep.subr.bf16.mxu0 %v2688
    %6084 = vmatpush1.bf16.msra.mxu0 %v2687
    %6085 = vmatprep.subr.bf16.mxu0 %v2672
    %6086 = vmatpush1.bf16.msra.mxu0 %v2671
    %6087 = vmatprep.subr.bf16.mxu0 %v2912
    %6088 = vmatpush2.bf16.msra.mxu0 %v2911
    %6089 = vmatprep.subr.bf16.mxu0 %v2896
    %6090 = vmatpush2.bf16.msra.mxu0 %v2895
    %6091 = vmatprep.subr.bf16.mxu0 %v2880
    %6092 = vmatpush2.bf16.msra.mxu0 %v2879
    %6093 = vmatprep.subr.bf16.mxu0 %v2864
    %6094 = vmatpush2.bf16.msra.mxu0 %v2863
    %6095 = vmatprep.subr.bf16.mxu0 %v2848
    %6096 = vmatpush2.bf16.msra.mxu0 %v2847
    %6097 = vmatprep.subr.bf16.mxu0 %v2832
    %6098 = vmatpush2.bf16.msra.mxu0 %v2831
    %6099 = vmatprep.subr.bf16.mxu0 %v2816
    %6100 = vmatpush2.bf16.msra.mxu0 %v2815
    %6101 = vmatprep.subr.bf16.mxu0 %v2800
    %6102 = vmatpush2.bf16.msra.mxu0 %v2799
    %6103 = vmatprep.mubr.bf16.mxu0 %v3549
    %6104 = vmatmul.mubr.bf16.gmra.mxu0 %v3548
    %v6105 = vpop.f32.mrf.mxu0
    %v6106 = vadd.f32 %v6065, %v6105
    %v6107 = vpop.f32.mrf.mxu0
    %v6108 = vadd.f32 %v6067, %v6107
    %v6109 = vpop.f32.mrf.mxu0
    %v6110 = vpop.f32.mrf.mxu0
    %6111 = vdwg.mxu0
    %6112 = vmatprep.subr.bf16.mxu0 %v3040
    %6113 = vmatpush1.bf16.msra.mxu0 %v3039
    %6114 = vmatprep.subr.bf16.mxu0 %v3024
    %6115 = vmatpush1.bf16.msra.mxu0 %v3023
    %6116 = vmatprep.subr.bf16.mxu0 %v3008
    %6117 = vmatpush1.bf16.msra.mxu0 %v3007
    %6118 = vmatprep.subr.bf16.mxu0 %v2992
    %6119 = vmatpush1.bf16.msra.mxu0 %v2991
    %6120 = vmatprep.subr.bf16.mxu0 %v2976
    %6121 = vmatpush1.bf16.msra.mxu0 %v2975
    %6122 = vmatprep.subr.bf16.mxu0 %v2960
    %6123 = vmatpush1.bf16.msra.mxu0 %v2959
    %6124 = vmatprep.subr.bf16.mxu0 %v2944
    %6125 = vmatpush1.bf16.msra.mxu0 %v2943
    %6126 = vmatprep.subr.bf16.mxu0 %v2928
    %6127 = vmatpush1.bf16.msra.mxu0 %v2927
    %6128 = vmatprep.subr.bf16.mxu0 %v3168
    %6129 = vmatpush2.bf16.msra.mxu0 %v3167
    %6130 = vmatprep.subr.bf16.mxu0 %v3152
    %6131 = vmatpush2.bf16.msra.mxu0 %v3151
    %6132 = vmatprep.subr.bf16.mxu0 %v3136
    %6133 = vmatpush2.bf16.msra.mxu0 %v3135
    %6134 = vmatprep.subr.bf16.mxu0 %v3120
    %6135 = vmatpush2.bf16.msra.mxu0 %v3119
    %6136 = vmatprep.subr.bf16.mxu0 %v3104
    %6137 = vmatpush2.bf16.msra.mxu0 %v3103
    %6138 = vmatprep.subr.bf16.mxu0 %v3088
    %6139 = vmatpush2.bf16.msra.mxu0 %v3087
    %6140 = vmatprep.subr.bf16.mxu0 %v3072
    %6141 = vmatpush2.bf16.msra.mxu0 %v3071
    %6142 = vmatprep.subr.bf16.mxu0 %v3056
    %6143 = vmatpush2.bf16.msra.mxu0 %v3055
    %6144 = vmatprep.mubr.bf16.mxu0 %v3551
    %6145 = vmatmul.mubr.bf16.gmra.mxu0 %v3550
    %v6146 = vpop.f32.mrf.mxu0
    %v6147 = vadd.f32 %v6106, %v6146
    %v6148 = vpop.f32.mrf.mxu0
    %v6149 = vadd.f32 %v6108, %v6148
    %v6150 = vpop.f32.mrf.mxu0
    %v6151 = vpop.f32.mrf.mxu0
    %6152 = vdwg.mxu0
    %6153 = vmatprep.subr.bf16.mxu0 %v3296
    %6154 = vmatpush1.bf16.msra.mxu0 %v3295
    %6155 = vmatprep.subr.bf16.mxu0 %v3280
    %6156 = vmatpush1.bf16.msra.mxu0 %v3279
    %6157 = vmatprep.subr.bf16.mxu0 %v3264
    %6158 = vmatpush1.bf16.msra.mxu0 %v3263
    %6159 = vmatprep.subr.bf16.mxu0 %v3248
    %6160 = vmatpush1.bf16.msra.mxu0 %v3247
    %6161 = vmatprep.subr.bf16.mxu0 %v3232
    %6162 = vmatpush1.bf16.msra.mxu0 %v3231
    %6163 = vmatprep.subr.bf16.mxu0 %v3216
    %6164 = vmatpush1.bf16.msra.mxu0 %v3215
    %6165 = vmatprep.subr.bf16.mxu0 %v3200
    %6166 = vmatpush1.bf16.msra.mxu0 %v3199
    %6167 = vmatprep.subr.bf16.mxu0 %v3184
    %6168 = vmatpush1.bf16.msra.mxu0 %v3183
    %6169 = vmatprep.subr.bf16.mxu0 %v3424
    %6170 = vmatpush2.bf16.msra.mxu0 %v3423
    %6171 = vmatprep.subr.bf16.mxu0 %v3408
    %6172 = vmatpush2.bf16.msra.mxu0 %v3407
    %6173 = vmatprep.subr.bf16.mxu0 %v3392
    %6174 = vmatpush2.bf16.msra.mxu0 %v3391
    %6175 = vmatprep.subr.bf16.mxu0 %v3376
    %6176 = vmatpush2.bf16.msra.mxu0 %v3375
    %6177 = vmatprep.subr.bf16.mxu0 %v3360
    %6178 = vmatpush2.bf16.msra.mxu0 %v3359
    %6179 = vmatprep.subr.bf16.mxu0 %v3344
    %6180 = vmatpush2.bf16.msra.mxu0 %v3343
    %6181 = vmatprep.subr.bf16.mxu0 %v3328
    %6182 = vmatpush2.bf16.msra.mxu0 %v3327
    %6183 = vmatprep.subr.bf16.mxu0 %v3312
    %6184 = vmatpush2.bf16.msra.mxu0 %v3311
    %6185 = vmatprep.mubr.bf16.mxu0 %v3553
    %6186 = vmatmul.mubr.bf16.gmra.mxu0 %v3552
    %v6187 = vpop.f32.mrf.mxu0
    %v6188 = vadd.f32 %v6147, %v6187
    %v6189 = vpop.f32.mrf.mxu0
    %v6190 = vadd.f32 %v6149, %v6189
    %v6191 = vpop.f32.mrf.mxu0
    %v6192 = vpop.f32.mrf.mxu0
    %6193 = vdwg.mxu0
    %s6194 = smul.u32 0, 16
    %s6195 = scalar_lea.vmem [#allocation5], %s6194
    %v6196 = vld [vmem:[%s6195] sm:$0xff]
    %v6197 = vld [vmem:[%s6195 + $0x8] sm:$0xff]
    %v6200 = vlaneseq
    %v6201 = vshrl.u32 %v6200, 7
    %v6202 = vsub.s32 0, %v6201
    %v6203 = vrot.slane %v6196, %v6202
    %v6204 = vlaneseq
    %v6205 = vshrl.u32 %v6204, 7
    %v6206 = vsub.s32 1, %v6205
    %v6207 = vrot.slane %v6196, %v6206
    %v6208 = vlaneseq
    %v6209 = vshrl.u32 %v6208, 7
    %v6210 = vsub.s32 2, %v6209
    %v6211 = vrot.slane %v6196, %v6210
    %v6212 = vlaneseq
    %v6213 = vshrl.u32 %v6212, 7
    %v6214 = vsub.s32 3, %v6213
    %v6215 = vrot.slane %v6196, %v6214
    %v6216 = vlaneseq
    %v6217 = vshrl.u32 %v6216, 7
    %v6218 = vsub.s32 4, %v6217
    %v6219 = vrot.slane %v6196, %v6218
    %v6220 = vlaneseq
    %v6221 = vshrl.u32 %v6220, 7
    %v6222 = vsub.s32 5, %v6221
    %v6223 = vrot.slane %v6196, %v6222
    %v6224 = vlaneseq
    %v6225 = vshrl.u32 %v6224, 7
    %v6226 = vsub.s32 6, %v6225
    %v6227 = vrot.slane %v6196, %v6226
    %v6228 = vlaneseq
    %v6229 = vshrl.u32 %v6228, 7
    %v6230 = vsub.s32 7, %v6229
    %v6231 = vrot.slane %v6196, %v6230
    %v6232 = vlaneseq
    %v6233 = vshrl.u32 %v6232, 7
    %v6234 = vsub.s32 0, %v6233
    %v6235 = vrot.slane %v6197, %v6234
    %v6236 = vlaneseq
    %v6237 = vshrl.u32 %v6236, 7
    %v6238 = vsub.s32 1, %v6237
    %v6239 = vrot.slane %v6197, %v6238
    %v6240 = vlaneseq
    %v6241 = vshrl.u32 %v6240, 7
    %v6242 = vsub.s32 2, %v6241
    %v6243 = vrot.slane %v6197, %v6242
    %v6244 = vlaneseq
    %v6245 = vshrl.u32 %v6244, 7
    %v6246 = vsub.s32 3, %v6245
    %v6247 = vrot.slane %v6197, %v6246
    %v6248 = vlaneseq
    %v6249 = vshrl.u32 %v6248, 7
    %v6250 = vsub.s32 4, %v6249
    %v6251 = vrot.slane %v6197, %v6250
    %v6252 = vlaneseq
    %v6253 = vshrl.u32 %v6252, 7
    %v6254 = vsub.s32 5, %v6253
    %v6255 = vrot.slane %v6197, %v6254
    %v6256 = vlaneseq
    %v6257 = vshrl.u32 %v6256, 7
    %v6258 = vsub.s32 6, %v6257
    %v6259 = vrot.slane %v6197, %v6258
    %v6260 = vlaneseq
    %v6261 = vshrl.u32 %v6260, 7
    %v6262 = vsub.s32 7, %v6261
    %v6263 = vrot.slane %v6197, %v6262
    %v6280 = vmul.f32 %v3892, %v6203
    %v6281 = vmul.f32 %v3894, %v6207
    %v6282 = vmul.f32 %v4220, %v6211
    %v6283 = vmul.f32 %v4222, %v6215
    %v6284 = vmul.f32 %v4548, %v6219
    %v6285 = vmul.f32 %v4550, %v6223
    %v6286 = vmul.f32 %v4876, %v6227
    %v6287 = vmul.f32 %v4878, %v6231
    %v6288 = vmul.f32 %v5204, %v6235
    %v6289 = vmul.f32 %v5206, %v6239
    %v6290 = vmul.f32 %v5532, %v6243
    %v6291 = vmul.f32 %v5534, %v6247
    %v6292 = vmul.f32 %v5860, %v6251
    %v6293 = vmul.f32 %v5862, %v6255
    %v6294 = vmul.f32 %v6188, %v6259
    %v6295 = vmul.f32 %v6190, %v6263
    %s6296 = scalar_lea.vmem [#allocation7], %s6194
    %v6297 = vld [vmem:[%s6296] sm:$0xff]
    %v6298 = vld [vmem:[%s6296 + $0x8] sm:$0xff]
    %v6301 = vlaneseq
    %v6302 = vshrl.u32 %v6301, 7
    %v6303 = vsub.s32 0, %v6302
    %v6304 = vrot.slane %v6297, %v6303
    %v6305 = vlaneseq
    %v6306 = vshrl.u32 %v6305, 7
    %v6307 = vsub.s32 1, %v6306
    %v6308 = vrot.slane %v6297, %v6307
    %v6309 = vlaneseq
    %v6310 = vshrl.u32 %v6309, 7
    %v6311 = vsub.s32 2, %v6310
    %v6312 = vrot.slane %v6297, %v6311
    %v6313 = vlaneseq
    %v6314 = vshrl.u32 %v6313, 7
    %v6315 = vsub.s32 3, %v6314
    %v6316 = vrot.slane %v6297, %v6315
    %v6317 = vlaneseq
    %v6318 = vshrl.u32 %v6317, 7
    %v6319 = vsub.s32 4, %v6318
    %v6320 = vrot.slane %v6297, %v6319
    %v6321 = vlaneseq
    %v6322 = vshrl.u32 %v6321, 7
    %v6323 = vsub.s32 5, %v6322
    %v6324 = vrot.slane %v6297, %v6323
    %v6325 = vlaneseq
    %v6326 = vshrl.u32 %v6325, 7
    %v6327 = vsub.s32 6, %v6326
    %v6328 = vrot.slane %v6297, %v6327
    %v6329 = vlaneseq
    %v6330 = vshrl.u32 %v6329, 7
    %v6331 = vsub.s32 7, %v6330
    %v6332 = vrot.slane %v6297, %v6331
    %v6333 = vlaneseq
    %v6334 = vshrl.u32 %v6333, 7
    %v6335 = vsub.s32 0, %v6334
    %v6336 = vrot.slane %v6298, %v6335
    %v6337 = vlaneseq
    %v6338 = vshrl.u32 %v6337, 7
    %v6339 = vsub.s32 1, %v6338
    %v6340 = vrot.slane %v6298, %v6339
    %v6341 = vlaneseq
    %v6342 = vshrl.u32 %v6341, 7
    %v6343 = vsub.s32 2, %v6342
    %v6344 = vrot.slane %v6298, %v6343
    %v6345 = vlaneseq
    %v6346 = vshrl.u32 %v6345, 7
    %v6347 = vsub.s32 3, %v6346
    %v6348 = vrot.slane %v6298, %v6347
    %v6349 = vlaneseq
    %v6350 = vshrl.u32 %v6349, 7
    %v6351 = vsub.s32 4, %v6350
    %v6352 = vrot.slane %v6298, %v6351
    %v6353 = vlaneseq
    %v6354 = vshrl.u32 %v6353, 7
    %v6355 = vsub.s32 5, %v6354
    %v6356 = vrot.slane %v6298, %v6355
    %v6357 = vlaneseq
    %v6358 = vshrl.u32 %v6357, 7
    %v6359 = vsub.s32 6, %v6358
    %v6360 = vrot.slane %v6298, %v6359
    %v6361 = vlaneseq
    %v6362 = vshrl.u32 %v6361, 7
    %v6363 = vsub.s32 7, %v6362
    %v6364 = vrot.slane %v6298, %v6363
    %v6381 = vadd.f32 %v6280, %v6304
    %v6382 = vadd.f32 %v6281, %v6308
    %v6383 = vadd.f32 %v6282, %v6312
    %v6384 = vadd.f32 %v6283, %v6316
    %v6385 = vadd.f32 %v6284, %v6320
    %v6386 = vadd.f32 %v6285, %v6324
    %v6387 = vadd.f32 %v6286, %v6328
    %v6388 = vadd.f32 %v6287, %v6332
    %v6389 = vadd.f32 %v6288, %v6336
    %v6390 = vadd.f32 %v6289, %v6340
    %v6391 = vadd.f32 %v6290, %v6344
    %v6392 = vadd.f32 %v6291, %v6348
    %v6393 = vadd.f32 %v6292, %v6352
    %v6394 = vadd.f32 %v6293, %v6356
    %v6395 = vadd.f32 %v6294, %v6360
    %v6396 = vadd.f32 %v6295, %v6364
    %v6413 = vcombine.low %v6381, %v6382
    %v6414 = vcombine.low %v6383, %v6384
    %v6416 = vunpack.c.l.s4 1983009808
    %v6417 = vunpack.c.0.s8 %v6416
    %v6418 = vlaneseq
    %v6419 = vshrl.u32 %v6418, 7
    %v6420 = vsub.s32 %v6417, %v6419
    %v6421 = vrot.slane %v6413, %v6420
    %v6423 = vunpack.c.l.s4 1983009808
    %v6424 = vunpack.c.0.s8 %v6423
    %v6425 = vlaneseq
    %v6426 = vshrl.u32 %v6425, 7
    %v6427 = vsub.s32 %v6424, %v6426
    %v6428 = vrot.slane %v6414, %v6427
    %v6429 = vcombine.low %v6421, %v6428
    %v6430 = vcombine.low %v6385, %v6386
    %v6431 = vcombine.low %v6387, %v6388
    %v6433 = vunpack.c.l.s4 1983009808
    %v6434 = vunpack.c.0.s8 %v6433
    %v6435 = vlaneseq
    %v6436 = vshrl.u32 %v6435, 7
    %v6437 = vsub.s32 %v6434, %v6436
    %v6438 = vrot.slane %v6430, %v6437
    %v6440 = vunpack.c.l.s4 1983009808
    %v6441 = vunpack.c.0.s8 %v6440
    %v6442 = vlaneseq
    %v6443 = vshrl.u32 %v6442, 7
    %v6444 = vsub.s32 %v6441, %v6443
    %v6445 = vrot.slane %v6431, %v6444
    %v6446 = vcombine.low %v6438, %v6445
    %v6447 = vcombine.low %v6389, %v6390
    %v6448 = vcombine.low %v6391, %v6392
    %v6450 = vunpack.c.l.s4 1983009808
    %v6451 = vunpack.c.0.s8 %v6450
    %v6452 = vlaneseq
    %v6453 = vshrl.u32 %v6452, 7
    %v6454 = vsub.s32 %v6451, %v6453
    %v6455 = vrot.slane %v6447, %v6454
    %v6457 = vunpack.c.l.s4 1983009808
    %v6458 = vunpack.c.0.s8 %v6457
    %v6459 = vlaneseq
    %v6460 = vshrl.u32 %v6459, 7
    %v6461 = vsub.s32 %v6458, %v6460
    %v6462 = vrot.slane %v6448, %v6461
    %v6463 = vcombine.low %v6455, %v6462
    %v6464 = vcombine.low %v6393, %v6394
    %v6465 = vcombine.low %v6395, %v6396
    %v6467 = vunpack.c.l.s4 1983009808
    %v6468 = vunpack.c.0.s8 %v6467
    %v6469 = vlaneseq
    %v6470 = vshrl.u32 %v6469, 7
    %v6471 = vsub.s32 %v6468, %v6470
    %v6472 = vrot.slane %v6464, %v6471
    %v6474 = vunpack.c.l.s4 1983009808
    %v6475 = vunpack.c.0.s8 %v6474
    %v6476 = vlaneseq
    %v6477 = vshrl.u32 %v6476, 7
    %v6478 = vsub.s32 %v6475, %v6477
    %v6479 = vrot.slane %v6465, %v6478
    %v6480 = vcombine.low %v6472, %v6479
    %6485 = vst [vmem:[#allocation8] sm:$0xff] %v6429
    %6486 = vst [vmem:[#allocation8 + $0x8] sm:$0xff] %v6446
    %6487 = vst [vmem:[#allocation8 + $0x10] sm:$0xff] %v6463
    %6488 = vst [vmem:[#allocation8 + $0x18] sm:$0xff] %v6480
    // Predicated region
    $region34: #{network_forward.1} parent=1 // pred_check
      _
    $region35: #{network_forward.1} parent=1 // pred_check_branch
      %6490 = sbr.rel (0) target = $region37
    $region36: #{network_forward.1} parent=1 // pred_region
      %s6492 = ssub.s32 512, 512
      %6493 = vsyncadd [#allocation4], %s6492
      %s6495 = sshll.u32 [#allocation8], 4
      %s6496 = int_to_ptr.vmem [resolvable:$true] %s6495
      %6498 = dma.vmem_to_hbm [thread:$0]  %s6496, 512, %s5, [#allocation4]
    $region37: #{network_forward.1} parent=1 // pred_fallthru
      _
    // Predicated region
    $region38: #{network_forward.1} parent=1 // pred_check
      _
    $region39: #{network_forward.1} parent=1 // pred_check_branch
      %6500 = sbr.rel (0) target = $region41
    $region40: #{network_forward.1} parent=1 // pred_region
      %6501 = dma.done [#allocation4], 512
    $region41: #{network_forward.1} parent=1 // pred_fallthru
      _
    %6502 = vsyncpa [#allocation3], 1
    %6503 = vsyncpa [#allocation6], 1
    %6504 = vsyncpa [#allocation4], 1

</llo_original>
